<compile_context>
chip_gen: v5e
topology: v5e:2x2
jax: 0.10.0
libtpu: 0.0.40
codegen_flags: <defaults>
</compile_context>

<pallas_src>
import functools

import jax
import jax.numpy as jnp
from jax import lax
from jax.experimental import pallas as pl
from jax.experimental.pallas import tpu as pltpu

# ----------------------------------------------------------------------------
# Module hyper-parameters (deterministic, synthetic)
# ----------------------------------------------------------------------------
STEP_SIZE = 0.05
NUM_STEPS = 10

# Forest-Ruth 4th-order symplectic coefficients.
_THETA = 1.0 / (2.0 - 2.0 ** (1.0 / 3.0))
_CA1 = _THETA / 2.0            # = ca4
_CA2 = (1.0 - _THETA) / 2.0    # = ca3
_D1 = _THETA                   # = d3
_D2 = 1.0 - 2.0 * _THETA

_LANES = 128
_CHUNK_ROWS = 16               # (16,128) f32 = 2 vregs per live array


def _round_up(v, m):
    return ((v + m - 1) // m) * m


def _symplectic_kernel(coef_ref, qp_ref, out_ref, *, num_steps, chunk_rows):
    """Integrates one (2, br, 128) lane-dense tile for num_steps steps.

    coef_ref (SMEM, shape (6,)): [A1, A2, B1, B2, C1, C2] with
      drift: q += A_i * p
      kick:  p -= B_i * cos(q) + C_i * q
    qp_ref / out_ref: (2, br, 128); index 0 is q, index 1 is p.
    """
    # Scalar coefficients straight from SMEM: scalar*vector splats from an
    # sreg, zero vreg/VMEM traffic (no full-tile broadcast constants).
    a1 = coef_ref[0]
    a2 = coef_ref[1]
    b1 = coef_ref[2]
    b2 = coef_ref[3]
    c1 = coef_ref[4]
    c2 = coef_ref[5]

    def step(_, carry):
        q, p = carry
        # Forest-Ruth 4th-order symplectic update (drift/kick interleave),
        # all scalar coefficients pre-folded.
        q = q + a1 * p
        p = p - (b1 * jnp.cos(q) + c1 * q)
        q = q + a2 * p
        p = p - (b2 * jnp.cos(q) + c2 * q)
        q = q + a2 * p
        p = p - (b1 * jnp.cos(q) + c1 * q)
        q = q + a1 * p
        return q, p

    n_chunks = qp_ref.shape[1] // chunk_rows

    # Register-block: keep a (chunk_rows, 128) slice of q and p resident in
    # vregs across the entire (fully unrolled) step loop, then write it back
    # and move to the next slice.  Only the carry (q, p) is live across step
    # boundaries, so the 64-entry vreg file is never exceeded.
    @pl.loop(0, n_chunks)
    def _(c):
        r = pl.multiple_of(c * chunk_rows, chunk_rows)
        q = qp_ref[0, pl.ds(r, chunk_rows), :].astype(jnp.float32)
        p = qp_ref[1, pl.ds(r, chunk_rows), :].astype(jnp.float32)
        q, p = lax.fori_loop(0, num_steps, step, (q, p), unroll=True)
        out_ref[0, pl.ds(r, chunk_rows), :] = q.astype(out_ref.dtype)
        out_ref[1, pl.ds(r, chunk_rows), :] = p.astype(out_ref.dtype)


def symplectic_expression_forward(x, constants, *, num_steps=NUM_STEPS,
                                  step_size=STEP_SIZE, block_rows=1024,
                                  chunk_rows=_CHUNK_ROWS):
    """x: [B, 2*D] float32, constants: [2] float32  ->  y: [B, 2*D]."""
    b, two_d = x.shape
    d = two_d // 2
    n = b * d

    # --- tile geometry -------------------------------------------------------
    rows = max(1, pl.cdiv(n, _LANES))
    # Balanced, chunk-aligned tiles; force >= 2 tiles when there is enough
    # work so the "parallel" grid axis can shard across v7x's 2 TensorCores.
    nt = max(1, pl.cdiv(rows, block_rows))
    if rows >= 2 * chunk_rows:
        nt = max(nt, 2)
    br = _round_up(pl.cdiv(rows, nt), chunk_rows)
    nt = pl.cdiv(rows, br)
    rows_p = nt * br
    total = rows_p * _LANES

    # --- glue: single lane-dense (2, rows_p, 128) slab for q and p ----------
    # One transpose/reshape each way -> 1 input + 1 output DMA stream (was 4).
    # TODO(synk): when d % 128 == 0 the repack could be skipped entirely by
    #             slicing q/p at lane-aligned offsets inside the kernel.
    qp = jnp.transpose(x.reshape(b, 2, d), (1, 0, 2)).reshape(2, n)
    pad = total - n
    if pad:
        qp = jnp.pad(qp, ((0, 0), (0, pad)))
    qp = qp.reshape(2, rows_p, _LANES)

    # --- fold all scalar coefficients once, outside the kernel --------------
    c0 = constants[0].astype(jnp.float32)   # Vq constant
    c1 = constants[1].astype(jnp.float32)   # Tp constant
    h = jnp.float32(step_size)
    coef = jnp.stack([
        2.0 * c1 * jnp.float32(_CA1) * h,   # A1
        2.0 * c1 * jnp.float32(_CA2) * h,   # A2
        jnp.float32(_D1) * h * c0,          # B1
        jnp.float32(_D2) * h * c0,          # B2
        2.0 * jnp.float32(_D1) * h,         # C1 (same f32 h as A/B)
        2.0 * jnp.float32(_D2) * h,         # C2
    ]).astype(jnp.float32)

    kernel = functools.partial(_symplectic_kernel, num_steps=num_steps,
                               chunk_rows=chunk_rows)

    out = pl.pallas_call(
        kernel,
        out_shape=jax.ShapeDtypeStruct((2, rows_p, _LANES), x.dtype),
        grid_spec=pltpu.PrefetchScalarGridSpec(
            num_scalar_prefetch=1,                       # coef -> SMEM
            grid=(nt,),
            in_specs=[pl.BlockSpec((2, br, _LANES), lambda i, c: (0, i, 0))],
            out_specs=pl.BlockSpec((2, br, _LANES), lambda i, c: (0, i, 0)),
        ),
        compiler_params=pltpu.CompilerParams(
            dimension_semantics=("parallel",)),
        cost_estimate=pl.CostEstimate(
            flops=20 * num_steps * total,            # 4 drifts + 3 kicks / step
            transcendentals=3 * num_steps * total,   # 3 cos / step
            bytes_accessed=4 * 4 * total),           # read q,p + write q,p f32
    )(coef, qp)

    # un-pad and restore [B, 2D]: equivalent of torch.cat((q, p), axis=1)[:, :, 0]
    qp_out = out.reshape(2, -1)[:, :n].reshape(2, b, d)
    return jnp.transpose(qp_out, (1, 0, 2)).reshape(b, two_d)


def _reference_forward(x, constants, *, num_steps=NUM_STEPS,
                       step_size=STEP_SIZE):
    """Pure-JAX reference of the same forward (unfolded form)."""
    c0, c1 = constants[0], constants[1]
    d = x.shape[1] // 2
    q, p = x[:, :d], x[:, d:]
    h = jnp.float32(step_size)

    def dVdq(q):
        return c0 * jnp.cos(q) + 2.0 * q

    def dTdp(p):
        return 2.0 * c1 * p

    for _ in range(num_steps):
        q = q + _CA1 * h * dTdp(p)
        p = p - _D1 * h * dVdq(q)
        q = q + _CA2 * h * dTdp(p)
        p = p - _D2 * h * dVdq(q)
        q = q + _CA2 * h * dTdp(p)
        p = p - _D1 * h * dVdq(q)
        q = q + _CA1 * h * dTdp(p)
    return jnp.concatenate([q, p], axis=1)


if __name__ == "__main__":
    key = jax.random.PRNGKey(0)
    k_x, k_c = jax.random.split(key)

    B, D_HALF = 8, 8                       # X: [batch, 2*d] = [8, 16]
    x = jax.random.normal(k_x, (B, 2 * D_HALF), dtype=jnp.float32)
    # One learnable constant per ChildExpression (Vq, Tp) -> init like torch.rand
    constants = jax.random.uniform(k_c, (2,), dtype=jnp.float32)

    y = symplectic_expression_forward(x, constants)
    y = jax.block_until_ready(y)

    y_ref = _reference_forward(x, constants)
    assert y.shape == (B, 2 * D_HALF)
    assert jnp.allclose(y, y_ref, atol=1e-4, rtol=1e-4)

    print("KERNEL_OK")
</pallas_src>

<mosaic_0001>
module attributes {stable_mosaic.version = 11 : i64} {
  func.func @_symplectic_kernel(%arg0: i32, %arg1: memref<6xf32, #tpu.memory_space<smem>>, %arg2: memref<2x16x128xf32, #tpu.memory_space<vmem>>, %arg3: memref<2x16x128xf32, #tpu.memory_space<vmem>>) attributes {dimension_semantics = [#tpu.dimension_semantics<parallel>], iteration_bounds = array<i64: 1>, scalar_prefetch = 1 : i64, scratch_operands = 0 : i64, tpu.core_type = #tpu.core_type<tc>, window_params = [{transform_indices = @transform_0, window_bounds = array<i64: 2, 16, 128>}, {transform_indices = @transform_1, window_bounds = array<i64: 2, 16, 128>}]} {
    %c0 = arith.constant 0 : index
    %0 = memref.load %arg1[%c0] : memref<6xf32, #tpu.memory_space<smem>>
    %c1 = arith.constant 1 : index
    %1 = memref.load %arg1[%c1] : memref<6xf32, #tpu.memory_space<smem>>
    %c2 = arith.constant 2 : index
    %2 = memref.load %arg1[%c2] : memref<6xf32, #tpu.memory_space<smem>>
    %c3 = arith.constant 3 : index
    %3 = memref.load %arg1[%c3] : memref<6xf32, #tpu.memory_space<smem>>
    %c4 = arith.constant 4 : index
    %4 = memref.load %arg1[%c4] : memref<6xf32, #tpu.memory_space<smem>>
    %c5 = arith.constant 5 : index
    %5 = memref.load %arg1[%c5] : memref<6xf32, #tpu.memory_space<smem>>
    %c0_i32 = arith.constant 0 : i32
    %c1_i32 = arith.constant 1 : i32
    %6 = arith.muli %c0_i32, %c1_i32 : i32
    %c0_i32_0 = arith.constant 0 : i32
    %7 = arith.addi %c0_i32_0, %6 : i32
    %c16_i32 = arith.constant 16 : i32
    %8 = arith.muli %7, %c16_i32 : i32
    %9 = tpu.assume_multiple %8, 16 : i32
    %c0_1 = arith.constant 0 : index
    %10 = arith.index_cast %9 : i32 to index
    %c0_2 = arith.constant 0 : index
    %11 = vector.load %arg2[%c0_1, %10, %c0_2] : memref<2x16x128xf32, #tpu.memory_space<vmem>>, vector<1x16x128xf32>
    %12 = vector.shape_cast %11 : vector<1x16x128xf32> to vector<16x128xf32>
    %c1_3 = arith.constant 1 : index
    %13 = arith.index_cast %9 : i32 to index
    %c0_4 = arith.constant 0 : index
    %14 = vector.load %arg2[%c1_3, %13, %c0_4] : memref<2x16x128xf32, #tpu.memory_space<vmem>>, vector<1x16x128xf32>
    %15 = vector.shape_cast %14 : vector<1x16x128xf32> to vector<16x128xf32>
    %c0_i32_5 = arith.constant 0 : i32
    %16 = vector.broadcast %0 : f32 to vector<16x128xf32>
    %17 = arith.mulf %16, %15 : vector<16x128xf32>
    %18 = arith.addf %12, %17 : vector<16x128xf32>
    %19 = math.cos %18 : vector<16x128xf32>
    %20 = vector.broadcast %2 : f32 to vector<16x128xf32>
    %21 = arith.mulf %20, %19 : vector<16x128xf32>
    %22 = vector.broadcast %4 : f32 to vector<16x128xf32>
    %23 = arith.mulf %22, %18 : vector<16x128xf32>
    %24 = arith.addf %21, %23 : vector<16x128xf32>
    %25 = arith.subf %15, %24 : vector<16x128xf32>
    %26 = vector.broadcast %1 : f32 to vector<16x128xf32>
    %27 = arith.mulf %26, %25 : vector<16x128xf32>
    %28 = arith.addf %18, %27 : vector<16x128xf32>
    %29 = math.cos %28 : vector<16x128xf32>
    %30 = vector.broadcast %3 : f32 to vector<16x128xf32>
    %31 = arith.mulf %30, %29 : vector<16x128xf32>
    %32 = vector.broadcast %5 : f32 to vector<16x128xf32>
    %33 = arith.mulf %32, %28 : vector<16x128xf32>
    %34 = arith.addf %31, %33 : vector<16x128xf32>
    %35 = arith.subf %25, %34 : vector<16x128xf32>
    %36 = vector.broadcast %1 : f32 to vector<16x128xf32>
    %37 = arith.mulf %36, %35 : vector<16x128xf32>
    %38 = arith.addf %28, %37 : vector<16x128xf32>
    %39 = math.cos %38 : vector<16x128xf32>
    %40 = vector.broadcast %2 : f32 to vector<16x128xf32>
    %41 = arith.mulf %40, %39 : vector<16x128xf32>
    %42 = vector.broadcast %4 : f32 to vector<16x128xf32>
    %43 = arith.mulf %42, %38 : vector<16x128xf32>
    %44 = arith.addf %41, %43 : vector<16x128xf32>
    %45 = arith.subf %35, %44 : vector<16x128xf32>
    %46 = vector.broadcast %0 : f32 to vector<16x128xf32>
    %47 = arith.mulf %46, %45 : vector<16x128xf32>
    %48 = arith.addf %38, %47 : vector<16x128xf32>
    %c1_i32_6 = arith.constant 1 : i32
    %49 = vector.broadcast %0 : f32 to vector<16x128xf32>
    %50 = arith.mulf %49, %45 : vector<16x128xf32>
    %51 = arith.addf %48, %50 : vector<16x128xf32>
    %52 = math.cos %51 : vector<16x128xf32>
    %53 = vector.broadcast %2 : f32 to vector<16x128xf32>
    %54 = arith.mulf %53, %52 : vector<16x128xf32>
    %55 = vector.broadcast %4 : f32 to vector<16x128xf32>
    %56 = arith.mulf %55, %51 : vector<16x128xf32>
    %57 = arith.addf %54, %56 : vector<16x128xf32>
    %58 = arith.subf %45, %57 : vector<16x128xf32>
    %59 = vector.broadcast %1 : f32 to vector<16x128xf32>
    %60 = arith.mulf %59, %58 : vector<16x128xf32>
    %61 = arith.addf %51, %60 : vector<16x128xf32>
    %62 = math.cos %61 : vector<16x128xf32>
    %63 = vector.broadcast %3 : f32 to vector<16x128xf32>
    %64 = arith.mulf %63, %62 : vector<16x128xf32>
    %65 = vector.broadcast %5 : f32 to vector<16x128xf32>
    %66 = arith.mulf %65, %61 : vector<16x128xf32>
    %67 = arith.addf %64, %66 : vector<16x128xf32>
    %68 = arith.subf %58, %67 : vector<16x128xf32>
    %69 = vector.broadcast %1 : f32 to vector<16x128xf32>
    %70 = arith.mulf %69, %68 : vector<16x128xf32>
    %71 = arith.addf %61, %70 : vector<16x128xf32>
    %72 = math.cos %71 : vector<16x128xf32>
    %73 = vector.broadcast %2 : f32 to vector<16x128xf32>
    %74 = arith.mulf %73, %72 : vector<16x128xf32>
    %75 = vector.broadcast %4 : f32 to vector<16x128xf32>
    %76 = arith.mulf %75, %71 : vector<16x128xf32>
    %77 = arith.addf %74, %76 : vector<16x128xf32>
    %78 = arith.subf %68, %77 : vector<16x128xf32>
    %79 = vector.broadcast %0 : f32 to vector<16x128xf32>
    %80 = arith.mulf %79, %78 : vector<16x128xf32>
    %81 = arith.addf %71, %80 : vector<16x128xf32>
    %c2_i32 = arith.constant 2 : i32
    %82 = vector.broadcast %0 : f32 to vector<16x128xf32>
    %83 = arith.mulf %82, %78 : vector<16x128xf32>
    %84 = arith.addf %81, %83 : vector<16x128xf32>
    %85 = math.cos %84 : vector<16x128xf32>
    %86 = vector.broadcast %2 : f32 to vector<16x128xf32>
    %87 = arith.mulf %86, %85 : vector<16x128xf32>
    %88 = vector.broadcast %4 : f32 to vector<16x128xf32>
    %89 = arith.mulf %88, %84 : vector<16x128xf32>
    %90 = arith.addf %87, %89 : vector<16x128xf32>
    %91 = arith.subf %78, %90 : vector<16x128xf32>
    %92 = vector.broadcast %1 : f32 to vector<16x128xf32>
    %93 = arith.mulf %92, %91 : vector<16x128xf32>
    %94 = arith.addf %84, %93 : vector<16x128xf32>
    %95 = math.cos %94 : vector<16x128xf32>
    %96 = vector.broadcast %3 : f32 to vector<16x128xf32>
    %97 = arith.mulf %96, %95 : vector<16x128xf32>
    %98 = vector.broadcast %5 : f32 to vector<16x128xf32>
    %99 = arith.mulf %98, %94 : vector<16x128xf32>
    %100 = arith.addf %97, %99 : vector<16x128xf32>
    %101 = arith.subf %91, %100 : vector<16x128xf32>
    %102 = vector.broadcast %1 : f32 to vector<16x128xf32>
    %103 = arith.mulf %102, %101 : vector<16x128xf32>
    %104 = arith.addf %94, %103 : vector<16x128xf32>
    %105 = math.cos %104 : vector<16x128xf32>
    %106 = vector.broadcast %2 : f32 to vector<16x128xf32>
    %107 = arith.mulf %106, %105 : vector<16x128xf32>
    %108 = vector.broadcast %4 : f32 to vector<16x128xf32>
    %109 = arith.mulf %108, %104 : vector<16x128xf32>
    %110 = arith.addf %107, %109 : vector<16x128xf32>
    %111 = arith.subf %101, %110 : vector<16x128xf32>
    %112 = vector.broadcast %0 : f32 to vector<16x128xf32>
    %113 = arith.mulf %112, %111 : vector<16x128xf32>
    %114 = arith.addf %104, %113 : vector<16x128xf32>
    %c3_i32 = arith.constant 3 : i32
    %115 = vector.broadcast %0 : f32 to vector<16x128xf32>
    %116 = arith.mulf %115, %111 : vector<16x128xf32>
    %117 = arith.addf %114, %116 : vector<16x128xf32>
    %118 = math.cos %117 : vector<16x128xf32>
    %119 = vector.broadcast %2 : f32 to vector<16x128xf32>
    %120 = arith.mulf %119, %118 : vector<16x128xf32>
    %121 = vector.broadcast %4 : f32 to vector<16x128xf32>
    %122 = arith.mulf %121, %117 : vector<16x128xf32>
    %123 = arith.addf %120, %122 : vector<16x128xf32>
    %124 = arith.subf %111, %123 : vector<16x128xf32>
    %125 = vector.broadcast %1 : f32 to vector<16x128xf32>
    %126 = arith.mulf %125, %124 : vector<16x128xf32>
    %127 = arith.addf %117, %126 : vector<16x128xf32>
    %128 = math.cos %127 : vector<16x128xf32>
    %129 = vector.broadcast %3 : f32 to vector<16x128xf32>
    %130 = arith.mulf %129, %128 : vector<16x128xf32>
    %131 = vector.broadcast %5 : f32 to vector<16x128xf32>
    %132 = arith.mulf %131, %127 : vector<16x128xf32>
    %133 = arith.addf %130, %132 : vector<16x128xf32>
    %134 = arith.subf %124, %133 : vector<16x128xf32>
    %135 = vector.broadcast %1 : f32 to vector<16x128xf32>
    %136 = arith.mulf %135, %134 : vector<16x128xf32>
    %137 = arith.addf %127, %136 : vector<16x128xf32>
    %138 = math.cos %137 : vector<16x128xf32>
    %139 = vector.broadcast %2 : f32 to vector<16x128xf32>
    %140 = arith.mulf %139, %138 : vector<16x128xf32>
    %141 = vector.broadcast %4 : f32 to vector<16x128xf32>
    %142 = arith.mulf %141, %137 : vector<16x128xf32>
    %143 = arith.addf %140, %142 : vector<16x128xf32>
    %144 = arith.subf %134, %143 : vector<16x128xf32>
    %145 = vector.broadcast %0 : f32 to vector<16x128xf32>
    %146 = arith.mulf %145, %144 : vector<16x128xf32>
    %147 = arith.addf %137, %146 : vector<16x128xf32>
    %c4_i32 = arith.constant 4 : i32
    %148 = vector.broadcast %0 : f32 to vector<16x128xf32>
    %149 = arith.mulf %148, %144 : vector<16x128xf32>
    %150 = arith.addf %147, %149 : vector<16x128xf32>
    %151 = math.cos %150 : vector<16x128xf32>
    %152 = vector.broadcast %2 : f32 to vector<16x128xf32>
    %153 = arith.mulf %152, %151 : vector<16x128xf32>
    %154 = vector.broadcast %4 : f32 to vector<16x128xf32>
    %155 = arith.mulf %154, %150 : vector<16x128xf32>
    %156 = arith.addf %153, %155 : vector<16x128xf32>
    %157 = arith.subf %144, %156 : vector<16x128xf32>
    %158 = vector.broadcast %1 : f32 to vector<16x128xf32>
    %159 = arith.mulf %158, %157 : vector<16x128xf32>
    %160 = arith.addf %150, %159 : vector<16x128xf32>
    %161 = math.cos %160 : vector<16x128xf32>
    %162 = vector.broadcast %3 : f32 to vector<16x128xf32>
    %163 = arith.mulf %162, %161 : vector<16x128xf32>
    %164 = vector.broadcast %5 : f32 to vector<16x128xf32>
    %165 = arith.mulf %164, %160 : vector<16x128xf32>
    %166 = arith.addf %163, %165 : vector<16x128xf32>
    %167 = arith.subf %157, %166 : vector<16x128xf32>
    %168 = vector.broadcast %1 : f32 to vector<16x128xf32>
    %169 = arith.mulf %168, %167 : vector<16x128xf32>
    %170 = arith.addf %160, %169 : vector<16x128xf32>
    %171 = math.cos %170 : vector<16x128xf32>
    %172 = vector.broadcast %2 : f32 to vector<16x128xf32>
    %173 = arith.mulf %172, %171 : vector<16x128xf32>
    %174 = vector.broadcast %4 : f32 to vector<16x128xf32>
    %175 = arith.mulf %174, %170 : vector<16x128xf32>
    %176 = arith.addf %173, %175 : vector<16x128xf32>
    %177 = arith.subf %167, %176 : vector<16x128xf32>
    %178 = vector.broadcast %0 : f32 to vector<16x128xf32>
    %179 = arith.mulf %178, %177 : vector<16x128xf32>
    %180 = arith.addf %170, %179 : vector<16x128xf32>
    %c5_i32 = arith.constant 5 : i32
    %181 = vector.broadcast %0 : f32 to vector<16x128xf32>
    %182 = arith.mulf %181, %177 : vector<16x128xf32>
    %183 = arith.addf %180, %182 : vector<16x128xf32>
    %184 = math.cos %183 : vector<16x128xf32>
    %185 = vector.broadcast %2 : f32 to vector<16x128xf32>
    %186 = arith.mulf %185, %184 : vector<16x128xf32>
    %187 = vector.broadcast %4 : f32 to vector<16x128xf32>
    %188 = arith.mulf %187, %183 : vector<16x128xf32>
    %189 = arith.addf %186, %188 : vector<16x128xf32>
    %190 = arith.subf %177, %189 : vector<16x128xf32>
    %191 = vector.broadcast %1 : f32 to vector<16x128xf32>
    %192 = arith.mulf %191, %190 : vector<16x128xf32>
    %193 = arith.addf %183, %192 : vector<16x128xf32>
    %194 = math.cos %193 : vector<16x128xf32>
    %195 = vector.broadcast %3 : f32 to vector<16x128xf32>
    %196 = arith.mulf %195, %194 : vector<16x128xf32>
    %197 = vector.broadcast %5 : f32 to vector<16x128xf32>
    %198 = arith.mulf %197, %193 : vector<16x128xf32>
    %199 = arith.addf %196, %198 : vector<16x128xf32>
    %200 = arith.subf %190, %199 : vector<16x128xf32>
    %201 = vector.broadcast %1 : f32 to vector<16x128xf32>
    %202 = arith.mulf %201, %200 : vector<16x128xf32>
    %203 = arith.addf %193, %202 : vector<16x128xf32>
    %204 = math.cos %203 : vector<16x128xf32>
    %205 = vector.broadcast %2 : f32 to vector<16x128xf32>
    %206 = arith.mulf %205, %204 : vector<16x128xf32>
    %207 = vector.broadcast %4 : f32 to vector<16x128xf32>
    %208 = arith.mulf %207, %203 : vector<16x128xf32>
    %209 = arith.addf %206, %208 : vector<16x128xf32>
    %210 = arith.subf %200, %209 : vector<16x128xf32>
    %211 = vector.broadcast %0 : f32 to vector<16x128xf32>
    %212 = arith.mulf %211, %210 : vector<16x128xf32>
    %213 = arith.addf %203, %212 : vector<16x128xf32>
    %c6_i32 = arith.constant 6 : i32
    %214 = vector.broadcast %0 : f32 to vector<16x128xf32>
    %215 = arith.mulf %214, %210 : vector<16x128xf32>
    %216 = arith.addf %213, %215 : vector<16x128xf32>
    %217 = math.cos %216 : vector<16x128xf32>
    %218 = vector.broadcast %2 : f32 to vector<16x128xf32>
    %219 = arith.mulf %218, %217 : vector<16x128xf32>
    %220 = vector.broadcast %4 : f32 to vector<16x128xf32>
    %221 = arith.mulf %220, %216 : vector<16x128xf32>
    %222 = arith.addf %219, %221 : vector<16x128xf32>
    %223 = arith.subf %210, %222 : vector<16x128xf32>
    %224 = vector.broadcast %1 : f32 to vector<16x128xf32>
    %225 = arith.mulf %224, %223 : vector<16x128xf32>
    %226 = arith.addf %216, %225 : vector<16x128xf32>
    %227 = math.cos %226 : vector<16x128xf32>
    %228 = vector.broadcast %3 : f32 to vector<16x128xf32>
    %229 = arith.mulf %228, %227 : vector<16x128xf32>
    %230 = vector.broadcast %5 : f32 to vector<16x128xf32>
    %231 = arith.mulf %230, %226 : vector<16x128xf32>
    %232 = arith.addf %229, %231 : vector<16x128xf32>
    %233 = arith.subf %223, %232 : vector<16x128xf32>
    %234 = vector.broadcast %1 : f32 to vector<16x128xf32>
    %235 = arith.mulf %234, %233 : vector<16x128xf32>
    %236 = arith.addf %226, %235 : vector<16x128xf32>
    %237 = math.cos %236 : vector<16x128xf32>
    %238 = vector.broadcast %2 : f32 to vector<16x128xf32>
    %239 = arith.mulf %238, %237 : vector<16x128xf32>
    %240 = vector.broadcast %4 : f32 to vector<16x128xf32>
    %241 = arith.mulf %240, %236 : vector<16x128xf32>
    %242 = arith.addf %239, %241 : vector<16x128xf32>
    %243 = arith.subf %233, %242 : vector<16x128xf32>
    %244 = vector.broadcast %0 : f32 to vector<16x128xf32>
    %245 = arith.mulf %244, %243 : vector<16x128xf32>
    %246 = arith.addf %236, %245 : vector<16x128xf32>
    %c7_i32 = arith.constant 7 : i32
    %247 = vector.broadcast %0 : f32 to vector<16x128xf32>
    %248 = arith.mulf %247, %243 : vector<16x128xf32>
    %249 = arith.addf %246, %248 : vector<16x128xf32>
    %250 = math.cos %249 : vector<16x128xf32>
    %251 = vector.broadcast %2 : f32 to vector<16x128xf32>
    %252 = arith.mulf %251, %250 : vector<16x128xf32>
    %253 = vector.broadcast %4 : f32 to vector<16x128xf32>
    %254 = arith.mulf %253, %249 : vector<16x128xf32>
    %255 = arith.addf %252, %254 : vector<16x128xf32>
    %256 = arith.subf %243, %255 : vector<16x128xf32>
    %257 = vector.broadcast %1 : f32 to vector<16x128xf32>
    %258 = arith.mulf %257, %256 : vector<16x128xf32>
    %259 = arith.addf %249, %258 : vector<16x128xf32>
    %260 = math.cos %259 : vector<16x128xf32>
    %261 = vector.broadcast %3 : f32 to vector<16x128xf32>
    %262 = arith.mulf %261, %260 : vector<16x128xf32>
    %263 = vector.broadcast %5 : f32 to vector<16x128xf32>
    %264 = arith.mulf %263, %259 : vector<16x128xf32>
    %265 = arith.addf %262, %264 : vector<16x128xf32>
    %266 = arith.subf %256, %265 : vector<16x128xf32>
    %267 = vector.broadcast %1 : f32 to vector<16x128xf32>
    %268 = arith.mulf %267, %266 : vector<16x128xf32>
    %269 = arith.addf %259, %268 : vector<16x128xf32>
    %270 = math.cos %269 : vector<16x128xf32>
    %271 = vector.broadcast %2 : f32 to vector<16x128xf32>
    %272 = arith.mulf %271, %270 : vector<16x128xf32>
    %273 = vector.broadcast %4 : f32 to vector<16x128xf32>
    %274 = arith.mulf %273, %269 : vector<16x128xf32>
    %275 = arith.addf %272, %274 : vector<16x128xf32>
    %276 = arith.subf %266, %275 : vector<16x128xf32>
    %277 = vector.broadcast %0 : f32 to vector<16x128xf32>
    %278 = arith.mulf %277, %276 : vector<16x128xf32>
    %279 = arith.addf %269, %278 : vector<16x128xf32>
    %c8_i32 = arith.constant 8 : i32
    %280 = vector.broadcast %0 : f32 to vector<16x128xf32>
    %281 = arith.mulf %280, %276 : vector<16x128xf32>
    %282 = arith.addf %279, %281 : vector<16x128xf32>
    %283 = math.cos %282 : vector<16x128xf32>
    %284 = vector.broadcast %2 : f32 to vector<16x128xf32>
    %285 = arith.mulf %284, %283 : vector<16x128xf32>
    %286 = vector.broadcast %4 : f32 to vector<16x128xf32>
    %287 = arith.mulf %286, %282 : vector<16x128xf32>
    %288 = arith.addf %285, %287 : vector<16x128xf32>
    %289 = arith.subf %276, %288 : vector<16x128xf32>
    %290 = vector.broadcast %1 : f32 to vector<16x128xf32>
    %291 = arith.mulf %290, %289 : vector<16x128xf32>
    %292 = arith.addf %282, %291 : vector<16x128xf32>
    %293 = math.cos %292 : vector<16x128xf32>
    %294 = vector.broadcast %3 : f32 to vector<16x128xf32>
    %295 = arith.mulf %294, %293 : vector<16x128xf32>
    %296 = vector.broadcast %5 : f32 to vector<16x128xf32>
    %297 = arith.mulf %296, %292 : vector<16x128xf32>
    %298 = arith.addf %295, %297 : vector<16x128xf32>
    %299 = arith.subf %289, %298 : vector<16x128xf32>
    %300 = vector.broadcast %1 : f32 to vector<16x128xf32>
    %301 = arith.mulf %300, %299 : vector<16x128xf32>
    %302 = arith.addf %292, %301 : vector<16x128xf32>
    %303 = math.cos %302 : vector<16x128xf32>
    %304 = vector.broadcast %2 : f32 to vector<16x128xf32>
    %305 = arith.mulf %304, %303 : vector<16x128xf32>
    %306 = vector.broadcast %4 : f32 to vector<16x128xf32>
    %307 = arith.mulf %306, %302 : vector<16x128xf32>
    %308 = arith.addf %305, %307 : vector<16x128xf32>
    %309 = arith.subf %299, %308 : vector<16x128xf32>
    %310 = vector.broadcast %0 : f32 to vector<16x128xf32>
    %311 = arith.mulf %310, %309 : vector<16x128xf32>
    %312 = arith.addf %302, %311 : vector<16x128xf32>
    %c9_i32 = arith.constant 9 : i32
    %313 = vector.broadcast %0 : f32 to vector<16x128xf32>
    %314 = arith.mulf %313, %309 : vector<16x128xf32>
    %315 = arith.addf %312, %314 : vector<16x128xf32>
    %316 = math.cos %315 : vector<16x128xf32>
    %317 = vector.broadcast %2 : f32 to vector<16x128xf32>
    %318 = arith.mulf %317, %316 : vector<16x128xf32>
    %319 = vector.broadcast %4 : f32 to vector<16x128xf32>
    %320 = arith.mulf %319, %315 : vector<16x128xf32>
    %321 = arith.addf %318, %320 : vector<16x128xf32>
    %322 = arith.subf %309, %321 : vector<16x128xf32>
    %323 = vector.broadcast %1 : f32 to vector<16x128xf32>
    %324 = arith.mulf %323, %322 : vector<16x128xf32>
    %325 = arith.addf %315, %324 : vector<16x128xf32>
    %326 = math.cos %325 : vector<16x128xf32>
    %327 = vector.broadcast %3 : f32 to vector<16x128xf32>
    %328 = arith.mulf %327, %326 : vector<16x128xf32>
    %329 = vector.broadcast %5 : f32 to vector<16x128xf32>
    %330 = arith.mulf %329, %325 : vector<16x128xf32>
    %331 = arith.addf %328, %330 : vector<16x128xf32>
    %332 = arith.subf %322, %331 : vector<16x128xf32>
    %333 = vector.broadcast %1 : f32 to vector<16x128xf32>
    %334 = arith.mulf %333, %332 : vector<16x128xf32>
    %335 = arith.addf %325, %334 : vector<16x128xf32>
    %336 = math.cos %335 : vector<16x128xf32>
    %337 = vector.broadcast %2 : f32 to vector<16x128xf32>
    %338 = arith.mulf %337, %336 : vector<16x128xf32>
    %339 = vector.broadcast %4 : f32 to vector<16x128xf32>
    %340 = arith.mulf %339, %335 : vector<16x128xf32>
    %341 = arith.addf %338, %340 : vector<16x128xf32>
    %342 = arith.subf %332, %341 : vector<16x128xf32>
    %343 = vector.broadcast %0 : f32 to vector<16x128xf32>
    %344 = arith.mulf %343, %342 : vector<16x128xf32>
    %345 = arith.addf %335, %344 : vector<16x128xf32>
    %c0_7 = arith.constant 0 : index
    %346 = arith.index_cast %9 : i32 to index
    %c0_8 = arith.constant 0 : index
    %347 = vector.load %arg3[%c0_7, %346, %c0_8] : memref<2x16x128xf32, #tpu.memory_space<vmem>>, vector<1x16x128xf32>
    %348 = vector.shape_cast %347 : vector<1x16x128xf32> to vector<16x128xf32>
    %349 = vector.shape_cast %345 : vector<16x128xf32> to vector<1x16x128xf32>
    tpu.vector_store %arg3[%c0_7, %346, %c0_8], %349 {strides = array<i32>} : memref<2x16x128xf32, #tpu.memory_space<vmem>>, vector<1x16x128xf32>,
    %c1_9 = arith.constant 1 : index
    %350 = arith.index_cast %9 : i32 to index
    %c0_10 = arith.constant 0 : index
    %351 = vector.load %arg3[%c1_9, %350, %c0_10] : memref<2x16x128xf32, #tpu.memory_space<vmem>>, vector<1x16x128xf32>
    %352 = vector.shape_cast %351 : vector<1x16x128xf32> to vector<16x128xf32>
    %353 = vector.shape_cast %342 : vector<16x128xf32> to vector<1x16x128xf32>
    tpu.vector_store %arg3[%c1_9, %350, %c0_10], %353 {strides = array<i32>} : memref<2x16x128xf32, #tpu.memory_space<vmem>>, vector<1x16x128xf32>,
    %c1_i32_11 = arith.constant 1 : i32
    return
  }
  func.func @transform_0(%arg0: i32, %arg1: memref<6xf32, #tpu.memory_space<smem>>) -> (i32, i32, i32) {
    %c0_i32 = arith.constant 0 : i32
    %c0_i32_0 = arith.constant 0 : i32
    %c0_i32_1 = arith.constant 0 : i32
    return %c0_i32, %arg0, %c0_i32_0 : i32, i32, i32
  }
  func.func @transform_1(%arg0: i32, %arg1: memref<6xf32, #tpu.memory_space<smem>>) -> (i32, i32, i32) {
    %c0_i32 = arith.constant 0 : i32
    %c0_i32_0 = arith.constant 0 : i32
    %c0_i32_1 = arith.constant 0 : i32
    return %c0_i32, %arg0, %c0_i32_0 : i32, i32, i32
  }
}

</mosaic_0001>

<llo_original>
// kernel: tpu_custom_call.1
$region0: #{tpu_custom_call.1}
  #allocation0 [shape = 'u32[]', space=smem, size = 0x4, offset = 0x4, fixed_abs, tag = 'smem constant byte address 0x4 - core index']
  #allocation1 [shape = 'u32[72,128]{1,0:T(1,128)}', space=vmem, size = 0x9000, scoped, tag = 'internal scratch']
  #allocation2 [shape = 's32[1]{0}', space=sflag, size = 0x4, scoped, tag = 'scoped memory for tpu_custom_call.1']
  #allocation3 [shape = 'u8[512]{0}', space=smem, size = 0x200, scoped, tag = 'prefetched SMEM operand 0']
  %s0 = inlined_call_operand.hbm [shape: f32[6], index: 0, kind: input, shape index: {}]
  %s1 = inlined_call_operand.hbm [shape: f32[2,16,128], index: 1, kind: input, shape index: {}]
  %s2 = inlined_call_operand.hbm [shape: f32[2,16,128], index: 2, kind: output, shape index: {}]
  %s3 = sld [smem:[#allocation0]]
  $region18: #{tpu_custom_call.1} parent=0
    _
  %s5 = ssub.s32 1, %s3
  %s6 = scalar_select 0, %s5, %s3
  %s8 = sshll.u32 %s0, 4
  %s9 = int_to_ptr.hbm [resolvable:$true] %s8
  %11 = dma.hbm_to_smem %s9, 16, [#allocation3], [#allocation2]
  %13 = dma.done [#allocation2], 16
  %14 = sfence
  $region1: #{tpu_custom_call.1} parent=0
    #allocation4 [shape = 'u8[16384]{0}', space=vmem, size = 0x4000, scoped, tag = 'input window, operand 1, single buffered']
    #allocation5 [shape = 's32[1]{0}', space=sflag, size = 0x4, scoped, tag = 'scoped memory for tpu_custom_call.1']
    #allocation6 [shape = 's32[1]{0}', space=sflag, size = 0x4, scoped, tag = 'scoped memory for tpu_custom_call.1']
    #allocation7 [shape = 'u8[16384]{0}', space=vmem, size = 0x4000, scoped, tag = 'output window, operand 0, single buffered']
    %15 = vsyncpa [#allocation5], 0
    %16 = vsyncpa [#allocation6], 0
    // Predicated region
    $region2: #{tpu_custom_call.1} parent=1 // pred_check
      _
    $region3: #{tpu_custom_call.1} parent=1 // pred_check_branch
      %18 = sbr.rel (0) target = $region5
    $region4: #{tpu_custom_call.1} parent=1 // pred_region
      %20 = vsyncadd [#allocation5], 0
      %s21 = sshll.u32 %s1, 4
      %s22 = int_to_ptr.hbm [resolvable:$true] %s21
      %s23 = sshll.u32 [#allocation4], 4
      %s24 = int_to_ptr.vmem [resolvable:$true] %s23
      %29 = dma.hbm_to_vmem [thread:$0]  %s22, 512, %s24, [#allocation5], 128, 128, 8
    $region5: #{tpu_custom_call.1} parent=1 // pred_fallthru
      _
    // Predicated region
    $region6: #{tpu_custom_call.1} parent=1 // pred_check
      _
    $region7: #{tpu_custom_call.1} parent=1 // pred_check_branch
      %31 = sbr.rel (0) target = $region9
    $region8: #{tpu_custom_call.1} parent=1 // pred_region
      %33 = dma.done [#allocation5], 512
    $region9: #{tpu_custom_call.1} parent=1 // pred_fallthru
      _
    %s34 = sld [smem:[#allocation3]]
    %s35 = sld [smem:[#allocation3 + $0x1]]
    %s36 = sld [smem:[#allocation3 + $0x2]]
    %s37 = sld [smem:[#allocation3 + $0x3]]
    %s38 = sld [smem:[#allocation3 + $0x4]]
    %s39 = sld [smem:[#allocation3 + $0x5]]
    %v40 = vld [vmem:[#allocation4] sm:$0xff]
    %v41 = vld [vmem:[#allocation4 + $0x8] sm:$0xff]
    %s42 = sadd.s32 0, 16
    %s43 = scalar_lea.vmem [#allocation4], %s42
    %v44 = vld [vmem:[%s43] sm:$0xff]
    %v45 = vld [vmem:[%s43 + $0x8] sm:$0xff]
    %v46 = vstv %s34
    %v47 = vmul.f32 %v46, %v44
    %v48 = vmul.f32 %v46, %v45
    %v49 = vadd.f32 %v40, %v47
    %v50 = vadd.f32 %v41, %v48
    %v51 = vand.u32 2147483647, %v49
    %vm52 = vcmp.le.f32.partialorder %v51, 0.7853982
    %vm53 = vcmp.lt.s32.totalorder %v49, 0
    %v54 = vand.u32 %v49, 2139095040
    %v55 = vshrl.u32 %v54, 23
    %v56 = vsub.s32 %v55, 127
    %v57 = vand.u32 2147483647, %v49
    %v58 = vand.u32 %v57, 8388607
    %v59 = vor.u32 %v58, 8388608
    %v60 = vsub.s32 0, %v59
    %v61 = vadd.s32 %v56, 1
    %vm62 = vcmp.gt.s32.totalorder %v61, 0
    %v63 = vsel %vm62, %v61, 0
    %v64 = vshrl.u32 %v63, 5
    %v65 = vand.u32 %v63, 31
    %v66 = vsub.s32 32, %v65
    %v67 = vshrl.u32 683565275, %v66
    %v68 = vshll.u32 683565275, %v65
    %v69 = vshrl.u32 2475754826, %v66
    %v70 = vor.u32 %v68, %v69
    %v71 = vshll.u32 2475754826, %v65
    %v72 = vshrl.u32 2131351028, %v66
    %v73 = vor.u32 %v71, %v72
    %v74 = vshll.u32 2131351028, %v65
    %v75 = vshrl.u32 2102212464, %v66
    %v76 = vor.u32 %v74, %v75
    %v77 = vshll.u32 2102212464, %v65
    %v78 = vshrl.u32 920167782, %v66
    %v79 = vor.u32 %v77, %v78
    %v80 = vshll.u32 920167782, %v65
    %v81 = vshrl.u32 1326507024, %v66
    %v82 = vor.u32 %v80, %v81
    %vm83 = vcmp.lt.s32.totalorder %v64, 1
    %vm84 = vcmp.lt.s32.totalorder %v64, 2
    %vm85 = vcmp.lt.s32.totalorder %v64, 3
    %vm86 = vcmp.lt.s32.totalorder %v64, 4
    %v87 = vsel %vm83, %v67, %v70
    %v88 = vsel %vm86, %v76, 2102212464
    %v89 = vsel %vm85, %v73, %v88
    %v90 = vsel %vm84, %v87, %v89
    %v91 = vsel %vm83, %v70, %v73
    %v92 = vsel %vm86, %v79, 920167782
    %v93 = vsel %vm85, %v76, %v92
    %v94 = vsel %vm84, %v91, %v93
    %v95 = vsel %vm83, %v73, %v76
    %v96 = vsel %vm86, %v82, 1326507024
    %v97 = vsel %vm85, %v79, %v96
    %v98 = vsel %vm84, %v95, %v97
    %v99 = vshll.u32 %v59, 8
    %v100 = vand.u32 %v99, 65535
    %v101 = vshrl.u32 %v99, 16
    %v102 = vand.u32 %v98, 65535
    %v103 = vshrl.u32 %v98, 16
    %v104 = vmul.u32 %v100, %v102
    %v105 = vmul.u32 %v100, %v103
    %v106 = vmul.u32 %v101, %v102
    %v107 = vmul.u32 %v101, %v103
    %v108 = vshll.u32 %v105, 16
    %v109 = vshrl.u32 %v105, 16
    %v110 = vshll.u32 %v106, 16
    %v111 = vshrl.u32 %v106, 16
    %vm112 = vc.u32 %v104, %v108
    %v113 = vsel %vm112, 1, 0
    %v114 = vadd.s32 %v104, %v108
    %v115 = vadd.s32 %v107, %v113
    %vm116 = vc.u32 %v114, %v110
    %v117 = vsel %vm116, 1, 0
    %v118 = vadd.s32 %v114, %v110
    %v119 = vadd.s32 %v115, %v117
    %v120 = vadd.s32 %v119, %v109
    %v121 = vadd.s32 %v120, %v111
    %v122 = vand.u32 %v99, 65535
    %v123 = vshrl.u32 %v99, 16
    %v124 = vand.u32 %v94, 65535
    %v125 = vshrl.u32 %v94, 16
    %v126 = vmul.u32 %v122, %v124
    %v127 = vmul.u32 %v122, %v125
    %v128 = vmul.u32 %v123, %v124
    %v129 = vmul.u32 %v123, %v125
    %v130 = vshll.u32 %v127, 16
    %v131 = vshrl.u32 %v127, 16
    %v132 = vshll.u32 %v128, 16
    %v133 = vshrl.u32 %v128, 16
    %vm134 = vc.u32 %v126, %v130
    %v135 = vsel %vm134, 1, 0
    %v136 = vadd.s32 %v126, %v130
    %v137 = vadd.s32 %v129, %v135
    %vm138 = vc.u32 %v136, %v132
    %v139 = vsel %vm138, 1, 0
    %v140 = vadd.s32 %v136, %v132
    %v141 = vadd.s32 %v137, %v139
    %v142 = vadd.s32 %v141, %v131
    %v143 = vadd.s32 %v142, %v133
    %v144 = vmul.u32 %v99, %v90
    %v145 = vadd.s32 %v121, %v140
    %vm146 = vc.u32 %v121, %v140
    %v147 = vadd.s32 %v143, 1
    %v148 = vsel %vm146, %v147, %v143
    %v149 = vadd.s32 %v144, %v148
    %v150 = vadd.s32 %v149, 536870912
    %v151 = vshrl.u32 %v150, 30
    %v152 = vshll.u32 %v151, 30
    %v153 = vsub.s32 %v149, %v152
    %vm154 = vcmp.lt.s32.totalorder %v153, 0
    %v155 = vsub.s32 0, %v153
    %v156 = vsel %vm154, %v155, %v153
    %v157 = vclz %v156
    %v158 = vsub.s32 %v157, 2
    %vm159 = vcmp.gt.s32.totalorder 0, %v158
    %v160 = vsel %vm159, 0, %v158
    %v161 = vsub.s32 32, %v160
    %v162 = vshll.u32 %v153, %v160
    %v163 = vshrl.u32 %v145, %v161
    %v164 = vor.u32 %v162, %v163
    %v165 = vsub.s32 4294967266, %v160
    %v166 = vadd.s32 %v165, 127
    %v167 = vshll.u32 %v166, 23
    %v168 = vor.u32 4788187, %v167
    %v169 = vand.u32 2147483647, %v168
    %v171 = vcvt.s32.f32 %v164
    %v172 = vmul.f32 %v171, %v169
    %v173 = vxor.u32 %v172, 2147483648
    %v174 = vsel %vm53, %v173, %v172
    %v175 = vsub.s32 4, %v151
    %v176 = vsel %vm53, %v175, %v151
    %v177 = vsel %vm52, %v49, %v174
    %v178 = vsel %vm52, 0, %v176
    %v179 = vmul.f32 %v177, %v177
    %v180 = vmul.f32 %v179, -0.001358992
    %v181 = vadd.f32 %v180, 0.041655596
    %v182 = vmul.f32 %v179, %v181
    %v183 = vadd.f32 %v182, -0.4999988
    %v184 = vmul.f32 %v179, %v183
    %v185 = vadd.f32 1.0, %v184
    %v186 = vmul.f32 %v177, %v177
    %v187 = vmul.f32 %v186, -0.00019511016
    %v188 = vadd.f32 %v187, 0.008332121
    %v189 = vmul.f32 %v186, %v188
    %v190 = vadd.f32 %v189, -0.16666654
    %v191 = vmul.f32 %v186, %v190
    %v192 = vadd.f32 %v191, 1.0
    %v193 = vmul.f32 %v192, %v177
    %vm194 = vweird.f32 %v49
    %v195 = vand.u32 %v178, 3
    %vm196 = vcmp.lt.s32.totalorder %v195, 2
    %vm197 = vcmp.eq.s32.totalorder %v195, 0
    %v198 = vxor.u32 %v193, 2147483648
    %v199 = vsel %vm197, %v185, %v198
    %vm200 = vcmp.eq.s32.totalorder %v195, 2
    %v201 = vxor.u32 %v185, 2147483648
    %v202 = vsel %vm200, %v201, %v193
    %v203 = vsel %vm196, %v199, %v202
    %v204 = vsel %vm194, nan, %v203
    %v205 = vand.u32 2147483647, %v50
    %vm206 = vcmp.le.f32.partialorder %v205, 0.7853982
    %vm207 = vcmp.lt.s32.totalorder %v50, 0
    %v208 = vand.u32 %v50, 2139095040
    %v209 = vshrl.u32 %v208, 23
    %v210 = vsub.s32 %v209, 127
    %v211 = vand.u32 2147483647, %v50
    %v212 = vand.u32 %v211, 8388607
    %v213 = vor.u32 %v212, 8388608
    %v214 = vsub.s32 0, %v213
    %v215 = vadd.s32 %v210, 1
    %vm216 = vcmp.gt.s32.totalorder %v215, 0
    %v217 = vsel %vm216, %v215, 0
    %v218 = vshrl.u32 %v217, 5
    %v219 = vand.u32 %v217, 31
    %v220 = vsub.s32 32, %v219
    %v221 = vshrl.u32 683565275, %v220
    %v222 = vshll.u32 683565275, %v219
    %v223 = vshrl.u32 2475754826, %v220
    %v224 = vor.u32 %v222, %v223
    %v225 = vshll.u32 2475754826, %v219
    %v226 = vshrl.u32 2131351028, %v220
    %v227 = vor.u32 %v225, %v226
    %v228 = vshll.u32 2131351028, %v219
    %v229 = vshrl.u32 2102212464, %v220
    %v230 = vor.u32 %v228, %v229
    %v231 = vshll.u32 2102212464, %v219
    %v232 = vshrl.u32 920167782, %v220
    %v233 = vor.u32 %v231, %v232
    %v234 = vshll.u32 920167782, %v219
    %v235 = vshrl.u32 1326507024, %v220
    %v236 = vor.u32 %v234, %v235
    %vm237 = vcmp.lt.s32.totalorder %v218, 1
    %vm238 = vcmp.lt.s32.totalorder %v218, 2
    %vm239 = vcmp.lt.s32.totalorder %v218, 3
    %vm240 = vcmp.lt.s32.totalorder %v218, 4
    %v241 = vsel %vm237, %v221, %v224
    %v242 = vsel %vm240, %v230, 2102212464
    %v243 = vsel %vm239, %v227, %v242
    %v244 = vsel %vm238, %v241, %v243
    %v245 = vsel %vm237, %v224, %v227
    %v246 = vsel %vm240, %v233, 920167782
    %v247 = vsel %vm239, %v230, %v246
    %v248 = vsel %vm238, %v245, %v247
    %v249 = vsel %vm237, %v227, %v230
    %v250 = vsel %vm240, %v236, 1326507024
    %v251 = vsel %vm239, %v233, %v250
    %v252 = vsel %vm238, %v249, %v251
    %v253 = vshll.u32 %v213, 8
    %v254 = vand.u32 %v253, 65535
    %v255 = vshrl.u32 %v253, 16
    %v256 = vand.u32 %v252, 65535
    %v257 = vshrl.u32 %v252, 16
    %v258 = vmul.u32 %v254, %v256
    %v259 = vmul.u32 %v254, %v257
    %v260 = vmul.u32 %v255, %v256
    %v261 = vmul.u32 %v255, %v257
    %v262 = vshll.u32 %v259, 16
    %v263 = vshrl.u32 %v259, 16
    %v264 = vshll.u32 %v260, 16
    %v265 = vshrl.u32 %v260, 16
    %vm266 = vc.u32 %v258, %v262
    %v267 = vsel %vm266, 1, 0
    %v268 = vadd.s32 %v258, %v262
    %v269 = vadd.s32 %v261, %v267
    %vm270 = vc.u32 %v268, %v264
    %v271 = vsel %vm270, 1, 0
    %v272 = vadd.s32 %v268, %v264
    %v273 = vadd.s32 %v269, %v271
    %v274 = vadd.s32 %v273, %v263
    %v275 = vadd.s32 %v274, %v265
    %v276 = vand.u32 %v253, 65535
    %v277 = vshrl.u32 %v253, 16
    %v278 = vand.u32 %v248, 65535
    %v279 = vshrl.u32 %v248, 16
    %v280 = vmul.u32 %v276, %v278
    %v281 = vmul.u32 %v276, %v279
    %v282 = vmul.u32 %v277, %v278
    %v283 = vmul.u32 %v277, %v279
    %v284 = vshll.u32 %v281, 16
    %v285 = vshrl.u32 %v281, 16
    %v286 = vshll.u32 %v282, 16
    %v287 = vshrl.u32 %v282, 16
    %vm288 = vc.u32 %v280, %v284
    %v289 = vsel %vm288, 1, 0
    %v290 = vadd.s32 %v280, %v284
    %v291 = vadd.s32 %v283, %v289
    %vm292 = vc.u32 %v290, %v286
    %v293 = vsel %vm292, 1, 0
    %v294 = vadd.s32 %v290, %v286
    %v295 = vadd.s32 %v291, %v293
    %v296 = vadd.s32 %v295, %v285
    %v297 = vadd.s32 %v296, %v287
    %v298 = vmul.u32 %v253, %v244
    %v299 = vadd.s32 %v275, %v294
    %vm300 = vc.u32 %v275, %v294
    %v301 = vadd.s32 %v297, 1
    %v302 = vsel %vm300, %v301, %v297
    %v303 = vadd.s32 %v298, %v302
    %v304 = vadd.s32 %v303, 536870912
    %v305 = vshrl.u32 %v304, 30
    %v306 = vshll.u32 %v305, 30
    %v307 = vsub.s32 %v303, %v306
    %vm308 = vcmp.lt.s32.totalorder %v307, 0
    %v309 = vsub.s32 0, %v307
    %v310 = vsel %vm308, %v309, %v307
    %v311 = vclz %v310
    %v312 = vsub.s32 %v311, 2
    %vm313 = vcmp.gt.s32.totalorder 0, %v312
    %v314 = vsel %vm313, 0, %v312
    %v315 = vsub.s32 32, %v314
    %v316 = vshll.u32 %v307, %v314
    %v317 = vshrl.u32 %v299, %v315
    %v318 = vor.u32 %v316, %v317
    %v319 = vsub.s32 4294967266, %v314
    %v320 = vadd.s32 %v319, 127
    %v321 = vshll.u32 %v320, 23
    %v322 = vor.u32 4788187, %v321
    %v323 = vand.u32 2147483647, %v322
    %v325 = vcvt.s32.f32 %v318
    %v326 = vmul.f32 %v325, %v323
    %v327 = vxor.u32 %v326, 2147483648
    %v328 = vsel %vm207, %v327, %v326
    %v329 = vsub.s32 4, %v305
    %v330 = vsel %vm207, %v329, %v305
    %v331 = vsel %vm206, %v50, %v328
    %v332 = vsel %vm206, 0, %v330
    %v333 = vmul.f32 %v331, %v331
    %v334 = vmul.f32 %v333, -0.001358992
    %v335 = vadd.f32 %v334, 0.041655596
    %v336 = vmul.f32 %v333, %v335
    %v337 = vadd.f32 %v336, -0.4999988
    %v338 = vmul.f32 %v333, %v337
    %v339 = vadd.f32 1.0, %v338
    %v340 = vmul.f32 %v331, %v331
    %v341 = vmul.f32 %v340, -0.00019511016
    %v342 = vadd.f32 %v341, 0.008332121
    %v343 = vmul.f32 %v340, %v342
    %v344 = vadd.f32 %v343, -0.16666654
    %v345 = vmul.f32 %v340, %v344
    %v346 = vadd.f32 %v345, 1.0
    %v347 = vmul.f32 %v346, %v331
    %vm348 = vweird.f32 %v50
    %v349 = vand.u32 %v332, 3
    %vm350 = vcmp.lt.s32.totalorder %v349, 2
    %vm351 = vcmp.eq.s32.totalorder %v349, 0
    %v352 = vxor.u32 %v347, 2147483648
    %v353 = vsel %vm351, %v339, %v352
    %vm354 = vcmp.eq.s32.totalorder %v349, 2
    %v355 = vxor.u32 %v339, 2147483648
    %v356 = vsel %vm354, %v355, %v347
    %v357 = vsel %vm350, %v353, %v356
    %v358 = vsel %vm348, nan, %v357
    %v359 = vstv %s36
    %v360 = vmul.f32 %v359, %v204
    %v361 = vmul.f32 %v359, %v358
    %v362 = vstv %s38
    %v363 = vmul.f32 %v362, %v49
    %v364 = vmul.f32 %v362, %v50
    %v365 = vadd.f32 %v360, %v363
    %v366 = vadd.f32 %v361, %v364
    %v367 = vsub.f32 %v44, %v365
    %v368 = vsub.f32 %v45, %v366
    %v369 = vstv %s35
    %v370 = vmul.f32 %v369, %v367
    %v371 = vmul.f32 %v369, %v368
    %v372 = vadd.f32 %v49, %v370
    %v373 = vadd.f32 %v50, %v371
    %v374 = vand.u32 2147483647, %v372
    %vm375 = vcmp.le.f32.partialorder %v374, 0.7853982
    %vm376 = vcmp.lt.s32.totalorder %v372, 0
    %v377 = vand.u32 %v372, 2139095040
    %v378 = vshrl.u32 %v377, 23
    %v379 = vsub.s32 %v378, 127
    %v380 = vand.u32 2147483647, %v372
    %v381 = vand.u32 %v380, 8388607
    %v382 = vor.u32 %v381, 8388608
    %v383 = vsub.s32 0, %v382
    %v384 = vadd.s32 %v379, 1
    %vm385 = vcmp.gt.s32.totalorder %v384, 0
    %v386 = vsel %vm385, %v384, 0
    %v387 = vshrl.u32 %v386, 5
    %v388 = vand.u32 %v386, 31
    %v389 = vsub.s32 32, %v388
    %v390 = vshrl.u32 683565275, %v389
    %v391 = vshll.u32 683565275, %v388
    %v392 = vshrl.u32 2475754826, %v389
    %v393 = vor.u32 %v391, %v392
    %v394 = vshll.u32 2475754826, %v388
    %v395 = vshrl.u32 2131351028, %v389
    %v396 = vor.u32 %v394, %v395
    %v397 = vshll.u32 2131351028, %v388
    %v398 = vshrl.u32 2102212464, %v389
    %v399 = vor.u32 %v397, %v398
    %v400 = vshll.u32 2102212464, %v388
    %v401 = vshrl.u32 920167782, %v389
    %v402 = vor.u32 %v400, %v401
    %v403 = vshll.u32 920167782, %v388
    %v404 = vshrl.u32 1326507024, %v389
    %v405 = vor.u32 %v403, %v404
    %vm406 = vcmp.lt.s32.totalorder %v387, 1
    %vm407 = vcmp.lt.s32.totalorder %v387, 2
    %vm408 = vcmp.lt.s32.totalorder %v387, 3
    %vm409 = vcmp.lt.s32.totalorder %v387, 4
    %v410 = vsel %vm406, %v390, %v393
    %v411 = vsel %vm409, %v399, 2102212464
    %v412 = vsel %vm408, %v396, %v411
    %v413 = vsel %vm407, %v410, %v412
    %v414 = vsel %vm406, %v393, %v396
    %v415 = vsel %vm409, %v402, 920167782
    %v416 = vsel %vm408, %v399, %v415
    %v417 = vsel %vm407, %v414, %v416
    %v418 = vsel %vm406, %v396, %v399
    %v419 = vsel %vm409, %v405, 1326507024
    %v420 = vsel %vm408, %v402, %v419
    %v421 = vsel %vm407, %v418, %v420
    %v422 = vshll.u32 %v382, 8
    %v423 = vand.u32 %v422, 65535
    %v424 = vshrl.u32 %v422, 16
    %v425 = vand.u32 %v421, 65535
    %v426 = vshrl.u32 %v421, 16
    %v427 = vmul.u32 %v423, %v425
    %v428 = vmul.u32 %v423, %v426
    %v429 = vmul.u32 %v424, %v425
    %v430 = vmul.u32 %v424, %v426
    %v431 = vshll.u32 %v428, 16
    %v432 = vshrl.u32 %v428, 16
    %v433 = vshll.u32 %v429, 16
    %v434 = vshrl.u32 %v429, 16
    %vm435 = vc.u32 %v427, %v431
    %v436 = vsel %vm435, 1, 0
    %v437 = vadd.s32 %v427, %v431
    %v438 = vadd.s32 %v430, %v436
    %vm439 = vc.u32 %v437, %v433
    %v440 = vsel %vm439, 1, 0
    %v441 = vadd.s32 %v437, %v433
    %v442 = vadd.s32 %v438, %v440
    %v443 = vadd.s32 %v442, %v432
    %v444 = vadd.s32 %v443, %v434
    %v445 = vand.u32 %v422, 65535
    %v446 = vshrl.u32 %v422, 16
    %v447 = vand.u32 %v417, 65535
    %v448 = vshrl.u32 %v417, 16
    %v449 = vmul.u32 %v445, %v447
    %v450 = vmul.u32 %v445, %v448
    %v451 = vmul.u32 %v446, %v447
    %v452 = vmul.u32 %v446, %v448
    %v453 = vshll.u32 %v450, 16
    %v454 = vshrl.u32 %v450, 16
    %v455 = vshll.u32 %v451, 16
    %v456 = vshrl.u32 %v451, 16
    %vm457 = vc.u32 %v449, %v453
    %v458 = vsel %vm457, 1, 0
    %v459 = vadd.s32 %v449, %v453
    %v460 = vadd.s32 %v452, %v458
    %vm461 = vc.u32 %v459, %v455
    %v462 = vsel %vm461, 1, 0
    %v463 = vadd.s32 %v459, %v455
    %v464 = vadd.s32 %v460, %v462
    %v465 = vadd.s32 %v464, %v454
    %v466 = vadd.s32 %v465, %v456
    %v467 = vmul.u32 %v422, %v413
    %v468 = vadd.s32 %v444, %v463
    %vm469 = vc.u32 %v444, %v463
    %v470 = vadd.s32 %v466, 1
    %v471 = vsel %vm469, %v470, %v466
    %v472 = vadd.s32 %v467, %v471
    %v473 = vadd.s32 %v472, 536870912
    %v474 = vshrl.u32 %v473, 30
    %v475 = vshll.u32 %v474, 30
    %v476 = vsub.s32 %v472, %v475
    %vm477 = vcmp.lt.s32.totalorder %v476, 0
    %v478 = vsub.s32 0, %v476
    %v479 = vsel %vm477, %v478, %v476
    %v480 = vclz %v479
    %v481 = vsub.s32 %v480, 2
    %vm482 = vcmp.gt.s32.totalorder 0, %v481
    %v483 = vsel %vm482, 0, %v481
    %v484 = vsub.s32 32, %v483
    %v485 = vshll.u32 %v476, %v483
    %v486 = vshrl.u32 %v468, %v484
    %v487 = vor.u32 %v485, %v486
    %v488 = vsub.s32 4294967266, %v483
    %v489 = vadd.s32 %v488, 127
    %v490 = vshll.u32 %v489, 23
    %v491 = vor.u32 4788187, %v490
    %v492 = vand.u32 2147483647, %v491
    %v494 = vcvt.s32.f32 %v487
    %v495 = vmul.f32 %v494, %v492
    %v496 = vxor.u32 %v495, 2147483648
    %v497 = vsel %vm376, %v496, %v495
    %v498 = vsub.s32 4, %v474
    %v499 = vsel %vm376, %v498, %v474
    %v500 = vsel %vm375, %v372, %v497
    %v501 = vsel %vm375, 0, %v499
    %v502 = vmul.f32 %v500, %v500
    %v503 = vmul.f32 %v502, -0.001358992
    %v504 = vadd.f32 %v503, 0.041655596
    %v505 = vmul.f32 %v502, %v504
    %v506 = vadd.f32 %v505, -0.4999988
    %v507 = vmul.f32 %v502, %v506
    %v508 = vadd.f32 1.0, %v507
    %v509 = vmul.f32 %v500, %v500
    %v510 = vmul.f32 %v509, -0.00019511016
    %v511 = vadd.f32 %v510, 0.008332121
    %v512 = vmul.f32 %v509, %v511
    %v513 = vadd.f32 %v512, -0.16666654
    %v514 = vmul.f32 %v509, %v513
    %v515 = vadd.f32 %v514, 1.0
    %v516 = vmul.f32 %v515, %v500
    %vm517 = vweird.f32 %v372
    %v518 = vand.u32 %v501, 3
    %vm519 = vcmp.lt.s32.totalorder %v518, 2
    %vm520 = vcmp.eq.s32.totalorder %v518, 0
    %v521 = vxor.u32 %v516, 2147483648
    %v522 = vsel %vm520, %v508, %v521
    %vm523 = vcmp.eq.s32.totalorder %v518, 2
    %v524 = vxor.u32 %v508, 2147483648
    %v525 = vsel %vm523, %v524, %v516
    %v526 = vsel %vm519, %v522, %v525
    %v527 = vsel %vm517, nan, %v526
    %v528 = vand.u32 2147483647, %v373
    %vm529 = vcmp.le.f32.partialorder %v528, 0.7853982
    %vm530 = vcmp.lt.s32.totalorder %v373, 0
    %v531 = vand.u32 %v373, 2139095040
    %v532 = vshrl.u32 %v531, 23
    %v533 = vsub.s32 %v532, 127
    %v534 = vand.u32 2147483647, %v373
    %v535 = vand.u32 %v534, 8388607
    %v536 = vor.u32 %v535, 8388608
    %v537 = vsub.s32 0, %v536
    %v538 = vadd.s32 %v533, 1
    %vm539 = vcmp.gt.s32.totalorder %v538, 0
    %v540 = vsel %vm539, %v538, 0
    %v541 = vshrl.u32 %v540, 5
    %v542 = vand.u32 %v540, 31
    %v543 = vsub.s32 32, %v542
    %v544 = vshrl.u32 683565275, %v543
    %v545 = vshll.u32 683565275, %v542
    %v546 = vshrl.u32 2475754826, %v543
    %v547 = vor.u32 %v545, %v546
    %v548 = vshll.u32 2475754826, %v542
    %v549 = vshrl.u32 2131351028, %v543
    %v550 = vor.u32 %v548, %v549
    %v551 = vshll.u32 2131351028, %v542
    %v552 = vshrl.u32 2102212464, %v543
    %v553 = vor.u32 %v551, %v552
    %v554 = vshll.u32 2102212464, %v542
    %v555 = vshrl.u32 920167782, %v543
    %v556 = vor.u32 %v554, %v555
    %v557 = vshll.u32 920167782, %v542
    %v558 = vshrl.u32 1326507024, %v543
    %v559 = vor.u32 %v557, %v558
    %vm560 = vcmp.lt.s32.totalorder %v541, 1
    %vm561 = vcmp.lt.s32.totalorder %v541, 2
    %vm562 = vcmp.lt.s32.totalorder %v541, 3
    %vm563 = vcmp.lt.s32.totalorder %v541, 4
    %v564 = vsel %vm560, %v544, %v547
    %v565 = vsel %vm563, %v553, 2102212464
    %v566 = vsel %vm562, %v550, %v565
    %v567 = vsel %vm561, %v564, %v566
    %v568 = vsel %vm560, %v547, %v550
    %v569 = vsel %vm563, %v556, 920167782
    %v570 = vsel %vm562, %v553, %v569
    %v571 = vsel %vm561, %v568, %v570
    %v572 = vsel %vm560, %v550, %v553
    %v573 = vsel %vm563, %v559, 1326507024
    %v574 = vsel %vm562, %v556, %v573
    %v575 = vsel %vm561, %v572, %v574
    %v576 = vshll.u32 %v536, 8
    %v577 = vand.u32 %v576, 65535
    %v578 = vshrl.u32 %v576, 16
    %v579 = vand.u32 %v575, 65535
    %v580 = vshrl.u32 %v575, 16
    %v581 = vmul.u32 %v577, %v579
    %v582 = vmul.u32 %v577, %v580
    %v583 = vmul.u32 %v578, %v579
    %v584 = vmul.u32 %v578, %v580
    %v585 = vshll.u32 %v582, 16
    %v586 = vshrl.u32 %v582, 16
    %v587 = vshll.u32 %v583, 16
    %v588 = vshrl.u32 %v583, 16
    %vm589 = vc.u32 %v581, %v585
    %v590 = vsel %vm589, 1, 0
    %v591 = vadd.s32 %v581, %v585
    %v592 = vadd.s32 %v584, %v590
    %vm593 = vc.u32 %v591, %v587
    %v594 = vsel %vm593, 1, 0
    %v595 = vadd.s32 %v591, %v587
    %v596 = vadd.s32 %v592, %v594
    %v597 = vadd.s32 %v596, %v586
    %v598 = vadd.s32 %v597, %v588
    %v599 = vand.u32 %v576, 65535
    %v600 = vshrl.u32 %v576, 16
    %v601 = vand.u32 %v571, 65535
    %v602 = vshrl.u32 %v571, 16
    %v603 = vmul.u32 %v599, %v601
    %v604 = vmul.u32 %v599, %v602
    %v605 = vmul.u32 %v600, %v601
    %v606 = vmul.u32 %v600, %v602
    %v607 = vshll.u32 %v604, 16
    %v608 = vshrl.u32 %v604, 16
    %v609 = vshll.u32 %v605, 16
    %v610 = vshrl.u32 %v605, 16
    %vm611 = vc.u32 %v603, %v607
    %v612 = vsel %vm611, 1, 0
    %v613 = vadd.s32 %v603, %v607
    %v614 = vadd.s32 %v606, %v612
    %vm615 = vc.u32 %v613, %v609
    %v616 = vsel %vm615, 1, 0
    %v617 = vadd.s32 %v613, %v609
    %v618 = vadd.s32 %v614, %v616
    %v619 = vadd.s32 %v618, %v608
    %v620 = vadd.s32 %v619, %v610
    %v621 = vmul.u32 %v576, %v567
    %v622 = vadd.s32 %v598, %v617
    %vm623 = vc.u32 %v598, %v617
    %v624 = vadd.s32 %v620, 1
    %v625 = vsel %vm623, %v624, %v620
    %v626 = vadd.s32 %v621, %v625
    %v627 = vadd.s32 %v626, 536870912
    %v628 = vshrl.u32 %v627, 30
    %v629 = vshll.u32 %v628, 30
    %v630 = vsub.s32 %v626, %v629
    %vm631 = vcmp.lt.s32.totalorder %v630, 0
    %v632 = vsub.s32 0, %v630
    %v633 = vsel %vm631, %v632, %v630
    %v634 = vclz %v633
    %v635 = vsub.s32 %v634, 2
    %vm636 = vcmp.gt.s32.totalorder 0, %v635
    %v637 = vsel %vm636, 0, %v635
    %v638 = vsub.s32 32, %v637
    %v639 = vshll.u32 %v630, %v637
    %v640 = vshrl.u32 %v622, %v638
    %v641 = vor.u32 %v639, %v640
    %v642 = vsub.s32 4294967266, %v637
    %v643 = vadd.s32 %v642, 127
    %v644 = vshll.u32 %v643, 23
    %v645 = vor.u32 4788187, %v644
    %v646 = vand.u32 2147483647, %v645
    %v648 = vcvt.s32.f32 %v641
    %v649 = vmul.f32 %v648, %v646
    %v650 = vxor.u32 %v649, 2147483648
    %v651 = vsel %vm530, %v650, %v649
    %v652 = vsub.s32 4, %v628
    %v653 = vsel %vm530, %v652, %v628
    %v654 = vsel %vm529, %v373, %v651
    %v655 = vsel %vm529, 0, %v653
    %v656 = vmul.f32 %v654, %v654
    %v657 = vmul.f32 %v656, -0.001358992
    %v658 = vadd.f32 %v657, 0.041655596
    %v659 = vmul.f32 %v656, %v658
    %v660 = vadd.f32 %v659, -0.4999988
    %v661 = vmul.f32 %v656, %v660
    %v662 = vadd.f32 1.0, %v661
    %v663 = vmul.f32 %v654, %v654
    %v664 = vmul.f32 %v663, -0.00019511016
    %v665 = vadd.f32 %v664, 0.008332121
    %v666 = vmul.f32 %v663, %v665
    %v667 = vadd.f32 %v666, -0.16666654
    %v668 = vmul.f32 %v663, %v667
    %v669 = vadd.f32 %v668, 1.0
    %v670 = vmul.f32 %v669, %v654
    %vm671 = vweird.f32 %v373
    %v672 = vand.u32 %v655, 3
    %vm673 = vcmp.lt.s32.totalorder %v672, 2
    %vm674 = vcmp.eq.s32.totalorder %v672, 0
    %v675 = vxor.u32 %v670, 2147483648
    %v676 = vsel %vm674, %v662, %v675
    %vm677 = vcmp.eq.s32.totalorder %v672, 2
    %v678 = vxor.u32 %v662, 2147483648
    %v679 = vsel %vm677, %v678, %v670
    %v680 = vsel %vm673, %v676, %v679
    %v681 = vsel %vm671, nan, %v680
    %v682 = vstv %s37
    %v683 = vmul.f32 %v682, %v527
    %v684 = vmul.f32 %v682, %v681
    %v685 = vstv %s39
    %v686 = vmul.f32 %v685, %v372
    %v687 = vmul.f32 %v685, %v373
    %v688 = vadd.f32 %v683, %v686
    %v689 = vadd.f32 %v684, %v687
    %v690 = vsub.f32 %v367, %v688
    %v691 = vsub.f32 %v368, %v689
    %v692 = vmul.f32 %v369, %v690
    %v693 = vmul.f32 %v369, %v691
    %v694 = vadd.f32 %v372, %v692
    %v695 = vadd.f32 %v373, %v693
    %v696 = vand.u32 2147483647, %v694
    %vm697 = vcmp.le.f32.partialorder %v696, 0.7853982
    %vm698 = vcmp.lt.s32.totalorder %v694, 0
    %v699 = vand.u32 %v694, 2139095040
    %v700 = vshrl.u32 %v699, 23
    %v701 = vsub.s32 %v700, 127
    %v702 = vand.u32 2147483647, %v694
    %v703 = vand.u32 %v702, 8388607
    %v704 = vor.u32 %v703, 8388608
    %v705 = vsub.s32 0, %v704
    %v706 = vadd.s32 %v701, 1
    %vm707 = vcmp.gt.s32.totalorder %v706, 0
    %v708 = vsel %vm707, %v706, 0
    %v709 = vshrl.u32 %v708, 5
    %v710 = vand.u32 %v708, 31
    %v711 = vsub.s32 32, %v710
    %v712 = vshrl.u32 683565275, %v711
    %v713 = vshll.u32 683565275, %v710
    %v714 = vshrl.u32 2475754826, %v711
    %v715 = vor.u32 %v713, %v714
    %v716 = vshll.u32 2475754826, %v710
    %v717 = vshrl.u32 2131351028, %v711
    %v718 = vor.u32 %v716, %v717
    %v719 = vshll.u32 2131351028, %v710
    %v720 = vshrl.u32 2102212464, %v711
    %v721 = vor.u32 %v719, %v720
    %v722 = vshll.u32 2102212464, %v710
    %v723 = vshrl.u32 920167782, %v711
    %v724 = vor.u32 %v722, %v723
    %v725 = vshll.u32 920167782, %v710
    %v726 = vshrl.u32 1326507024, %v711
    %v727 = vor.u32 %v725, %v726
    %vm728 = vcmp.lt.s32.totalorder %v709, 1
    %vm729 = vcmp.lt.s32.totalorder %v709, 2
    %vm730 = vcmp.lt.s32.totalorder %v709, 3
    %vm731 = vcmp.lt.s32.totalorder %v709, 4
    %v732 = vsel %vm728, %v712, %v715
    %v733 = vsel %vm731, %v721, 2102212464
    %v734 = vsel %vm730, %v718, %v733
    %v735 = vsel %vm729, %v732, %v734
    %v736 = vsel %vm728, %v715, %v718
    %v737 = vsel %vm731, %v724, 920167782
    %v738 = vsel %vm730, %v721, %v737
    %v739 = vsel %vm729, %v736, %v738
    %v740 = vsel %vm728, %v718, %v721
    %v741 = vsel %vm731, %v727, 1326507024
    %v742 = vsel %vm730, %v724, %v741
    %v743 = vsel %vm729, %v740, %v742
    %v744 = vshll.u32 %v704, 8
    %v745 = vand.u32 %v744, 65535
    %v746 = vshrl.u32 %v744, 16
    %v747 = vand.u32 %v743, 65535
    %v748 = vshrl.u32 %v743, 16
    %v749 = vmul.u32 %v745, %v747
    %v750 = vmul.u32 %v745, %v748
    %v751 = vmul.u32 %v746, %v747
    %v752 = vmul.u32 %v746, %v748
    %v753 = vshll.u32 %v750, 16
    %v754 = vshrl.u32 %v750, 16
    %v755 = vshll.u32 %v751, 16
    %v756 = vshrl.u32 %v751, 16
    %vm757 = vc.u32 %v749, %v753
    %v758 = vsel %vm757, 1, 0
    %v759 = vadd.s32 %v749, %v753
    %v760 = vadd.s32 %v752, %v758
    %vm761 = vc.u32 %v759, %v755
    %v762 = vsel %vm761, 1, 0
    %v763 = vadd.s32 %v759, %v755
    %v764 = vadd.s32 %v760, %v762
    %v765 = vadd.s32 %v764, %v754
    %v766 = vadd.s32 %v765, %v756
    %v767 = vand.u32 %v744, 65535
    %v768 = vshrl.u32 %v744, 16
    %v769 = vand.u32 %v739, 65535
    %v770 = vshrl.u32 %v739, 16
    %v771 = vmul.u32 %v767, %v769
    %v772 = vmul.u32 %v767, %v770
    %v773 = vmul.u32 %v768, %v769
    %v774 = vmul.u32 %v768, %v770
    %v775 = vshll.u32 %v772, 16
    %v776 = vshrl.u32 %v772, 16
    %v777 = vshll.u32 %v773, 16
    %v778 = vshrl.u32 %v773, 16
    %vm779 = vc.u32 %v771, %v775
    %v780 = vsel %vm779, 1, 0
    %v781 = vadd.s32 %v771, %v775
    %v782 = vadd.s32 %v774, %v780
    %vm783 = vc.u32 %v781, %v777
    %v784 = vsel %vm783, 1, 0
    %v785 = vadd.s32 %v781, %v777
    %v786 = vadd.s32 %v782, %v784
    %v787 = vadd.s32 %v786, %v776
    %v788 = vadd.s32 %v787, %v778
    %v789 = vmul.u32 %v744, %v735
    %v790 = vadd.s32 %v766, %v785
    %vm791 = vc.u32 %v766, %v785
    %v792 = vadd.s32 %v788, 1
    %v793 = vsel %vm791, %v792, %v788
    %v794 = vadd.s32 %v789, %v793
    %v795 = vadd.s32 %v794, 536870912
    %v796 = vshrl.u32 %v795, 30
    %v797 = vshll.u32 %v796, 30
    %v798 = vsub.s32 %v794, %v797
    %vm799 = vcmp.lt.s32.totalorder %v798, 0
    %v800 = vsub.s32 0, %v798
    %v801 = vsel %vm799, %v800, %v798
    %v802 = vclz %v801
    %v803 = vsub.s32 %v802, 2
    %vm804 = vcmp.gt.s32.totalorder 0, %v803
    %v805 = vsel %vm804, 0, %v803
    %v806 = vsub.s32 32, %v805
    %v807 = vshll.u32 %v798, %v805
    %v808 = vshrl.u32 %v790, %v806
    %v809 = vor.u32 %v807, %v808
    %v810 = vsub.s32 4294967266, %v805
    %v811 = vadd.s32 %v810, 127
    %v812 = vshll.u32 %v811, 23
    %v813 = vor.u32 4788187, %v812
    %v814 = vand.u32 2147483647, %v813
    %v816 = vcvt.s32.f32 %v809
    %v817 = vmul.f32 %v816, %v814
    %v818 = vxor.u32 %v817, 2147483648
    %v819 = vsel %vm698, %v818, %v817
    %v820 = vsub.s32 4, %v796
    %v821 = vsel %vm698, %v820, %v796
    %v822 = vsel %vm697, %v694, %v819
    %v823 = vsel %vm697, 0, %v821
    %v824 = vmul.f32 %v822, %v822
    %v825 = vmul.f32 %v824, -0.001358992
    %v826 = vadd.f32 %v825, 0.041655596
    %v827 = vmul.f32 %v824, %v826
    %v828 = vadd.f32 %v827, -0.4999988
    %v829 = vmul.f32 %v824, %v828
    %v830 = vadd.f32 1.0, %v829
    %v831 = vmul.f32 %v822, %v822
    %v832 = vmul.f32 %v831, -0.00019511016
    %v833 = vadd.f32 %v832, 0.008332121
    %v834 = vmul.f32 %v831, %v833
    %v835 = vadd.f32 %v834, -0.16666654
    %v836 = vmul.f32 %v831, %v835
    %v837 = vadd.f32 %v836, 1.0
    %v838 = vmul.f32 %v837, %v822
    %vm839 = vweird.f32 %v694
    %v840 = vand.u32 %v823, 3
    %vm841 = vcmp.lt.s32.totalorder %v840, 2
    %vm842 = vcmp.eq.s32.totalorder %v840, 0
    %v843 = vxor.u32 %v838, 2147483648
    %v844 = vsel %vm842, %v830, %v843
    %vm845 = vcmp.eq.s32.totalorder %v840, 2
    %v846 = vxor.u32 %v830, 2147483648
    %v847 = vsel %vm845, %v846, %v838
    %v848 = vsel %vm841, %v844, %v847
    %v849 = vsel %vm839, nan, %v848
    %v850 = vand.u32 2147483647, %v695
    %vm851 = vcmp.le.f32.partialorder %v850, 0.7853982
    %vm852 = vcmp.lt.s32.totalorder %v695, 0
    %v853 = vand.u32 %v695, 2139095040
    %v854 = vshrl.u32 %v853, 23
    %v855 = vsub.s32 %v854, 127
    %v856 = vand.u32 2147483647, %v695
    %v857 = vand.u32 %v856, 8388607
    %v858 = vor.u32 %v857, 8388608
    %v859 = vsub.s32 0, %v858
    %v860 = vadd.s32 %v855, 1
    %vm861 = vcmp.gt.s32.totalorder %v860, 0
    %v862 = vsel %vm861, %v860, 0
    %v863 = vshrl.u32 %v862, 5
    %v864 = vand.u32 %v862, 31
    %v865 = vsub.s32 32, %v864
    %v866 = vshrl.u32 683565275, %v865
    %v867 = vshll.u32 683565275, %v864
    %v868 = vshrl.u32 2475754826, %v865
    %v869 = vor.u32 %v867, %v868
    %v870 = vshll.u32 2475754826, %v864
    %v871 = vshrl.u32 2131351028, %v865
    %v872 = vor.u32 %v870, %v871
    %v873 = vshll.u32 2131351028, %v864
    %v874 = vshrl.u32 2102212464, %v865
    %v875 = vor.u32 %v873, %v874
    %v876 = vshll.u32 2102212464, %v864
    %v877 = vshrl.u32 920167782, %v865
    %v878 = vor.u32 %v876, %v877
    %v879 = vshll.u32 920167782, %v864
    %v880 = vshrl.u32 1326507024, %v865
    %v881 = vor.u32 %v879, %v880
    %vm882 = vcmp.lt.s32.totalorder %v863, 1
    %vm883 = vcmp.lt.s32.totalorder %v863, 2
    %vm884 = vcmp.lt.s32.totalorder %v863, 3
    %vm885 = vcmp.lt.s32.totalorder %v863, 4
    %v886 = vsel %vm882, %v866, %v869
    %v887 = vsel %vm885, %v875, 2102212464
    %v888 = vsel %vm884, %v872, %v887
    %v889 = vsel %vm883, %v886, %v888
    %v890 = vsel %vm882, %v869, %v872
    %v891 = vsel %vm885, %v878, 920167782
    %v892 = vsel %vm884, %v875, %v891
    %v893 = vsel %vm883, %v890, %v892
    %v894 = vsel %vm882, %v872, %v875
    %v895 = vsel %vm885, %v881, 1326507024
    %v896 = vsel %vm884, %v878, %v895
    %v897 = vsel %vm883, %v894, %v896
    %v898 = vshll.u32 %v858, 8
    %v899 = vand.u32 %v898, 65535
    %v900 = vshrl.u32 %v898, 16
    %v901 = vand.u32 %v897, 65535
    %v902 = vshrl.u32 %v897, 16
    %v903 = vmul.u32 %v899, %v901
    %v904 = vmul.u32 %v899, %v902
    %v905 = vmul.u32 %v900, %v901
    %v906 = vmul.u32 %v900, %v902
    %v907 = vshll.u32 %v904, 16
    %v908 = vshrl.u32 %v904, 16
    %v909 = vshll.u32 %v905, 16
    %v910 = vshrl.u32 %v905, 16
    %vm911 = vc.u32 %v903, %v907
    %v912 = vsel %vm911, 1, 0
    %v913 = vadd.s32 %v903, %v907
    %v914 = vadd.s32 %v906, %v912
    %vm915 = vc.u32 %v913, %v909
    %v916 = vsel %vm915, 1, 0
    %v917 = vadd.s32 %v913, %v909
    %v918 = vadd.s32 %v914, %v916
    %v919 = vadd.s32 %v918, %v908
    %v920 = vadd.s32 %v919, %v910
    %v921 = vand.u32 %v898, 65535
    %v922 = vshrl.u32 %v898, 16
    %v923 = vand.u32 %v893, 65535
    %v924 = vshrl.u32 %v893, 16
    %v925 = vmul.u32 %v921, %v923
    %v926 = vmul.u32 %v921, %v924
    %v927 = vmul.u32 %v922, %v923
    %v928 = vmul.u32 %v922, %v924
    %v929 = vshll.u32 %v926, 16
    %v930 = vshrl.u32 %v926, 16
    %v931 = vshll.u32 %v927, 16
    %v932 = vshrl.u32 %v927, 16
    %vm933 = vc.u32 %v925, %v929
    %v934 = vsel %vm933, 1, 0
    %v935 = vadd.s32 %v925, %v929
    %v936 = vadd.s32 %v928, %v934
    %vm937 = vc.u32 %v935, %v931
    %v938 = vsel %vm937, 1, 0
    %v939 = vadd.s32 %v935, %v931
    %v940 = vadd.s32 %v936, %v938
    %v941 = vadd.s32 %v940, %v930
    %v942 = vadd.s32 %v941, %v932
    %v943 = vmul.u32 %v898, %v889
    %v944 = vadd.s32 %v920, %v939
    %vm945 = vc.u32 %v920, %v939
    %v946 = vadd.s32 %v942, 1
    %v947 = vsel %vm945, %v946, %v942
    %v948 = vadd.s32 %v943, %v947
    %v949 = vadd.s32 %v948, 536870912
    %v950 = vshrl.u32 %v949, 30
    %v951 = vshll.u32 %v950, 30
    %v952 = vsub.s32 %v948, %v951
    %vm953 = vcmp.lt.s32.totalorder %v952, 0
    %v954 = vsub.s32 0, %v952
    %v955 = vsel %vm953, %v954, %v952
    %v956 = vclz %v955
    %v957 = vsub.s32 %v956, 2
    %vm958 = vcmp.gt.s32.totalorder 0, %v957
    %v959 = vsel %vm958, 0, %v957
    %v960 = vsub.s32 32, %v959
    %v961 = vshll.u32 %v952, %v959
    %v962 = vshrl.u32 %v944, %v960
    %v963 = vor.u32 %v961, %v962
    %v964 = vsub.s32 4294967266, %v959
    %v965 = vadd.s32 %v964, 127
    %v966 = vshll.u32 %v965, 23
    %v967 = vor.u32 4788187, %v966
    %v968 = vand.u32 2147483647, %v967
    %v970 = vcvt.s32.f32 %v963
    %v971 = vmul.f32 %v970, %v968
    %v972 = vxor.u32 %v971, 2147483648
    %v973 = vsel %vm852, %v972, %v971
    %v974 = vsub.s32 4, %v950
    %v975 = vsel %vm852, %v974, %v950
    %v976 = vsel %vm851, %v695, %v973
    %v977 = vsel %vm851, 0, %v975
    %v978 = vmul.f32 %v976, %v976
    %v979 = vmul.f32 %v978, -0.001358992
    %v980 = vadd.f32 %v979, 0.041655596
    %v981 = vmul.f32 %v978, %v980
    %v982 = vadd.f32 %v981, -0.4999988
    %v983 = vmul.f32 %v978, %v982
    %v984 = vadd.f32 1.0, %v983
    %v985 = vmul.f32 %v976, %v976
    %v986 = vmul.f32 %v985, -0.00019511016
    %v987 = vadd.f32 %v986, 0.008332121
    %v988 = vmul.f32 %v985, %v987
    %v989 = vadd.f32 %v988, -0.16666654
    %v990 = vmul.f32 %v985, %v989
    %v991 = vadd.f32 %v990, 1.0
    %v992 = vmul.f32 %v991, %v976
    %vm993 = vweird.f32 %v695
    %v994 = vand.u32 %v977, 3
    %vm995 = vcmp.lt.s32.totalorder %v994, 2
    %vm996 = vcmp.eq.s32.totalorder %v994, 0
    %v997 = vxor.u32 %v992, 2147483648
    %v998 = vsel %vm996, %v984, %v997
    %vm999 = vcmp.eq.s32.totalorder %v994, 2
    %v1000 = vxor.u32 %v984, 2147483648
    %v1001 = vsel %vm999, %v1000, %v992
    %v1002 = vsel %vm995, %v998, %v1001
    %v1003 = vsel %vm993, nan, %v1002
    %v1004 = vmul.f32 %v359, %v849
    %v1005 = vmul.f32 %v359, %v1003
    %v1006 = vmul.f32 %v362, %v694
    %v1007 = vmul.f32 %v362, %v695
    %v1008 = vadd.f32 %v1004, %v1006
    %v1009 = vadd.f32 %v1005, %v1007
    %v1010 = vsub.f32 %v690, %v1008
    %v1011 = vsub.f32 %v691, %v1009
    %v1012 = vmul.f32 %v46, %v1010
    %v1013 = vmul.f32 %v46, %v1011
    %v1014 = vadd.f32 %v694, %v1012
    %v1015 = vadd.f32 %v695, %v1013
    %v1016 = vadd.f32 %v1014, %v1012
    %v1017 = vadd.f32 %v1015, %v1013
    %v1018 = vand.u32 2147483647, %v1016
    %vm1019 = vcmp.le.f32.partialorder %v1018, 0.7853982
    %vm1020 = vcmp.lt.s32.totalorder %v1016, 0
    %v1021 = vand.u32 %v1016, 2139095040
    %v1022 = vshrl.u32 %v1021, 23
    %v1023 = vsub.s32 %v1022, 127
    %v1024 = vand.u32 2147483647, %v1016
    %v1025 = vand.u32 %v1024, 8388607
    %v1026 = vor.u32 %v1025, 8388608
    %v1027 = vsub.s32 0, %v1026
    %v1028 = vadd.s32 %v1023, 1
    %vm1029 = vcmp.gt.s32.totalorder %v1028, 0
    %v1030 = vsel %vm1029, %v1028, 0
    %v1031 = vshrl.u32 %v1030, 5
    %v1032 = vand.u32 %v1030, 31
    %v1033 = vsub.s32 32, %v1032
    %v1034 = vshrl.u32 683565275, %v1033
    %v1035 = vshll.u32 683565275, %v1032
    %v1036 = vshrl.u32 2475754826, %v1033
    %v1037 = vor.u32 %v1035, %v1036
    %v1038 = vshll.u32 2475754826, %v1032
    %v1039 = vshrl.u32 2131351028, %v1033
    %v1040 = vor.u32 %v1038, %v1039
    %v1041 = vshll.u32 2131351028, %v1032
    %v1042 = vshrl.u32 2102212464, %v1033
    %v1043 = vor.u32 %v1041, %v1042
    %v1044 = vshll.u32 2102212464, %v1032
    %v1045 = vshrl.u32 920167782, %v1033
    %v1046 = vor.u32 %v1044, %v1045
    %v1047 = vshll.u32 920167782, %v1032
    %v1048 = vshrl.u32 1326507024, %v1033
    %v1049 = vor.u32 %v1047, %v1048
    %vm1050 = vcmp.lt.s32.totalorder %v1031, 1
    %vm1051 = vcmp.lt.s32.totalorder %v1031, 2
    %vm1052 = vcmp.lt.s32.totalorder %v1031, 3
    %vm1053 = vcmp.lt.s32.totalorder %v1031, 4
    %v1054 = vsel %vm1050, %v1034, %v1037
    %v1055 = vsel %vm1053, %v1043, 2102212464
    %v1056 = vsel %vm1052, %v1040, %v1055
    %v1057 = vsel %vm1051, %v1054, %v1056
    %v1058 = vsel %vm1050, %v1037, %v1040
    %v1059 = vsel %vm1053, %v1046, 920167782
    %v1060 = vsel %vm1052, %v1043, %v1059
    %v1061 = vsel %vm1051, %v1058, %v1060
    %v1062 = vsel %vm1050, %v1040, %v1043
    %v1063 = vsel %vm1053, %v1049, 1326507024
    %v1064 = vsel %vm1052, %v1046, %v1063
    %v1065 = vsel %vm1051, %v1062, %v1064
    %v1066 = vshll.u32 %v1026, 8
    %v1067 = vand.u32 %v1066, 65535
    %v1068 = vshrl.u32 %v1066, 16
    %v1069 = vand.u32 %v1065, 65535
    %v1070 = vshrl.u32 %v1065, 16
    %v1071 = vmul.u32 %v1067, %v1069
    %v1072 = vmul.u32 %v1067, %v1070
    %v1073 = vmul.u32 %v1068, %v1069
    %v1074 = vmul.u32 %v1068, %v1070
    %v1075 = vshll.u32 %v1072, 16
    %v1076 = vshrl.u32 %v1072, 16
    %v1077 = vshll.u32 %v1073, 16
    %v1078 = vshrl.u32 %v1073, 16
    %vm1079 = vc.u32 %v1071, %v1075
    %v1080 = vsel %vm1079, 1, 0
    %v1081 = vadd.s32 %v1071, %v1075
    %v1082 = vadd.s32 %v1074, %v1080
    %vm1083 = vc.u32 %v1081, %v1077
    %v1084 = vsel %vm1083, 1, 0
    %v1085 = vadd.s32 %v1081, %v1077
    %v1086 = vadd.s32 %v1082, %v1084
    %v1087 = vadd.s32 %v1086, %v1076
    %v1088 = vadd.s32 %v1087, %v1078
    %v1089 = vand.u32 %v1066, 65535
    %v1090 = vshrl.u32 %v1066, 16
    %v1091 = vand.u32 %v1061, 65535
    %v1092 = vshrl.u32 %v1061, 16
    %v1093 = vmul.u32 %v1089, %v1091
    %v1094 = vmul.u32 %v1089, %v1092
    %v1095 = vmul.u32 %v1090, %v1091
    %v1096 = vmul.u32 %v1090, %v1092
    %v1097 = vshll.u32 %v1094, 16
    %v1098 = vshrl.u32 %v1094, 16
    %v1099 = vshll.u32 %v1095, 16
    %v1100 = vshrl.u32 %v1095, 16
    %vm1101 = vc.u32 %v1093, %v1097
    %v1102 = vsel %vm1101, 1, 0
    %v1103 = vadd.s32 %v1093, %v1097
    %v1104 = vadd.s32 %v1096, %v1102
    %vm1105 = vc.u32 %v1103, %v1099
    %v1106 = vsel %vm1105, 1, 0
    %v1107 = vadd.s32 %v1103, %v1099
    %v1108 = vadd.s32 %v1104, %v1106
    %v1109 = vadd.s32 %v1108, %v1098
    %v1110 = vadd.s32 %v1109, %v1100
    %v1111 = vmul.u32 %v1066, %v1057
    %v1112 = vadd.s32 %v1088, %v1107
    %vm1113 = vc.u32 %v1088, %v1107
    %v1114 = vadd.s32 %v1110, 1
    %v1115 = vsel %vm1113, %v1114, %v1110
    %v1116 = vadd.s32 %v1111, %v1115
    %v1117 = vadd.s32 %v1116, 536870912
    %v1118 = vshrl.u32 %v1117, 30
    %v1119 = vshll.u32 %v1118, 30
    %v1120 = vsub.s32 %v1116, %v1119
    %vm1121 = vcmp.lt.s32.totalorder %v1120, 0
    %v1122 = vsub.s32 0, %v1120
    %v1123 = vsel %vm1121, %v1122, %v1120
    %v1124 = vclz %v1123
    %v1125 = vsub.s32 %v1124, 2
    %vm1126 = vcmp.gt.s32.totalorder 0, %v1125
    %v1127 = vsel %vm1126, 0, %v1125
    %v1128 = vsub.s32 32, %v1127
    %v1129 = vshll.u32 %v1120, %v1127
    %v1130 = vshrl.u32 %v1112, %v1128
    %v1131 = vor.u32 %v1129, %v1130
    %v1132 = vsub.s32 4294967266, %v1127
    %v1133 = vadd.s32 %v1132, 127
    %v1134 = vshll.u32 %v1133, 23
    %v1135 = vor.u32 4788187, %v1134
    %v1136 = vand.u32 2147483647, %v1135
    %v1138 = vcvt.s32.f32 %v1131
    %v1139 = vmul.f32 %v1138, %v1136
    %v1140 = vxor.u32 %v1139, 2147483648
    %v1141 = vsel %vm1020, %v1140, %v1139
    %v1142 = vsub.s32 4, %v1118
    %v1143 = vsel %vm1020, %v1142, %v1118
    %v1144 = vsel %vm1019, %v1016, %v1141
    %v1145 = vsel %vm1019, 0, %v1143
    %v1146 = vmul.f32 %v1144, %v1144
    %v1147 = vmul.f32 %v1146, -0.001358992
    %v1148 = vadd.f32 %v1147, 0.041655596
    %v1149 = vmul.f32 %v1146, %v1148
    %v1150 = vadd.f32 %v1149, -0.4999988
    %v1151 = vmul.f32 %v1146, %v1150
    %v1152 = vadd.f32 1.0, %v1151
    %v1153 = vmul.f32 %v1144, %v1144
    %v1154 = vmul.f32 %v1153, -0.00019511016
    %v1155 = vadd.f32 %v1154, 0.008332121
    %v1156 = vmul.f32 %v1153, %v1155
    %v1157 = vadd.f32 %v1156, -0.16666654
    %v1158 = vmul.f32 %v1153, %v1157
    %v1159 = vadd.f32 %v1158, 1.0
    %v1160 = vmul.f32 %v1159, %v1144
    %vm1161 = vweird.f32 %v1016
    %v1162 = vand.u32 %v1145, 3
    %vm1163 = vcmp.lt.s32.totalorder %v1162, 2
    %vm1164 = vcmp.eq.s32.totalorder %v1162, 0
    %v1165 = vxor.u32 %v1160, 2147483648
    %v1166 = vsel %vm1164, %v1152, %v1165
    %vm1167 = vcmp.eq.s32.totalorder %v1162, 2
    %v1168 = vxor.u32 %v1152, 2147483648
    %v1169 = vsel %vm1167, %v1168, %v1160
    %v1170 = vsel %vm1163, %v1166, %v1169
    %v1171 = vsel %vm1161, nan, %v1170
    %v1172 = vand.u32 2147483647, %v1017
    %vm1173 = vcmp.le.f32.partialorder %v1172, 0.7853982
    %vm1174 = vcmp.lt.s32.totalorder %v1017, 0
    %v1175 = vand.u32 %v1017, 2139095040
    %v1176 = vshrl.u32 %v1175, 23
    %v1177 = vsub.s32 %v1176, 127
    %v1178 = vand.u32 2147483647, %v1017
    %v1179 = vand.u32 %v1178, 8388607
    %v1180 = vor.u32 %v1179, 8388608
    %v1181 = vsub.s32 0, %v1180
    %v1182 = vadd.s32 %v1177, 1
    %vm1183 = vcmp.gt.s32.totalorder %v1182, 0
    %v1184 = vsel %vm1183, %v1182, 0
    %v1185 = vshrl.u32 %v1184, 5
    %v1186 = vand.u32 %v1184, 31
    %v1187 = vsub.s32 32, %v1186
    %v1188 = vshrl.u32 683565275, %v1187
    %v1189 = vshll.u32 683565275, %v1186
    %v1190 = vshrl.u32 2475754826, %v1187
    %v1191 = vor.u32 %v1189, %v1190
    %v1192 = vshll.u32 2475754826, %v1186
    %v1193 = vshrl.u32 2131351028, %v1187
    %v1194 = vor.u32 %v1192, %v1193
    %v1195 = vshll.u32 2131351028, %v1186
    %v1196 = vshrl.u32 2102212464, %v1187
    %v1197 = vor.u32 %v1195, %v1196
    %v1198 = vshll.u32 2102212464, %v1186
    %v1199 = vshrl.u32 920167782, %v1187
    %v1200 = vor.u32 %v1198, %v1199
    %v1201 = vshll.u32 920167782, %v1186
    %v1202 = vshrl.u32 1326507024, %v1187
    %v1203 = vor.u32 %v1201, %v1202
    %vm1204 = vcmp.lt.s32.totalorder %v1185, 1
    %vm1205 = vcmp.lt.s32.totalorder %v1185, 2
    %vm1206 = vcmp.lt.s32.totalorder %v1185, 3
    %vm1207 = vcmp.lt.s32.totalorder %v1185, 4
    %v1208 = vsel %vm1204, %v1188, %v1191
    %v1209 = vsel %vm1207, %v1197, 2102212464
    %v1210 = vsel %vm1206, %v1194, %v1209
    %v1211 = vsel %vm1205, %v1208, %v1210
    %v1212 = vsel %vm1204, %v1191, %v1194
    %v1213 = vsel %vm1207, %v1200, 920167782
    %v1214 = vsel %vm1206, %v1197, %v1213
    %v1215 = vsel %vm1205, %v1212, %v1214
    %v1216 = vsel %vm1204, %v1194, %v1197
    %v1217 = vsel %vm1207, %v1203, 1326507024
    %v1218 = vsel %vm1206, %v1200, %v1217
    %v1219 = vsel %vm1205, %v1216, %v1218
    %v1220 = vshll.u32 %v1180, 8
    %v1221 = vand.u32 %v1220, 65535
    %v1222 = vshrl.u32 %v1220, 16
    %v1223 = vand.u32 %v1219, 65535
    %v1224 = vshrl.u32 %v1219, 16
    %v1225 = vmul.u32 %v1221, %v1223
    %v1226 = vmul.u32 %v1221, %v1224
    %v1227 = vmul.u32 %v1222, %v1223
    %v1228 = vmul.u32 %v1222, %v1224
    %v1229 = vshll.u32 %v1226, 16
    %v1230 = vshrl.u32 %v1226, 16
    %v1231 = vshll.u32 %v1227, 16
    %v1232 = vshrl.u32 %v1227, 16
    %vm1233 = vc.u32 %v1225, %v1229
    %v1234 = vsel %vm1233, 1, 0
    %v1235 = vadd.s32 %v1225, %v1229
    %v1236 = vadd.s32 %v1228, %v1234
    %vm1237 = vc.u32 %v1235, %v1231
    %v1238 = vsel %vm1237, 1, 0
    %v1239 = vadd.s32 %v1235, %v1231
    %v1240 = vadd.s32 %v1236, %v1238
    %v1241 = vadd.s32 %v1240, %v1230
    %v1242 = vadd.s32 %v1241, %v1232
    %v1243 = vand.u32 %v1220, 65535
    %v1244 = vshrl.u32 %v1220, 16
    %v1245 = vand.u32 %v1215, 65535
    %v1246 = vshrl.u32 %v1215, 16
    %v1247 = vmul.u32 %v1243, %v1245
    %v1248 = vmul.u32 %v1243, %v1246
    %v1249 = vmul.u32 %v1244, %v1245
    %v1250 = vmul.u32 %v1244, %v1246
    %v1251 = vshll.u32 %v1248, 16
    %v1252 = vshrl.u32 %v1248, 16
    %v1253 = vshll.u32 %v1249, 16
    %v1254 = vshrl.u32 %v1249, 16
    %vm1255 = vc.u32 %v1247, %v1251
    %v1256 = vsel %vm1255, 1, 0
    %v1257 = vadd.s32 %v1247, %v1251
    %v1258 = vadd.s32 %v1250, %v1256
    %vm1259 = vc.u32 %v1257, %v1253
    %v1260 = vsel %vm1259, 1, 0
    %v1261 = vadd.s32 %v1257, %v1253
    %v1262 = vadd.s32 %v1258, %v1260
    %v1263 = vadd.s32 %v1262, %v1252
    %v1264 = vadd.s32 %v1263, %v1254
    %v1265 = vmul.u32 %v1220, %v1211
    %v1266 = vadd.s32 %v1242, %v1261
    %vm1267 = vc.u32 %v1242, %v1261
    %v1268 = vadd.s32 %v1264, 1
    %v1269 = vsel %vm1267, %v1268, %v1264
    %v1270 = vadd.s32 %v1265, %v1269
    %v1271 = vadd.s32 %v1270, 536870912
    %v1272 = vshrl.u32 %v1271, 30
    %v1273 = vshll.u32 %v1272, 30
    %v1274 = vsub.s32 %v1270, %v1273
    %vm1275 = vcmp.lt.s32.totalorder %v1274, 0
    %v1276 = vsub.s32 0, %v1274
    %v1277 = vsel %vm1275, %v1276, %v1274
    %v1278 = vclz %v1277
    %v1279 = vsub.s32 %v1278, 2
    %vm1280 = vcmp.gt.s32.totalorder 0, %v1279
    %v1281 = vsel %vm1280, 0, %v1279
    %v1282 = vsub.s32 32, %v1281
    %v1283 = vshll.u32 %v1274, %v1281
    %v1284 = vshrl.u32 %v1266, %v1282
    %v1285 = vor.u32 %v1283, %v1284
    %v1286 = vsub.s32 4294967266, %v1281
    %v1287 = vadd.s32 %v1286, 127
    %v1288 = vshll.u32 %v1287, 23
    %v1289 = vor.u32 4788187, %v1288
    %v1290 = vand.u32 2147483647, %v1289
    %v1292 = vcvt.s32.f32 %v1285
    %v1293 = vmul.f32 %v1292, %v1290
    %v1294 = vxor.u32 %v1293, 2147483648
    %v1295 = vsel %vm1174, %v1294, %v1293
    %v1296 = vsub.s32 4, %v1272
    %v1297 = vsel %vm1174, %v1296, %v1272
    %v1298 = vsel %vm1173, %v1017, %v1295
    %v1299 = vsel %vm1173, 0, %v1297
    %v1300 = vmul.f32 %v1298, %v1298
    %v1301 = vmul.f32 %v1300, -0.001358992
    %v1302 = vadd.f32 %v1301, 0.041655596
    %v1303 = vmul.f32 %v1300, %v1302
    %v1304 = vadd.f32 %v1303, -0.4999988
    %v1305 = vmul.f32 %v1300, %v1304
    %v1306 = vadd.f32 1.0, %v1305
    %v1307 = vmul.f32 %v1298, %v1298
    %v1308 = vmul.f32 %v1307, -0.00019511016
    %v1309 = vadd.f32 %v1308, 0.008332121
    %v1310 = vmul.f32 %v1307, %v1309
    %v1311 = vadd.f32 %v1310, -0.16666654
    %v1312 = vmul.f32 %v1307, %v1311
    %v1313 = vadd.f32 %v1312, 1.0
    %v1314 = vmul.f32 %v1313, %v1298
    %vm1315 = vweird.f32 %v1017
    %v1316 = vand.u32 %v1299, 3
    %vm1317 = vcmp.lt.s32.totalorder %v1316, 2
    %vm1318 = vcmp.eq.s32.totalorder %v1316, 0
    %v1319 = vxor.u32 %v1314, 2147483648
    %v1320 = vsel %vm1318, %v1306, %v1319
    %vm1321 = vcmp.eq.s32.totalorder %v1316, 2
    %v1322 = vxor.u32 %v1306, 2147483648
    %v1323 = vsel %vm1321, %v1322, %v1314
    %v1324 = vsel %vm1317, %v1320, %v1323
    %v1325 = vsel %vm1315, nan, %v1324
    %v1326 = vmul.f32 %v359, %v1171
    %v1327 = vmul.f32 %v359, %v1325
    %v1328 = vmul.f32 %v362, %v1016
    %v1329 = vmul.f32 %v362, %v1017
    %v1330 = vadd.f32 %v1326, %v1328
    %v1331 = vadd.f32 %v1327, %v1329
    %v1332 = vsub.f32 %v1010, %v1330
    %v1333 = vsub.f32 %v1011, %v1331
    %v1334 = vmul.f32 %v369, %v1332
    %v1335 = vmul.f32 %v369, %v1333
    %v1336 = vadd.f32 %v1016, %v1334
    %v1337 = vadd.f32 %v1017, %v1335
    %v1338 = vand.u32 2147483647, %v1336
    %vm1339 = vcmp.le.f32.partialorder %v1338, 0.7853982
    %vm1340 = vcmp.lt.s32.totalorder %v1336, 0
    %v1341 = vand.u32 %v1336, 2139095040
    %v1342 = vshrl.u32 %v1341, 23
    %v1343 = vsub.s32 %v1342, 127
    %v1344 = vand.u32 2147483647, %v1336
    %v1345 = vand.u32 %v1344, 8388607
    %v1346 = vor.u32 %v1345, 8388608
    %v1347 = vsub.s32 0, %v1346
    %v1348 = vadd.s32 %v1343, 1
    %vm1349 = vcmp.gt.s32.totalorder %v1348, 0
    %v1350 = vsel %vm1349, %v1348, 0
    %v1351 = vshrl.u32 %v1350, 5
    %v1352 = vand.u32 %v1350, 31
    %v1353 = vsub.s32 32, %v1352
    %v1354 = vshrl.u32 683565275, %v1353
    %v1355 = vshll.u32 683565275, %v1352
    %v1356 = vshrl.u32 2475754826, %v1353
    %v1357 = vor.u32 %v1355, %v1356
    %v1358 = vshll.u32 2475754826, %v1352
    %v1359 = vshrl.u32 2131351028, %v1353
    %v1360 = vor.u32 %v1358, %v1359
    %v1361 = vshll.u32 2131351028, %v1352
    %v1362 = vshrl.u32 2102212464, %v1353
    %v1363 = vor.u32 %v1361, %v1362
    %v1364 = vshll.u32 2102212464, %v1352
    %v1365 = vshrl.u32 920167782, %v1353
    %v1366 = vor.u32 %v1364, %v1365
    %v1367 = vshll.u32 920167782, %v1352
    %v1368 = vshrl.u32 1326507024, %v1353
    %v1369 = vor.u32 %v1367, %v1368
    %vm1370 = vcmp.lt.s32.totalorder %v1351, 1
    %vm1371 = vcmp.lt.s32.totalorder %v1351, 2
    %vm1372 = vcmp.lt.s32.totalorder %v1351, 3
    %vm1373 = vcmp.lt.s32.totalorder %v1351, 4
    %v1374 = vsel %vm1370, %v1354, %v1357
    %v1375 = vsel %vm1373, %v1363, 2102212464
    %v1376 = vsel %vm1372, %v1360, %v1375
    %v1377 = vsel %vm1371, %v1374, %v1376
    %v1378 = vsel %vm1370, %v1357, %v1360
    %v1379 = vsel %vm1373, %v1366, 920167782
    %v1380 = vsel %vm1372, %v1363, %v1379
    %v1381 = vsel %vm1371, %v1378, %v1380
    %v1382 = vsel %vm1370, %v1360, %v1363
    %v1383 = vsel %vm1373, %v1369, 1326507024
    %v1384 = vsel %vm1372, %v1366, %v1383
    %v1385 = vsel %vm1371, %v1382, %v1384
    %v1386 = vshll.u32 %v1346, 8
    %v1387 = vand.u32 %v1386, 65535
    %v1388 = vshrl.u32 %v1386, 16
    %v1389 = vand.u32 %v1385, 65535
    %v1390 = vshrl.u32 %v1385, 16
    %v1391 = vmul.u32 %v1387, %v1389
    %v1392 = vmul.u32 %v1387, %v1390
    %v1393 = vmul.u32 %v1388, %v1389
    %v1394 = vmul.u32 %v1388, %v1390
    %v1395 = vshll.u32 %v1392, 16
    %v1396 = vshrl.u32 %v1392, 16
    %v1397 = vshll.u32 %v1393, 16
    %v1398 = vshrl.u32 %v1393, 16
    %vm1399 = vc.u32 %v1391, %v1395
    %v1400 = vsel %vm1399, 1, 0
    %v1401 = vadd.s32 %v1391, %v1395
    %v1402 = vadd.s32 %v1394, %v1400
    %vm1403 = vc.u32 %v1401, %v1397
    %v1404 = vsel %vm1403, 1, 0
    %v1405 = vadd.s32 %v1401, %v1397
    %v1406 = vadd.s32 %v1402, %v1404
    %v1407 = vadd.s32 %v1406, %v1396
    %v1408 = vadd.s32 %v1407, %v1398
    %v1409 = vand.u32 %v1386, 65535
    %v1410 = vshrl.u32 %v1386, 16
    %v1411 = vand.u32 %v1381, 65535
    %v1412 = vshrl.u32 %v1381, 16
    %v1413 = vmul.u32 %v1409, %v1411
    %v1414 = vmul.u32 %v1409, %v1412
    %v1415 = vmul.u32 %v1410, %v1411
    %v1416 = vmul.u32 %v1410, %v1412
    %v1417 = vshll.u32 %v1414, 16
    %v1418 = vshrl.u32 %v1414, 16
    %v1419 = vshll.u32 %v1415, 16
    %v1420 = vshrl.u32 %v1415, 16
    %vm1421 = vc.u32 %v1413, %v1417
    %v1422 = vsel %vm1421, 1, 0
    %v1423 = vadd.s32 %v1413, %v1417
    %v1424 = vadd.s32 %v1416, %v1422
    %vm1425 = vc.u32 %v1423, %v1419
    %v1426 = vsel %vm1425, 1, 0
    %v1427 = vadd.s32 %v1423, %v1419
    %v1428 = vadd.s32 %v1424, %v1426
    %v1429 = vadd.s32 %v1428, %v1418
    %v1430 = vadd.s32 %v1429, %v1420
    %v1431 = vmul.u32 %v1386, %v1377
    %v1432 = vadd.s32 %v1408, %v1427
    %vm1433 = vc.u32 %v1408, %v1427
    %v1434 = vadd.s32 %v1430, 1
    %v1435 = vsel %vm1433, %v1434, %v1430
    %v1436 = vadd.s32 %v1431, %v1435
    %v1437 = vadd.s32 %v1436, 536870912
    %v1438 = vshrl.u32 %v1437, 30
    %v1439 = vshll.u32 %v1438, 30
    %v1440 = vsub.s32 %v1436, %v1439
    %vm1441 = vcmp.lt.s32.totalorder %v1440, 0
    %v1442 = vsub.s32 0, %v1440
    %v1443 = vsel %vm1441, %v1442, %v1440
    %v1444 = vclz %v1443
    %v1445 = vsub.s32 %v1444, 2
    %vm1446 = vcmp.gt.s32.totalorder 0, %v1445
    %v1447 = vsel %vm1446, 0, %v1445
    %v1448 = vsub.s32 32, %v1447
    %v1449 = vshll.u32 %v1440, %v1447
    %v1450 = vshrl.u32 %v1432, %v1448
    %v1451 = vor.u32 %v1449, %v1450
    %v1452 = vsub.s32 4294967266, %v1447
    %v1453 = vadd.s32 %v1452, 127
    %v1454 = vshll.u32 %v1453, 23
    %v1455 = vor.u32 4788187, %v1454
    %v1456 = vand.u32 2147483647, %v1455
    %v1458 = vcvt.s32.f32 %v1451
    %v1459 = vmul.f32 %v1458, %v1456
    %v1460 = vxor.u32 %v1459, 2147483648
    %v1461 = vsel %vm1340, %v1460, %v1459
    %v1462 = vsub.s32 4, %v1438
    %v1463 = vsel %vm1340, %v1462, %v1438
    %v1464 = vsel %vm1339, %v1336, %v1461
    %v1465 = vsel %vm1339, 0, %v1463
    %v1466 = vmul.f32 %v1464, %v1464
    %v1467 = vmul.f32 %v1466, -0.001358992
    %v1468 = vadd.f32 %v1467, 0.041655596
    %v1469 = vmul.f32 %v1466, %v1468
    %v1470 = vadd.f32 %v1469, -0.4999988
    %v1471 = vmul.f32 %v1466, %v1470
    %v1472 = vadd.f32 1.0, %v1471
    %v1473 = vmul.f32 %v1464, %v1464
    %v1474 = vmul.f32 %v1473, -0.00019511016
    %v1475 = vadd.f32 %v1474, 0.008332121
    %v1476 = vmul.f32 %v1473, %v1475
    %v1477 = vadd.f32 %v1476, -0.16666654
    %v1478 = vmul.f32 %v1473, %v1477
    %v1479 = vadd.f32 %v1478, 1.0
    %v1480 = vmul.f32 %v1479, %v1464
    %vm1481 = vweird.f32 %v1336
    %v1482 = vand.u32 %v1465, 3
    %vm1483 = vcmp.lt.s32.totalorder %v1482, 2
    %vm1484 = vcmp.eq.s32.totalorder %v1482, 0
    %v1485 = vxor.u32 %v1480, 2147483648
    %v1486 = vsel %vm1484, %v1472, %v1485
    %vm1487 = vcmp.eq.s32.totalorder %v1482, 2
    %v1488 = vxor.u32 %v1472, 2147483648
    %v1489 = vsel %vm1487, %v1488, %v1480
    %v1490 = vsel %vm1483, %v1486, %v1489
    %v1491 = vsel %vm1481, nan, %v1490
    %v1492 = vand.u32 2147483647, %v1337
    %vm1493 = vcmp.le.f32.partialorder %v1492, 0.7853982
    %vm1494 = vcmp.lt.s32.totalorder %v1337, 0
    %v1495 = vand.u32 %v1337, 2139095040
    %v1496 = vshrl.u32 %v1495, 23
    %v1497 = vsub.s32 %v1496, 127
    %v1498 = vand.u32 2147483647, %v1337
    %v1499 = vand.u32 %v1498, 8388607
    %v1500 = vor.u32 %v1499, 8388608
    %v1501 = vsub.s32 0, %v1500
    %v1502 = vadd.s32 %v1497, 1
    %vm1503 = vcmp.gt.s32.totalorder %v1502, 0
    %v1504 = vsel %vm1503, %v1502, 0
    %v1505 = vshrl.u32 %v1504, 5
    %v1506 = vand.u32 %v1504, 31
    %v1507 = vsub.s32 32, %v1506
    %v1508 = vshrl.u32 683565275, %v1507
    %v1509 = vshll.u32 683565275, %v1506
    %v1510 = vshrl.u32 2475754826, %v1507
    %v1511 = vor.u32 %v1509, %v1510
    %v1512 = vshll.u32 2475754826, %v1506
    %v1513 = vshrl.u32 2131351028, %v1507
    %v1514 = vor.u32 %v1512, %v1513
    %v1515 = vshll.u32 2131351028, %v1506
    %v1516 = vshrl.u32 2102212464, %v1507
    %v1517 = vor.u32 %v1515, %v1516
    %v1518 = vshll.u32 2102212464, %v1506
    %v1519 = vshrl.u32 920167782, %v1507
    %v1520 = vor.u32 %v1518, %v1519
    %v1521 = vshll.u32 920167782, %v1506
    %v1522 = vshrl.u32 1326507024, %v1507
    %v1523 = vor.u32 %v1521, %v1522
    %vm1524 = vcmp.lt.s32.totalorder %v1505, 1
    %vm1525 = vcmp.lt.s32.totalorder %v1505, 2
    %vm1526 = vcmp.lt.s32.totalorder %v1505, 3
    %vm1527 = vcmp.lt.s32.totalorder %v1505, 4
    %v1528 = vsel %vm1524, %v1508, %v1511
    %v1529 = vsel %vm1527, %v1517, 2102212464
    %v1530 = vsel %vm1526, %v1514, %v1529
    %v1531 = vsel %vm1525, %v1528, %v1530
    %v1532 = vsel %vm1524, %v1511, %v1514
    %v1533 = vsel %vm1527, %v1520, 920167782
    %v1534 = vsel %vm1526, %v1517, %v1533
    %v1535 = vsel %vm1525, %v1532, %v1534
    %v1536 = vsel %vm1524, %v1514, %v1517
    %v1537 = vsel %vm1527, %v1523, 1326507024
    %v1538 = vsel %vm1526, %v1520, %v1537
    %v1539 = vsel %vm1525, %v1536, %v1538
    %v1540 = vshll.u32 %v1500, 8
    %v1541 = vand.u32 %v1540, 65535
    %v1542 = vshrl.u32 %v1540, 16
    %v1543 = vand.u32 %v1539, 65535
    %v1544 = vshrl.u32 %v1539, 16
    %v1545 = vmul.u32 %v1541, %v1543
    %v1546 = vmul.u32 %v1541, %v1544
    %v1547 = vmul.u32 %v1542, %v1543
    %v1548 = vmul.u32 %v1542, %v1544
    %v1549 = vshll.u32 %v1546, 16
    %v1550 = vshrl.u32 %v1546, 16
    %v1551 = vshll.u32 %v1547, 16
    %v1552 = vshrl.u32 %v1547, 16
    %vm1553 = vc.u32 %v1545, %v1549
    %v1554 = vsel %vm1553, 1, 0
    %v1555 = vadd.s32 %v1545, %v1549
    %v1556 = vadd.s32 %v1548, %v1554
    %vm1557 = vc.u32 %v1555, %v1551
    %v1558 = vsel %vm1557, 1, 0
    %v1559 = vadd.s32 %v1555, %v1551
    %v1560 = vadd.s32 %v1556, %v1558
    %v1561 = vadd.s32 %v1560, %v1550
    %v1562 = vadd.s32 %v1561, %v1552
    %v1563 = vand.u32 %v1540, 65535
    %v1564 = vshrl.u32 %v1540, 16
    %v1565 = vand.u32 %v1535, 65535
    %v1566 = vshrl.u32 %v1535, 16
    %v1567 = vmul.u32 %v1563, %v1565
    %v1568 = vmul.u32 %v1563, %v1566
    %v1569 = vmul.u32 %v1564, %v1565
    %v1570 = vmul.u32 %v1564, %v1566
    %v1571 = vshll.u32 %v1568, 16
    %v1572 = vshrl.u32 %v1568, 16
    %v1573 = vshll.u32 %v1569, 16
    %v1574 = vshrl.u32 %v1569, 16
    %vm1575 = vc.u32 %v1567, %v1571
    %v1576 = vsel %vm1575, 1, 0
    %v1577 = vadd.s32 %v1567, %v1571
    %v1578 = vadd.s32 %v1570, %v1576
    %vm1579 = vc.u32 %v1577, %v1573
    %v1580 = vsel %vm1579, 1, 0
    %v1581 = vadd.s32 %v1577, %v1573
    %v1582 = vadd.s32 %v1578, %v1580
    %v1583 = vadd.s32 %v1582, %v1572
    %v1584 = vadd.s32 %v1583, %v1574
    %v1585 = vmul.u32 %v1540, %v1531
    %v1586 = vadd.s32 %v1562, %v1581
    %vm1587 = vc.u32 %v1562, %v1581
    %v1588 = vadd.s32 %v1584, 1
    %v1589 = vsel %vm1587, %v1588, %v1584
    %v1590 = vadd.s32 %v1585, %v1589
    %v1591 = vadd.s32 %v1590, 536870912
    %v1592 = vshrl.u32 %v1591, 30
    %v1593 = vshll.u32 %v1592, 30
    %v1594 = vsub.s32 %v1590, %v1593
    %vm1595 = vcmp.lt.s32.totalorder %v1594, 0
    %v1596 = vsub.s32 0, %v1594
    %v1597 = vsel %vm1595, %v1596, %v1594
    %v1598 = vclz %v1597
    %v1599 = vsub.s32 %v1598, 2
    %vm1600 = vcmp.gt.s32.totalorder 0, %v1599
    %v1601 = vsel %vm1600, 0, %v1599
    %v1602 = vsub.s32 32, %v1601
    %v1603 = vshll.u32 %v1594, %v1601
    %v1604 = vshrl.u32 %v1586, %v1602
    %v1605 = vor.u32 %v1603, %v1604
    %v1606 = vsub.s32 4294967266, %v1601
    %v1607 = vadd.s32 %v1606, 127
    %v1608 = vshll.u32 %v1607, 23
    %v1609 = vor.u32 4788187, %v1608
    %v1610 = vand.u32 2147483647, %v1609
    %v1612 = vcvt.s32.f32 %v1605
    %v1613 = vmul.f32 %v1612, %v1610
    %v1614 = vxor.u32 %v1613, 2147483648
    %v1615 = vsel %vm1494, %v1614, %v1613
    %v1616 = vsub.s32 4, %v1592
    %v1617 = vsel %vm1494, %v1616, %v1592
    %v1618 = vsel %vm1493, %v1337, %v1615
    %v1619 = vsel %vm1493, 0, %v1617
    %v1620 = vmul.f32 %v1618, %v1618
    %v1621 = vmul.f32 %v1620, -0.001358992
    %v1622 = vadd.f32 %v1621, 0.041655596
    %v1623 = vmul.f32 %v1620, %v1622
    %v1624 = vadd.f32 %v1623, -0.4999988
    %v1625 = vmul.f32 %v1620, %v1624
    %v1626 = vadd.f32 1.0, %v1625
    %v1627 = vmul.f32 %v1618, %v1618
    %v1628 = vmul.f32 %v1627, -0.00019511016
    %v1629 = vadd.f32 %v1628, 0.008332121
    %v1630 = vmul.f32 %v1627, %v1629
    %v1631 = vadd.f32 %v1630, -0.16666654
    %v1632 = vmul.f32 %v1627, %v1631
    %v1633 = vadd.f32 %v1632, 1.0
    %v1634 = vmul.f32 %v1633, %v1618
    %vm1635 = vweird.f32 %v1337
    %v1636 = vand.u32 %v1619, 3
    %vm1637 = vcmp.lt.s32.totalorder %v1636, 2
    %vm1638 = vcmp.eq.s32.totalorder %v1636, 0
    %v1639 = vxor.u32 %v1634, 2147483648
    %v1640 = vsel %vm1638, %v1626, %v1639
    %vm1641 = vcmp.eq.s32.totalorder %v1636, 2
    %v1642 = vxor.u32 %v1626, 2147483648
    %v1643 = vsel %vm1641, %v1642, %v1634
    %v1644 = vsel %vm1637, %v1640, %v1643
    %v1645 = vsel %vm1635, nan, %v1644
    %v1646 = vmul.f32 %v682, %v1491
    %v1647 = vmul.f32 %v682, %v1645
    %v1648 = vmul.f32 %v685, %v1336
    %v1649 = vmul.f32 %v685, %v1337
    %v1650 = vadd.f32 %v1646, %v1648
    %v1651 = vadd.f32 %v1647, %v1649
    %v1652 = vsub.f32 %v1332, %v1650
    %v1653 = vsub.f32 %v1333, %v1651
    %v1654 = vmul.f32 %v369, %v1652
    %v1655 = vmul.f32 %v369, %v1653
    %v1656 = vadd.f32 %v1336, %v1654
    %v1657 = vadd.f32 %v1337, %v1655
    %v1658 = vand.u32 2147483647, %v1656
    %vm1659 = vcmp.le.f32.partialorder %v1658, 0.7853982
    %vm1660 = vcmp.lt.s32.totalorder %v1656, 0
    %v1661 = vand.u32 %v1656, 2139095040
    %v1662 = vshrl.u32 %v1661, 23
    %v1663 = vsub.s32 %v1662, 127
    %v1664 = vand.u32 2147483647, %v1656
    %v1665 = vand.u32 %v1664, 8388607
    %v1666 = vor.u32 %v1665, 8388608
    %v1667 = vsub.s32 0, %v1666
    %v1668 = vadd.s32 %v1663, 1
    %vm1669 = vcmp.gt.s32.totalorder %v1668, 0
    %v1670 = vsel %vm1669, %v1668, 0
    %v1671 = vshrl.u32 %v1670, 5
    %v1672 = vand.u32 %v1670, 31
    %v1673 = vsub.s32 32, %v1672
    %v1674 = vshrl.u32 683565275, %v1673
    %v1675 = vshll.u32 683565275, %v1672
    %v1676 = vshrl.u32 2475754826, %v1673
    %v1677 = vor.u32 %v1675, %v1676
    %v1678 = vshll.u32 2475754826, %v1672
    %v1679 = vshrl.u32 2131351028, %v1673
    %v1680 = vor.u32 %v1678, %v1679
    %v1681 = vshll.u32 2131351028, %v1672
    %v1682 = vshrl.u32 2102212464, %v1673
    %v1683 = vor.u32 %v1681, %v1682
    %v1684 = vshll.u32 2102212464, %v1672
    %v1685 = vshrl.u32 920167782, %v1673
    %v1686 = vor.u32 %v1684, %v1685
    %v1687 = vshll.u32 920167782, %v1672
    %v1688 = vshrl.u32 1326507024, %v1673
    %v1689 = vor.u32 %v1687, %v1688
    %vm1690 = vcmp.lt.s32.totalorder %v1671, 1
    %vm1691 = vcmp.lt.s32.totalorder %v1671, 2
    %vm1692 = vcmp.lt.s32.totalorder %v1671, 3
    %vm1693 = vcmp.lt.s32.totalorder %v1671, 4
    %v1694 = vsel %vm1690, %v1674, %v1677
    %v1695 = vsel %vm1693, %v1683, 2102212464
    %v1696 = vsel %vm1692, %v1680, %v1695
    %v1697 = vsel %vm1691, %v1694, %v1696
    %v1698 = vsel %vm1690, %v1677, %v1680
    %v1699 = vsel %vm1693, %v1686, 920167782
    %v1700 = vsel %vm1692, %v1683, %v1699
    %v1701 = vsel %vm1691, %v1698, %v1700
    %v1702 = vsel %vm1690, %v1680, %v1683
    %v1703 = vsel %vm1693, %v1689, 1326507024
    %v1704 = vsel %vm1692, %v1686, %v1703
    %v1705 = vsel %vm1691, %v1702, %v1704
    %v1706 = vshll.u32 %v1666, 8
    %v1707 = vand.u32 %v1706, 65535
    %v1708 = vshrl.u32 %v1706, 16
    %v1709 = vand.u32 %v1705, 65535
    %v1710 = vshrl.u32 %v1705, 16
    %v1711 = vmul.u32 %v1707, %v1709
    %v1712 = vmul.u32 %v1707, %v1710
    %v1713 = vmul.u32 %v1708, %v1709
    %v1714 = vmul.u32 %v1708, %v1710
    %v1715 = vshll.u32 %v1712, 16
    %v1716 = vshrl.u32 %v1712, 16
    %v1717 = vshll.u32 %v1713, 16
    %v1718 = vshrl.u32 %v1713, 16
    %vm1719 = vc.u32 %v1711, %v1715
    %v1720 = vsel %vm1719, 1, 0
    %v1721 = vadd.s32 %v1711, %v1715
    %v1722 = vadd.s32 %v1714, %v1720
    %vm1723 = vc.u32 %v1721, %v1717
    %v1724 = vsel %vm1723, 1, 0
    %v1725 = vadd.s32 %v1721, %v1717
    %v1726 = vadd.s32 %v1722, %v1724
    %v1727 = vadd.s32 %v1726, %v1716
    %v1728 = vadd.s32 %v1727, %v1718
    %v1729 = vand.u32 %v1706, 65535
    %v1730 = vshrl.u32 %v1706, 16
    %v1731 = vand.u32 %v1701, 65535
    %v1732 = vshrl.u32 %v1701, 16
    %v1733 = vmul.u32 %v1729, %v1731
    %v1734 = vmul.u32 %v1729, %v1732
    %v1735 = vmul.u32 %v1730, %v1731
    %v1736 = vmul.u32 %v1730, %v1732
    %v1737 = vshll.u32 %v1734, 16
    %v1738 = vshrl.u32 %v1734, 16
    %v1739 = vshll.u32 %v1735, 16
    %v1740 = vshrl.u32 %v1735, 16
    %vm1741 = vc.u32 %v1733, %v1737
    %v1742 = vsel %vm1741, 1, 0
    %v1743 = vadd.s32 %v1733, %v1737
    %v1744 = vadd.s32 %v1736, %v1742
    %vm1745 = vc.u32 %v1743, %v1739
    %v1746 = vsel %vm1745, 1, 0
    %v1747 = vadd.s32 %v1743, %v1739
    %v1748 = vadd.s32 %v1744, %v1746
    %v1749 = vadd.s32 %v1748, %v1738
    %v1750 = vadd.s32 %v1749, %v1740
    %v1751 = vmul.u32 %v1706, %v1697
    %v1752 = vadd.s32 %v1728, %v1747
    %vm1753 = vc.u32 %v1728, %v1747
    %v1754 = vadd.s32 %v1750, 1
    %v1755 = vsel %vm1753, %v1754, %v1750
    %v1756 = vadd.s32 %v1751, %v1755
    %v1757 = vadd.s32 %v1756, 536870912
    %v1758 = vshrl.u32 %v1757, 30
    %v1759 = vshll.u32 %v1758, 30
    %v1760 = vsub.s32 %v1756, %v1759
    %vm1761 = vcmp.lt.s32.totalorder %v1760, 0
    %v1762 = vsub.s32 0, %v1760
    %v1763 = vsel %vm1761, %v1762, %v1760
    %v1764 = vclz %v1763
    %v1765 = vsub.s32 %v1764, 2
    %vm1766 = vcmp.gt.s32.totalorder 0, %v1765
    %v1767 = vsel %vm1766, 0, %v1765
    %v1768 = vsub.s32 32, %v1767
    %v1769 = vshll.u32 %v1760, %v1767
    %v1770 = vshrl.u32 %v1752, %v1768
    %v1771 = vor.u32 %v1769, %v1770
    %v1772 = vsub.s32 4294967266, %v1767
    %v1773 = vadd.s32 %v1772, 127
    %v1774 = vshll.u32 %v1773, 23
    %v1775 = vor.u32 4788187, %v1774
    %v1776 = vand.u32 2147483647, %v1775
    %v1778 = vcvt.s32.f32 %v1771
    %v1779 = vmul.f32 %v1778, %v1776
    %v1780 = vxor.u32 %v1779, 2147483648
    %v1781 = vsel %vm1660, %v1780, %v1779
    %v1782 = vsub.s32 4, %v1758
    %v1783 = vsel %vm1660, %v1782, %v1758
    %v1784 = vsel %vm1659, %v1656, %v1781
    %v1785 = vsel %vm1659, 0, %v1783
    %v1786 = vmul.f32 %v1784, %v1784
    %v1787 = vmul.f32 %v1786, -0.001358992
    %v1788 = vadd.f32 %v1787, 0.041655596
    %v1789 = vmul.f32 %v1786, %v1788
    %v1790 = vadd.f32 %v1789, -0.4999988
    %v1791 = vmul.f32 %v1786, %v1790
    %v1792 = vadd.f32 1.0, %v1791
    %v1793 = vmul.f32 %v1784, %v1784
    %v1794 = vmul.f32 %v1793, -0.00019511016
    %v1795 = vadd.f32 %v1794, 0.008332121
    %v1796 = vmul.f32 %v1793, %v1795
    %v1797 = vadd.f32 %v1796, -0.16666654
    %v1798 = vmul.f32 %v1793, %v1797
    %v1799 = vadd.f32 %v1798, 1.0
    %v1800 = vmul.f32 %v1799, %v1784
    %vm1801 = vweird.f32 %v1656
    %v1802 = vand.u32 %v1785, 3
    %vm1803 = vcmp.lt.s32.totalorder %v1802, 2
    %vm1804 = vcmp.eq.s32.totalorder %v1802, 0
    %v1805 = vxor.u32 %v1800, 2147483648
    %v1806 = vsel %vm1804, %v1792, %v1805
    %vm1807 = vcmp.eq.s32.totalorder %v1802, 2
    %v1808 = vxor.u32 %v1792, 2147483648
    %v1809 = vsel %vm1807, %v1808, %v1800
    %v1810 = vsel %vm1803, %v1806, %v1809
    %v1811 = vsel %vm1801, nan, %v1810
    %v1812 = vand.u32 2147483647, %v1657
    %vm1813 = vcmp.le.f32.partialorder %v1812, 0.7853982
    %vm1814 = vcmp.lt.s32.totalorder %v1657, 0
    %v1815 = vand.u32 %v1657, 2139095040
    %v1816 = vshrl.u32 %v1815, 23
    %v1817 = vsub.s32 %v1816, 127
    %v1818 = vand.u32 2147483647, %v1657
    %v1819 = vand.u32 %v1818, 8388607
    %v1820 = vor.u32 %v1819, 8388608
    %v1821 = vsub.s32 0, %v1820
    %v1822 = vadd.s32 %v1817, 1
    %vm1823 = vcmp.gt.s32.totalorder %v1822, 0
    %v1824 = vsel %vm1823, %v1822, 0
    %v1825 = vshrl.u32 %v1824, 5
    %v1826 = vand.u32 %v1824, 31
    %v1827 = vsub.s32 32, %v1826
    %v1828 = vshrl.u32 683565275, %v1827
    %v1829 = vshll.u32 683565275, %v1826
    %v1830 = vshrl.u32 2475754826, %v1827
    %v1831 = vor.u32 %v1829, %v1830
    %v1832 = vshll.u32 2475754826, %v1826
    %v1833 = vshrl.u32 2131351028, %v1827
    %v1834 = vor.u32 %v1832, %v1833
    %v1835 = vshll.u32 2131351028, %v1826
    %v1836 = vshrl.u32 2102212464, %v1827
    %v1837 = vor.u32 %v1835, %v1836
    %v1838 = vshll.u32 2102212464, %v1826
    %v1839 = vshrl.u32 920167782, %v1827
    %v1840 = vor.u32 %v1838, %v1839
    %v1841 = vshll.u32 920167782, %v1826
    %v1842 = vshrl.u32 1326507024, %v1827
    %v1843 = vor.u32 %v1841, %v1842
    %vm1844 = vcmp.lt.s32.totalorder %v1825, 1
    %vm1845 = vcmp.lt.s32.totalorder %v1825, 2
    %vm1846 = vcmp.lt.s32.totalorder %v1825, 3
    %vm1847 = vcmp.lt.s32.totalorder %v1825, 4
    %v1848 = vsel %vm1844, %v1828, %v1831
    %v1849 = vsel %vm1847, %v1837, 2102212464
    %v1850 = vsel %vm1846, %v1834, %v1849
    %v1851 = vsel %vm1845, %v1848, %v1850
    %v1852 = vsel %vm1844, %v1831, %v1834
    %v1853 = vsel %vm1847, %v1840, 920167782
    %v1854 = vsel %vm1846, %v1837, %v1853
    %v1855 = vsel %vm1845, %v1852, %v1854
    %v1856 = vsel %vm1844, %v1834, %v1837
    %v1857 = vsel %vm1847, %v1843, 1326507024
    %v1858 = vsel %vm1846, %v1840, %v1857
    %v1859 = vsel %vm1845, %v1856, %v1858
    %v1860 = vshll.u32 %v1820, 8
    %v1861 = vand.u32 %v1860, 65535
    %v1862 = vshrl.u32 %v1860, 16
    %v1863 = vand.u32 %v1859, 65535
    %v1864 = vshrl.u32 %v1859, 16
    %v1865 = vmul.u32 %v1861, %v1863
    %v1866 = vmul.u32 %v1861, %v1864
    %v1867 = vmul.u32 %v1862, %v1863
    %v1868 = vmul.u32 %v1862, %v1864
    %v1869 = vshll.u32 %v1866, 16
    %v1870 = vshrl.u32 %v1866, 16
    %v1871 = vshll.u32 %v1867, 16
    %v1872 = vshrl.u32 %v1867, 16
    %vm1873 = vc.u32 %v1865, %v1869
    %v1874 = vsel %vm1873, 1, 0
    %v1875 = vadd.s32 %v1865, %v1869
    %v1876 = vadd.s32 %v1868, %v1874
    %vm1877 = vc.u32 %v1875, %v1871
    %v1878 = vsel %vm1877, 1, 0
    %v1879 = vadd.s32 %v1875, %v1871
    %v1880 = vadd.s32 %v1876, %v1878
    %v1881 = vadd.s32 %v1880, %v1870
    %v1882 = vadd.s32 %v1881, %v1872
    %v1883 = vand.u32 %v1860, 65535
    %v1884 = vshrl.u32 %v1860, 16
    %v1885 = vand.u32 %v1855, 65535
    %v1886 = vshrl.u32 %v1855, 16
    %v1887 = vmul.u32 %v1883, %v1885
    %v1888 = vmul.u32 %v1883, %v1886
    %v1889 = vmul.u32 %v1884, %v1885
    %v1890 = vmul.u32 %v1884, %v1886
    %v1891 = vshll.u32 %v1888, 16
    %v1892 = vshrl.u32 %v1888, 16
    %v1893 = vshll.u32 %v1889, 16
    %v1894 = vshrl.u32 %v1889, 16
    %vm1895 = vc.u32 %v1887, %v1891
    %v1896 = vsel %vm1895, 1, 0
    %v1897 = vadd.s32 %v1887, %v1891
    %v1898 = vadd.s32 %v1890, %v1896
    %vm1899 = vc.u32 %v1897, %v1893
    %v1900 = vsel %vm1899, 1, 0
    %v1901 = vadd.s32 %v1897, %v1893
    %v1902 = vadd.s32 %v1898, %v1900
    %v1903 = vadd.s32 %v1902, %v1892
    %v1904 = vadd.s32 %v1903, %v1894
    %v1905 = vmul.u32 %v1860, %v1851
    %v1906 = vadd.s32 %v1882, %v1901
    %vm1907 = vc.u32 %v1882, %v1901
    %v1908 = vadd.s32 %v1904, 1
    %v1909 = vsel %vm1907, %v1908, %v1904
    %v1910 = vadd.s32 %v1905, %v1909
    %v1911 = vadd.s32 %v1910, 536870912
    %v1912 = vshrl.u32 %v1911, 30
    %v1913 = vshll.u32 %v1912, 30
    %v1914 = vsub.s32 %v1910, %v1913
    %vm1915 = vcmp.lt.s32.totalorder %v1914, 0
    %v1916 = vsub.s32 0, %v1914
    %v1917 = vsel %vm1915, %v1916, %v1914
    %v1918 = vclz %v1917
    %v1919 = vsub.s32 %v1918, 2
    %vm1920 = vcmp.gt.s32.totalorder 0, %v1919
    %v1921 = vsel %vm1920, 0, %v1919
    %v1922 = vsub.s32 32, %v1921
    %v1923 = vshll.u32 %v1914, %v1921
    %v1924 = vshrl.u32 %v1906, %v1922
    %v1925 = vor.u32 %v1923, %v1924
    %v1926 = vsub.s32 4294967266, %v1921
    %v1927 = vadd.s32 %v1926, 127
    %v1928 = vshll.u32 %v1927, 23
    %v1929 = vor.u32 4788187, %v1928
    %v1930 = vand.u32 2147483647, %v1929
    %v1932 = vcvt.s32.f32 %v1925
    %v1933 = vmul.f32 %v1932, %v1930
    %v1934 = vxor.u32 %v1933, 2147483648
    %v1935 = vsel %vm1814, %v1934, %v1933
    %v1936 = vsub.s32 4, %v1912
    %v1937 = vsel %vm1814, %v1936, %v1912
    %v1938 = vsel %vm1813, %v1657, %v1935
    %v1939 = vsel %vm1813, 0, %v1937
    %v1940 = vmul.f32 %v1938, %v1938
    %v1941 = vmul.f32 %v1940, -0.001358992
    %v1942 = vadd.f32 %v1941, 0.041655596
    %v1943 = vmul.f32 %v1940, %v1942
    %v1944 = vadd.f32 %v1943, -0.4999988
    %v1945 = vmul.f32 %v1940, %v1944
    %v1946 = vadd.f32 1.0, %v1945
    %v1947 = vmul.f32 %v1938, %v1938
    %v1948 = vmul.f32 %v1947, -0.00019511016
    %v1949 = vadd.f32 %v1948, 0.008332121
    %v1950 = vmul.f32 %v1947, %v1949
    %v1951 = vadd.f32 %v1950, -0.16666654
    %v1952 = vmul.f32 %v1947, %v1951
    %v1953 = vadd.f32 %v1952, 1.0
    %v1954 = vmul.f32 %v1953, %v1938
    %vm1955 = vweird.f32 %v1657
    %v1956 = vand.u32 %v1939, 3
    %vm1957 = vcmp.lt.s32.totalorder %v1956, 2
    %vm1958 = vcmp.eq.s32.totalorder %v1956, 0
    %v1959 = vxor.u32 %v1954, 2147483648
    %v1960 = vsel %vm1958, %v1946, %v1959
    %vm1961 = vcmp.eq.s32.totalorder %v1956, 2
    %v1962 = vxor.u32 %v1946, 2147483648
    %v1963 = vsel %vm1961, %v1962, %v1954
    %v1964 = vsel %vm1957, %v1960, %v1963
    %v1965 = vsel %vm1955, nan, %v1964
    %v1966 = vmul.f32 %v359, %v1811
    %v1967 = vmul.f32 %v359, %v1965
    %v1968 = vmul.f32 %v362, %v1656
    %v1969 = vmul.f32 %v362, %v1657
    %v1970 = vadd.f32 %v1966, %v1968
    %v1971 = vadd.f32 %v1967, %v1969
    %v1972 = vsub.f32 %v1652, %v1970
    %v1973 = vsub.f32 %v1653, %v1971
    %v1974 = vmul.f32 %v46, %v1972
    %v1975 = vmul.f32 %v46, %v1973
    %v1976 = vadd.f32 %v1656, %v1974
    %v1977 = vadd.f32 %v1657, %v1975
    %v1978 = vadd.f32 %v1976, %v1974
    %v1979 = vadd.f32 %v1977, %v1975
    %v1980 = vand.u32 2147483647, %v1978
    %vm1981 = vcmp.le.f32.partialorder %v1980, 0.7853982
    %vm1982 = vcmp.lt.s32.totalorder %v1978, 0
    %v1983 = vand.u32 %v1978, 2139095040
    %v1984 = vshrl.u32 %v1983, 23
    %v1985 = vsub.s32 %v1984, 127
    %v1986 = vand.u32 2147483647, %v1978
    %v1987 = vand.u32 %v1986, 8388607
    %v1988 = vor.u32 %v1987, 8388608
    %v1989 = vsub.s32 0, %v1988
    %v1990 = vadd.s32 %v1985, 1
    %vm1991 = vcmp.gt.s32.totalorder %v1990, 0
    %v1992 = vsel %vm1991, %v1990, 0
    %v1993 = vshrl.u32 %v1992, 5
    %v1994 = vand.u32 %v1992, 31
    %v1995 = vsub.s32 32, %v1994
    %v1996 = vshrl.u32 683565275, %v1995
    %v1997 = vshll.u32 683565275, %v1994
    %v1998 = vshrl.u32 2475754826, %v1995
    %v1999 = vor.u32 %v1997, %v1998
    %v2000 = vshll.u32 2475754826, %v1994
    %v2001 = vshrl.u32 2131351028, %v1995
    %v2002 = vor.u32 %v2000, %v2001
    %v2003 = vshll.u32 2131351028, %v1994
    %v2004 = vshrl.u32 2102212464, %v1995
    %v2005 = vor.u32 %v2003, %v2004
    %v2006 = vshll.u32 2102212464, %v1994
    %v2007 = vshrl.u32 920167782, %v1995
    %v2008 = vor.u32 %v2006, %v2007
    %v2009 = vshll.u32 920167782, %v1994
    %v2010 = vshrl.u32 1326507024, %v1995
    %v2011 = vor.u32 %v2009, %v2010
    %vm2012 = vcmp.lt.s32.totalorder %v1993, 1
    %vm2013 = vcmp.lt.s32.totalorder %v1993, 2
    %vm2014 = vcmp.lt.s32.totalorder %v1993, 3
    %vm2015 = vcmp.lt.s32.totalorder %v1993, 4
    %v2016 = vsel %vm2012, %v1996, %v1999
    %v2017 = vsel %vm2015, %v2005, 2102212464
    %v2018 = vsel %vm2014, %v2002, %v2017
    %v2019 = vsel %vm2013, %v2016, %v2018
    %v2020 = vsel %vm2012, %v1999, %v2002
    %v2021 = vsel %vm2015, %v2008, 920167782
    %v2022 = vsel %vm2014, %v2005, %v2021
    %v2023 = vsel %vm2013, %v2020, %v2022
    %v2024 = vsel %vm2012, %v2002, %v2005
    %v2025 = vsel %vm2015, %v2011, 1326507024
    %v2026 = vsel %vm2014, %v2008, %v2025
    %v2027 = vsel %vm2013, %v2024, %v2026
    %v2028 = vshll.u32 %v1988, 8
    %v2029 = vand.u32 %v2028, 65535
    %v2030 = vshrl.u32 %v2028, 16
    %v2031 = vand.u32 %v2027, 65535
    %v2032 = vshrl.u32 %v2027, 16
    %v2033 = vmul.u32 %v2029, %v2031
    %v2034 = vmul.u32 %v2029, %v2032
    %v2035 = vmul.u32 %v2030, %v2031
    %v2036 = vmul.u32 %v2030, %v2032
    %v2037 = vshll.u32 %v2034, 16
    %v2038 = vshrl.u32 %v2034, 16
    %v2039 = vshll.u32 %v2035, 16
    %v2040 = vshrl.u32 %v2035, 16
    %vm2041 = vc.u32 %v2033, %v2037
    %v2042 = vsel %vm2041, 1, 0
    %v2043 = vadd.s32 %v2033, %v2037
    %v2044 = vadd.s32 %v2036, %v2042
    %vm2045 = vc.u32 %v2043, %v2039
    %v2046 = vsel %vm2045, 1, 0
    %v2047 = vadd.s32 %v2043, %v2039
    %v2048 = vadd.s32 %v2044, %v2046
    %v2049 = vadd.s32 %v2048, %v2038
    %v2050 = vadd.s32 %v2049, %v2040
    %v2051 = vand.u32 %v2028, 65535
    %v2052 = vshrl.u32 %v2028, 16
    %v2053 = vand.u32 %v2023, 65535
    %v2054 = vshrl.u32 %v2023, 16
    %v2055 = vmul.u32 %v2051, %v2053
    %v2056 = vmul.u32 %v2051, %v2054
    %v2057 = vmul.u32 %v2052, %v2053
    %v2058 = vmul.u32 %v2052, %v2054
    %v2059 = vshll.u32 %v2056, 16
    %v2060 = vshrl.u32 %v2056, 16
    %v2061 = vshll.u32 %v2057, 16
    %v2062 = vshrl.u32 %v2057, 16
    %vm2063 = vc.u32 %v2055, %v2059
    %v2064 = vsel %vm2063, 1, 0
    %v2065 = vadd.s32 %v2055, %v2059
    %v2066 = vadd.s32 %v2058, %v2064
    %vm2067 = vc.u32 %v2065, %v2061
    %v2068 = vsel %vm2067, 1, 0
    %v2069 = vadd.s32 %v2065, %v2061
    %v2070 = vadd.s32 %v2066, %v2068
    %v2071 = vadd.s32 %v2070, %v2060
    %v2072 = vadd.s32 %v2071, %v2062
    %v2073 = vmul.u32 %v2028, %v2019
    %v2074 = vadd.s32 %v2050, %v2069
    %vm2075 = vc.u32 %v2050, %v2069
    %v2076 = vadd.s32 %v2072, 1
    %v2077 = vsel %vm2075, %v2076, %v2072
    %v2078 = vadd.s32 %v2073, %v2077
    %v2079 = vadd.s32 %v2078, 536870912
    %v2080 = vshrl.u32 %v2079, 30
    %v2081 = vshll.u32 %v2080, 30
    %v2082 = vsub.s32 %v2078, %v2081
    %vm2083 = vcmp.lt.s32.totalorder %v2082, 0
    %v2084 = vsub.s32 0, %v2082
    %v2085 = vsel %vm2083, %v2084, %v2082
    %v2086 = vclz %v2085
    %v2087 = vsub.s32 %v2086, 2
    %vm2088 = vcmp.gt.s32.totalorder 0, %v2087
    %v2089 = vsel %vm2088, 0, %v2087
    %v2090 = vsub.s32 32, %v2089
    %v2091 = vshll.u32 %v2082, %v2089
    %v2092 = vshrl.u32 %v2074, %v2090
    %v2093 = vor.u32 %v2091, %v2092
    %v2094 = vsub.s32 4294967266, %v2089
    %v2095 = vadd.s32 %v2094, 127
    %v2096 = vshll.u32 %v2095, 23
    %v2097 = vor.u32 4788187, %v2096
    %v2098 = vand.u32 2147483647, %v2097
    %v2100 = vcvt.s32.f32 %v2093
    %v2101 = vmul.f32 %v2100, %v2098
    %v2102 = vxor.u32 %v2101, 2147483648
    %v2103 = vsel %vm1982, %v2102, %v2101
    %v2104 = vsub.s32 4, %v2080
    %v2105 = vsel %vm1982, %v2104, %v2080
    %v2106 = vsel %vm1981, %v1978, %v2103
    %v2107 = vsel %vm1981, 0, %v2105
    %v2108 = vmul.f32 %v2106, %v2106
    %v2109 = vmul.f32 %v2108, -0.001358992
    %v2110 = vadd.f32 %v2109, 0.041655596
    %v2111 = vmul.f32 %v2108, %v2110
    %v2112 = vadd.f32 %v2111, -0.4999988
    %v2113 = vmul.f32 %v2108, %v2112
    %v2114 = vadd.f32 1.0, %v2113
    %v2115 = vmul.f32 %v2106, %v2106
    %v2116 = vmul.f32 %v2115, -0.00019511016
    %v2117 = vadd.f32 %v2116, 0.008332121
    %v2118 = vmul.f32 %v2115, %v2117
    %v2119 = vadd.f32 %v2118, -0.16666654
    %v2120 = vmul.f32 %v2115, %v2119
    %v2121 = vadd.f32 %v2120, 1.0
    %v2122 = vmul.f32 %v2121, %v2106
    %vm2123 = vweird.f32 %v1978
    %v2124 = vand.u32 %v2107, 3
    %vm2125 = vcmp.lt.s32.totalorder %v2124, 2
    %vm2126 = vcmp.eq.s32.totalorder %v2124, 0
    %v2127 = vxor.u32 %v2122, 2147483648
    %v2128 = vsel %vm2126, %v2114, %v2127
    %vm2129 = vcmp.eq.s32.totalorder %v2124, 2
    %v2130 = vxor.u32 %v2114, 2147483648
    %v2131 = vsel %vm2129, %v2130, %v2122
    %v2132 = vsel %vm2125, %v2128, %v2131
    %v2133 = vsel %vm2123, nan, %v2132
    %v2134 = vand.u32 2147483647, %v1979
    %vm2135 = vcmp.le.f32.partialorder %v2134, 0.7853982
    %vm2136 = vcmp.lt.s32.totalorder %v1979, 0
    %v2137 = vand.u32 %v1979, 2139095040
    %v2138 = vshrl.u32 %v2137, 23
    %v2139 = vsub.s32 %v2138, 127
    %v2140 = vand.u32 2147483647, %v1979
    %v2141 = vand.u32 %v2140, 8388607
    %v2142 = vor.u32 %v2141, 8388608
    %v2143 = vsub.s32 0, %v2142
    %v2144 = vadd.s32 %v2139, 1
    %vm2145 = vcmp.gt.s32.totalorder %v2144, 0
    %v2146 = vsel %vm2145, %v2144, 0
    %v2147 = vshrl.u32 %v2146, 5
    %v2148 = vand.u32 %v2146, 31
    %v2149 = vsub.s32 32, %v2148
    %v2150 = vshrl.u32 683565275, %v2149
    %v2151 = vshll.u32 683565275, %v2148
    %v2152 = vshrl.u32 2475754826, %v2149
    %v2153 = vor.u32 %v2151, %v2152
    %v2154 = vshll.u32 2475754826, %v2148
    %v2155 = vshrl.u32 2131351028, %v2149
    %v2156 = vor.u32 %v2154, %v2155
    %v2157 = vshll.u32 2131351028, %v2148
    %v2158 = vshrl.u32 2102212464, %v2149
    %v2159 = vor.u32 %v2157, %v2158
    %v2160 = vshll.u32 2102212464, %v2148
    %v2161 = vshrl.u32 920167782, %v2149
    %v2162 = vor.u32 %v2160, %v2161
    %v2163 = vshll.u32 920167782, %v2148
    %v2164 = vshrl.u32 1326507024, %v2149
    %v2165 = vor.u32 %v2163, %v2164
    %vm2166 = vcmp.lt.s32.totalorder %v2147, 1
    %vm2167 = vcmp.lt.s32.totalorder %v2147, 2
    %vm2168 = vcmp.lt.s32.totalorder %v2147, 3
    %vm2169 = vcmp.lt.s32.totalorder %v2147, 4
    %v2170 = vsel %vm2166, %v2150, %v2153
    %v2171 = vsel %vm2169, %v2159, 2102212464
    %v2172 = vsel %vm2168, %v2156, %v2171
    %v2173 = vsel %vm2167, %v2170, %v2172
    %v2174 = vsel %vm2166, %v2153, %v2156
    %v2175 = vsel %vm2169, %v2162, 920167782
    %v2176 = vsel %vm2168, %v2159, %v2175
    %v2177 = vsel %vm2167, %v2174, %v2176
    %v2178 = vsel %vm2166, %v2156, %v2159
    %v2179 = vsel %vm2169, %v2165, 1326507024
    %v2180 = vsel %vm2168, %v2162, %v2179
    %v2181 = vsel %vm2167, %v2178, %v2180
    %v2182 = vshll.u32 %v2142, 8
    %v2183 = vand.u32 %v2182, 65535
    %v2184 = vshrl.u32 %v2182, 16
    %v2185 = vand.u32 %v2181, 65535
    %v2186 = vshrl.u32 %v2181, 16
    %v2187 = vmul.u32 %v2183, %v2185
    %v2188 = vmul.u32 %v2183, %v2186
    %v2189 = vmul.u32 %v2184, %v2185
    %v2190 = vmul.u32 %v2184, %v2186
    %v2191 = vshll.u32 %v2188, 16
    %v2192 = vshrl.u32 %v2188, 16
    %v2193 = vshll.u32 %v2189, 16
    %v2194 = vshrl.u32 %v2189, 16
    %vm2195 = vc.u32 %v2187, %v2191
    %v2196 = vsel %vm2195, 1, 0
    %v2197 = vadd.s32 %v2187, %v2191
    %v2198 = vadd.s32 %v2190, %v2196
    %vm2199 = vc.u32 %v2197, %v2193
    %v2200 = vsel %vm2199, 1, 0
    %v2201 = vadd.s32 %v2197, %v2193
    %v2202 = vadd.s32 %v2198, %v2200
    %v2203 = vadd.s32 %v2202, %v2192
    %v2204 = vadd.s32 %v2203, %v2194
    %v2205 = vand.u32 %v2182, 65535
    %v2206 = vshrl.u32 %v2182, 16
    %v2207 = vand.u32 %v2177, 65535
    %v2208 = vshrl.u32 %v2177, 16
    %v2209 = vmul.u32 %v2205, %v2207
    %v2210 = vmul.u32 %v2205, %v2208
    %v2211 = vmul.u32 %v2206, %v2207
    %v2212 = vmul.u32 %v2206, %v2208
    %v2213 = vshll.u32 %v2210, 16
    %v2214 = vshrl.u32 %v2210, 16
    %v2215 = vshll.u32 %v2211, 16
    %v2216 = vshrl.u32 %v2211, 16
    %vm2217 = vc.u32 %v2209, %v2213
    %v2218 = vsel %vm2217, 1, 0
    %v2219 = vadd.s32 %v2209, %v2213
    %v2220 = vadd.s32 %v2212, %v2218
    %vm2221 = vc.u32 %v2219, %v2215
    %v2222 = vsel %vm2221, 1, 0
    %v2223 = vadd.s32 %v2219, %v2215
    %v2224 = vadd.s32 %v2220, %v2222
    %v2225 = vadd.s32 %v2224, %v2214
    %v2226 = vadd.s32 %v2225, %v2216
    %v2227 = vmul.u32 %v2182, %v2173
    %v2228 = vadd.s32 %v2204, %v2223
    %vm2229 = vc.u32 %v2204, %v2223
    %v2230 = vadd.s32 %v2226, 1
    %v2231 = vsel %vm2229, %v2230, %v2226
    %v2232 = vadd.s32 %v2227, %v2231
    %v2233 = vadd.s32 %v2232, 536870912
    %v2234 = vshrl.u32 %v2233, 30
    %v2235 = vshll.u32 %v2234, 30
    %v2236 = vsub.s32 %v2232, %v2235
    %vm2237 = vcmp.lt.s32.totalorder %v2236, 0
    %v2238 = vsub.s32 0, %v2236
    %v2239 = vsel %vm2237, %v2238, %v2236
    %v2240 = vclz %v2239
    %v2241 = vsub.s32 %v2240, 2
    %vm2242 = vcmp.gt.s32.totalorder 0, %v2241
    %v2243 = vsel %vm2242, 0, %v2241
    %v2244 = vsub.s32 32, %v2243
    %v2245 = vshll.u32 %v2236, %v2243
    %v2246 = vshrl.u32 %v2228, %v2244
    %v2247 = vor.u32 %v2245, %v2246
    %v2248 = vsub.s32 4294967266, %v2243
    %v2249 = vadd.s32 %v2248, 127
    %v2250 = vshll.u32 %v2249, 23
    %v2251 = vor.u32 4788187, %v2250
    %v2252 = vand.u32 2147483647, %v2251
    %v2254 = vcvt.s32.f32 %v2247
    %v2255 = vmul.f32 %v2254, %v2252
    %v2256 = vxor.u32 %v2255, 2147483648
    %v2257 = vsel %vm2136, %v2256, %v2255
    %v2258 = vsub.s32 4, %v2234
    %v2259 = vsel %vm2136, %v2258, %v2234
    %v2260 = vsel %vm2135, %v1979, %v2257
    %v2261 = vsel %vm2135, 0, %v2259
    %v2262 = vmul.f32 %v2260, %v2260
    %v2263 = vmul.f32 %v2262, -0.001358992
    %v2264 = vadd.f32 %v2263, 0.041655596
    %v2265 = vmul.f32 %v2262, %v2264
    %v2266 = vadd.f32 %v2265, -0.4999988
    %v2267 = vmul.f32 %v2262, %v2266
    %v2268 = vadd.f32 1.0, %v2267
    %v2269 = vmul.f32 %v2260, %v2260
    %v2270 = vmul.f32 %v2269, -0.00019511016
    %v2271 = vadd.f32 %v2270, 0.008332121
    %v2272 = vmul.f32 %v2269, %v2271
    %v2273 = vadd.f32 %v2272, -0.16666654
    %v2274 = vmul.f32 %v2269, %v2273
    %v2275 = vadd.f32 %v2274, 1.0
    %v2276 = vmul.f32 %v2275, %v2260
    %vm2277 = vweird.f32 %v1979
    %v2278 = vand.u32 %v2261, 3
    %vm2279 = vcmp.lt.s32.totalorder %v2278, 2
    %vm2280 = vcmp.eq.s32.totalorder %v2278, 0
    %v2281 = vxor.u32 %v2276, 2147483648
    %v2282 = vsel %vm2280, %v2268, %v2281
    %vm2283 = vcmp.eq.s32.totalorder %v2278, 2
    %v2284 = vxor.u32 %v2268, 2147483648
    %v2285 = vsel %vm2283, %v2284, %v2276
    %v2286 = vsel %vm2279, %v2282, %v2285
    %v2287 = vsel %vm2277, nan, %v2286
    %v2288 = vmul.f32 %v359, %v2133
    %v2289 = vmul.f32 %v359, %v2287
    %v2290 = vmul.f32 %v362, %v1978
    %v2291 = vmul.f32 %v362, %v1979
    %v2292 = vadd.f32 %v2288, %v2290
    %v2293 = vadd.f32 %v2289, %v2291
    %v2294 = vsub.f32 %v1972, %v2292
    %v2295 = vsub.f32 %v1973, %v2293
    %v2296 = vmul.f32 %v369, %v2294
    %v2297 = vmul.f32 %v369, %v2295
    %v2298 = vadd.f32 %v1978, %v2296
    %v2299 = vadd.f32 %v1979, %v2297
    %v2300 = vand.u32 2147483647, %v2298
    %vm2301 = vcmp.le.f32.partialorder %v2300, 0.7853982
    %vm2302 = vcmp.lt.s32.totalorder %v2298, 0
    %v2303 = vand.u32 %v2298, 2139095040
    %v2304 = vshrl.u32 %v2303, 23
    %v2305 = vsub.s32 %v2304, 127
    %v2306 = vand.u32 2147483647, %v2298
    %v2307 = vand.u32 %v2306, 8388607
    %v2308 = vor.u32 %v2307, 8388608
    %v2309 = vsub.s32 0, %v2308
    %v2310 = vadd.s32 %v2305, 1
    %vm2311 = vcmp.gt.s32.totalorder %v2310, 0
    %v2312 = vsel %vm2311, %v2310, 0
    %v2313 = vshrl.u32 %v2312, 5
    %v2314 = vand.u32 %v2312, 31
    %v2315 = vsub.s32 32, %v2314
    %v2316 = vshrl.u32 683565275, %v2315
    %v2317 = vshll.u32 683565275, %v2314
    %v2318 = vshrl.u32 2475754826, %v2315
    %v2319 = vor.u32 %v2317, %v2318
    %v2320 = vshll.u32 2475754826, %v2314
    %v2321 = vshrl.u32 2131351028, %v2315
    %v2322 = vor.u32 %v2320, %v2321
    %v2323 = vshll.u32 2131351028, %v2314
    %v2324 = vshrl.u32 2102212464, %v2315
    %v2325 = vor.u32 %v2323, %v2324
    %v2326 = vshll.u32 2102212464, %v2314
    %v2327 = vshrl.u32 920167782, %v2315
    %v2328 = vor.u32 %v2326, %v2327
    %v2329 = vshll.u32 920167782, %v2314
    %v2330 = vshrl.u32 1326507024, %v2315
    %v2331 = vor.u32 %v2329, %v2330
    %vm2332 = vcmp.lt.s32.totalorder %v2313, 1
    %vm2333 = vcmp.lt.s32.totalorder %v2313, 2
    %vm2334 = vcmp.lt.s32.totalorder %v2313, 3
    %vm2335 = vcmp.lt.s32.totalorder %v2313, 4
    %v2336 = vsel %vm2332, %v2316, %v2319
    %v2337 = vsel %vm2335, %v2325, 2102212464
    %v2338 = vsel %vm2334, %v2322, %v2337
    %v2339 = vsel %vm2333, %v2336, %v2338
    %v2340 = vsel %vm2332, %v2319, %v2322
    %v2341 = vsel %vm2335, %v2328, 920167782
    %v2342 = vsel %vm2334, %v2325, %v2341
    %v2343 = vsel %vm2333, %v2340, %v2342
    %v2344 = vsel %vm2332, %v2322, %v2325
    %v2345 = vsel %vm2335, %v2331, 1326507024
    %v2346 = vsel %vm2334, %v2328, %v2345
    %v2347 = vsel %vm2333, %v2344, %v2346
    %v2348 = vshll.u32 %v2308, 8
    %v2349 = vand.u32 %v2348, 65535
    %v2350 = vshrl.u32 %v2348, 16
    %v2351 = vand.u32 %v2347, 65535
    %v2352 = vshrl.u32 %v2347, 16
    %v2353 = vmul.u32 %v2349, %v2351
    %v2354 = vmul.u32 %v2349, %v2352
    %v2355 = vmul.u32 %v2350, %v2351
    %v2356 = vmul.u32 %v2350, %v2352
    %v2357 = vshll.u32 %v2354, 16
    %v2358 = vshrl.u32 %v2354, 16
    %v2359 = vshll.u32 %v2355, 16
    %v2360 = vshrl.u32 %v2355, 16
    %vm2361 = vc.u32 %v2353, %v2357
    %v2362 = vsel %vm2361, 1, 0
    %v2363 = vadd.s32 %v2353, %v2357
    %v2364 = vadd.s32 %v2356, %v2362
    %vm2365 = vc.u32 %v2363, %v2359
    %v2366 = vsel %vm2365, 1, 0
    %v2367 = vadd.s32 %v2363, %v2359
    %v2368 = vadd.s32 %v2364, %v2366
    %v2369 = vadd.s32 %v2368, %v2358
    %v2370 = vadd.s32 %v2369, %v2360
    %v2371 = vand.u32 %v2348, 65535
    %v2372 = vshrl.u32 %v2348, 16
    %v2373 = vand.u32 %v2343, 65535
    %v2374 = vshrl.u32 %v2343, 16
    %v2375 = vmul.u32 %v2371, %v2373
    %v2376 = vmul.u32 %v2371, %v2374
    %v2377 = vmul.u32 %v2372, %v2373
    %v2378 = vmul.u32 %v2372, %v2374
    %v2379 = vshll.u32 %v2376, 16
    %v2380 = vshrl.u32 %v2376, 16
    %v2381 = vshll.u32 %v2377, 16
    %v2382 = vshrl.u32 %v2377, 16
    %vm2383 = vc.u32 %v2375, %v2379
    %v2384 = vsel %vm2383, 1, 0
    %v2385 = vadd.s32 %v2375, %v2379
    %v2386 = vadd.s32 %v2378, %v2384
    %vm2387 = vc.u32 %v2385, %v2381
    %v2388 = vsel %vm2387, 1, 0
    %v2389 = vadd.s32 %v2385, %v2381
    %v2390 = vadd.s32 %v2386, %v2388
    %v2391 = vadd.s32 %v2390, %v2380
    %v2392 = vadd.s32 %v2391, %v2382
    %v2393 = vmul.u32 %v2348, %v2339
    %v2394 = vadd.s32 %v2370, %v2389
    %vm2395 = vc.u32 %v2370, %v2389
    %v2396 = vadd.s32 %v2392, 1
    %v2397 = vsel %vm2395, %v2396, %v2392
    %v2398 = vadd.s32 %v2393, %v2397
    %v2399 = vadd.s32 %v2398, 536870912
    %v2400 = vshrl.u32 %v2399, 30
    %v2401 = vshll.u32 %v2400, 30
    %v2402 = vsub.s32 %v2398, %v2401
    %vm2403 = vcmp.lt.s32.totalorder %v2402, 0
    %v2404 = vsub.s32 0, %v2402
    %v2405 = vsel %vm2403, %v2404, %v2402
    %v2406 = vclz %v2405
    %v2407 = vsub.s32 %v2406, 2
    %vm2408 = vcmp.gt.s32.totalorder 0, %v2407
    %v2409 = vsel %vm2408, 0, %v2407
    %v2410 = vsub.s32 32, %v2409
    %v2411 = vshll.u32 %v2402, %v2409
    %v2412 = vshrl.u32 %v2394, %v2410
    %v2413 = vor.u32 %v2411, %v2412
    %v2414 = vsub.s32 4294967266, %v2409
    %v2415 = vadd.s32 %v2414, 127
    %v2416 = vshll.u32 %v2415, 23
    %v2417 = vor.u32 4788187, %v2416
    %v2418 = vand.u32 2147483647, %v2417
    %v2420 = vcvt.s32.f32 %v2413
    %v2421 = vmul.f32 %v2420, %v2418
    %v2422 = vxor.u32 %v2421, 2147483648
    %v2423 = vsel %vm2302, %v2422, %v2421
    %v2424 = vsub.s32 4, %v2400
    %v2425 = vsel %vm2302, %v2424, %v2400
    %v2426 = vsel %vm2301, %v2298, %v2423
    %v2427 = vsel %vm2301, 0, %v2425
    %v2428 = vmul.f32 %v2426, %v2426
    %v2429 = vmul.f32 %v2428, -0.001358992
    %v2430 = vadd.f32 %v2429, 0.041655596
    %v2431 = vmul.f32 %v2428, %v2430
    %v2432 = vadd.f32 %v2431, -0.4999988
    %v2433 = vmul.f32 %v2428, %v2432
    %v2434 = vadd.f32 1.0, %v2433
    %v2435 = vmul.f32 %v2426, %v2426
    %v2436 = vmul.f32 %v2435, -0.00019511016
    %v2437 = vadd.f32 %v2436, 0.008332121
    %v2438 = vmul.f32 %v2435, %v2437
    %v2439 = vadd.f32 %v2438, -0.16666654
    %v2440 = vmul.f32 %v2435, %v2439
    %v2441 = vadd.f32 %v2440, 1.0
    %v2442 = vmul.f32 %v2441, %v2426
    %vm2443 = vweird.f32 %v2298
    %v2444 = vand.u32 %v2427, 3
    %vm2445 = vcmp.lt.s32.totalorder %v2444, 2
    %vm2446 = vcmp.eq.s32.totalorder %v2444, 0
    %v2447 = vxor.u32 %v2442, 2147483648
    %v2448 = vsel %vm2446, %v2434, %v2447
    %vm2449 = vcmp.eq.s32.totalorder %v2444, 2
    %v2450 = vxor.u32 %v2434, 2147483648
    %v2451 = vsel %vm2449, %v2450, %v2442
    %v2452 = vsel %vm2445, %v2448, %v2451
    %v2453 = vsel %vm2443, nan, %v2452
    %v2454 = vand.u32 2147483647, %v2299
    %vm2455 = vcmp.le.f32.partialorder %v2454, 0.7853982
    %vm2456 = vcmp.lt.s32.totalorder %v2299, 0
    %v2457 = vand.u32 %v2299, 2139095040
    %v2458 = vshrl.u32 %v2457, 23
    %v2459 = vsub.s32 %v2458, 127
    %v2460 = vand.u32 2147483647, %v2299
    %v2461 = vand.u32 %v2460, 8388607
    %v2462 = vor.u32 %v2461, 8388608
    %v2463 = vsub.s32 0, %v2462
    %v2464 = vadd.s32 %v2459, 1
    %vm2465 = vcmp.gt.s32.totalorder %v2464, 0
    %v2466 = vsel %vm2465, %v2464, 0
    %v2467 = vshrl.u32 %v2466, 5
    %v2468 = vand.u32 %v2466, 31
    %v2469 = vsub.s32 32, %v2468
    %v2470 = vshrl.u32 683565275, %v2469
    %v2471 = vshll.u32 683565275, %v2468
    %v2472 = vshrl.u32 2475754826, %v2469
    %v2473 = vor.u32 %v2471, %v2472
    %v2474 = vshll.u32 2475754826, %v2468
    %v2475 = vshrl.u32 2131351028, %v2469
    %v2476 = vor.u32 %v2474, %v2475
    %v2477 = vshll.u32 2131351028, %v2468
    %v2478 = vshrl.u32 2102212464, %v2469
    %v2479 = vor.u32 %v2477, %v2478
    %v2480 = vshll.u32 2102212464, %v2468
    %v2481 = vshrl.u32 920167782, %v2469
    %v2482 = vor.u32 %v2480, %v2481
    %v2483 = vshll.u32 920167782, %v2468
    %v2484 = vshrl.u32 1326507024, %v2469
    %v2485 = vor.u32 %v2483, %v2484
    %vm2486 = vcmp.lt.s32.totalorder %v2467, 1
    %vm2487 = vcmp.lt.s32.totalorder %v2467, 2
    %vm2488 = vcmp.lt.s32.totalorder %v2467, 3
    %vm2489 = vcmp.lt.s32.totalorder %v2467, 4
    %v2490 = vsel %vm2486, %v2470, %v2473
    %v2491 = vsel %vm2489, %v2479, 2102212464
    %v2492 = vsel %vm2488, %v2476, %v2491
    %v2493 = vsel %vm2487, %v2490, %v2492
    %v2494 = vsel %vm2486, %v2473, %v2476
    %v2495 = vsel %vm2489, %v2482, 920167782
    %v2496 = vsel %vm2488, %v2479, %v2495
    %v2497 = vsel %vm2487, %v2494, %v2496
    %v2498 = vsel %vm2486, %v2476, %v2479
    %v2499 = vsel %vm2489, %v2485, 1326507024
    %v2500 = vsel %vm2488, %v2482, %v2499
    %v2501 = vsel %vm2487, %v2498, %v2500
    %v2502 = vshll.u32 %v2462, 8
    %v2503 = vand.u32 %v2502, 65535
    %v2504 = vshrl.u32 %v2502, 16
    %v2505 = vand.u32 %v2501, 65535
    %v2506 = vshrl.u32 %v2501, 16
    %v2507 = vmul.u32 %v2503, %v2505
    %v2508 = vmul.u32 %v2503, %v2506
    %v2509 = vmul.u32 %v2504, %v2505
    %v2510 = vmul.u32 %v2504, %v2506
    %v2511 = vshll.u32 %v2508, 16
    %v2512 = vshrl.u32 %v2508, 16
    %v2513 = vshll.u32 %v2509, 16
    %v2514 = vshrl.u32 %v2509, 16
    %vm2515 = vc.u32 %v2507, %v2511
    %v2516 = vsel %vm2515, 1, 0
    %v2517 = vadd.s32 %v2507, %v2511
    %v2518 = vadd.s32 %v2510, %v2516
    %vm2519 = vc.u32 %v2517, %v2513
    %v2520 = vsel %vm2519, 1, 0
    %v2521 = vadd.s32 %v2517, %v2513
    %v2522 = vadd.s32 %v2518, %v2520
    %v2523 = vadd.s32 %v2522, %v2512
    %v2524 = vadd.s32 %v2523, %v2514
    %v2525 = vand.u32 %v2502, 65535
    %v2526 = vshrl.u32 %v2502, 16
    %v2527 = vand.u32 %v2497, 65535
    %v2528 = vshrl.u32 %v2497, 16
    %v2529 = vmul.u32 %v2525, %v2527
    %v2530 = vmul.u32 %v2525, %v2528
    %v2531 = vmul.u32 %v2526, %v2527
    %v2532 = vmul.u32 %v2526, %v2528
    %v2533 = vshll.u32 %v2530, 16
    %v2534 = vshrl.u32 %v2530, 16
    %v2535 = vshll.u32 %v2531, 16
    %v2536 = vshrl.u32 %v2531, 16
    %vm2537 = vc.u32 %v2529, %v2533
    %v2538 = vsel %vm2537, 1, 0
    %v2539 = vadd.s32 %v2529, %v2533
    %v2540 = vadd.s32 %v2532, %v2538
    %vm2541 = vc.u32 %v2539, %v2535
    %v2542 = vsel %vm2541, 1, 0
    %v2543 = vadd.s32 %v2539, %v2535
    %v2544 = vadd.s32 %v2540, %v2542
    %v2545 = vadd.s32 %v2544, %v2534
    %v2546 = vadd.s32 %v2545, %v2536
    %v2547 = vmul.u32 %v2502, %v2493
    %v2548 = vadd.s32 %v2524, %v2543
    %vm2549 = vc.u32 %v2524, %v2543
    %v2550 = vadd.s32 %v2546, 1
    %v2551 = vsel %vm2549, %v2550, %v2546
    %v2552 = vadd.s32 %v2547, %v2551
    %v2553 = vadd.s32 %v2552, 536870912
    %v2554 = vshrl.u32 %v2553, 30
    %v2555 = vshll.u32 %v2554, 30
    %v2556 = vsub.s32 %v2552, %v2555
    %vm2557 = vcmp.lt.s32.totalorder %v2556, 0
    %v2558 = vsub.s32 0, %v2556
    %v2559 = vsel %vm2557, %v2558, %v2556
    %v2560 = vclz %v2559
    %v2561 = vsub.s32 %v2560, 2
    %vm2562 = vcmp.gt.s32.totalorder 0, %v2561
    %v2563 = vsel %vm2562, 0, %v2561
    %v2564 = vsub.s32 32, %v2563
    %v2565 = vshll.u32 %v2556, %v2563
    %v2566 = vshrl.u32 %v2548, %v2564
    %v2567 = vor.u32 %v2565, %v2566
    %v2568 = vsub.s32 4294967266, %v2563
    %v2569 = vadd.s32 %v2568, 127
    %v2570 = vshll.u32 %v2569, 23
    %v2571 = vor.u32 4788187, %v2570
    %v2572 = vand.u32 2147483647, %v2571
    %v2574 = vcvt.s32.f32 %v2567
    %v2575 = vmul.f32 %v2574, %v2572
    %v2576 = vxor.u32 %v2575, 2147483648
    %v2577 = vsel %vm2456, %v2576, %v2575
    %v2578 = vsub.s32 4, %v2554
    %v2579 = vsel %vm2456, %v2578, %v2554
    %v2580 = vsel %vm2455, %v2299, %v2577
    %v2581 = vsel %vm2455, 0, %v2579
    %v2582 = vmul.f32 %v2580, %v2580
    %v2583 = vmul.f32 %v2582, -0.001358992
    %v2584 = vadd.f32 %v2583, 0.041655596
    %v2585 = vmul.f32 %v2582, %v2584
    %v2586 = vadd.f32 %v2585, -0.4999988
    %v2587 = vmul.f32 %v2582, %v2586
    %v2588 = vadd.f32 1.0, %v2587
    %v2589 = vmul.f32 %v2580, %v2580
    %v2590 = vmul.f32 %v2589, -0.00019511016
    %v2591 = vadd.f32 %v2590, 0.008332121
    %v2592 = vmul.f32 %v2589, %v2591
    %v2593 = vadd.f32 %v2592, -0.16666654
    %v2594 = vmul.f32 %v2589, %v2593
    %v2595 = vadd.f32 %v2594, 1.0
    %v2596 = vmul.f32 %v2595, %v2580
    %vm2597 = vweird.f32 %v2299
    %v2598 = vand.u32 %v2581, 3
    %vm2599 = vcmp.lt.s32.totalorder %v2598, 2
    %vm2600 = vcmp.eq.s32.totalorder %v2598, 0
    %v2601 = vxor.u32 %v2596, 2147483648
    %v2602 = vsel %vm2600, %v2588, %v2601
    %vm2603 = vcmp.eq.s32.totalorder %v2598, 2
    %v2604 = vxor.u32 %v2588, 2147483648
    %v2605 = vsel %vm2603, %v2604, %v2596
    %v2606 = vsel %vm2599, %v2602, %v2605
    %v2607 = vsel %vm2597, nan, %v2606
    %v2608 = vmul.f32 %v682, %v2453
    %v2609 = vmul.f32 %v682, %v2607
    %v2610 = vmul.f32 %v685, %v2298
    %v2611 = vmul.f32 %v685, %v2299
    %v2612 = vadd.f32 %v2608, %v2610
    %v2613 = vadd.f32 %v2609, %v2611
    %v2614 = vsub.f32 %v2294, %v2612
    %v2615 = vsub.f32 %v2295, %v2613
    %v2616 = vmul.f32 %v369, %v2614
    %v2617 = vmul.f32 %v369, %v2615
    %v2618 = vadd.f32 %v2298, %v2616
    %v2619 = vadd.f32 %v2299, %v2617
    %v2620 = vand.u32 2147483647, %v2618
    %vm2621 = vcmp.le.f32.partialorder %v2620, 0.7853982
    %vm2622 = vcmp.lt.s32.totalorder %v2618, 0
    %v2623 = vand.u32 %v2618, 2139095040
    %v2624 = vshrl.u32 %v2623, 23
    %v2625 = vsub.s32 %v2624, 127
    %v2626 = vand.u32 2147483647, %v2618
    %v2627 = vand.u32 %v2626, 8388607
    %v2628 = vor.u32 %v2627, 8388608
    %v2629 = vsub.s32 0, %v2628
    %v2630 = vadd.s32 %v2625, 1
    %vm2631 = vcmp.gt.s32.totalorder %v2630, 0
    %v2632 = vsel %vm2631, %v2630, 0
    %v2633 = vshrl.u32 %v2632, 5
    %v2634 = vand.u32 %v2632, 31
    %v2635 = vsub.s32 32, %v2634
    %v2636 = vshrl.u32 683565275, %v2635
    %v2637 = vshll.u32 683565275, %v2634
    %v2638 = vshrl.u32 2475754826, %v2635
    %v2639 = vor.u32 %v2637, %v2638
    %v2640 = vshll.u32 2475754826, %v2634
    %v2641 = vshrl.u32 2131351028, %v2635
    %v2642 = vor.u32 %v2640, %v2641
    %v2643 = vshll.u32 2131351028, %v2634
    %v2644 = vshrl.u32 2102212464, %v2635
    %v2645 = vor.u32 %v2643, %v2644
    %v2646 = vshll.u32 2102212464, %v2634
    %v2647 = vshrl.u32 920167782, %v2635
    %v2648 = vor.u32 %v2646, %v2647
    %v2649 = vshll.u32 920167782, %v2634
    %v2650 = vshrl.u32 1326507024, %v2635
    %v2651 = vor.u32 %v2649, %v2650
    %vm2652 = vcmp.lt.s32.totalorder %v2633, 1
    %vm2653 = vcmp.lt.s32.totalorder %v2633, 2
    %vm2654 = vcmp.lt.s32.totalorder %v2633, 3
    %vm2655 = vcmp.lt.s32.totalorder %v2633, 4
    %v2656 = vsel %vm2652, %v2636, %v2639
    %v2657 = vsel %vm2655, %v2645, 2102212464
    %v2658 = vsel %vm2654, %v2642, %v2657
    %v2659 = vsel %vm2653, %v2656, %v2658
    %v2660 = vsel %vm2652, %v2639, %v2642
    %v2661 = vsel %vm2655, %v2648, 920167782
    %v2662 = vsel %vm2654, %v2645, %v2661
    %v2663 = vsel %vm2653, %v2660, %v2662
    %v2664 = vsel %vm2652, %v2642, %v2645
    %v2665 = vsel %vm2655, %v2651, 1326507024
    %v2666 = vsel %vm2654, %v2648, %v2665
    %v2667 = vsel %vm2653, %v2664, %v2666
    %v2668 = vshll.u32 %v2628, 8
    %v2669 = vand.u32 %v2668, 65535
    %v2670 = vshrl.u32 %v2668, 16
    %v2671 = vand.u32 %v2667, 65535
    %v2672 = vshrl.u32 %v2667, 16
    %v2673 = vmul.u32 %v2669, %v2671
    %v2674 = vmul.u32 %v2669, %v2672
    %v2675 = vmul.u32 %v2670, %v2671
    %v2676 = vmul.u32 %v2670, %v2672
    %v2677 = vshll.u32 %v2674, 16
    %v2678 = vshrl.u32 %v2674, 16
    %v2679 = vshll.u32 %v2675, 16
    %v2680 = vshrl.u32 %v2675, 16
    %vm2681 = vc.u32 %v2673, %v2677
    %v2682 = vsel %vm2681, 1, 0
    %v2683 = vadd.s32 %v2673, %v2677
    %v2684 = vadd.s32 %v2676, %v2682
    %vm2685 = vc.u32 %v2683, %v2679
    %v2686 = vsel %vm2685, 1, 0
    %v2687 = vadd.s32 %v2683, %v2679
    %v2688 = vadd.s32 %v2684, %v2686
    %v2689 = vadd.s32 %v2688, %v2678
    %v2690 = vadd.s32 %v2689, %v2680
    %v2691 = vand.u32 %v2668, 65535
    %v2692 = vshrl.u32 %v2668, 16
    %v2693 = vand.u32 %v2663, 65535
    %v2694 = vshrl.u32 %v2663, 16
    %v2695 = vmul.u32 %v2691, %v2693
    %v2696 = vmul.u32 %v2691, %v2694
    %v2697 = vmul.u32 %v2692, %v2693
    %v2698 = vmul.u32 %v2692, %v2694
    %v2699 = vshll.u32 %v2696, 16
    %v2700 = vshrl.u32 %v2696, 16
    %v2701 = vshll.u32 %v2697, 16
    %v2702 = vshrl.u32 %v2697, 16
    %vm2703 = vc.u32 %v2695, %v2699
    %v2704 = vsel %vm2703, 1, 0
    %v2705 = vadd.s32 %v2695, %v2699
    %v2706 = vadd.s32 %v2698, %v2704
    %vm2707 = vc.u32 %v2705, %v2701
    %v2708 = vsel %vm2707, 1, 0
    %v2709 = vadd.s32 %v2705, %v2701
    %v2710 = vadd.s32 %v2706, %v2708
    %v2711 = vadd.s32 %v2710, %v2700
    %v2712 = vadd.s32 %v2711, %v2702
    %v2713 = vmul.u32 %v2668, %v2659
    %v2714 = vadd.s32 %v2690, %v2709
    %vm2715 = vc.u32 %v2690, %v2709
    %v2716 = vadd.s32 %v2712, 1
    %v2717 = vsel %vm2715, %v2716, %v2712
    %v2718 = vadd.s32 %v2713, %v2717
    %v2719 = vadd.s32 %v2718, 536870912
    %v2720 = vshrl.u32 %v2719, 30
    %v2721 = vshll.u32 %v2720, 30
    %v2722 = vsub.s32 %v2718, %v2721
    %vm2723 = vcmp.lt.s32.totalorder %v2722, 0
    %v2724 = vsub.s32 0, %v2722
    %v2725 = vsel %vm2723, %v2724, %v2722
    %v2726 = vclz %v2725
    %v2727 = vsub.s32 %v2726, 2
    %vm2728 = vcmp.gt.s32.totalorder 0, %v2727
    %v2729 = vsel %vm2728, 0, %v2727
    %v2730 = vsub.s32 32, %v2729
    %v2731 = vshll.u32 %v2722, %v2729
    %v2732 = vshrl.u32 %v2714, %v2730
    %v2733 = vor.u32 %v2731, %v2732
    %v2734 = vsub.s32 4294967266, %v2729
    %v2735 = vadd.s32 %v2734, 127
    %v2736 = vshll.u32 %v2735, 23
    %v2737 = vor.u32 4788187, %v2736
    %v2738 = vand.u32 2147483647, %v2737
    %v2740 = vcvt.s32.f32 %v2733
    %v2741 = vmul.f32 %v2740, %v2738
    %v2742 = vxor.u32 %v2741, 2147483648
    %v2743 = vsel %vm2622, %v2742, %v2741
    %v2744 = vsub.s32 4, %v2720
    %v2745 = vsel %vm2622, %v2744, %v2720
    %v2746 = vsel %vm2621, %v2618, %v2743
    %v2747 = vsel %vm2621, 0, %v2745
    %v2748 = vmul.f32 %v2746, %v2746
    %v2749 = vmul.f32 %v2748, -0.001358992
    %v2750 = vadd.f32 %v2749, 0.041655596
    %v2751 = vmul.f32 %v2748, %v2750
    %v2752 = vadd.f32 %v2751, -0.4999988
    %v2753 = vmul.f32 %v2748, %v2752
    %v2754 = vadd.f32 1.0, %v2753
    %v2755 = vmul.f32 %v2746, %v2746
    %v2756 = vmul.f32 %v2755, -0.00019511016
    %v2757 = vadd.f32 %v2756, 0.008332121
    %v2758 = vmul.f32 %v2755, %v2757
    %v2759 = vadd.f32 %v2758, -0.16666654
    %v2760 = vmul.f32 %v2755, %v2759
    %v2761 = vadd.f32 %v2760, 1.0
    %v2762 = vmul.f32 %v2761, %v2746
    %vm2763 = vweird.f32 %v2618
    %v2764 = vand.u32 %v2747, 3
    %vm2765 = vcmp.lt.s32.totalorder %v2764, 2
    %vm2766 = vcmp.eq.s32.totalorder %v2764, 0
    %v2767 = vxor.u32 %v2762, 2147483648
    %v2768 = vsel %vm2766, %v2754, %v2767
    %vm2769 = vcmp.eq.s32.totalorder %v2764, 2
    %v2770 = vxor.u32 %v2754, 2147483648
    %v2771 = vsel %vm2769, %v2770, %v2762
    %v2772 = vsel %vm2765, %v2768, %v2771
    %v2773 = vsel %vm2763, nan, %v2772
    %v2774 = vand.u32 2147483647, %v2619
    %vm2775 = vcmp.le.f32.partialorder %v2774, 0.7853982
    %vm2776 = vcmp.lt.s32.totalorder %v2619, 0
    %v2777 = vand.u32 %v2619, 2139095040
    %v2778 = vshrl.u32 %v2777, 23
    %v2779 = vsub.s32 %v2778, 127
    %v2780 = vand.u32 2147483647, %v2619
    %v2781 = vand.u32 %v2780, 8388607
    %v2782 = vor.u32 %v2781, 8388608
    %v2783 = vsub.s32 0, %v2782
    %v2784 = vadd.s32 %v2779, 1
    %vm2785 = vcmp.gt.s32.totalorder %v2784, 0
    %v2786 = vsel %vm2785, %v2784, 0
    %v2787 = vshrl.u32 %v2786, 5
    %v2788 = vand.u32 %v2786, 31
    %v2789 = vsub.s32 32, %v2788
    %v2790 = vshrl.u32 683565275, %v2789
    %v2791 = vshll.u32 683565275, %v2788
    %v2792 = vshrl.u32 2475754826, %v2789
    %v2793 = vor.u32 %v2791, %v2792
    %v2794 = vshll.u32 2475754826, %v2788
    %v2795 = vshrl.u32 2131351028, %v2789
    %v2796 = vor.u32 %v2794, %v2795
    %v2797 = vshll.u32 2131351028, %v2788
    %v2798 = vshrl.u32 2102212464, %v2789
    %v2799 = vor.u32 %v2797, %v2798
    %v2800 = vshll.u32 2102212464, %v2788
    %v2801 = vshrl.u32 920167782, %v2789
    %v2802 = vor.u32 %v2800, %v2801
    %v2803 = vshll.u32 920167782, %v2788
    %v2804 = vshrl.u32 1326507024, %v2789
    %v2805 = vor.u32 %v2803, %v2804
    %vm2806 = vcmp.lt.s32.totalorder %v2787, 1
    %vm2807 = vcmp.lt.s32.totalorder %v2787, 2
    %vm2808 = vcmp.lt.s32.totalorder %v2787, 3
    %vm2809 = vcmp.lt.s32.totalorder %v2787, 4
    %v2810 = vsel %vm2806, %v2790, %v2793
    %v2811 = vsel %vm2809, %v2799, 2102212464
    %v2812 = vsel %vm2808, %v2796, %v2811
    %v2813 = vsel %vm2807, %v2810, %v2812
    %v2814 = vsel %vm2806, %v2793, %v2796
    %v2815 = vsel %vm2809, %v2802, 920167782
    %v2816 = vsel %vm2808, %v2799, %v2815
    %v2817 = vsel %vm2807, %v2814, %v2816
    %v2818 = vsel %vm2806, %v2796, %v2799
    %v2819 = vsel %vm2809, %v2805, 1326507024
    %v2820 = vsel %vm2808, %v2802, %v2819
    %v2821 = vsel %vm2807, %v2818, %v2820
    %v2822 = vshll.u32 %v2782, 8
    %v2823 = vand.u32 %v2822, 65535
    %v2824 = vshrl.u32 %v2822, 16
    %v2825 = vand.u32 %v2821, 65535
    %v2826 = vshrl.u32 %v2821, 16
    %v2827 = vmul.u32 %v2823, %v2825
    %v2828 = vmul.u32 %v2823, %v2826
    %v2829 = vmul.u32 %v2824, %v2825
    %v2830 = vmul.u32 %v2824, %v2826
    %v2831 = vshll.u32 %v2828, 16
    %v2832 = vshrl.u32 %v2828, 16
    %v2833 = vshll.u32 %v2829, 16
    %v2834 = vshrl.u32 %v2829, 16
    %vm2835 = vc.u32 %v2827, %v2831
    %v2836 = vsel %vm2835, 1, 0
    %v2837 = vadd.s32 %v2827, %v2831
    %v2838 = vadd.s32 %v2830, %v2836
    %vm2839 = vc.u32 %v2837, %v2833
    %v2840 = vsel %vm2839, 1, 0
    %v2841 = vadd.s32 %v2837, %v2833
    %v2842 = vadd.s32 %v2838, %v2840
    %v2843 = vadd.s32 %v2842, %v2832
    %v2844 = vadd.s32 %v2843, %v2834
    %v2845 = vand.u32 %v2822, 65535
    %v2846 = vshrl.u32 %v2822, 16
    %v2847 = vand.u32 %v2817, 65535
    %v2848 = vshrl.u32 %v2817, 16
    %v2849 = vmul.u32 %v2845, %v2847
    %v2850 = vmul.u32 %v2845, %v2848
    %v2851 = vmul.u32 %v2846, %v2847
    %v2852 = vmul.u32 %v2846, %v2848
    %v2853 = vshll.u32 %v2850, 16
    %v2854 = vshrl.u32 %v2850, 16
    %v2855 = vshll.u32 %v2851, 16
    %v2856 = vshrl.u32 %v2851, 16
    %vm2857 = vc.u32 %v2849, %v2853
    %v2858 = vsel %vm2857, 1, 0
    %v2859 = vadd.s32 %v2849, %v2853
    %v2860 = vadd.s32 %v2852, %v2858
    %vm2861 = vc.u32 %v2859, %v2855
    %v2862 = vsel %vm2861, 1, 0
    %v2863 = vadd.s32 %v2859, %v2855
    %v2864 = vadd.s32 %v2860, %v2862
    %v2865 = vadd.s32 %v2864, %v2854
    %v2866 = vadd.s32 %v2865, %v2856
    %v2867 = vmul.u32 %v2822, %v2813
    %v2868 = vadd.s32 %v2844, %v2863
    %vm2869 = vc.u32 %v2844, %v2863
    %v2870 = vadd.s32 %v2866, 1
    %v2871 = vsel %vm2869, %v2870, %v2866
    %v2872 = vadd.s32 %v2867, %v2871
    %v2873 = vadd.s32 %v2872, 536870912
    %v2874 = vshrl.u32 %v2873, 30
    %v2875 = vshll.u32 %v2874, 30
    %v2876 = vsub.s32 %v2872, %v2875
    %vm2877 = vcmp.lt.s32.totalorder %v2876, 0
    %v2878 = vsub.s32 0, %v2876
    %v2879 = vsel %vm2877, %v2878, %v2876
    %v2880 = vclz %v2879
    %v2881 = vsub.s32 %v2880, 2
    %vm2882 = vcmp.gt.s32.totalorder 0, %v2881
    %v2883 = vsel %vm2882, 0, %v2881
    %v2884 = vsub.s32 32, %v2883
    %v2885 = vshll.u32 %v2876, %v2883
    %v2886 = vshrl.u32 %v2868, %v2884
    %v2887 = vor.u32 %v2885, %v2886
    %v2888 = vsub.s32 4294967266, %v2883
    %v2889 = vadd.s32 %v2888, 127
    %v2890 = vshll.u32 %v2889, 23
    %v2891 = vor.u32 4788187, %v2890
    %v2892 = vand.u32 2147483647, %v2891
    %v2894 = vcvt.s32.f32 %v2887
    %v2895 = vmul.f32 %v2894, %v2892
    %v2896 = vxor.u32 %v2895, 2147483648
    %v2897 = vsel %vm2776, %v2896, %v2895
    %v2898 = vsub.s32 4, %v2874
    %v2899 = vsel %vm2776, %v2898, %v2874
    %v2900 = vsel %vm2775, %v2619, %v2897
    %v2901 = vsel %vm2775, 0, %v2899
    %v2902 = vmul.f32 %v2900, %v2900
    %v2903 = vmul.f32 %v2902, -0.001358992
    %v2904 = vadd.f32 %v2903, 0.041655596
    %v2905 = vmul.f32 %v2902, %v2904
    %v2906 = vadd.f32 %v2905, -0.4999988
    %v2907 = vmul.f32 %v2902, %v2906
    %v2908 = vadd.f32 1.0, %v2907
    %v2909 = vmul.f32 %v2900, %v2900
    %v2910 = vmul.f32 %v2909, -0.00019511016
    %v2911 = vadd.f32 %v2910, 0.008332121
    %v2912 = vmul.f32 %v2909, %v2911
    %v2913 = vadd.f32 %v2912, -0.16666654
    %v2914 = vmul.f32 %v2909, %v2913
    %v2915 = vadd.f32 %v2914, 1.0
    %v2916 = vmul.f32 %v2915, %v2900
    %vm2917 = vweird.f32 %v2619
    %v2918 = vand.u32 %v2901, 3
    %vm2919 = vcmp.lt.s32.totalorder %v2918, 2
    %vm2920 = vcmp.eq.s32.totalorder %v2918, 0
    %v2921 = vxor.u32 %v2916, 2147483648
    %v2922 = vsel %vm2920, %v2908, %v2921
    %vm2923 = vcmp.eq.s32.totalorder %v2918, 2
    %v2924 = vxor.u32 %v2908, 2147483648
    %v2925 = vsel %vm2923, %v2924, %v2916
    %v2926 = vsel %vm2919, %v2922, %v2925
    %v2927 = vsel %vm2917, nan, %v2926
    %v2928 = vmul.f32 %v359, %v2773
    %v2929 = vmul.f32 %v359, %v2927
    %v2930 = vmul.f32 %v362, %v2618
    %v2931 = vmul.f32 %v362, %v2619
    %v2932 = vadd.f32 %v2928, %v2930
    %v2933 = vadd.f32 %v2929, %v2931
    %v2934 = vsub.f32 %v2614, %v2932
    %v2935 = vsub.f32 %v2615, %v2933
    %v2936 = vmul.f32 %v46, %v2934
    %v2937 = vmul.f32 %v46, %v2935
    %v2938 = vadd.f32 %v2618, %v2936
    %v2939 = vadd.f32 %v2619, %v2937
    %v2940 = vadd.f32 %v2938, %v2936
    %v2941 = vadd.f32 %v2939, %v2937
    %v2942 = vand.u32 2147483647, %v2940
    %vm2943 = vcmp.le.f32.partialorder %v2942, 0.7853982
    %vm2944 = vcmp.lt.s32.totalorder %v2940, 0
    %v2945 = vand.u32 %v2940, 2139095040
    %v2946 = vshrl.u32 %v2945, 23
    %v2947 = vsub.s32 %v2946, 127
    %v2948 = vand.u32 2147483647, %v2940
    %v2949 = vand.u32 %v2948, 8388607
    %v2950 = vor.u32 %v2949, 8388608
    %v2951 = vsub.s32 0, %v2950
    %v2952 = vadd.s32 %v2947, 1
    %vm2953 = vcmp.gt.s32.totalorder %v2952, 0
    %v2954 = vsel %vm2953, %v2952, 0
    %v2955 = vshrl.u32 %v2954, 5
    %v2956 = vand.u32 %v2954, 31
    %v2957 = vsub.s32 32, %v2956
    %v2958 = vshrl.u32 683565275, %v2957
    %v2959 = vshll.u32 683565275, %v2956
    %v2960 = vshrl.u32 2475754826, %v2957
    %v2961 = vor.u32 %v2959, %v2960
    %v2962 = vshll.u32 2475754826, %v2956
    %v2963 = vshrl.u32 2131351028, %v2957
    %v2964 = vor.u32 %v2962, %v2963
    %v2965 = vshll.u32 2131351028, %v2956
    %v2966 = vshrl.u32 2102212464, %v2957
    %v2967 = vor.u32 %v2965, %v2966
    %v2968 = vshll.u32 2102212464, %v2956
    %v2969 = vshrl.u32 920167782, %v2957
    %v2970 = vor.u32 %v2968, %v2969
    %v2971 = vshll.u32 920167782, %v2956
    %v2972 = vshrl.u32 1326507024, %v2957
    %v2973 = vor.u32 %v2971, %v2972
    %vm2974 = vcmp.lt.s32.totalorder %v2955, 1
    %vm2975 = vcmp.lt.s32.totalorder %v2955, 2
    %vm2976 = vcmp.lt.s32.totalorder %v2955, 3
    %vm2977 = vcmp.lt.s32.totalorder %v2955, 4
    %v2978 = vsel %vm2974, %v2958, %v2961
    %v2979 = vsel %vm2977, %v2967, 2102212464
    %v2980 = vsel %vm2976, %v2964, %v2979
    %v2981 = vsel %vm2975, %v2978, %v2980
    %v2982 = vsel %vm2974, %v2961, %v2964
    %v2983 = vsel %vm2977, %v2970, 920167782
    %v2984 = vsel %vm2976, %v2967, %v2983
    %v2985 = vsel %vm2975, %v2982, %v2984
    %v2986 = vsel %vm2974, %v2964, %v2967
    %v2987 = vsel %vm2977, %v2973, 1326507024
    %v2988 = vsel %vm2976, %v2970, %v2987
    %v2989 = vsel %vm2975, %v2986, %v2988
    %v2990 = vshll.u32 %v2950, 8
    %v2991 = vand.u32 %v2990, 65535
    %v2992 = vshrl.u32 %v2990, 16
    %v2993 = vand.u32 %v2989, 65535
    %v2994 = vshrl.u32 %v2989, 16
    %v2995 = vmul.u32 %v2991, %v2993
    %v2996 = vmul.u32 %v2991, %v2994
    %v2997 = vmul.u32 %v2992, %v2993
    %v2998 = vmul.u32 %v2992, %v2994
    %v2999 = vshll.u32 %v2996, 16
    %v3000 = vshrl.u32 %v2996, 16
    %v3001 = vshll.u32 %v2997, 16
    %v3002 = vshrl.u32 %v2997, 16
    %vm3003 = vc.u32 %v2995, %v2999
    %v3004 = vsel %vm3003, 1, 0
    %v3005 = vadd.s32 %v2995, %v2999
    %v3006 = vadd.s32 %v2998, %v3004
    %vm3007 = vc.u32 %v3005, %v3001
    %v3008 = vsel %vm3007, 1, 0
    %v3009 = vadd.s32 %v3005, %v3001
    %v3010 = vadd.s32 %v3006, %v3008
    %v3011 = vadd.s32 %v3010, %v3000
    %v3012 = vadd.s32 %v3011, %v3002
    %v3013 = vand.u32 %v2990, 65535
    %v3014 = vshrl.u32 %v2990, 16
    %v3015 = vand.u32 %v2985, 65535
    %v3016 = vshrl.u32 %v2985, 16
    %v3017 = vmul.u32 %v3013, %v3015
    %v3018 = vmul.u32 %v3013, %v3016
    %v3019 = vmul.u32 %v3014, %v3015
    %v3020 = vmul.u32 %v3014, %v3016
    %v3021 = vshll.u32 %v3018, 16
    %v3022 = vshrl.u32 %v3018, 16
    %v3023 = vshll.u32 %v3019, 16
    %v3024 = vshrl.u32 %v3019, 16
    %vm3025 = vc.u32 %v3017, %v3021
    %v3026 = vsel %vm3025, 1, 0
    %v3027 = vadd.s32 %v3017, %v3021
    %v3028 = vadd.s32 %v3020, %v3026
    %vm3029 = vc.u32 %v3027, %v3023
    %v3030 = vsel %vm3029, 1, 0
    %v3031 = vadd.s32 %v3027, %v3023
    %v3032 = vadd.s32 %v3028, %v3030
    %v3033 = vadd.s32 %v3032, %v3022
    %v3034 = vadd.s32 %v3033, %v3024
    %v3035 = vmul.u32 %v2990, %v2981
    %v3036 = vadd.s32 %v3012, %v3031
    %vm3037 = vc.u32 %v3012, %v3031
    %v3038 = vadd.s32 %v3034, 1
    %v3039 = vsel %vm3037, %v3038, %v3034
    %v3040 = vadd.s32 %v3035, %v3039
    %v3041 = vadd.s32 %v3040, 536870912
    %v3042 = vshrl.u32 %v3041, 30
    %v3043 = vshll.u32 %v3042, 30
    %v3044 = vsub.s32 %v3040, %v3043
    %vm3045 = vcmp.lt.s32.totalorder %v3044, 0
    %v3046 = vsub.s32 0, %v3044
    %v3047 = vsel %vm3045, %v3046, %v3044
    %v3048 = vclz %v3047
    %v3049 = vsub.s32 %v3048, 2
    %vm3050 = vcmp.gt.s32.totalorder 0, %v3049
    %v3051 = vsel %vm3050, 0, %v3049
    %v3052 = vsub.s32 32, %v3051
    %v3053 = vshll.u32 %v3044, %v3051
    %v3054 = vshrl.u32 %v3036, %v3052
    %v3055 = vor.u32 %v3053, %v3054
    %v3056 = vsub.s32 4294967266, %v3051
    %v3057 = vadd.s32 %v3056, 127
    %v3058 = vshll.u32 %v3057, 23
    %v3059 = vor.u32 4788187, %v3058
    %v3060 = vand.u32 2147483647, %v3059
    %v3062 = vcvt.s32.f32 %v3055
    %v3063 = vmul.f32 %v3062, %v3060
    %v3064 = vxor.u32 %v3063, 2147483648
    %v3065 = vsel %vm2944, %v3064, %v3063
    %v3066 = vsub.s32 4, %v3042
    %v3067 = vsel %vm2944, %v3066, %v3042
    %v3068 = vsel %vm2943, %v2940, %v3065
    %v3069 = vsel %vm2943, 0, %v3067
    %v3070 = vmul.f32 %v3068, %v3068
    %v3071 = vmul.f32 %v3070, -0.001358992
    %v3072 = vadd.f32 %v3071, 0.041655596
    %v3073 = vmul.f32 %v3070, %v3072
    %v3074 = vadd.f32 %v3073, -0.4999988
    %v3075 = vmul.f32 %v3070, %v3074
    %v3076 = vadd.f32 1.0, %v3075
    %v3077 = vmul.f32 %v3068, %v3068
    %v3078 = vmul.f32 %v3077, -0.00019511016
    %v3079 = vadd.f32 %v3078, 0.008332121
    %v3080 = vmul.f32 %v3077, %v3079
    %v3081 = vadd.f32 %v3080, -0.16666654
    %v3082 = vmul.f32 %v3077, %v3081
    %v3083 = vadd.f32 %v3082, 1.0
    %v3084 = vmul.f32 %v3083, %v3068
    %vm3085 = vweird.f32 %v2940
    %v3086 = vand.u32 %v3069, 3
    %vm3087 = vcmp.lt.s32.totalorder %v3086, 2
    %vm3088 = vcmp.eq.s32.totalorder %v3086, 0
    %v3089 = vxor.u32 %v3084, 2147483648
    %v3090 = vsel %vm3088, %v3076, %v3089
    %vm3091 = vcmp.eq.s32.totalorder %v3086, 2
    %v3092 = vxor.u32 %v3076, 2147483648
    %v3093 = vsel %vm3091, %v3092, %v3084
    %v3094 = vsel %vm3087, %v3090, %v3093
    %v3095 = vsel %vm3085, nan, %v3094
    %v3096 = vand.u32 2147483647, %v2941
    %vm3097 = vcmp.le.f32.partialorder %v3096, 0.7853982
    %vm3098 = vcmp.lt.s32.totalorder %v2941, 0
    %v3099 = vand.u32 %v2941, 2139095040
    %v3100 = vshrl.u32 %v3099, 23
    %v3101 = vsub.s32 %v3100, 127
    %v3102 = vand.u32 2147483647, %v2941
    %v3103 = vand.u32 %v3102, 8388607
    %v3104 = vor.u32 %v3103, 8388608
    %v3105 = vsub.s32 0, %v3104
    %v3106 = vadd.s32 %v3101, 1
    %vm3107 = vcmp.gt.s32.totalorder %v3106, 0
    %v3108 = vsel %vm3107, %v3106, 0
    %v3109 = vshrl.u32 %v3108, 5
    %v3110 = vand.u32 %v3108, 31
    %v3111 = vsub.s32 32, %v3110
    %v3112 = vshrl.u32 683565275, %v3111
    %v3113 = vshll.u32 683565275, %v3110
    %v3114 = vshrl.u32 2475754826, %v3111
    %v3115 = vor.u32 %v3113, %v3114
    %v3116 = vshll.u32 2475754826, %v3110
    %v3117 = vshrl.u32 2131351028, %v3111
    %v3118 = vor.u32 %v3116, %v3117
    %v3119 = vshll.u32 2131351028, %v3110
    %v3120 = vshrl.u32 2102212464, %v3111
    %v3121 = vor.u32 %v3119, %v3120
    %v3122 = vshll.u32 2102212464, %v3110
    %v3123 = vshrl.u32 920167782, %v3111
    %v3124 = vor.u32 %v3122, %v3123
    %v3125 = vshll.u32 920167782, %v3110
    %v3126 = vshrl.u32 1326507024, %v3111
    %v3127 = vor.u32 %v3125, %v3126
    %vm3128 = vcmp.lt.s32.totalorder %v3109, 1
    %vm3129 = vcmp.lt.s32.totalorder %v3109, 2
    %vm3130 = vcmp.lt.s32.totalorder %v3109, 3
    %vm3131 = vcmp.lt.s32.totalorder %v3109, 4
    %v3132 = vsel %vm3128, %v3112, %v3115
    %v3133 = vsel %vm3131, %v3121, 2102212464
    %v3134 = vsel %vm3130, %v3118, %v3133
    %v3135 = vsel %vm3129, %v3132, %v3134
    %v3136 = vsel %vm3128, %v3115, %v3118
    %v3137 = vsel %vm3131, %v3124, 920167782
    %v3138 = vsel %vm3130, %v3121, %v3137
    %v3139 = vsel %vm3129, %v3136, %v3138
    %v3140 = vsel %vm3128, %v3118, %v3121
    %v3141 = vsel %vm3131, %v3127, 1326507024
    %v3142 = vsel %vm3130, %v3124, %v3141
    %v3143 = vsel %vm3129, %v3140, %v3142
    %v3144 = vshll.u32 %v3104, 8
    %v3145 = vand.u32 %v3144, 65535
    %v3146 = vshrl.u32 %v3144, 16
    %v3147 = vand.u32 %v3143, 65535
    %v3148 = vshrl.u32 %v3143, 16
    %v3149 = vmul.u32 %v3145, %v3147
    %v3150 = vmul.u32 %v3145, %v3148
    %v3151 = vmul.u32 %v3146, %v3147
    %v3152 = vmul.u32 %v3146, %v3148
    %v3153 = vshll.u32 %v3150, 16
    %v3154 = vshrl.u32 %v3150, 16
    %v3155 = vshll.u32 %v3151, 16
    %v3156 = vshrl.u32 %v3151, 16
    %vm3157 = vc.u32 %v3149, %v3153
    %v3158 = vsel %vm3157, 1, 0
    %v3159 = vadd.s32 %v3149, %v3153
    %v3160 = vadd.s32 %v3152, %v3158
    %vm3161 = vc.u32 %v3159, %v3155
    %v3162 = vsel %vm3161, 1, 0
    %v3163 = vadd.s32 %v3159, %v3155
    %v3164 = vadd.s32 %v3160, %v3162
    %v3165 = vadd.s32 %v3164, %v3154
    %v3166 = vadd.s32 %v3165, %v3156
    %v3167 = vand.u32 %v3144, 65535
    %v3168 = vshrl.u32 %v3144, 16
    %v3169 = vand.u32 %v3139, 65535
    %v3170 = vshrl.u32 %v3139, 16
    %v3171 = vmul.u32 %v3167, %v3169
    %v3172 = vmul.u32 %v3167, %v3170
    %v3173 = vmul.u32 %v3168, %v3169
    %v3174 = vmul.u32 %v3168, %v3170
    %v3175 = vshll.u32 %v3172, 16
    %v3176 = vshrl.u32 %v3172, 16
    %v3177 = vshll.u32 %v3173, 16
    %v3178 = vshrl.u32 %v3173, 16
    %vm3179 = vc.u32 %v3171, %v3175
    %v3180 = vsel %vm3179, 1, 0
    %v3181 = vadd.s32 %v3171, %v3175
    %v3182 = vadd.s32 %v3174, %v3180
    %vm3183 = vc.u32 %v3181, %v3177
    %v3184 = vsel %vm3183, 1, 0
    %v3185 = vadd.s32 %v3181, %v3177
    %v3186 = vadd.s32 %v3182, %v3184
    %v3187 = vadd.s32 %v3186, %v3176
    %v3188 = vadd.s32 %v3187, %v3178
    %v3189 = vmul.u32 %v3144, %v3135
    %v3190 = vadd.s32 %v3166, %v3185
    %vm3191 = vc.u32 %v3166, %v3185
    %v3192 = vadd.s32 %v3188, 1
    %v3193 = vsel %vm3191, %v3192, %v3188
    %v3194 = vadd.s32 %v3189, %v3193
    %v3195 = vadd.s32 %v3194, 536870912
    %v3196 = vshrl.u32 %v3195, 30
    %v3197 = vshll.u32 %v3196, 30
    %v3198 = vsub.s32 %v3194, %v3197
    %vm3199 = vcmp.lt.s32.totalorder %v3198, 0
    %v3200 = vsub.s32 0, %v3198
    %v3201 = vsel %vm3199, %v3200, %v3198
    %v3202 = vclz %v3201
    %v3203 = vsub.s32 %v3202, 2
    %vm3204 = vcmp.gt.s32.totalorder 0, %v3203
    %v3205 = vsel %vm3204, 0, %v3203
    %v3206 = vsub.s32 32, %v3205
    %v3207 = vshll.u32 %v3198, %v3205
    %v3208 = vshrl.u32 %v3190, %v3206
    %v3209 = vor.u32 %v3207, %v3208
    %v3210 = vsub.s32 4294967266, %v3205
    %v3211 = vadd.s32 %v3210, 127
    %v3212 = vshll.u32 %v3211, 23
    %v3213 = vor.u32 4788187, %v3212
    %v3214 = vand.u32 2147483647, %v3213
    %v3216 = vcvt.s32.f32 %v3209
    %v3217 = vmul.f32 %v3216, %v3214
    %v3218 = vxor.u32 %v3217, 2147483648
    %v3219 = vsel %vm3098, %v3218, %v3217
    %v3220 = vsub.s32 4, %v3196
    %v3221 = vsel %vm3098, %v3220, %v3196
    %v3222 = vsel %vm3097, %v2941, %v3219
    %v3223 = vsel %vm3097, 0, %v3221
    %v3224 = vmul.f32 %v3222, %v3222
    %v3225 = vmul.f32 %v3224, -0.001358992
    %v3226 = vadd.f32 %v3225, 0.041655596
    %v3227 = vmul.f32 %v3224, %v3226
    %v3228 = vadd.f32 %v3227, -0.4999988
    %v3229 = vmul.f32 %v3224, %v3228
    %v3230 = vadd.f32 1.0, %v3229
    %v3231 = vmul.f32 %v3222, %v3222
    %v3232 = vmul.f32 %v3231, -0.00019511016
    %v3233 = vadd.f32 %v3232, 0.008332121
    %v3234 = vmul.f32 %v3231, %v3233
    %v3235 = vadd.f32 %v3234, -0.16666654
    %v3236 = vmul.f32 %v3231, %v3235
    %v3237 = vadd.f32 %v3236, 1.0
    %v3238 = vmul.f32 %v3237, %v3222
    %vm3239 = vweird.f32 %v2941
    %v3240 = vand.u32 %v3223, 3
    %vm3241 = vcmp.lt.s32.totalorder %v3240, 2
    %vm3242 = vcmp.eq.s32.totalorder %v3240, 0
    %v3243 = vxor.u32 %v3238, 2147483648
    %v3244 = vsel %vm3242, %v3230, %v3243
    %vm3245 = vcmp.eq.s32.totalorder %v3240, 2
    %v3246 = vxor.u32 %v3230, 2147483648
    %v3247 = vsel %vm3245, %v3246, %v3238
    %v3248 = vsel %vm3241, %v3244, %v3247
    %v3249 = vsel %vm3239, nan, %v3248
    %v3250 = vmul.f32 %v359, %v3095
    %v3251 = vmul.f32 %v359, %v3249
    %v3252 = vmul.f32 %v362, %v2940
    %v3253 = vmul.f32 %v362, %v2941
    %v3254 = vadd.f32 %v3250, %v3252
    %v3255 = vadd.f32 %v3251, %v3253
    %v3256 = vsub.f32 %v2934, %v3254
    %v3257 = vsub.f32 %v2935, %v3255
    %v3258 = vmul.f32 %v369, %v3256
    %v3259 = vmul.f32 %v369, %v3257
    %v3260 = vadd.f32 %v2940, %v3258
    %v3261 = vadd.f32 %v2941, %v3259
    %v3262 = vand.u32 2147483647, %v3260
    %vm3263 = vcmp.le.f32.partialorder %v3262, 0.7853982
    %vm3264 = vcmp.lt.s32.totalorder %v3260, 0
    %v3265 = vand.u32 %v3260, 2139095040
    %v3266 = vshrl.u32 %v3265, 23
    %v3267 = vsub.s32 %v3266, 127
    %v3268 = vand.u32 2147483647, %v3260
    %v3269 = vand.u32 %v3268, 8388607
    %v3270 = vor.u32 %v3269, 8388608
    %v3271 = vsub.s32 0, %v3270
    %v3272 = vadd.s32 %v3267, 1
    %vm3273 = vcmp.gt.s32.totalorder %v3272, 0
    %v3274 = vsel %vm3273, %v3272, 0
    %v3275 = vshrl.u32 %v3274, 5
    %v3276 = vand.u32 %v3274, 31
    %v3277 = vsub.s32 32, %v3276
    %v3278 = vshrl.u32 683565275, %v3277
    %v3279 = vshll.u32 683565275, %v3276
    %v3280 = vshrl.u32 2475754826, %v3277
    %v3281 = vor.u32 %v3279, %v3280
    %v3282 = vshll.u32 2475754826, %v3276
    %v3283 = vshrl.u32 2131351028, %v3277
    %v3284 = vor.u32 %v3282, %v3283
    %v3285 = vshll.u32 2131351028, %v3276
    %v3286 = vshrl.u32 2102212464, %v3277
    %v3287 = vor.u32 %v3285, %v3286
    %v3288 = vshll.u32 2102212464, %v3276
    %v3289 = vshrl.u32 920167782, %v3277
    %v3290 = vor.u32 %v3288, %v3289
    %v3291 = vshll.u32 920167782, %v3276
    %v3292 = vshrl.u32 1326507024, %v3277
    %v3293 = vor.u32 %v3291, %v3292
    %vm3294 = vcmp.lt.s32.totalorder %v3275, 1
    %vm3295 = vcmp.lt.s32.totalorder %v3275, 2
    %vm3296 = vcmp.lt.s32.totalorder %v3275, 3
    %vm3297 = vcmp.lt.s32.totalorder %v3275, 4
    %v3298 = vsel %vm3294, %v3278, %v3281
    %v3299 = vsel %vm3297, %v3287, 2102212464
    %v3300 = vsel %vm3296, %v3284, %v3299
    %v3301 = vsel %vm3295, %v3298, %v3300
    %v3302 = vsel %vm3294, %v3281, %v3284
    %v3303 = vsel %vm3297, %v3290, 920167782
    %v3304 = vsel %vm3296, %v3287, %v3303
    %v3305 = vsel %vm3295, %v3302, %v3304
    %v3306 = vsel %vm3294, %v3284, %v3287
    %v3307 = vsel %vm3297, %v3293, 1326507024
    %v3308 = vsel %vm3296, %v3290, %v3307
    %v3309 = vsel %vm3295, %v3306, %v3308
    %v3310 = vshll.u32 %v3270, 8
    %v3311 = vand.u32 %v3310, 65535
    %v3312 = vshrl.u32 %v3310, 16
    %v3313 = vand.u32 %v3309, 65535
    %v3314 = vshrl.u32 %v3309, 16
    %v3315 = vmul.u32 %v3311, %v3313
    %v3316 = vmul.u32 %v3311, %v3314
    %v3317 = vmul.u32 %v3312, %v3313
    %v3318 = vmul.u32 %v3312, %v3314
    %v3319 = vshll.u32 %v3316, 16
    %v3320 = vshrl.u32 %v3316, 16
    %v3321 = vshll.u32 %v3317, 16
    %v3322 = vshrl.u32 %v3317, 16
    %vm3323 = vc.u32 %v3315, %v3319
    %v3324 = vsel %vm3323, 1, 0
    %v3325 = vadd.s32 %v3315, %v3319
    %v3326 = vadd.s32 %v3318, %v3324
    %vm3327 = vc.u32 %v3325, %v3321
    %v3328 = vsel %vm3327, 1, 0
    %v3329 = vadd.s32 %v3325, %v3321
    %v3330 = vadd.s32 %v3326, %v3328
    %v3331 = vadd.s32 %v3330, %v3320
    %v3332 = vadd.s32 %v3331, %v3322
    %v3333 = vand.u32 %v3310, 65535
    %v3334 = vshrl.u32 %v3310, 16
    %v3335 = vand.u32 %v3305, 65535
    %v3336 = vshrl.u32 %v3305, 16
    %v3337 = vmul.u32 %v3333, %v3335
    %v3338 = vmul.u32 %v3333, %v3336
    %v3339 = vmul.u32 %v3334, %v3335
    %v3340 = vmul.u32 %v3334, %v3336
    %v3341 = vshll.u32 %v3338, 16
    %v3342 = vshrl.u32 %v3338, 16
    %v3343 = vshll.u32 %v3339, 16
    %v3344 = vshrl.u32 %v3339, 16
    %vm3345 = vc.u32 %v3337, %v3341
    %v3346 = vsel %vm3345, 1, 0
    %v3347 = vadd.s32 %v3337, %v3341
    %v3348 = vadd.s32 %v3340, %v3346
    %vm3349 = vc.u32 %v3347, %v3343
    %v3350 = vsel %vm3349, 1, 0
    %v3351 = vadd.s32 %v3347, %v3343
    %v3352 = vadd.s32 %v3348, %v3350
    %v3353 = vadd.s32 %v3352, %v3342
    %v3354 = vadd.s32 %v3353, %v3344
    %v3355 = vmul.u32 %v3310, %v3301
    %v3356 = vadd.s32 %v3332, %v3351
    %vm3357 = vc.u32 %v3332, %v3351
    %v3358 = vadd.s32 %v3354, 1
    %v3359 = vsel %vm3357, %v3358, %v3354
    %v3360 = vadd.s32 %v3355, %v3359
    %v3361 = vadd.s32 %v3360, 536870912
    %v3362 = vshrl.u32 %v3361, 30
    %v3363 = vshll.u32 %v3362, 30
    %v3364 = vsub.s32 %v3360, %v3363
    %vm3365 = vcmp.lt.s32.totalorder %v3364, 0
    %v3366 = vsub.s32 0, %v3364
    %v3367 = vsel %vm3365, %v3366, %v3364
    %v3368 = vclz %v3367
    %v3369 = vsub.s32 %v3368, 2
    %vm3370 = vcmp.gt.s32.totalorder 0, %v3369
    %v3371 = vsel %vm3370, 0, %v3369
    %v3372 = vsub.s32 32, %v3371
    %v3373 = vshll.u32 %v3364, %v3371
    %v3374 = vshrl.u32 %v3356, %v3372
    %v3375 = vor.u32 %v3373, %v3374
    %v3376 = vsub.s32 4294967266, %v3371
    %v3377 = vadd.s32 %v3376, 127
    %v3378 = vshll.u32 %v3377, 23
    %v3379 = vor.u32 4788187, %v3378
    %v3380 = vand.u32 2147483647, %v3379
    %v3382 = vcvt.s32.f32 %v3375
    %v3383 = vmul.f32 %v3382, %v3380
    %v3384 = vxor.u32 %v3383, 2147483648
    %v3385 = vsel %vm3264, %v3384, %v3383
    %v3386 = vsub.s32 4, %v3362
    %v3387 = vsel %vm3264, %v3386, %v3362
    %v3388 = vsel %vm3263, %v3260, %v3385
    %v3389 = vsel %vm3263, 0, %v3387
    %v3390 = vmul.f32 %v3388, %v3388
    %v3391 = vmul.f32 %v3390, -0.001358992
    %v3392 = vadd.f32 %v3391, 0.041655596
    %v3393 = vmul.f32 %v3390, %v3392
    %v3394 = vadd.f32 %v3393, -0.4999988
    %v3395 = vmul.f32 %v3390, %v3394
    %v3396 = vadd.f32 1.0, %v3395
    %v3397 = vmul.f32 %v3388, %v3388
    %v3398 = vmul.f32 %v3397, -0.00019511016
    %v3399 = vadd.f32 %v3398, 0.008332121
    %v3400 = vmul.f32 %v3397, %v3399
    %v3401 = vadd.f32 %v3400, -0.16666654
    %v3402 = vmul.f32 %v3397, %v3401
    %v3403 = vadd.f32 %v3402, 1.0
    %v3404 = vmul.f32 %v3403, %v3388
    %vm3405 = vweird.f32 %v3260
    %v3406 = vand.u32 %v3389, 3
    %vm3407 = vcmp.lt.s32.totalorder %v3406, 2
    %vm3408 = vcmp.eq.s32.totalorder %v3406, 0
    %v3409 = vxor.u32 %v3404, 2147483648
    %v3410 = vsel %vm3408, %v3396, %v3409
    %vm3411 = vcmp.eq.s32.totalorder %v3406, 2
    %v3412 = vxor.u32 %v3396, 2147483648
    %v3413 = vsel %vm3411, %v3412, %v3404
    %v3414 = vsel %vm3407, %v3410, %v3413
    %v3415 = vsel %vm3405, nan, %v3414
    %v3416 = vand.u32 2147483647, %v3261
    %vm3417 = vcmp.le.f32.partialorder %v3416, 0.7853982
    %vm3418 = vcmp.lt.s32.totalorder %v3261, 0
    %v3419 = vand.u32 %v3261, 2139095040
    %v3420 = vshrl.u32 %v3419, 23
    %v3421 = vsub.s32 %v3420, 127
    %v3422 = vand.u32 2147483647, %v3261
    %v3423 = vand.u32 %v3422, 8388607
    %v3424 = vor.u32 %v3423, 8388608
    %v3425 = vsub.s32 0, %v3424
    %v3426 = vadd.s32 %v3421, 1
    %vm3427 = vcmp.gt.s32.totalorder %v3426, 0
    %v3428 = vsel %vm3427, %v3426, 0
    %v3429 = vshrl.u32 %v3428, 5
    %v3430 = vand.u32 %v3428, 31
    %v3431 = vsub.s32 32, %v3430
    %v3432 = vshrl.u32 683565275, %v3431
    %v3433 = vshll.u32 683565275, %v3430
    %v3434 = vshrl.u32 2475754826, %v3431
    %v3435 = vor.u32 %v3433, %v3434
    %v3436 = vshll.u32 2475754826, %v3430
    %v3437 = vshrl.u32 2131351028, %v3431
    %v3438 = vor.u32 %v3436, %v3437
    %v3439 = vshll.u32 2131351028, %v3430
    %v3440 = vshrl.u32 2102212464, %v3431
    %v3441 = vor.u32 %v3439, %v3440
    %v3442 = vshll.u32 2102212464, %v3430
    %v3443 = vshrl.u32 920167782, %v3431
    %v3444 = vor.u32 %v3442, %v3443
    %v3445 = vshll.u32 920167782, %v3430
    %v3446 = vshrl.u32 1326507024, %v3431
    %v3447 = vor.u32 %v3445, %v3446
    %vm3448 = vcmp.lt.s32.totalorder %v3429, 1
    %vm3449 = vcmp.lt.s32.totalorder %v3429, 2
    %vm3450 = vcmp.lt.s32.totalorder %v3429, 3
    %vm3451 = vcmp.lt.s32.totalorder %v3429, 4
    %v3452 = vsel %vm3448, %v3432, %v3435
    %v3453 = vsel %vm3451, %v3441, 2102212464
    %v3454 = vsel %vm3450, %v3438, %v3453
    %v3455 = vsel %vm3449, %v3452, %v3454
    %v3456 = vsel %vm3448, %v3435, %v3438
    %v3457 = vsel %vm3451, %v3444, 920167782
    %v3458 = vsel %vm3450, %v3441, %v3457
    %v3459 = vsel %vm3449, %v3456, %v3458
    %v3460 = vsel %vm3448, %v3438, %v3441
    %v3461 = vsel %vm3451, %v3447, 1326507024
    %v3462 = vsel %vm3450, %v3444, %v3461
    %v3463 = vsel %vm3449, %v3460, %v3462
    %v3464 = vshll.u32 %v3424, 8
    %v3465 = vand.u32 %v3464, 65535
    %v3466 = vshrl.u32 %v3464, 16
    %v3467 = vand.u32 %v3463, 65535
    %v3468 = vshrl.u32 %v3463, 16
    %v3469 = vmul.u32 %v3465, %v3467
    %v3470 = vmul.u32 %v3465, %v3468
    %v3471 = vmul.u32 %v3466, %v3467
    %v3472 = vmul.u32 %v3466, %v3468
    %v3473 = vshll.u32 %v3470, 16
    %v3474 = vshrl.u32 %v3470, 16
    %v3475 = vshll.u32 %v3471, 16
    %v3476 = vshrl.u32 %v3471, 16
    %vm3477 = vc.u32 %v3469, %v3473
    %v3478 = vsel %vm3477, 1, 0
    %v3479 = vadd.s32 %v3469, %v3473
    %v3480 = vadd.s32 %v3472, %v3478
    %vm3481 = vc.u32 %v3479, %v3475
    %v3482 = vsel %vm3481, 1, 0
    %v3483 = vadd.s32 %v3479, %v3475
    %v3484 = vadd.s32 %v3480, %v3482
    %v3485 = vadd.s32 %v3484, %v3474
    %v3486 = vadd.s32 %v3485, %v3476
    %v3487 = vand.u32 %v3464, 65535
    %v3488 = vshrl.u32 %v3464, 16
    %v3489 = vand.u32 %v3459, 65535
    %v3490 = vshrl.u32 %v3459, 16
    %v3491 = vmul.u32 %v3487, %v3489
    %v3492 = vmul.u32 %v3487, %v3490
    %v3493 = vmul.u32 %v3488, %v3489
    %v3494 = vmul.u32 %v3488, %v3490
    %v3495 = vshll.u32 %v3492, 16
    %v3496 = vshrl.u32 %v3492, 16
    %v3497 = vshll.u32 %v3493, 16
    %v3498 = vshrl.u32 %v3493, 16
    %vm3499 = vc.u32 %v3491, %v3495
    %v3500 = vsel %vm3499, 1, 0
    %v3501 = vadd.s32 %v3491, %v3495
    %v3502 = vadd.s32 %v3494, %v3500
    %vm3503 = vc.u32 %v3501, %v3497
    %v3504 = vsel %vm3503, 1, 0
    %v3505 = vadd.s32 %v3501, %v3497
    %v3506 = vadd.s32 %v3502, %v3504
    %v3507 = vadd.s32 %v3506, %v3496
    %v3508 = vadd.s32 %v3507, %v3498
    %v3509 = vmul.u32 %v3464, %v3455
    %v3510 = vadd.s32 %v3486, %v3505
    %vm3511 = vc.u32 %v3486, %v3505
    %v3512 = vadd.s32 %v3508, 1
    %v3513 = vsel %vm3511, %v3512, %v3508
    %v3514 = vadd.s32 %v3509, %v3513
    %v3515 = vadd.s32 %v3514, 536870912
    %v3516 = vshrl.u32 %v3515, 30
    %v3517 = vshll.u32 %v3516, 30
    %v3518 = vsub.s32 %v3514, %v3517
    %vm3519 = vcmp.lt.s32.totalorder %v3518, 0
    %v3520 = vsub.s32 0, %v3518
    %v3521 = vsel %vm3519, %v3520, %v3518
    %v3522 = vclz %v3521
    %v3523 = vsub.s32 %v3522, 2
    %vm3524 = vcmp.gt.s32.totalorder 0, %v3523
    %v3525 = vsel %vm3524, 0, %v3523
    %v3526 = vsub.s32 32, %v3525
    %v3527 = vshll.u32 %v3518, %v3525
    %v3528 = vshrl.u32 %v3510, %v3526
    %v3529 = vor.u32 %v3527, %v3528
    %v3530 = vsub.s32 4294967266, %v3525
    %v3531 = vadd.s32 %v3530, 127
    %v3532 = vshll.u32 %v3531, 23
    %v3533 = vor.u32 4788187, %v3532
    %v3534 = vand.u32 2147483647, %v3533
    %v3536 = vcvt.s32.f32 %v3529
    %v3537 = vmul.f32 %v3536, %v3534
    %v3538 = vxor.u32 %v3537, 2147483648
    %v3539 = vsel %vm3418, %v3538, %v3537
    %v3540 = vsub.s32 4, %v3516
    %v3541 = vsel %vm3418, %v3540, %v3516
    %v3542 = vsel %vm3417, %v3261, %v3539
    %v3543 = vsel %vm3417, 0, %v3541
    %v3544 = vmul.f32 %v3542, %v3542
    %v3545 = vmul.f32 %v3544, -0.001358992
    %v3546 = vadd.f32 %v3545, 0.041655596
    %v3547 = vmul.f32 %v3544, %v3546
    %v3548 = vadd.f32 %v3547, -0.4999988
    %v3549 = vmul.f32 %v3544, %v3548
    %v3550 = vadd.f32 1.0, %v3549
    %v3551 = vmul.f32 %v3542, %v3542
    %v3552 = vmul.f32 %v3551, -0.00019511016
    %v3553 = vadd.f32 %v3552, 0.008332121
    %v3554 = vmul.f32 %v3551, %v3553
    %v3555 = vadd.f32 %v3554, -0.16666654
    %v3556 = vmul.f32 %v3551, %v3555
    %v3557 = vadd.f32 %v3556, 1.0
    %v3558 = vmul.f32 %v3557, %v3542
    %vm3559 = vweird.f32 %v3261
    %v3560 = vand.u32 %v3543, 3
    %vm3561 = vcmp.lt.s32.totalorder %v3560, 2
    %vm3562 = vcmp.eq.s32.totalorder %v3560, 0
    %v3563 = vxor.u32 %v3558, 2147483648
    %v3564 = vsel %vm3562, %v3550, %v3563
    %vm3565 = vcmp.eq.s32.totalorder %v3560, 2
    %v3566 = vxor.u32 %v3550, 2147483648
    %v3567 = vsel %vm3565, %v3566, %v3558
    %v3568 = vsel %vm3561, %v3564, %v3567
    %v3569 = vsel %vm3559, nan, %v3568
    %v3570 = vmul.f32 %v682, %v3415
    %v3571 = vmul.f32 %v682, %v3569
    %v3572 = vmul.f32 %v685, %v3260
    %v3573 = vmul.f32 %v685, %v3261
    %v3574 = vadd.f32 %v3570, %v3572
    %v3575 = vadd.f32 %v3571, %v3573
    %v3576 = vsub.f32 %v3256, %v3574
    %v3577 = vsub.f32 %v3257, %v3575
    %v3578 = vmul.f32 %v369, %v3576
    %v3579 = vmul.f32 %v369, %v3577
    %v3580 = vadd.f32 %v3260, %v3578
    %v3581 = vadd.f32 %v3261, %v3579
    %v3582 = vand.u32 2147483647, %v3580
    %vm3583 = vcmp.le.f32.partialorder %v3582, 0.7853982
    %vm3584 = vcmp.lt.s32.totalorder %v3580, 0
    %v3585 = vand.u32 %v3580, 2139095040
    %v3586 = vshrl.u32 %v3585, 23
    %v3587 = vsub.s32 %v3586, 127
    %v3588 = vand.u32 2147483647, %v3580
    %v3589 = vand.u32 %v3588, 8388607
    %v3590 = vor.u32 %v3589, 8388608
    %v3591 = vsub.s32 0, %v3590
    %v3592 = vadd.s32 %v3587, 1
    %vm3593 = vcmp.gt.s32.totalorder %v3592, 0
    %v3594 = vsel %vm3593, %v3592, 0
    %v3595 = vshrl.u32 %v3594, 5
    %v3596 = vand.u32 %v3594, 31
    %v3597 = vsub.s32 32, %v3596
    %v3598 = vshrl.u32 683565275, %v3597
    %v3599 = vshll.u32 683565275, %v3596
    %v3600 = vshrl.u32 2475754826, %v3597
    %v3601 = vor.u32 %v3599, %v3600
    %v3602 = vshll.u32 2475754826, %v3596
    %v3603 = vshrl.u32 2131351028, %v3597
    %v3604 = vor.u32 %v3602, %v3603
    %v3605 = vshll.u32 2131351028, %v3596
    %v3606 = vshrl.u32 2102212464, %v3597
    %v3607 = vor.u32 %v3605, %v3606
    %v3608 = vshll.u32 2102212464, %v3596
    %v3609 = vshrl.u32 920167782, %v3597
    %v3610 = vor.u32 %v3608, %v3609
    %v3611 = vshll.u32 920167782, %v3596
    %v3612 = vshrl.u32 1326507024, %v3597
    %v3613 = vor.u32 %v3611, %v3612
    %vm3614 = vcmp.lt.s32.totalorder %v3595, 1
    %vm3615 = vcmp.lt.s32.totalorder %v3595, 2
    %vm3616 = vcmp.lt.s32.totalorder %v3595, 3
    %vm3617 = vcmp.lt.s32.totalorder %v3595, 4
    %v3618 = vsel %vm3614, %v3598, %v3601
    %v3619 = vsel %vm3617, %v3607, 2102212464
    %v3620 = vsel %vm3616, %v3604, %v3619
    %v3621 = vsel %vm3615, %v3618, %v3620
    %v3622 = vsel %vm3614, %v3601, %v3604
    %v3623 = vsel %vm3617, %v3610, 920167782
    %v3624 = vsel %vm3616, %v3607, %v3623
    %v3625 = vsel %vm3615, %v3622, %v3624
    %v3626 = vsel %vm3614, %v3604, %v3607
    %v3627 = vsel %vm3617, %v3613, 1326507024
    %v3628 = vsel %vm3616, %v3610, %v3627
    %v3629 = vsel %vm3615, %v3626, %v3628
    %v3630 = vshll.u32 %v3590, 8
    %v3631 = vand.u32 %v3630, 65535
    %v3632 = vshrl.u32 %v3630, 16
    %v3633 = vand.u32 %v3629, 65535
    %v3634 = vshrl.u32 %v3629, 16
    %v3635 = vmul.u32 %v3631, %v3633
    %v3636 = vmul.u32 %v3631, %v3634
    %v3637 = vmul.u32 %v3632, %v3633
    %v3638 = vmul.u32 %v3632, %v3634
    %v3639 = vshll.u32 %v3636, 16
    %v3640 = vshrl.u32 %v3636, 16
    %v3641 = vshll.u32 %v3637, 16
    %v3642 = vshrl.u32 %v3637, 16
    %vm3643 = vc.u32 %v3635, %v3639
    %v3644 = vsel %vm3643, 1, 0
    %v3645 = vadd.s32 %v3635, %v3639
    %v3646 = vadd.s32 %v3638, %v3644
    %vm3647 = vc.u32 %v3645, %v3641
    %v3648 = vsel %vm3647, 1, 0
    %v3649 = vadd.s32 %v3645, %v3641
    %v3650 = vadd.s32 %v3646, %v3648
    %v3651 = vadd.s32 %v3650, %v3640
    %v3652 = vadd.s32 %v3651, %v3642
    %v3653 = vand.u32 %v3630, 65535
    %v3654 = vshrl.u32 %v3630, 16
    %v3655 = vand.u32 %v3625, 65535
    %v3656 = vshrl.u32 %v3625, 16
    %v3657 = vmul.u32 %v3653, %v3655
    %v3658 = vmul.u32 %v3653, %v3656
    %v3659 = vmul.u32 %v3654, %v3655
    %v3660 = vmul.u32 %v3654, %v3656
    %v3661 = vshll.u32 %v3658, 16
    %v3662 = vshrl.u32 %v3658, 16
    %v3663 = vshll.u32 %v3659, 16
    %v3664 = vshrl.u32 %v3659, 16
    %vm3665 = vc.u32 %v3657, %v3661
    %v3666 = vsel %vm3665, 1, 0
    %v3667 = vadd.s32 %v3657, %v3661
    %v3668 = vadd.s32 %v3660, %v3666
    %vm3669 = vc.u32 %v3667, %v3663
    %v3670 = vsel %vm3669, 1, 0
    %v3671 = vadd.s32 %v3667, %v3663
    %v3672 = vadd.s32 %v3668, %v3670
    %v3673 = vadd.s32 %v3672, %v3662
    %v3674 = vadd.s32 %v3673, %v3664
    %v3675 = vmul.u32 %v3630, %v3621
    %v3676 = vadd.s32 %v3652, %v3671
    %vm3677 = vc.u32 %v3652, %v3671
    %v3678 = vadd.s32 %v3674, 1
    %v3679 = vsel %vm3677, %v3678, %v3674
    %v3680 = vadd.s32 %v3675, %v3679
    %v3681 = vadd.s32 %v3680, 536870912
    %v3682 = vshrl.u32 %v3681, 30
    %v3683 = vshll.u32 %v3682, 30
    %v3684 = vsub.s32 %v3680, %v3683
    %vm3685 = vcmp.lt.s32.totalorder %v3684, 0
    %v3686 = vsub.s32 0, %v3684
    %v3687 = vsel %vm3685, %v3686, %v3684
    %v3688 = vclz %v3687
    %v3689 = vsub.s32 %v3688, 2
    %vm3690 = vcmp.gt.s32.totalorder 0, %v3689
    %v3691 = vsel %vm3690, 0, %v3689
    %v3692 = vsub.s32 32, %v3691
    %v3693 = vshll.u32 %v3684, %v3691
    %v3694 = vshrl.u32 %v3676, %v3692
    %v3695 = vor.u32 %v3693, %v3694
    %v3696 = vsub.s32 4294967266, %v3691
    %v3697 = vadd.s32 %v3696, 127
    %v3698 = vshll.u32 %v3697, 23
    %v3699 = vor.u32 4788187, %v3698
    %v3700 = vand.u32 2147483647, %v3699
    %v3702 = vcvt.s32.f32 %v3695
    %v3703 = vmul.f32 %v3702, %v3700
    %v3704 = vxor.u32 %v3703, 2147483648
    %v3705 = vsel %vm3584, %v3704, %v3703
    %v3706 = vsub.s32 4, %v3682
    %v3707 = vsel %vm3584, %v3706, %v3682
    %v3708 = vsel %vm3583, %v3580, %v3705
    %v3709 = vsel %vm3583, 0, %v3707
    %v3710 = vmul.f32 %v3708, %v3708
    %v3711 = vmul.f32 %v3710, -0.001358992
    %v3712 = vadd.f32 %v3711, 0.041655596
    %v3713 = vmul.f32 %v3710, %v3712
    %v3714 = vadd.f32 %v3713, -0.4999988
    %v3715 = vmul.f32 %v3710, %v3714
    %v3716 = vadd.f32 1.0, %v3715
    %v3717 = vmul.f32 %v3708, %v3708
    %v3718 = vmul.f32 %v3717, -0.00019511016
    %v3719 = vadd.f32 %v3718, 0.008332121
    %v3720 = vmul.f32 %v3717, %v3719
    %v3721 = vadd.f32 %v3720, -0.16666654
    %v3722 = vmul.f32 %v3717, %v3721
    %v3723 = vadd.f32 %v3722, 1.0
    %v3724 = vmul.f32 %v3723, %v3708
    %vm3725 = vweird.f32 %v3580
    %v3726 = vand.u32 %v3709, 3
    %vm3727 = vcmp.lt.s32.totalorder %v3726, 2
    %vm3728 = vcmp.eq.s32.totalorder %v3726, 0
    %v3729 = vxor.u32 %v3724, 2147483648
    %v3730 = vsel %vm3728, %v3716, %v3729
    %vm3731 = vcmp.eq.s32.totalorder %v3726, 2
    %v3732 = vxor.u32 %v3716, 2147483648
    %v3733 = vsel %vm3731, %v3732, %v3724
    %v3734 = vsel %vm3727, %v3730, %v3733
    %v3735 = vsel %vm3725, nan, %v3734
    %v3736 = vand.u32 2147483647, %v3581
    %vm3737 = vcmp.le.f32.partialorder %v3736, 0.7853982
    %vm3738 = vcmp.lt.s32.totalorder %v3581, 0
    %v3739 = vand.u32 %v3581, 2139095040
    %v3740 = vshrl.u32 %v3739, 23
    %v3741 = vsub.s32 %v3740, 127
    %v3742 = vand.u32 2147483647, %v3581
    %v3743 = vand.u32 %v3742, 8388607
    %v3744 = vor.u32 %v3743, 8388608
    %v3745 = vsub.s32 0, %v3744
    %v3746 = vadd.s32 %v3741, 1
    %vm3747 = vcmp.gt.s32.totalorder %v3746, 0
    %v3748 = vsel %vm3747, %v3746, 0
    %v3749 = vshrl.u32 %v3748, 5
    %v3750 = vand.u32 %v3748, 31
    %v3751 = vsub.s32 32, %v3750
    %v3752 = vshrl.u32 683565275, %v3751
    %v3753 = vshll.u32 683565275, %v3750
    %v3754 = vshrl.u32 2475754826, %v3751
    %v3755 = vor.u32 %v3753, %v3754
    %v3756 = vshll.u32 2475754826, %v3750
    %v3757 = vshrl.u32 2131351028, %v3751
    %v3758 = vor.u32 %v3756, %v3757
    %v3759 = vshll.u32 2131351028, %v3750
    %v3760 = vshrl.u32 2102212464, %v3751
    %v3761 = vor.u32 %v3759, %v3760
    %v3762 = vshll.u32 2102212464, %v3750
    %v3763 = vshrl.u32 920167782, %v3751
    %v3764 = vor.u32 %v3762, %v3763
    %v3765 = vshll.u32 920167782, %v3750
    %v3766 = vshrl.u32 1326507024, %v3751
    %v3767 = vor.u32 %v3765, %v3766
    %vm3768 = vcmp.lt.s32.totalorder %v3749, 1
    %vm3769 = vcmp.lt.s32.totalorder %v3749, 2
    %vm3770 = vcmp.lt.s32.totalorder %v3749, 3
    %vm3771 = vcmp.lt.s32.totalorder %v3749, 4
    %v3772 = vsel %vm3768, %v3752, %v3755
    %v3773 = vsel %vm3771, %v3761, 2102212464
    %v3774 = vsel %vm3770, %v3758, %v3773
    %v3775 = vsel %vm3769, %v3772, %v3774
    %v3776 = vsel %vm3768, %v3755, %v3758
    %v3777 = vsel %vm3771, %v3764, 920167782
    %v3778 = vsel %vm3770, %v3761, %v3777
    %v3779 = vsel %vm3769, %v3776, %v3778
    %v3780 = vsel %vm3768, %v3758, %v3761
    %v3781 = vsel %vm3771, %v3767, 1326507024
    %v3782 = vsel %vm3770, %v3764, %v3781
    %v3783 = vsel %vm3769, %v3780, %v3782
    %v3784 = vshll.u32 %v3744, 8
    %v3785 = vand.u32 %v3784, 65535
    %v3786 = vshrl.u32 %v3784, 16
    %v3787 = vand.u32 %v3783, 65535
    %v3788 = vshrl.u32 %v3783, 16
    %v3789 = vmul.u32 %v3785, %v3787
    %v3790 = vmul.u32 %v3785, %v3788
    %v3791 = vmul.u32 %v3786, %v3787
    %v3792 = vmul.u32 %v3786, %v3788
    %v3793 = vshll.u32 %v3790, 16
    %v3794 = vshrl.u32 %v3790, 16
    %v3795 = vshll.u32 %v3791, 16
    %v3796 = vshrl.u32 %v3791, 16
    %vm3797 = vc.u32 %v3789, %v3793
    %v3798 = vsel %vm3797, 1, 0
    %v3799 = vadd.s32 %v3789, %v3793
    %v3800 = vadd.s32 %v3792, %v3798
    %vm3801 = vc.u32 %v3799, %v3795
    %v3802 = vsel %vm3801, 1, 0
    %v3803 = vadd.s32 %v3799, %v3795
    %v3804 = vadd.s32 %v3800, %v3802
    %v3805 = vadd.s32 %v3804, %v3794
    %v3806 = vadd.s32 %v3805, %v3796
    %v3807 = vand.u32 %v3784, 65535
    %v3808 = vshrl.u32 %v3784, 16
    %v3809 = vand.u32 %v3779, 65535
    %v3810 = vshrl.u32 %v3779, 16
    %v3811 = vmul.u32 %v3807, %v3809
    %v3812 = vmul.u32 %v3807, %v3810
    %v3813 = vmul.u32 %v3808, %v3809
    %v3814 = vmul.u32 %v3808, %v3810
    %v3815 = vshll.u32 %v3812, 16
    %v3816 = vshrl.u32 %v3812, 16
    %v3817 = vshll.u32 %v3813, 16
    %v3818 = vshrl.u32 %v3813, 16
    %vm3819 = vc.u32 %v3811, %v3815
    %v3820 = vsel %vm3819, 1, 0
    %v3821 = vadd.s32 %v3811, %v3815
    %v3822 = vadd.s32 %v3814, %v3820
    %vm3823 = vc.u32 %v3821, %v3817
    %v3824 = vsel %vm3823, 1, 0
    %v3825 = vadd.s32 %v3821, %v3817
    %v3826 = vadd.s32 %v3822, %v3824
    %v3827 = vadd.s32 %v3826, %v3816
    %v3828 = vadd.s32 %v3827, %v3818
    %v3829 = vmul.u32 %v3784, %v3775
    %v3830 = vadd.s32 %v3806, %v3825
    %vm3831 = vc.u32 %v3806, %v3825
    %v3832 = vadd.s32 %v3828, 1
    %v3833 = vsel %vm3831, %v3832, %v3828
    %v3834 = vadd.s32 %v3829, %v3833
    %v3835 = vadd.s32 %v3834, 536870912
    %v3836 = vshrl.u32 %v3835, 30
    %v3837 = vshll.u32 %v3836, 30
    %v3838 = vsub.s32 %v3834, %v3837
    %vm3839 = vcmp.lt.s32.totalorder %v3838, 0
    %v3840 = vsub.s32 0, %v3838
    %v3841 = vsel %vm3839, %v3840, %v3838
    %v3842 = vclz %v3841
    %v3843 = vsub.s32 %v3842, 2
    %vm3844 = vcmp.gt.s32.totalorder 0, %v3843
    %v3845 = vsel %vm3844, 0, %v3843
    %v3846 = vsub.s32 32, %v3845
    %v3847 = vshll.u32 %v3838, %v3845
    %v3848 = vshrl.u32 %v3830, %v3846
    %v3849 = vor.u32 %v3847, %v3848
    %v3850 = vsub.s32 4294967266, %v3845
    %v3851 = vadd.s32 %v3850, 127
    %v3852 = vshll.u32 %v3851, 23
    %v3853 = vor.u32 4788187, %v3852
    %v3854 = vand.u32 2147483647, %v3853
    %v3856 = vcvt.s32.f32 %v3849
    %v3857 = vmul.f32 %v3856, %v3854
    %v3858 = vxor.u32 %v3857, 2147483648
    %v3859 = vsel %vm3738, %v3858, %v3857
    %v3860 = vsub.s32 4, %v3836
    %v3861 = vsel %vm3738, %v3860, %v3836
    %v3862 = vsel %vm3737, %v3581, %v3859
    %v3863 = vsel %vm3737, 0, %v3861
    %v3864 = vmul.f32 %v3862, %v3862
    %v3865 = vmul.f32 %v3864, -0.001358992
    %v3866 = vadd.f32 %v3865, 0.041655596
    %v3867 = vmul.f32 %v3864, %v3866
    %v3868 = vadd.f32 %v3867, -0.4999988
    %v3869 = vmul.f32 %v3864, %v3868
    %v3870 = vadd.f32 1.0, %v3869
    %v3871 = vmul.f32 %v3862, %v3862
    %v3872 = vmul.f32 %v3871, -0.00019511016
    %v3873 = vadd.f32 %v3872, 0.008332121
    %v3874 = vmul.f32 %v3871, %v3873
    %v3875 = vadd.f32 %v3874, -0.16666654
    %v3876 = vmul.f32 %v3871, %v3875
    %v3877 = vadd.f32 %v3876, 1.0
    %v3878 = vmul.f32 %v3877, %v3862
    %vm3879 = vweird.f32 %v3581
    %v3880 = vand.u32 %v3863, 3
    %vm3881 = vcmp.lt.s32.totalorder %v3880, 2
    %vm3882 = vcmp.eq.s32.totalorder %v3880, 0
    %v3883 = vxor.u32 %v3878, 2147483648
    %v3884 = vsel %vm3882, %v3870, %v3883
    %vm3885 = vcmp.eq.s32.totalorder %v3880, 2
    %v3886 = vxor.u32 %v3870, 2147483648
    %v3887 = vsel %vm3885, %v3886, %v3878
    %v3888 = vsel %vm3881, %v3884, %v3887
    %v3889 = vsel %vm3879, nan, %v3888
    %v3890 = vmul.f32 %v359, %v3735
    %v3891 = vmul.f32 %v359, %v3889
    %v3892 = vmul.f32 %v362, %v3580
    %v3893 = vmul.f32 %v362, %v3581
    %v3894 = vadd.f32 %v3890, %v3892
    %v3895 = vadd.f32 %v3891, %v3893
    %v3896 = vsub.f32 %v3576, %v3894
    %v3897 = vsub.f32 %v3577, %v3895
    %v3898 = vmul.f32 %v46, %v3896
    %v3899 = vmul.f32 %v46, %v3897
    %v3900 = vadd.f32 %v3580, %v3898
    %v3901 = vadd.f32 %v3581, %v3899
    %v3902 = vadd.f32 %v3900, %v3898
    %v3903 = vadd.f32 %v3901, %v3899
    %v3904 = vand.u32 2147483647, %v3902
    %vm3905 = vcmp.le.f32.partialorder %v3904, 0.7853982
    %vm3906 = vcmp.lt.s32.totalorder %v3902, 0
    %v3907 = vand.u32 %v3902, 2139095040
    %v3908 = vshrl.u32 %v3907, 23
    %v3909 = vsub.s32 %v3908, 127
    %v3910 = vand.u32 2147483647, %v3902
    %v3911 = vand.u32 %v3910, 8388607
    %v3912 = vor.u32 %v3911, 8388608
    %v3913 = vsub.s32 0, %v3912
    %v3914 = vadd.s32 %v3909, 1
    %vm3915 = vcmp.gt.s32.totalorder %v3914, 0
    %v3916 = vsel %vm3915, %v3914, 0
    %v3917 = vshrl.u32 %v3916, 5
    %v3918 = vand.u32 %v3916, 31
    %v3919 = vsub.s32 32, %v3918
    %v3920 = vshrl.u32 683565275, %v3919
    %v3921 = vshll.u32 683565275, %v3918
    %v3922 = vshrl.u32 2475754826, %v3919
    %v3923 = vor.u32 %v3921, %v3922
    %v3924 = vshll.u32 2475754826, %v3918
    %v3925 = vshrl.u32 2131351028, %v3919
    %v3926 = vor.u32 %v3924, %v3925
    %v3927 = vshll.u32 2131351028, %v3918
    %v3928 = vshrl.u32 2102212464, %v3919
    %v3929 = vor.u32 %v3927, %v3928
    %v3930 = vshll.u32 2102212464, %v3918
    %v3931 = vshrl.u32 920167782, %v3919
    %v3932 = vor.u32 %v3930, %v3931
    %v3933 = vshll.u32 920167782, %v3918
    %v3934 = vshrl.u32 1326507024, %v3919
    %v3935 = vor.u32 %v3933, %v3934
    %vm3936 = vcmp.lt.s32.totalorder %v3917, 1
    %vm3937 = vcmp.lt.s32.totalorder %v3917, 2
    %vm3938 = vcmp.lt.s32.totalorder %v3917, 3
    %vm3939 = vcmp.lt.s32.totalorder %v3917, 4
    %v3940 = vsel %vm3936, %v3920, %v3923
    %v3941 = vsel %vm3939, %v3929, 2102212464
    %v3942 = vsel %vm3938, %v3926, %v3941
    %v3943 = vsel %vm3937, %v3940, %v3942
    %v3944 = vsel %vm3936, %v3923, %v3926
    %v3945 = vsel %vm3939, %v3932, 920167782
    %v3946 = vsel %vm3938, %v3929, %v3945
    %v3947 = vsel %vm3937, %v3944, %v3946
    %v3948 = vsel %vm3936, %v3926, %v3929
    %v3949 = vsel %vm3939, %v3935, 1326507024
    %v3950 = vsel %vm3938, %v3932, %v3949
    %v3951 = vsel %vm3937, %v3948, %v3950
    %v3952 = vshll.u32 %v3912, 8
    %v3953 = vand.u32 %v3952, 65535
    %v3954 = vshrl.u32 %v3952, 16
    %v3955 = vand.u32 %v3951, 65535
    %v3956 = vshrl.u32 %v3951, 16
    %v3957 = vmul.u32 %v3953, %v3955
    %v3958 = vmul.u32 %v3953, %v3956
    %v3959 = vmul.u32 %v3954, %v3955
    %v3960 = vmul.u32 %v3954, %v3956
    %v3961 = vshll.u32 %v3958, 16
    %v3962 = vshrl.u32 %v3958, 16
    %v3963 = vshll.u32 %v3959, 16
    %v3964 = vshrl.u32 %v3959, 16
    %vm3965 = vc.u32 %v3957, %v3961
    %v3966 = vsel %vm3965, 1, 0
    %v3967 = vadd.s32 %v3957, %v3961
    %v3968 = vadd.s32 %v3960, %v3966
    %vm3969 = vc.u32 %v3967, %v3963
    %v3970 = vsel %vm3969, 1, 0
    %v3971 = vadd.s32 %v3967, %v3963
    %v3972 = vadd.s32 %v3968, %v3970
    %v3973 = vadd.s32 %v3972, %v3962
    %v3974 = vadd.s32 %v3973, %v3964
    %v3975 = vand.u32 %v3952, 65535
    %v3976 = vshrl.u32 %v3952, 16
    %v3977 = vand.u32 %v3947, 65535
    %v3978 = vshrl.u32 %v3947, 16
    %v3979 = vmul.u32 %v3975, %v3977
    %v3980 = vmul.u32 %v3975, %v3978
    %v3981 = vmul.u32 %v3976, %v3977
    %v3982 = vmul.u32 %v3976, %v3978
    %v3983 = vshll.u32 %v3980, 16
    %v3984 = vshrl.u32 %v3980, 16
    %v3985 = vshll.u32 %v3981, 16
    %v3986 = vshrl.u32 %v3981, 16
    %vm3987 = vc.u32 %v3979, %v3983
    %v3988 = vsel %vm3987, 1, 0
    %v3989 = vadd.s32 %v3979, %v3983
    %v3990 = vadd.s32 %v3982, %v3988
    %vm3991 = vc.u32 %v3989, %v3985
    %v3992 = vsel %vm3991, 1, 0
    %v3993 = vadd.s32 %v3989, %v3985
    %v3994 = vadd.s32 %v3990, %v3992
    %v3995 = vadd.s32 %v3994, %v3984
    %v3996 = vadd.s32 %v3995, %v3986
    %v3997 = vmul.u32 %v3952, %v3943
    %v3998 = vadd.s32 %v3974, %v3993
    %vm3999 = vc.u32 %v3974, %v3993
    %v4000 = vadd.s32 %v3996, 1
    %v4001 = vsel %vm3999, %v4000, %v3996
    %v4002 = vadd.s32 %v3997, %v4001
    %v4003 = vadd.s32 %v4002, 536870912
    %v4004 = vshrl.u32 %v4003, 30
    %v4005 = vshll.u32 %v4004, 30
    %v4006 = vsub.s32 %v4002, %v4005
    %vm4007 = vcmp.lt.s32.totalorder %v4006, 0
    %v4008 = vsub.s32 0, %v4006
    %v4009 = vsel %vm4007, %v4008, %v4006
    %v4010 = vclz %v4009
    %v4011 = vsub.s32 %v4010, 2
    %vm4012 = vcmp.gt.s32.totalorder 0, %v4011
    %v4013 = vsel %vm4012, 0, %v4011
    %v4014 = vsub.s32 32, %v4013
    %v4015 = vshll.u32 %v4006, %v4013
    %v4016 = vshrl.u32 %v3998, %v4014
    %v4017 = vor.u32 %v4015, %v4016
    %v4018 = vsub.s32 4294967266, %v4013
    %v4019 = vadd.s32 %v4018, 127
    %v4020 = vshll.u32 %v4019, 23
    %v4021 = vor.u32 4788187, %v4020
    %v4022 = vand.u32 2147483647, %v4021
    %v4024 = vcvt.s32.f32 %v4017
    %v4025 = vmul.f32 %v4024, %v4022
    %v4026 = vxor.u32 %v4025, 2147483648
    %v4027 = vsel %vm3906, %v4026, %v4025
    %v4028 = vsub.s32 4, %v4004
    %v4029 = vsel %vm3906, %v4028, %v4004
    %v4030 = vsel %vm3905, %v3902, %v4027
    %v4031 = vsel %vm3905, 0, %v4029
    %v4032 = vmul.f32 %v4030, %v4030
    %v4033 = vmul.f32 %v4032, -0.001358992
    %v4034 = vadd.f32 %v4033, 0.041655596
    %v4035 = vmul.f32 %v4032, %v4034
    %v4036 = vadd.f32 %v4035, -0.4999988
    %v4037 = vmul.f32 %v4032, %v4036
    %v4038 = vadd.f32 1.0, %v4037
    %v4039 = vmul.f32 %v4030, %v4030
    %v4040 = vmul.f32 %v4039, -0.00019511016
    %v4041 = vadd.f32 %v4040, 0.008332121
    %v4042 = vmul.f32 %v4039, %v4041
    %v4043 = vadd.f32 %v4042, -0.16666654
    %v4044 = vmul.f32 %v4039, %v4043
    %v4045 = vadd.f32 %v4044, 1.0
    %v4046 = vmul.f32 %v4045, %v4030
    %vm4047 = vweird.f32 %v3902
    %v4048 = vand.u32 %v4031, 3
    %vm4049 = vcmp.lt.s32.totalorder %v4048, 2
    %vm4050 = vcmp.eq.s32.totalorder %v4048, 0
    %v4051 = vxor.u32 %v4046, 2147483648
    %v4052 = vsel %vm4050, %v4038, %v4051
    %vm4053 = vcmp.eq.s32.totalorder %v4048, 2
    %v4054 = vxor.u32 %v4038, 2147483648
    %v4055 = vsel %vm4053, %v4054, %v4046
    %v4056 = vsel %vm4049, %v4052, %v4055
    %v4057 = vsel %vm4047, nan, %v4056
    %v4058 = vand.u32 2147483647, %v3903
    %vm4059 = vcmp.le.f32.partialorder %v4058, 0.7853982
    %vm4060 = vcmp.lt.s32.totalorder %v3903, 0
    %v4061 = vand.u32 %v3903, 2139095040
    %v4062 = vshrl.u32 %v4061, 23
    %v4063 = vsub.s32 %v4062, 127
    %v4064 = vand.u32 2147483647, %v3903
    %v4065 = vand.u32 %v4064, 8388607
    %v4066 = vor.u32 %v4065, 8388608
    %v4067 = vsub.s32 0, %v4066
    %v4068 = vadd.s32 %v4063, 1
    %vm4069 = vcmp.gt.s32.totalorder %v4068, 0
    %v4070 = vsel %vm4069, %v4068, 0
    %v4071 = vshrl.u32 %v4070, 5
    %v4072 = vand.u32 %v4070, 31
    %v4073 = vsub.s32 32, %v4072
    %v4074 = vshrl.u32 683565275, %v4073
    %v4075 = vshll.u32 683565275, %v4072
    %v4076 = vshrl.u32 2475754826, %v4073
    %v4077 = vor.u32 %v4075, %v4076
    %v4078 = vshll.u32 2475754826, %v4072
    %v4079 = vshrl.u32 2131351028, %v4073
    %v4080 = vor.u32 %v4078, %v4079
    %v4081 = vshll.u32 2131351028, %v4072
    %v4082 = vshrl.u32 2102212464, %v4073
    %v4083 = vor.u32 %v4081, %v4082
    %v4084 = vshll.u32 2102212464, %v4072
    %v4085 = vshrl.u32 920167782, %v4073
    %v4086 = vor.u32 %v4084, %v4085
    %v4087 = vshll.u32 920167782, %v4072
    %v4088 = vshrl.u32 1326507024, %v4073
    %v4089 = vor.u32 %v4087, %v4088
    %vm4090 = vcmp.lt.s32.totalorder %v4071, 1
    %vm4091 = vcmp.lt.s32.totalorder %v4071, 2
    %vm4092 = vcmp.lt.s32.totalorder %v4071, 3
    %vm4093 = vcmp.lt.s32.totalorder %v4071, 4
    %v4094 = vsel %vm4090, %v4074, %v4077
    %v4095 = vsel %vm4093, %v4083, 2102212464
    %v4096 = vsel %vm4092, %v4080, %v4095
    %v4097 = vsel %vm4091, %v4094, %v4096
    %v4098 = vsel %vm4090, %v4077, %v4080
    %v4099 = vsel %vm4093, %v4086, 920167782
    %v4100 = vsel %vm4092, %v4083, %v4099
    %v4101 = vsel %vm4091, %v4098, %v4100
    %v4102 = vsel %vm4090, %v4080, %v4083
    %v4103 = vsel %vm4093, %v4089, 1326507024
    %v4104 = vsel %vm4092, %v4086, %v4103
    %v4105 = vsel %vm4091, %v4102, %v4104
    %v4106 = vshll.u32 %v4066, 8
    %v4107 = vand.u32 %v4106, 65535
    %v4108 = vshrl.u32 %v4106, 16
    %v4109 = vand.u32 %v4105, 65535
    %v4110 = vshrl.u32 %v4105, 16
    %v4111 = vmul.u32 %v4107, %v4109
    %v4112 = vmul.u32 %v4107, %v4110
    %v4113 = vmul.u32 %v4108, %v4109
    %v4114 = vmul.u32 %v4108, %v4110
    %v4115 = vshll.u32 %v4112, 16
    %v4116 = vshrl.u32 %v4112, 16
    %v4117 = vshll.u32 %v4113, 16
    %v4118 = vshrl.u32 %v4113, 16
    %vm4119 = vc.u32 %v4111, %v4115
    %v4120 = vsel %vm4119, 1, 0
    %v4121 = vadd.s32 %v4111, %v4115
    %v4122 = vadd.s32 %v4114, %v4120
    %vm4123 = vc.u32 %v4121, %v4117
    %v4124 = vsel %vm4123, 1, 0
    %v4125 = vadd.s32 %v4121, %v4117
    %v4126 = vadd.s32 %v4122, %v4124
    %v4127 = vadd.s32 %v4126, %v4116
    %v4128 = vadd.s32 %v4127, %v4118
    %v4129 = vand.u32 %v4106, 65535
    %v4130 = vshrl.u32 %v4106, 16
    %v4131 = vand.u32 %v4101, 65535
    %v4132 = vshrl.u32 %v4101, 16
    %v4133 = vmul.u32 %v4129, %v4131
    %v4134 = vmul.u32 %v4129, %v4132
    %v4135 = vmul.u32 %v4130, %v4131
    %v4136 = vmul.u32 %v4130, %v4132
    %v4137 = vshll.u32 %v4134, 16
    %v4138 = vshrl.u32 %v4134, 16
    %v4139 = vshll.u32 %v4135, 16
    %v4140 = vshrl.u32 %v4135, 16
    %vm4141 = vc.u32 %v4133, %v4137
    %v4142 = vsel %vm4141, 1, 0
    %v4143 = vadd.s32 %v4133, %v4137
    %v4144 = vadd.s32 %v4136, %v4142
    %vm4145 = vc.u32 %v4143, %v4139
    %v4146 = vsel %vm4145, 1, 0
    %v4147 = vadd.s32 %v4143, %v4139
    %v4148 = vadd.s32 %v4144, %v4146
    %v4149 = vadd.s32 %v4148, %v4138
    %v4150 = vadd.s32 %v4149, %v4140
    %v4151 = vmul.u32 %v4106, %v4097
    %v4152 = vadd.s32 %v4128, %v4147
    %vm4153 = vc.u32 %v4128, %v4147
    %v4154 = vadd.s32 %v4150, 1
    %v4155 = vsel %vm4153, %v4154, %v4150
    %v4156 = vadd.s32 %v4151, %v4155
    %v4157 = vadd.s32 %v4156, 536870912
    %v4158 = vshrl.u32 %v4157, 30
    %v4159 = vshll.u32 %v4158, 30
    %v4160 = vsub.s32 %v4156, %v4159
    %vm4161 = vcmp.lt.s32.totalorder %v4160, 0
    %v4162 = vsub.s32 0, %v4160
    %v4163 = vsel %vm4161, %v4162, %v4160
    %v4164 = vclz %v4163
    %v4165 = vsub.s32 %v4164, 2
    %vm4166 = vcmp.gt.s32.totalorder 0, %v4165
    %v4167 = vsel %vm4166, 0, %v4165
    %v4168 = vsub.s32 32, %v4167
    %v4169 = vshll.u32 %v4160, %v4167
    %v4170 = vshrl.u32 %v4152, %v4168
    %v4171 = vor.u32 %v4169, %v4170
    %v4172 = vsub.s32 4294967266, %v4167
    %v4173 = vadd.s32 %v4172, 127
    %v4174 = vshll.u32 %v4173, 23
    %v4175 = vor.u32 4788187, %v4174
    %v4176 = vand.u32 2147483647, %v4175
    %v4178 = vcvt.s32.f32 %v4171
    %v4179 = vmul.f32 %v4178, %v4176
    %v4180 = vxor.u32 %v4179, 2147483648
    %v4181 = vsel %vm4060, %v4180, %v4179
    %v4182 = vsub.s32 4, %v4158
    %v4183 = vsel %vm4060, %v4182, %v4158
    %v4184 = vsel %vm4059, %v3903, %v4181
    %v4185 = vsel %vm4059, 0, %v4183
    %v4186 = vmul.f32 %v4184, %v4184
    %v4187 = vmul.f32 %v4186, -0.001358992
    %v4188 = vadd.f32 %v4187, 0.041655596
    %v4189 = vmul.f32 %v4186, %v4188
    %v4190 = vadd.f32 %v4189, -0.4999988
    %v4191 = vmul.f32 %v4186, %v4190
    %v4192 = vadd.f32 1.0, %v4191
    %v4193 = vmul.f32 %v4184, %v4184
    %v4194 = vmul.f32 %v4193, -0.00019511016
    %v4195 = vadd.f32 %v4194, 0.008332121
    %v4196 = vmul.f32 %v4193, %v4195
    %v4197 = vadd.f32 %v4196, -0.16666654
    %v4198 = vmul.f32 %v4193, %v4197
    %v4199 = vadd.f32 %v4198, 1.0
    %v4200 = vmul.f32 %v4199, %v4184
    %vm4201 = vweird.f32 %v3903
    %v4202 = vand.u32 %v4185, 3
    %vm4203 = vcmp.lt.s32.totalorder %v4202, 2
    %vm4204 = vcmp.eq.s32.totalorder %v4202, 0
    %v4205 = vxor.u32 %v4200, 2147483648
    %v4206 = vsel %vm4204, %v4192, %v4205
    %vm4207 = vcmp.eq.s32.totalorder %v4202, 2
    %v4208 = vxor.u32 %v4192, 2147483648
    %v4209 = vsel %vm4207, %v4208, %v4200
    %v4210 = vsel %vm4203, %v4206, %v4209
    %v4211 = vsel %vm4201, nan, %v4210
    %v4212 = vmul.f32 %v359, %v4057
    %v4213 = vmul.f32 %v359, %v4211
    %v4214 = vmul.f32 %v362, %v3902
    %v4215 = vmul.f32 %v362, %v3903
    %v4216 = vadd.f32 %v4212, %v4214
    %v4217 = vadd.f32 %v4213, %v4215
    %v4218 = vsub.f32 %v3896, %v4216
    %v4219 = vsub.f32 %v3897, %v4217
    %v4220 = vmul.f32 %v369, %v4218
    %v4221 = vmul.f32 %v369, %v4219
    %v4222 = vadd.f32 %v3902, %v4220
    %v4223 = vadd.f32 %v3903, %v4221
    %v4224 = vand.u32 2147483647, %v4222
    %vm4225 = vcmp.le.f32.partialorder %v4224, 0.7853982
    %vm4226 = vcmp.lt.s32.totalorder %v4222, 0
    %v4227 = vand.u32 %v4222, 2139095040
    %v4228 = vshrl.u32 %v4227, 23
    %v4229 = vsub.s32 %v4228, 127
    %v4230 = vand.u32 2147483647, %v4222
    %v4231 = vand.u32 %v4230, 8388607
    %v4232 = vor.u32 %v4231, 8388608
    %v4233 = vsub.s32 0, %v4232
    %v4234 = vadd.s32 %v4229, 1
    %vm4235 = vcmp.gt.s32.totalorder %v4234, 0
    %v4236 = vsel %vm4235, %v4234, 0
    %v4237 = vshrl.u32 %v4236, 5
    %v4238 = vand.u32 %v4236, 31
    %v4239 = vsub.s32 32, %v4238
    %v4240 = vshrl.u32 683565275, %v4239
    %v4241 = vshll.u32 683565275, %v4238
    %v4242 = vshrl.u32 2475754826, %v4239
    %v4243 = vor.u32 %v4241, %v4242
    %v4244 = vshll.u32 2475754826, %v4238
    %v4245 = vshrl.u32 2131351028, %v4239
    %v4246 = vor.u32 %v4244, %v4245
    %v4247 = vshll.u32 2131351028, %v4238
    %v4248 = vshrl.u32 2102212464, %v4239
    %v4249 = vor.u32 %v4247, %v4248
    %v4250 = vshll.u32 2102212464, %v4238
    %v4251 = vshrl.u32 920167782, %v4239
    %v4252 = vor.u32 %v4250, %v4251
    %v4253 = vshll.u32 920167782, %v4238
    %v4254 = vshrl.u32 1326507024, %v4239
    %v4255 = vor.u32 %v4253, %v4254
    %vm4256 = vcmp.lt.s32.totalorder %v4237, 1
    %vm4257 = vcmp.lt.s32.totalorder %v4237, 2
    %vm4258 = vcmp.lt.s32.totalorder %v4237, 3
    %vm4259 = vcmp.lt.s32.totalorder %v4237, 4
    %v4260 = vsel %vm4256, %v4240, %v4243
    %v4261 = vsel %vm4259, %v4249, 2102212464
    %v4262 = vsel %vm4258, %v4246, %v4261
    %v4263 = vsel %vm4257, %v4260, %v4262
    %v4264 = vsel %vm4256, %v4243, %v4246
    %v4265 = vsel %vm4259, %v4252, 920167782
    %v4266 = vsel %vm4258, %v4249, %v4265
    %v4267 = vsel %vm4257, %v4264, %v4266
    %v4268 = vsel %vm4256, %v4246, %v4249
    %v4269 = vsel %vm4259, %v4255, 1326507024
    %v4270 = vsel %vm4258, %v4252, %v4269
    %v4271 = vsel %vm4257, %v4268, %v4270
    %v4272 = vshll.u32 %v4232, 8
    %v4273 = vand.u32 %v4272, 65535
    %v4274 = vshrl.u32 %v4272, 16
    %v4275 = vand.u32 %v4271, 65535
    %v4276 = vshrl.u32 %v4271, 16
    %v4277 = vmul.u32 %v4273, %v4275
    %v4278 = vmul.u32 %v4273, %v4276
    %v4279 = vmul.u32 %v4274, %v4275
    %v4280 = vmul.u32 %v4274, %v4276
    %v4281 = vshll.u32 %v4278, 16
    %v4282 = vshrl.u32 %v4278, 16
    %v4283 = vshll.u32 %v4279, 16
    %v4284 = vshrl.u32 %v4279, 16
    %vm4285 = vc.u32 %v4277, %v4281
    %v4286 = vsel %vm4285, 1, 0
    %v4287 = vadd.s32 %v4277, %v4281
    %v4288 = vadd.s32 %v4280, %v4286
    %vm4289 = vc.u32 %v4287, %v4283
    %v4290 = vsel %vm4289, 1, 0
    %v4291 = vadd.s32 %v4287, %v4283
    %v4292 = vadd.s32 %v4288, %v4290
    %v4293 = vadd.s32 %v4292, %v4282
    %v4294 = vadd.s32 %v4293, %v4284
    %v4295 = vand.u32 %v4272, 65535
    %v4296 = vshrl.u32 %v4272, 16
    %v4297 = vand.u32 %v4267, 65535
    %v4298 = vshrl.u32 %v4267, 16
    %v4299 = vmul.u32 %v4295, %v4297
    %v4300 = vmul.u32 %v4295, %v4298
    %v4301 = vmul.u32 %v4296, %v4297
    %v4302 = vmul.u32 %v4296, %v4298
    %v4303 = vshll.u32 %v4300, 16
    %v4304 = vshrl.u32 %v4300, 16
    %v4305 = vshll.u32 %v4301, 16
    %v4306 = vshrl.u32 %v4301, 16
    %vm4307 = vc.u32 %v4299, %v4303
    %v4308 = vsel %vm4307, 1, 0
    %v4309 = vadd.s32 %v4299, %v4303
    %v4310 = vadd.s32 %v4302, %v4308
    %vm4311 = vc.u32 %v4309, %v4305
    %v4312 = vsel %vm4311, 1, 0
    %v4313 = vadd.s32 %v4309, %v4305
    %v4314 = vadd.s32 %v4310, %v4312
    %v4315 = vadd.s32 %v4314, %v4304
    %v4316 = vadd.s32 %v4315, %v4306
    %v4317 = vmul.u32 %v4272, %v4263
    %v4318 = vadd.s32 %v4294, %v4313
    %vm4319 = vc.u32 %v4294, %v4313
    %v4320 = vadd.s32 %v4316, 1
    %v4321 = vsel %vm4319, %v4320, %v4316
    %v4322 = vadd.s32 %v4317, %v4321
    %v4323 = vadd.s32 %v4322, 536870912
    %v4324 = vshrl.u32 %v4323, 30
    %v4325 = vshll.u32 %v4324, 30
    %v4326 = vsub.s32 %v4322, %v4325
    %vm4327 = vcmp.lt.s32.totalorder %v4326, 0
    %v4328 = vsub.s32 0, %v4326
    %v4329 = vsel %vm4327, %v4328, %v4326
    %v4330 = vclz %v4329
    %v4331 = vsub.s32 %v4330, 2
    %vm4332 = vcmp.gt.s32.totalorder 0, %v4331
    %v4333 = vsel %vm4332, 0, %v4331
    %v4334 = vsub.s32 32, %v4333
    %v4335 = vshll.u32 %v4326, %v4333
    %v4336 = vshrl.u32 %v4318, %v4334
    %v4337 = vor.u32 %v4335, %v4336
    %v4338 = vsub.s32 4294967266, %v4333
    %v4339 = vadd.s32 %v4338, 127
    %v4340 = vshll.u32 %v4339, 23
    %v4341 = vor.u32 4788187, %v4340
    %v4342 = vand.u32 2147483647, %v4341
    %v4344 = vcvt.s32.f32 %v4337
    %v4345 = vmul.f32 %v4344, %v4342
    %v4346 = vxor.u32 %v4345, 2147483648
    %v4347 = vsel %vm4226, %v4346, %v4345
    %v4348 = vsub.s32 4, %v4324
    %v4349 = vsel %vm4226, %v4348, %v4324
    %v4350 = vsel %vm4225, %v4222, %v4347
    %v4351 = vsel %vm4225, 0, %v4349
    %v4352 = vmul.f32 %v4350, %v4350
    %v4353 = vmul.f32 %v4352, -0.001358992
    %v4354 = vadd.f32 %v4353, 0.041655596
    %v4355 = vmul.f32 %v4352, %v4354
    %v4356 = vadd.f32 %v4355, -0.4999988
    %v4357 = vmul.f32 %v4352, %v4356
    %v4358 = vadd.f32 1.0, %v4357
    %v4359 = vmul.f32 %v4350, %v4350
    %v4360 = vmul.f32 %v4359, -0.00019511016
    %v4361 = vadd.f32 %v4360, 0.008332121
    %v4362 = vmul.f32 %v4359, %v4361
    %v4363 = vadd.f32 %v4362, -0.16666654
    %v4364 = vmul.f32 %v4359, %v4363
    %v4365 = vadd.f32 %v4364, 1.0
    %v4366 = vmul.f32 %v4365, %v4350
    %vm4367 = vweird.f32 %v4222
    %v4368 = vand.u32 %v4351, 3
    %vm4369 = vcmp.lt.s32.totalorder %v4368, 2
    %vm4370 = vcmp.eq.s32.totalorder %v4368, 0
    %v4371 = vxor.u32 %v4366, 2147483648
    %v4372 = vsel %vm4370, %v4358, %v4371
    %vm4373 = vcmp.eq.s32.totalorder %v4368, 2
    %v4374 = vxor.u32 %v4358, 2147483648
    %v4375 = vsel %vm4373, %v4374, %v4366
    %v4376 = vsel %vm4369, %v4372, %v4375
    %v4377 = vsel %vm4367, nan, %v4376
    %v4378 = vand.u32 2147483647, %v4223
    %vm4379 = vcmp.le.f32.partialorder %v4378, 0.7853982
    %vm4380 = vcmp.lt.s32.totalorder %v4223, 0
    %v4381 = vand.u32 %v4223, 2139095040
    %v4382 = vshrl.u32 %v4381, 23
    %v4383 = vsub.s32 %v4382, 127
    %v4384 = vand.u32 2147483647, %v4223
    %v4385 = vand.u32 %v4384, 8388607
    %v4386 = vor.u32 %v4385, 8388608
    %v4387 = vsub.s32 0, %v4386
    %v4388 = vadd.s32 %v4383, 1
    %vm4389 = vcmp.gt.s32.totalorder %v4388, 0
    %v4390 = vsel %vm4389, %v4388, 0
    %v4391 = vshrl.u32 %v4390, 5
    %v4392 = vand.u32 %v4390, 31
    %v4393 = vsub.s32 32, %v4392
    %v4394 = vshrl.u32 683565275, %v4393
    %v4395 = vshll.u32 683565275, %v4392
    %v4396 = vshrl.u32 2475754826, %v4393
    %v4397 = vor.u32 %v4395, %v4396
    %v4398 = vshll.u32 2475754826, %v4392
    %v4399 = vshrl.u32 2131351028, %v4393
    %v4400 = vor.u32 %v4398, %v4399
    %v4401 = vshll.u32 2131351028, %v4392
    %v4402 = vshrl.u32 2102212464, %v4393
    %v4403 = vor.u32 %v4401, %v4402
    %v4404 = vshll.u32 2102212464, %v4392
    %v4405 = vshrl.u32 920167782, %v4393
    %v4406 = vor.u32 %v4404, %v4405
    %v4407 = vshll.u32 920167782, %v4392
    %v4408 = vshrl.u32 1326507024, %v4393
    %v4409 = vor.u32 %v4407, %v4408
    %vm4410 = vcmp.lt.s32.totalorder %v4391, 1
    %vm4411 = vcmp.lt.s32.totalorder %v4391, 2
    %vm4412 = vcmp.lt.s32.totalorder %v4391, 3
    %vm4413 = vcmp.lt.s32.totalorder %v4391, 4
    %v4414 = vsel %vm4410, %v4394, %v4397
    %v4415 = vsel %vm4413, %v4403, 2102212464
    %v4416 = vsel %vm4412, %v4400, %v4415
    %v4417 = vsel %vm4411, %v4414, %v4416
    %v4418 = vsel %vm4410, %v4397, %v4400
    %v4419 = vsel %vm4413, %v4406, 920167782
    %v4420 = vsel %vm4412, %v4403, %v4419
    %v4421 = vsel %vm4411, %v4418, %v4420
    %v4422 = vsel %vm4410, %v4400, %v4403
    %v4423 = vsel %vm4413, %v4409, 1326507024
    %v4424 = vsel %vm4412, %v4406, %v4423
    %v4425 = vsel %vm4411, %v4422, %v4424
    %v4426 = vshll.u32 %v4386, 8
    %v4427 = vand.u32 %v4426, 65535
    %v4428 = vshrl.u32 %v4426, 16
    %v4429 = vand.u32 %v4425, 65535
    %v4430 = vshrl.u32 %v4425, 16
    %v4431 = vmul.u32 %v4427, %v4429
    %v4432 = vmul.u32 %v4427, %v4430
    %v4433 = vmul.u32 %v4428, %v4429
    %v4434 = vmul.u32 %v4428, %v4430
    %v4435 = vshll.u32 %v4432, 16
    %v4436 = vshrl.u32 %v4432, 16
    %v4437 = vshll.u32 %v4433, 16
    %v4438 = vshrl.u32 %v4433, 16
    %vm4439 = vc.u32 %v4431, %v4435
    %v4440 = vsel %vm4439, 1, 0
    %v4441 = vadd.s32 %v4431, %v4435
    %v4442 = vadd.s32 %v4434, %v4440
    %vm4443 = vc.u32 %v4441, %v4437
    %v4444 = vsel %vm4443, 1, 0
    %v4445 = vadd.s32 %v4441, %v4437
    %v4446 = vadd.s32 %v4442, %v4444
    %v4447 = vadd.s32 %v4446, %v4436
    %v4448 = vadd.s32 %v4447, %v4438
    %v4449 = vand.u32 %v4426, 65535
    %v4450 = vshrl.u32 %v4426, 16
    %v4451 = vand.u32 %v4421, 65535
    %v4452 = vshrl.u32 %v4421, 16
    %v4453 = vmul.u32 %v4449, %v4451
    %v4454 = vmul.u32 %v4449, %v4452
    %v4455 = vmul.u32 %v4450, %v4451
    %v4456 = vmul.u32 %v4450, %v4452
    %v4457 = vshll.u32 %v4454, 16
    %v4458 = vshrl.u32 %v4454, 16
    %v4459 = vshll.u32 %v4455, 16
    %v4460 = vshrl.u32 %v4455, 16
    %vm4461 = vc.u32 %v4453, %v4457
    %v4462 = vsel %vm4461, 1, 0
    %v4463 = vadd.s32 %v4453, %v4457
    %v4464 = vadd.s32 %v4456, %v4462
    %vm4465 = vc.u32 %v4463, %v4459
    %v4466 = vsel %vm4465, 1, 0
    %v4467 = vadd.s32 %v4463, %v4459
    %v4468 = vadd.s32 %v4464, %v4466
    %v4469 = vadd.s32 %v4468, %v4458
    %v4470 = vadd.s32 %v4469, %v4460
    %v4471 = vmul.u32 %v4426, %v4417
    %v4472 = vadd.s32 %v4448, %v4467
    %vm4473 = vc.u32 %v4448, %v4467
    %v4474 = vadd.s32 %v4470, 1
    %v4475 = vsel %vm4473, %v4474, %v4470
    %v4476 = vadd.s32 %v4471, %v4475
    %v4477 = vadd.s32 %v4476, 536870912
    %v4478 = vshrl.u32 %v4477, 30
    %v4479 = vshll.u32 %v4478, 30
    %v4480 = vsub.s32 %v4476, %v4479
    %vm4481 = vcmp.lt.s32.totalorder %v4480, 0
    %v4482 = vsub.s32 0, %v4480
    %v4483 = vsel %vm4481, %v4482, %v4480
    %v4484 = vclz %v4483
    %v4485 = vsub.s32 %v4484, 2
    %vm4486 = vcmp.gt.s32.totalorder 0, %v4485
    %v4487 = vsel %vm4486, 0, %v4485
    %v4488 = vsub.s32 32, %v4487
    %v4489 = vshll.u32 %v4480, %v4487
    %v4490 = vshrl.u32 %v4472, %v4488
    %v4491 = vor.u32 %v4489, %v4490
    %v4492 = vsub.s32 4294967266, %v4487
    %v4493 = vadd.s32 %v4492, 127
    %v4494 = vshll.u32 %v4493, 23
    %v4495 = vor.u32 4788187, %v4494
    %v4496 = vand.u32 2147483647, %v4495
    %v4498 = vcvt.s32.f32 %v4491
    %v4499 = vmul.f32 %v4498, %v4496
    %v4500 = vxor.u32 %v4499, 2147483648
    %v4501 = vsel %vm4380, %v4500, %v4499
    %v4502 = vsub.s32 4, %v4478
    %v4503 = vsel %vm4380, %v4502, %v4478
    %v4504 = vsel %vm4379, %v4223, %v4501
    %v4505 = vsel %vm4379, 0, %v4503
    %v4506 = vmul.f32 %v4504, %v4504
    %v4507 = vmul.f32 %v4506, -0.001358992
    %v4508 = vadd.f32 %v4507, 0.041655596
    %v4509 = vmul.f32 %v4506, %v4508
    %v4510 = vadd.f32 %v4509, -0.4999988
    %v4511 = vmul.f32 %v4506, %v4510
    %v4512 = vadd.f32 1.0, %v4511
    %v4513 = vmul.f32 %v4504, %v4504
    %v4514 = vmul.f32 %v4513, -0.00019511016
    %v4515 = vadd.f32 %v4514, 0.008332121
    %v4516 = vmul.f32 %v4513, %v4515
    %v4517 = vadd.f32 %v4516, -0.16666654
    %v4518 = vmul.f32 %v4513, %v4517
    %v4519 = vadd.f32 %v4518, 1.0
    %v4520 = vmul.f32 %v4519, %v4504
    %vm4521 = vweird.f32 %v4223
    %v4522 = vand.u32 %v4505, 3
    %vm4523 = vcmp.lt.s32.totalorder %v4522, 2
    %vm4524 = vcmp.eq.s32.totalorder %v4522, 0
    %v4525 = vxor.u32 %v4520, 2147483648
    %v4526 = vsel %vm4524, %v4512, %v4525
    %vm4527 = vcmp.eq.s32.totalorder %v4522, 2
    %v4528 = vxor.u32 %v4512, 2147483648
    %v4529 = vsel %vm4527, %v4528, %v4520
    %v4530 = vsel %vm4523, %v4526, %v4529
    %v4531 = vsel %vm4521, nan, %v4530
    %v4532 = vmul.f32 %v682, %v4377
    %v4533 = vmul.f32 %v682, %v4531
    %v4534 = vmul.f32 %v685, %v4222
    %v4535 = vmul.f32 %v685, %v4223
    %v4536 = vadd.f32 %v4532, %v4534
    %v4537 = vadd.f32 %v4533, %v4535
    %v4538 = vsub.f32 %v4218, %v4536
    %v4539 = vsub.f32 %v4219, %v4537
    %v4540 = vmul.f32 %v369, %v4538
    %v4541 = vmul.f32 %v369, %v4539
    %v4542 = vadd.f32 %v4222, %v4540
    %v4543 = vadd.f32 %v4223, %v4541
    %v4544 = vand.u32 2147483647, %v4542
    %vm4545 = vcmp.le.f32.partialorder %v4544, 0.7853982
    %vm4546 = vcmp.lt.s32.totalorder %v4542, 0
    %v4547 = vand.u32 %v4542, 2139095040
    %v4548 = vshrl.u32 %v4547, 23
    %v4549 = vsub.s32 %v4548, 127
    %v4550 = vand.u32 2147483647, %v4542
    %v4551 = vand.u32 %v4550, 8388607
    %v4552 = vor.u32 %v4551, 8388608
    %v4553 = vsub.s32 0, %v4552
    %v4554 = vadd.s32 %v4549, 1
    %vm4555 = vcmp.gt.s32.totalorder %v4554, 0
    %v4556 = vsel %vm4555, %v4554, 0
    %v4557 = vshrl.u32 %v4556, 5
    %v4558 = vand.u32 %v4556, 31
    %v4559 = vsub.s32 32, %v4558
    %v4560 = vshrl.u32 683565275, %v4559
    %v4561 = vshll.u32 683565275, %v4558
    %v4562 = vshrl.u32 2475754826, %v4559
    %v4563 = vor.u32 %v4561, %v4562
    %v4564 = vshll.u32 2475754826, %v4558
    %v4565 = vshrl.u32 2131351028, %v4559
    %v4566 = vor.u32 %v4564, %v4565
    %v4567 = vshll.u32 2131351028, %v4558
    %v4568 = vshrl.u32 2102212464, %v4559
    %v4569 = vor.u32 %v4567, %v4568
    %v4570 = vshll.u32 2102212464, %v4558
    %v4571 = vshrl.u32 920167782, %v4559
    %v4572 = vor.u32 %v4570, %v4571
    %v4573 = vshll.u32 920167782, %v4558
    %v4574 = vshrl.u32 1326507024, %v4559
    %v4575 = vor.u32 %v4573, %v4574
    %vm4576 = vcmp.lt.s32.totalorder %v4557, 1
    %vm4577 = vcmp.lt.s32.totalorder %v4557, 2
    %vm4578 = vcmp.lt.s32.totalorder %v4557, 3
    %vm4579 = vcmp.lt.s32.totalorder %v4557, 4
    %v4580 = vsel %vm4576, %v4560, %v4563
    %v4581 = vsel %vm4579, %v4569, 2102212464
    %v4582 = vsel %vm4578, %v4566, %v4581
    %v4583 = vsel %vm4577, %v4580, %v4582
    %v4584 = vsel %vm4576, %v4563, %v4566
    %v4585 = vsel %vm4579, %v4572, 920167782
    %v4586 = vsel %vm4578, %v4569, %v4585
    %v4587 = vsel %vm4577, %v4584, %v4586
    %v4588 = vsel %vm4576, %v4566, %v4569
    %v4589 = vsel %vm4579, %v4575, 1326507024
    %v4590 = vsel %vm4578, %v4572, %v4589
    %v4591 = vsel %vm4577, %v4588, %v4590
    %v4592 = vshll.u32 %v4552, 8
    %v4593 = vand.u32 %v4592, 65535
    %v4594 = vshrl.u32 %v4592, 16
    %v4595 = vand.u32 %v4591, 65535
    %v4596 = vshrl.u32 %v4591, 16
    %v4597 = vmul.u32 %v4593, %v4595
    %v4598 = vmul.u32 %v4593, %v4596
    %v4599 = vmul.u32 %v4594, %v4595
    %v4600 = vmul.u32 %v4594, %v4596
    %v4601 = vshll.u32 %v4598, 16
    %v4602 = vshrl.u32 %v4598, 16
    %v4603 = vshll.u32 %v4599, 16
    %v4604 = vshrl.u32 %v4599, 16
    %vm4605 = vc.u32 %v4597, %v4601
    %v4606 = vsel %vm4605, 1, 0
    %v4607 = vadd.s32 %v4597, %v4601
    %v4608 = vadd.s32 %v4600, %v4606
    %vm4609 = vc.u32 %v4607, %v4603
    %v4610 = vsel %vm4609, 1, 0
    %v4611 = vadd.s32 %v4607, %v4603
    %v4612 = vadd.s32 %v4608, %v4610
    %v4613 = vadd.s32 %v4612, %v4602
    %v4614 = vadd.s32 %v4613, %v4604
    %v4615 = vand.u32 %v4592, 65535
    %v4616 = vshrl.u32 %v4592, 16
    %v4617 = vand.u32 %v4587, 65535
    %v4618 = vshrl.u32 %v4587, 16
    %v4619 = vmul.u32 %v4615, %v4617
    %v4620 = vmul.u32 %v4615, %v4618
    %v4621 = vmul.u32 %v4616, %v4617
    %v4622 = vmul.u32 %v4616, %v4618
    %v4623 = vshll.u32 %v4620, 16
    %v4624 = vshrl.u32 %v4620, 16
    %v4625 = vshll.u32 %v4621, 16
    %v4626 = vshrl.u32 %v4621, 16
    %vm4627 = vc.u32 %v4619, %v4623
    %v4628 = vsel %vm4627, 1, 0
    %v4629 = vadd.s32 %v4619, %v4623
    %v4630 = vadd.s32 %v4622, %v4628
    %vm4631 = vc.u32 %v4629, %v4625
    %v4632 = vsel %vm4631, 1, 0
    %v4633 = vadd.s32 %v4629, %v4625
    %v4634 = vadd.s32 %v4630, %v4632
    %v4635 = vadd.s32 %v4634, %v4624
    %v4636 = vadd.s32 %v4635, %v4626
    %v4637 = vmul.u32 %v4592, %v4583
    %v4638 = vadd.s32 %v4614, %v4633
    %vm4639 = vc.u32 %v4614, %v4633
    %v4640 = vadd.s32 %v4636, 1
    %v4641 = vsel %vm4639, %v4640, %v4636
    %v4642 = vadd.s32 %v4637, %v4641
    %v4643 = vadd.s32 %v4642, 536870912
    %v4644 = vshrl.u32 %v4643, 30
    %v4645 = vshll.u32 %v4644, 30
    %v4646 = vsub.s32 %v4642, %v4645
    %vm4647 = vcmp.lt.s32.totalorder %v4646, 0
    %v4648 = vsub.s32 0, %v4646
    %v4649 = vsel %vm4647, %v4648, %v4646
    %v4650 = vclz %v4649
    %v4651 = vsub.s32 %v4650, 2
    %vm4652 = vcmp.gt.s32.totalorder 0, %v4651
    %v4653 = vsel %vm4652, 0, %v4651
    %v4654 = vsub.s32 32, %v4653
    %v4655 = vshll.u32 %v4646, %v4653
    %v4656 = vshrl.u32 %v4638, %v4654
    %v4657 = vor.u32 %v4655, %v4656
    %v4658 = vsub.s32 4294967266, %v4653
    %v4659 = vadd.s32 %v4658, 127
    %v4660 = vshll.u32 %v4659, 23
    %v4661 = vor.u32 4788187, %v4660
    %v4662 = vand.u32 2147483647, %v4661
    %v4664 = vcvt.s32.f32 %v4657
    %v4665 = vmul.f32 %v4664, %v4662
    %v4666 = vxor.u32 %v4665, 2147483648
    %v4667 = vsel %vm4546, %v4666, %v4665
    %v4668 = vsub.s32 4, %v4644
    %v4669 = vsel %vm4546, %v4668, %v4644
    %v4670 = vsel %vm4545, %v4542, %v4667
    %v4671 = vsel %vm4545, 0, %v4669
    %v4672 = vmul.f32 %v4670, %v4670
    %v4673 = vmul.f32 %v4672, -0.001358992
    %v4674 = vadd.f32 %v4673, 0.041655596
    %v4675 = vmul.f32 %v4672, %v4674
    %v4676 = vadd.f32 %v4675, -0.4999988
    %v4677 = vmul.f32 %v4672, %v4676
    %v4678 = vadd.f32 1.0, %v4677
    %v4679 = vmul.f32 %v4670, %v4670
    %v4680 = vmul.f32 %v4679, -0.00019511016
    %v4681 = vadd.f32 %v4680, 0.008332121
    %v4682 = vmul.f32 %v4679, %v4681
    %v4683 = vadd.f32 %v4682, -0.16666654
    %v4684 = vmul.f32 %v4679, %v4683
    %v4685 = vadd.f32 %v4684, 1.0
    %v4686 = vmul.f32 %v4685, %v4670
    %vm4687 = vweird.f32 %v4542
    %v4688 = vand.u32 %v4671, 3
    %vm4689 = vcmp.lt.s32.totalorder %v4688, 2
    %vm4690 = vcmp.eq.s32.totalorder %v4688, 0
    %v4691 = vxor.u32 %v4686, 2147483648
    %v4692 = vsel %vm4690, %v4678, %v4691
    %vm4693 = vcmp.eq.s32.totalorder %v4688, 2
    %v4694 = vxor.u32 %v4678, 2147483648
    %v4695 = vsel %vm4693, %v4694, %v4686
    %v4696 = vsel %vm4689, %v4692, %v4695
    %v4697 = vsel %vm4687, nan, %v4696
    %v4698 = vand.u32 2147483647, %v4543
    %vm4699 = vcmp.le.f32.partialorder %v4698, 0.7853982
    %vm4700 = vcmp.lt.s32.totalorder %v4543, 0
    %v4701 = vand.u32 %v4543, 2139095040
    %v4702 = vshrl.u32 %v4701, 23
    %v4703 = vsub.s32 %v4702, 127
    %v4704 = vand.u32 2147483647, %v4543
    %v4705 = vand.u32 %v4704, 8388607
    %v4706 = vor.u32 %v4705, 8388608
    %v4707 = vsub.s32 0, %v4706
    %v4708 = vadd.s32 %v4703, 1
    %vm4709 = vcmp.gt.s32.totalorder %v4708, 0
    %v4710 = vsel %vm4709, %v4708, 0
    %v4711 = vshrl.u32 %v4710, 5
    %v4712 = vand.u32 %v4710, 31
    %v4713 = vsub.s32 32, %v4712
    %v4714 = vshrl.u32 683565275, %v4713
    %v4715 = vshll.u32 683565275, %v4712
    %v4716 = vshrl.u32 2475754826, %v4713
    %v4717 = vor.u32 %v4715, %v4716
    %v4718 = vshll.u32 2475754826, %v4712
    %v4719 = vshrl.u32 2131351028, %v4713
    %v4720 = vor.u32 %v4718, %v4719
    %v4721 = vshll.u32 2131351028, %v4712
    %v4722 = vshrl.u32 2102212464, %v4713
    %v4723 = vor.u32 %v4721, %v4722
    %v4724 = vshll.u32 2102212464, %v4712
    %v4725 = vshrl.u32 920167782, %v4713
    %v4726 = vor.u32 %v4724, %v4725
    %v4727 = vshll.u32 920167782, %v4712
    %v4728 = vshrl.u32 1326507024, %v4713
    %v4729 = vor.u32 %v4727, %v4728
    %vm4730 = vcmp.lt.s32.totalorder %v4711, 1
    %vm4731 = vcmp.lt.s32.totalorder %v4711, 2
    %vm4732 = vcmp.lt.s32.totalorder %v4711, 3
    %vm4733 = vcmp.lt.s32.totalorder %v4711, 4
    %v4734 = vsel %vm4730, %v4714, %v4717
    %v4735 = vsel %vm4733, %v4723, 2102212464
    %v4736 = vsel %vm4732, %v4720, %v4735
    %v4737 = vsel %vm4731, %v4734, %v4736
    %v4738 = vsel %vm4730, %v4717, %v4720
    %v4739 = vsel %vm4733, %v4726, 920167782
    %v4740 = vsel %vm4732, %v4723, %v4739
    %v4741 = vsel %vm4731, %v4738, %v4740
    %v4742 = vsel %vm4730, %v4720, %v4723
    %v4743 = vsel %vm4733, %v4729, 1326507024
    %v4744 = vsel %vm4732, %v4726, %v4743
    %v4745 = vsel %vm4731, %v4742, %v4744
    %v4746 = vshll.u32 %v4706, 8
    %v4747 = vand.u32 %v4746, 65535
    %v4748 = vshrl.u32 %v4746, 16
    %v4749 = vand.u32 %v4745, 65535
    %v4750 = vshrl.u32 %v4745, 16
    %v4751 = vmul.u32 %v4747, %v4749
    %v4752 = vmul.u32 %v4747, %v4750
    %v4753 = vmul.u32 %v4748, %v4749
    %v4754 = vmul.u32 %v4748, %v4750
    %v4755 = vshll.u32 %v4752, 16
    %v4756 = vshrl.u32 %v4752, 16
    %v4757 = vshll.u32 %v4753, 16
    %v4758 = vshrl.u32 %v4753, 16
    %vm4759 = vc.u32 %v4751, %v4755
    %v4760 = vsel %vm4759, 1, 0
    %v4761 = vadd.s32 %v4751, %v4755
    %v4762 = vadd.s32 %v4754, %v4760
    %vm4763 = vc.u32 %v4761, %v4757
    %v4764 = vsel %vm4763, 1, 0
    %v4765 = vadd.s32 %v4761, %v4757
    %v4766 = vadd.s32 %v4762, %v4764
    %v4767 = vadd.s32 %v4766, %v4756
    %v4768 = vadd.s32 %v4767, %v4758
    %v4769 = vand.u32 %v4746, 65535
    %v4770 = vshrl.u32 %v4746, 16
    %v4771 = vand.u32 %v4741, 65535
    %v4772 = vshrl.u32 %v4741, 16
    %v4773 = vmul.u32 %v4769, %v4771
    %v4774 = vmul.u32 %v4769, %v4772
    %v4775 = vmul.u32 %v4770, %v4771
    %v4776 = vmul.u32 %v4770, %v4772
    %v4777 = vshll.u32 %v4774, 16
    %v4778 = vshrl.u32 %v4774, 16
    %v4779 = vshll.u32 %v4775, 16
    %v4780 = vshrl.u32 %v4775, 16
    %vm4781 = vc.u32 %v4773, %v4777
    %v4782 = vsel %vm4781, 1, 0
    %v4783 = vadd.s32 %v4773, %v4777
    %v4784 = vadd.s32 %v4776, %v4782
    %vm4785 = vc.u32 %v4783, %v4779
    %v4786 = vsel %vm4785, 1, 0
    %v4787 = vadd.s32 %v4783, %v4779
    %v4788 = vadd.s32 %v4784, %v4786
    %v4789 = vadd.s32 %v4788, %v4778
    %v4790 = vadd.s32 %v4789, %v4780
    %v4791 = vmul.u32 %v4746, %v4737
    %v4792 = vadd.s32 %v4768, %v4787
    %vm4793 = vc.u32 %v4768, %v4787
    %v4794 = vadd.s32 %v4790, 1
    %v4795 = vsel %vm4793, %v4794, %v4790
    %v4796 = vadd.s32 %v4791, %v4795
    %v4797 = vadd.s32 %v4796, 536870912
    %v4798 = vshrl.u32 %v4797, 30
    %v4799 = vshll.u32 %v4798, 30
    %v4800 = vsub.s32 %v4796, %v4799
    %vm4801 = vcmp.lt.s32.totalorder %v4800, 0
    %v4802 = vsub.s32 0, %v4800
    %v4803 = vsel %vm4801, %v4802, %v4800
    %v4804 = vclz %v4803
    %v4805 = vsub.s32 %v4804, 2
    %vm4806 = vcmp.gt.s32.totalorder 0, %v4805
    %v4807 = vsel %vm4806, 0, %v4805
    %v4808 = vsub.s32 32, %v4807
    %v4809 = vshll.u32 %v4800, %v4807
    %v4810 = vshrl.u32 %v4792, %v4808
    %v4811 = vor.u32 %v4809, %v4810
    %v4812 = vsub.s32 4294967266, %v4807
    %v4813 = vadd.s32 %v4812, 127
    %v4814 = vshll.u32 %v4813, 23
    %v4815 = vor.u32 4788187, %v4814
    %v4816 = vand.u32 2147483647, %v4815
    %v4818 = vcvt.s32.f32 %v4811
    %v4819 = vmul.f32 %v4818, %v4816
    %v4820 = vxor.u32 %v4819, 2147483648
    %v4821 = vsel %vm4700, %v4820, %v4819
    %v4822 = vsub.s32 4, %v4798
    %v4823 = vsel %vm4700, %v4822, %v4798
    %v4824 = vsel %vm4699, %v4543, %v4821
    %v4825 = vsel %vm4699, 0, %v4823
    %v4826 = vmul.f32 %v4824, %v4824
    %v4827 = vmul.f32 %v4826, -0.001358992
    %v4828 = vadd.f32 %v4827, 0.041655596
    %v4829 = vmul.f32 %v4826, %v4828
    %v4830 = vadd.f32 %v4829, -0.4999988
    %v4831 = vmul.f32 %v4826, %v4830
    %v4832 = vadd.f32 1.0, %v4831
    %v4833 = vmul.f32 %v4824, %v4824
    %v4834 = vmul.f32 %v4833, -0.00019511016
    %v4835 = vadd.f32 %v4834, 0.008332121
    %v4836 = vmul.f32 %v4833, %v4835
    %v4837 = vadd.f32 %v4836, -0.16666654
    %v4838 = vmul.f32 %v4833, %v4837
    %v4839 = vadd.f32 %v4838, 1.0
    %v4840 = vmul.f32 %v4839, %v4824
    %vm4841 = vweird.f32 %v4543
    %v4842 = vand.u32 %v4825, 3
    %vm4843 = vcmp.lt.s32.totalorder %v4842, 2
    %vm4844 = vcmp.eq.s32.totalorder %v4842, 0
    %v4845 = vxor.u32 %v4840, 2147483648
    %v4846 = vsel %vm4844, %v4832, %v4845
    %vm4847 = vcmp.eq.s32.totalorder %v4842, 2
    %v4848 = vxor.u32 %v4832, 2147483648
    %v4849 = vsel %vm4847, %v4848, %v4840
    %v4850 = vsel %vm4843, %v4846, %v4849
    %v4851 = vsel %vm4841, nan, %v4850
    %v4852 = vmul.f32 %v359, %v4697
    %v4853 = vmul.f32 %v359, %v4851
    %v4854 = vmul.f32 %v362, %v4542
    %v4855 = vmul.f32 %v362, %v4543
    %v4856 = vadd.f32 %v4852, %v4854
    %v4857 = vadd.f32 %v4853, %v4855
    %v4858 = vsub.f32 %v4538, %v4856
    %v4859 = vsub.f32 %v4539, %v4857
    %v4860 = vmul.f32 %v46, %v4858
    %v4861 = vmul.f32 %v46, %v4859
    %v4862 = vadd.f32 %v4542, %v4860
    %v4863 = vadd.f32 %v4543, %v4861
    %v4864 = vadd.f32 %v4862, %v4860
    %v4865 = vadd.f32 %v4863, %v4861
    %v4866 = vand.u32 2147483647, %v4864
    %vm4867 = vcmp.le.f32.partialorder %v4866, 0.7853982
    %vm4868 = vcmp.lt.s32.totalorder %v4864, 0
    %v4869 = vand.u32 %v4864, 2139095040
    %v4870 = vshrl.u32 %v4869, 23
    %v4871 = vsub.s32 %v4870, 127
    %v4872 = vand.u32 2147483647, %v4864
    %v4873 = vand.u32 %v4872, 8388607
    %v4874 = vor.u32 %v4873, 8388608
    %v4875 = vsub.s32 0, %v4874
    %v4876 = vadd.s32 %v4871, 1
    %vm4877 = vcmp.gt.s32.totalorder %v4876, 0
    %v4878 = vsel %vm4877, %v4876, 0
    %v4879 = vshrl.u32 %v4878, 5
    %v4880 = vand.u32 %v4878, 31
    %v4881 = vsub.s32 32, %v4880
    %v4882 = vshrl.u32 683565275, %v4881
    %v4883 = vshll.u32 683565275, %v4880
    %v4884 = vshrl.u32 2475754826, %v4881
    %v4885 = vor.u32 %v4883, %v4884
    %v4886 = vshll.u32 2475754826, %v4880
    %v4887 = vshrl.u32 2131351028, %v4881
    %v4888 = vor.u32 %v4886, %v4887
    %v4889 = vshll.u32 2131351028, %v4880
    %v4890 = vshrl.u32 2102212464, %v4881
    %v4891 = vor.u32 %v4889, %v4890
    %v4892 = vshll.u32 2102212464, %v4880
    %v4893 = vshrl.u32 920167782, %v4881
    %v4894 = vor.u32 %v4892, %v4893
    %v4895 = vshll.u32 920167782, %v4880
    %v4896 = vshrl.u32 1326507024, %v4881
    %v4897 = vor.u32 %v4895, %v4896
    %vm4898 = vcmp.lt.s32.totalorder %v4879, 1
    %vm4899 = vcmp.lt.s32.totalorder %v4879, 2
    %vm4900 = vcmp.lt.s32.totalorder %v4879, 3
    %vm4901 = vcmp.lt.s32.totalorder %v4879, 4
    %v4902 = vsel %vm4898, %v4882, %v4885
    %v4903 = vsel %vm4901, %v4891, 2102212464
    %v4904 = vsel %vm4900, %v4888, %v4903
    %v4905 = vsel %vm4899, %v4902, %v4904
    %v4906 = vsel %vm4898, %v4885, %v4888
    %v4907 = vsel %vm4901, %v4894, 920167782
    %v4908 = vsel %vm4900, %v4891, %v4907
    %v4909 = vsel %vm4899, %v4906, %v4908
    %v4910 = vsel %vm4898, %v4888, %v4891
    %v4911 = vsel %vm4901, %v4897, 1326507024
    %v4912 = vsel %vm4900, %v4894, %v4911
    %v4913 = vsel %vm4899, %v4910, %v4912
    %v4914 = vshll.u32 %v4874, 8
    %v4915 = vand.u32 %v4914, 65535
    %v4916 = vshrl.u32 %v4914, 16
    %v4917 = vand.u32 %v4913, 65535
    %v4918 = vshrl.u32 %v4913, 16
    %v4919 = vmul.u32 %v4915, %v4917
    %v4920 = vmul.u32 %v4915, %v4918
    %v4921 = vmul.u32 %v4916, %v4917
    %v4922 = vmul.u32 %v4916, %v4918
    %v4923 = vshll.u32 %v4920, 16
    %v4924 = vshrl.u32 %v4920, 16
    %v4925 = vshll.u32 %v4921, 16
    %v4926 = vshrl.u32 %v4921, 16
    %vm4927 = vc.u32 %v4919, %v4923
    %v4928 = vsel %vm4927, 1, 0
    %v4929 = vadd.s32 %v4919, %v4923
    %v4930 = vadd.s32 %v4922, %v4928
    %vm4931 = vc.u32 %v4929, %v4925
    %v4932 = vsel %vm4931, 1, 0
    %v4933 = vadd.s32 %v4929, %v4925
    %v4934 = vadd.s32 %v4930, %v4932
    %v4935 = vadd.s32 %v4934, %v4924
    %v4936 = vadd.s32 %v4935, %v4926
    %v4937 = vand.u32 %v4914, 65535
    %v4938 = vshrl.u32 %v4914, 16
    %v4939 = vand.u32 %v4909, 65535
    %v4940 = vshrl.u32 %v4909, 16
    %v4941 = vmul.u32 %v4937, %v4939
    %v4942 = vmul.u32 %v4937, %v4940
    %v4943 = vmul.u32 %v4938, %v4939
    %v4944 = vmul.u32 %v4938, %v4940
    %v4945 = vshll.u32 %v4942, 16
    %v4946 = vshrl.u32 %v4942, 16
    %v4947 = vshll.u32 %v4943, 16
    %v4948 = vshrl.u32 %v4943, 16
    %vm4949 = vc.u32 %v4941, %v4945
    %v4950 = vsel %vm4949, 1, 0
    %v4951 = vadd.s32 %v4941, %v4945
    %v4952 = vadd.s32 %v4944, %v4950
    %vm4953 = vc.u32 %v4951, %v4947
    %v4954 = vsel %vm4953, 1, 0
    %v4955 = vadd.s32 %v4951, %v4947
    %v4956 = vadd.s32 %v4952, %v4954
    %v4957 = vadd.s32 %v4956, %v4946
    %v4958 = vadd.s32 %v4957, %v4948
    %v4959 = vmul.u32 %v4914, %v4905
    %v4960 = vadd.s32 %v4936, %v4955
    %vm4961 = vc.u32 %v4936, %v4955
    %v4962 = vadd.s32 %v4958, 1
    %v4963 = vsel %vm4961, %v4962, %v4958
    %v4964 = vadd.s32 %v4959, %v4963
    %v4965 = vadd.s32 %v4964, 536870912
    %v4966 = vshrl.u32 %v4965, 30
    %v4967 = vshll.u32 %v4966, 30
    %v4968 = vsub.s32 %v4964, %v4967
    %vm4969 = vcmp.lt.s32.totalorder %v4968, 0
    %v4970 = vsub.s32 0, %v4968
    %v4971 = vsel %vm4969, %v4970, %v4968
    %v4972 = vclz %v4971
    %v4973 = vsub.s32 %v4972, 2
    %vm4974 = vcmp.gt.s32.totalorder 0, %v4973
    %v4975 = vsel %vm4974, 0, %v4973
    %v4976 = vsub.s32 32, %v4975
    %v4977 = vshll.u32 %v4968, %v4975
    %v4978 = vshrl.u32 %v4960, %v4976
    %v4979 = vor.u32 %v4977, %v4978
    %v4980 = vsub.s32 4294967266, %v4975
    %v4981 = vadd.s32 %v4980, 127
    %v4982 = vshll.u32 %v4981, 23
    %v4983 = vor.u32 4788187, %v4982
    %v4984 = vand.u32 2147483647, %v4983
    %v4986 = vcvt.s32.f32 %v4979
    %v4987 = vmul.f32 %v4986, %v4984
    %v4988 = vxor.u32 %v4987, 2147483648
    %v4989 = vsel %vm4868, %v4988, %v4987
    %v4990 = vsub.s32 4, %v4966
    %v4991 = vsel %vm4868, %v4990, %v4966
    %v4992 = vsel %vm4867, %v4864, %v4989
    %v4993 = vsel %vm4867, 0, %v4991
    %v4994 = vmul.f32 %v4992, %v4992
    %v4995 = vmul.f32 %v4994, -0.001358992
    %v4996 = vadd.f32 %v4995, 0.041655596
    %v4997 = vmul.f32 %v4994, %v4996
    %v4998 = vadd.f32 %v4997, -0.4999988
    %v4999 = vmul.f32 %v4994, %v4998
    %v5000 = vadd.f32 1.0, %v4999
    %v5001 = vmul.f32 %v4992, %v4992
    %v5002 = vmul.f32 %v5001, -0.00019511016
    %v5003 = vadd.f32 %v5002, 0.008332121
    %v5004 = vmul.f32 %v5001, %v5003
    %v5005 = vadd.f32 %v5004, -0.16666654
    %v5006 = vmul.f32 %v5001, %v5005
    %v5007 = vadd.f32 %v5006, 1.0
    %v5008 = vmul.f32 %v5007, %v4992
    %vm5009 = vweird.f32 %v4864
    %v5010 = vand.u32 %v4993, 3
    %vm5011 = vcmp.lt.s32.totalorder %v5010, 2
    %vm5012 = vcmp.eq.s32.totalorder %v5010, 0
    %v5013 = vxor.u32 %v5008, 2147483648
    %v5014 = vsel %vm5012, %v5000, %v5013
    %vm5015 = vcmp.eq.s32.totalorder %v5010, 2
    %v5016 = vxor.u32 %v5000, 2147483648
    %v5017 = vsel %vm5015, %v5016, %v5008
    %v5018 = vsel %vm5011, %v5014, %v5017
    %v5019 = vsel %vm5009, nan, %v5018
    %v5020 = vand.u32 2147483647, %v4865
    %vm5021 = vcmp.le.f32.partialorder %v5020, 0.7853982
    %vm5022 = vcmp.lt.s32.totalorder %v4865, 0
    %v5023 = vand.u32 %v4865, 2139095040
    %v5024 = vshrl.u32 %v5023, 23
    %v5025 = vsub.s32 %v5024, 127
    %v5026 = vand.u32 2147483647, %v4865
    %v5027 = vand.u32 %v5026, 8388607
    %v5028 = vor.u32 %v5027, 8388608
    %v5029 = vsub.s32 0, %v5028
    %v5030 = vadd.s32 %v5025, 1
    %vm5031 = vcmp.gt.s32.totalorder %v5030, 0
    %v5032 = vsel %vm5031, %v5030, 0
    %v5033 = vshrl.u32 %v5032, 5
    %v5034 = vand.u32 %v5032, 31
    %v5035 = vsub.s32 32, %v5034
    %v5036 = vshrl.u32 683565275, %v5035
    %v5037 = vshll.u32 683565275, %v5034
    %v5038 = vshrl.u32 2475754826, %v5035
    %v5039 = vor.u32 %v5037, %v5038
    %v5040 = vshll.u32 2475754826, %v5034
    %v5041 = vshrl.u32 2131351028, %v5035
    %v5042 = vor.u32 %v5040, %v5041
    %v5043 = vshll.u32 2131351028, %v5034
    %v5044 = vshrl.u32 2102212464, %v5035
    %v5045 = vor.u32 %v5043, %v5044
    %v5046 = vshll.u32 2102212464, %v5034
    %v5047 = vshrl.u32 920167782, %v5035
    %v5048 = vor.u32 %v5046, %v5047
    %v5049 = vshll.u32 920167782, %v5034
    %v5050 = vshrl.u32 1326507024, %v5035
    %v5051 = vor.u32 %v5049, %v5050
    %vm5052 = vcmp.lt.s32.totalorder %v5033, 1
    %vm5053 = vcmp.lt.s32.totalorder %v5033, 2
    %vm5054 = vcmp.lt.s32.totalorder %v5033, 3
    %vm5055 = vcmp.lt.s32.totalorder %v5033, 4
    %v5056 = vsel %vm5052, %v5036, %v5039
    %v5057 = vsel %vm5055, %v5045, 2102212464
    %v5058 = vsel %vm5054, %v5042, %v5057
    %v5059 = vsel %vm5053, %v5056, %v5058
    %v5060 = vsel %vm5052, %v5039, %v5042
    %v5061 = vsel %vm5055, %v5048, 920167782
    %v5062 = vsel %vm5054, %v5045, %v5061
    %v5063 = vsel %vm5053, %v5060, %v5062
    %v5064 = vsel %vm5052, %v5042, %v5045
    %v5065 = vsel %vm5055, %v5051, 1326507024
    %v5066 = vsel %vm5054, %v5048, %v5065
    %v5067 = vsel %vm5053, %v5064, %v5066
    %v5068 = vshll.u32 %v5028, 8
    %v5069 = vand.u32 %v5068, 65535
    %v5070 = vshrl.u32 %v5068, 16
    %v5071 = vand.u32 %v5067, 65535
    %v5072 = vshrl.u32 %v5067, 16
    %v5073 = vmul.u32 %v5069, %v5071
    %v5074 = vmul.u32 %v5069, %v5072
    %v5075 = vmul.u32 %v5070, %v5071
    %v5076 = vmul.u32 %v5070, %v5072
    %v5077 = vshll.u32 %v5074, 16
    %v5078 = vshrl.u32 %v5074, 16
    %v5079 = vshll.u32 %v5075, 16
    %v5080 = vshrl.u32 %v5075, 16
    %vm5081 = vc.u32 %v5073, %v5077
    %v5082 = vsel %vm5081, 1, 0
    %v5083 = vadd.s32 %v5073, %v5077
    %v5084 = vadd.s32 %v5076, %v5082
    %vm5085 = vc.u32 %v5083, %v5079
    %v5086 = vsel %vm5085, 1, 0
    %v5087 = vadd.s32 %v5083, %v5079
    %v5088 = vadd.s32 %v5084, %v5086
    %v5089 = vadd.s32 %v5088, %v5078
    %v5090 = vadd.s32 %v5089, %v5080
    %v5091 = vand.u32 %v5068, 65535
    %v5092 = vshrl.u32 %v5068, 16
    %v5093 = vand.u32 %v5063, 65535
    %v5094 = vshrl.u32 %v5063, 16
    %v5095 = vmul.u32 %v5091, %v5093
    %v5096 = vmul.u32 %v5091, %v5094
    %v5097 = vmul.u32 %v5092, %v5093
    %v5098 = vmul.u32 %v5092, %v5094
    %v5099 = vshll.u32 %v5096, 16
    %v5100 = vshrl.u32 %v5096, 16
    %v5101 = vshll.u32 %v5097, 16
    %v5102 = vshrl.u32 %v5097, 16
    %vm5103 = vc.u32 %v5095, %v5099
    %v5104 = vsel %vm5103, 1, 0
    %v5105 = vadd.s32 %v5095, %v5099
    %v5106 = vadd.s32 %v5098, %v5104
    %vm5107 = vc.u32 %v5105, %v5101
    %v5108 = vsel %vm5107, 1, 0
    %v5109 = vadd.s32 %v5105, %v5101
    %v5110 = vadd.s32 %v5106, %v5108
    %v5111 = vadd.s32 %v5110, %v5100
    %v5112 = vadd.s32 %v5111, %v5102
    %v5113 = vmul.u32 %v5068, %v5059
    %v5114 = vadd.s32 %v5090, %v5109
    %vm5115 = vc.u32 %v5090, %v5109
    %v5116 = vadd.s32 %v5112, 1
    %v5117 = vsel %vm5115, %v5116, %v5112
    %v5118 = vadd.s32 %v5113, %v5117
    %v5119 = vadd.s32 %v5118, 536870912
    %v5120 = vshrl.u32 %v5119, 30
    %v5121 = vshll.u32 %v5120, 30
    %v5122 = vsub.s32 %v5118, %v5121
    %vm5123 = vcmp.lt.s32.totalorder %v5122, 0
    %v5124 = vsub.s32 0, %v5122
    %v5125 = vsel %vm5123, %v5124, %v5122
    %v5126 = vclz %v5125
    %v5127 = vsub.s32 %v5126, 2
    %vm5128 = vcmp.gt.s32.totalorder 0, %v5127
    %v5129 = vsel %vm5128, 0, %v5127
    %v5130 = vsub.s32 32, %v5129
    %v5131 = vshll.u32 %v5122, %v5129
    %v5132 = vshrl.u32 %v5114, %v5130
    %v5133 = vor.u32 %v5131, %v5132
    %v5134 = vsub.s32 4294967266, %v5129
    %v5135 = vadd.s32 %v5134, 127
    %v5136 = vshll.u32 %v5135, 23
    %v5137 = vor.u32 4788187, %v5136
    %v5138 = vand.u32 2147483647, %v5137
    %v5140 = vcvt.s32.f32 %v5133
    %v5141 = vmul.f32 %v5140, %v5138
    %v5142 = vxor.u32 %v5141, 2147483648
    %v5143 = vsel %vm5022, %v5142, %v5141
    %v5144 = vsub.s32 4, %v5120
    %v5145 = vsel %vm5022, %v5144, %v5120
    %v5146 = vsel %vm5021, %v4865, %v5143
    %v5147 = vsel %vm5021, 0, %v5145
    %v5148 = vmul.f32 %v5146, %v5146
    %v5149 = vmul.f32 %v5148, -0.001358992
    %v5150 = vadd.f32 %v5149, 0.041655596
    %v5151 = vmul.f32 %v5148, %v5150
    %v5152 = vadd.f32 %v5151, -0.4999988
    %v5153 = vmul.f32 %v5148, %v5152
    %v5154 = vadd.f32 1.0, %v5153
    %v5155 = vmul.f32 %v5146, %v5146
    %v5156 = vmul.f32 %v5155, -0.00019511016
    %v5157 = vadd.f32 %v5156, 0.008332121
    %v5158 = vmul.f32 %v5155, %v5157
    %v5159 = vadd.f32 %v5158, -0.16666654
    %v5160 = vmul.f32 %v5155, %v5159
    %v5161 = vadd.f32 %v5160, 1.0
    %v5162 = vmul.f32 %v5161, %v5146
    %vm5163 = vweird.f32 %v4865
    %v5164 = vand.u32 %v5147, 3
    %vm5165 = vcmp.lt.s32.totalorder %v5164, 2
    %vm5166 = vcmp.eq.s32.totalorder %v5164, 0
    %v5167 = vxor.u32 %v5162, 2147483648
    %v5168 = vsel %vm5166, %v5154, %v5167
    %vm5169 = vcmp.eq.s32.totalorder %v5164, 2
    %v5170 = vxor.u32 %v5154, 2147483648
    %v5171 = vsel %vm5169, %v5170, %v5162
    %v5172 = vsel %vm5165, %v5168, %v5171
    %v5173 = vsel %vm5163, nan, %v5172
    %v5174 = vmul.f32 %v359, %v5019
    %v5175 = vmul.f32 %v359, %v5173
    %v5176 = vmul.f32 %v362, %v4864
    %v5177 = vmul.f32 %v362, %v4865
    %v5178 = vadd.f32 %v5174, %v5176
    %v5179 = vadd.f32 %v5175, %v5177
    %v5180 = vsub.f32 %v4858, %v5178
    %v5181 = vsub.f32 %v4859, %v5179
    %v5182 = vmul.f32 %v369, %v5180
    %v5183 = vmul.f32 %v369, %v5181
    %v5184 = vadd.f32 %v4864, %v5182
    %v5185 = vadd.f32 %v4865, %v5183
    %v5186 = vand.u32 2147483647, %v5184
    %vm5187 = vcmp.le.f32.partialorder %v5186, 0.7853982
    %vm5188 = vcmp.lt.s32.totalorder %v5184, 0
    %v5189 = vand.u32 %v5184, 2139095040
    %v5190 = vshrl.u32 %v5189, 23
    %v5191 = vsub.s32 %v5190, 127
    %v5192 = vand.u32 2147483647, %v5184
    %v5193 = vand.u32 %v5192, 8388607
    %v5194 = vor.u32 %v5193, 8388608
    %v5195 = vsub.s32 0, %v5194
    %v5196 = vadd.s32 %v5191, 1
    %vm5197 = vcmp.gt.s32.totalorder %v5196, 0
    %v5198 = vsel %vm5197, %v5196, 0
    %v5199 = vshrl.u32 %v5198, 5
    %v5200 = vand.u32 %v5198, 31
    %v5201 = vsub.s32 32, %v5200
    %v5202 = vshrl.u32 683565275, %v5201
    %v5203 = vshll.u32 683565275, %v5200
    %v5204 = vshrl.u32 2475754826, %v5201
    %v5205 = vor.u32 %v5203, %v5204
    %v5206 = vshll.u32 2475754826, %v5200
    %v5207 = vshrl.u32 2131351028, %v5201
    %v5208 = vor.u32 %v5206, %v5207
    %v5209 = vshll.u32 2131351028, %v5200
    %v5210 = vshrl.u32 2102212464, %v5201
    %v5211 = vor.u32 %v5209, %v5210
    %v5212 = vshll.u32 2102212464, %v5200
    %v5213 = vshrl.u32 920167782, %v5201
    %v5214 = vor.u32 %v5212, %v5213
    %v5215 = vshll.u32 920167782, %v5200
    %v5216 = vshrl.u32 1326507024, %v5201
    %v5217 = vor.u32 %v5215, %v5216
    %vm5218 = vcmp.lt.s32.totalorder %v5199, 1
    %vm5219 = vcmp.lt.s32.totalorder %v5199, 2
    %vm5220 = vcmp.lt.s32.totalorder %v5199, 3
    %vm5221 = vcmp.lt.s32.totalorder %v5199, 4
    %v5222 = vsel %vm5218, %v5202, %v5205
    %v5223 = vsel %vm5221, %v5211, 2102212464
    %v5224 = vsel %vm5220, %v5208, %v5223
    %v5225 = vsel %vm5219, %v5222, %v5224
    %v5226 = vsel %vm5218, %v5205, %v5208
    %v5227 = vsel %vm5221, %v5214, 920167782
    %v5228 = vsel %vm5220, %v5211, %v5227
    %v5229 = vsel %vm5219, %v5226, %v5228
    %v5230 = vsel %vm5218, %v5208, %v5211
    %v5231 = vsel %vm5221, %v5217, 1326507024
    %v5232 = vsel %vm5220, %v5214, %v5231
    %v5233 = vsel %vm5219, %v5230, %v5232
    %v5234 = vshll.u32 %v5194, 8
    %v5235 = vand.u32 %v5234, 65535
    %v5236 = vshrl.u32 %v5234, 16
    %v5237 = vand.u32 %v5233, 65535
    %v5238 = vshrl.u32 %v5233, 16
    %v5239 = vmul.u32 %v5235, %v5237
    %v5240 = vmul.u32 %v5235, %v5238
    %v5241 = vmul.u32 %v5236, %v5237
    %v5242 = vmul.u32 %v5236, %v5238
    %v5243 = vshll.u32 %v5240, 16
    %v5244 = vshrl.u32 %v5240, 16
    %v5245 = vshll.u32 %v5241, 16
    %v5246 = vshrl.u32 %v5241, 16
    %vm5247 = vc.u32 %v5239, %v5243
    %v5248 = vsel %vm5247, 1, 0
    %v5249 = vadd.s32 %v5239, %v5243
    %v5250 = vadd.s32 %v5242, %v5248
    %vm5251 = vc.u32 %v5249, %v5245
    %v5252 = vsel %vm5251, 1, 0
    %v5253 = vadd.s32 %v5249, %v5245
    %v5254 = vadd.s32 %v5250, %v5252
    %v5255 = vadd.s32 %v5254, %v5244
    %v5256 = vadd.s32 %v5255, %v5246
    %v5257 = vand.u32 %v5234, 65535
    %v5258 = vshrl.u32 %v5234, 16
    %v5259 = vand.u32 %v5229, 65535
    %v5260 = vshrl.u32 %v5229, 16
    %v5261 = vmul.u32 %v5257, %v5259
    %v5262 = vmul.u32 %v5257, %v5260
    %v5263 = vmul.u32 %v5258, %v5259
    %v5264 = vmul.u32 %v5258, %v5260
    %v5265 = vshll.u32 %v5262, 16
    %v5266 = vshrl.u32 %v5262, 16
    %v5267 = vshll.u32 %v5263, 16
    %v5268 = vshrl.u32 %v5263, 16
    %vm5269 = vc.u32 %v5261, %v5265
    %v5270 = vsel %vm5269, 1, 0
    %v5271 = vadd.s32 %v5261, %v5265
    %v5272 = vadd.s32 %v5264, %v5270
    %vm5273 = vc.u32 %v5271, %v5267
    %v5274 = vsel %vm5273, 1, 0
    %v5275 = vadd.s32 %v5271, %v5267
    %v5276 = vadd.s32 %v5272, %v5274
    %v5277 = vadd.s32 %v5276, %v5266
    %v5278 = vadd.s32 %v5277, %v5268
    %v5279 = vmul.u32 %v5234, %v5225
    %v5280 = vadd.s32 %v5256, %v5275
    %vm5281 = vc.u32 %v5256, %v5275
    %v5282 = vadd.s32 %v5278, 1
    %v5283 = vsel %vm5281, %v5282, %v5278
    %v5284 = vadd.s32 %v5279, %v5283
    %v5285 = vadd.s32 %v5284, 536870912
    %v5286 = vshrl.u32 %v5285, 30
    %v5287 = vshll.u32 %v5286, 30
    %v5288 = vsub.s32 %v5284, %v5287
    %vm5289 = vcmp.lt.s32.totalorder %v5288, 0
    %v5290 = vsub.s32 0, %v5288
    %v5291 = vsel %vm5289, %v5290, %v5288
    %v5292 = vclz %v5291
    %v5293 = vsub.s32 %v5292, 2
    %vm5294 = vcmp.gt.s32.totalorder 0, %v5293
    %v5295 = vsel %vm5294, 0, %v5293
    %v5296 = vsub.s32 32, %v5295
    %v5297 = vshll.u32 %v5288, %v5295
    %v5298 = vshrl.u32 %v5280, %v5296
    %v5299 = vor.u32 %v5297, %v5298
    %v5300 = vsub.s32 4294967266, %v5295
    %v5301 = vadd.s32 %v5300, 127
    %v5302 = vshll.u32 %v5301, 23
    %v5303 = vor.u32 4788187, %v5302
    %v5304 = vand.u32 2147483647, %v5303
    %v5306 = vcvt.s32.f32 %v5299
    %v5307 = vmul.f32 %v5306, %v5304
    %v5308 = vxor.u32 %v5307, 2147483648
    %v5309 = vsel %vm5188, %v5308, %v5307
    %v5310 = vsub.s32 4, %v5286
    %v5311 = vsel %vm5188, %v5310, %v5286
    %v5312 = vsel %vm5187, %v5184, %v5309
    %v5313 = vsel %vm5187, 0, %v5311
    %v5314 = vmul.f32 %v5312, %v5312
    %v5315 = vmul.f32 %v5314, -0.001358992
    %v5316 = vadd.f32 %v5315, 0.041655596
    %v5317 = vmul.f32 %v5314, %v5316
    %v5318 = vadd.f32 %v5317, -0.4999988
    %v5319 = vmul.f32 %v5314, %v5318
    %v5320 = vadd.f32 1.0, %v5319
    %v5321 = vmul.f32 %v5312, %v5312
    %v5322 = vmul.f32 %v5321, -0.00019511016
    %v5323 = vadd.f32 %v5322, 0.008332121
    %v5324 = vmul.f32 %v5321, %v5323
    %v5325 = vadd.f32 %v5324, -0.16666654
    %v5326 = vmul.f32 %v5321, %v5325
    %v5327 = vadd.f32 %v5326, 1.0
    %v5328 = vmul.f32 %v5327, %v5312
    %vm5329 = vweird.f32 %v5184
    %v5330 = vand.u32 %v5313, 3
    %vm5331 = vcmp.lt.s32.totalorder %v5330, 2
    %vm5332 = vcmp.eq.s32.totalorder %v5330, 0
    %v5333 = vxor.u32 %v5328, 2147483648
    %v5334 = vsel %vm5332, %v5320, %v5333
    %vm5335 = vcmp.eq.s32.totalorder %v5330, 2
    %v5336 = vxor.u32 %v5320, 2147483648
    %v5337 = vsel %vm5335, %v5336, %v5328
    %v5338 = vsel %vm5331, %v5334, %v5337
    %v5339 = vsel %vm5329, nan, %v5338
    %v5340 = vand.u32 2147483647, %v5185
    %vm5341 = vcmp.le.f32.partialorder %v5340, 0.7853982
    %vm5342 = vcmp.lt.s32.totalorder %v5185, 0
    %v5343 = vand.u32 %v5185, 2139095040
    %v5344 = vshrl.u32 %v5343, 23
    %v5345 = vsub.s32 %v5344, 127
    %v5346 = vand.u32 2147483647, %v5185
    %v5347 = vand.u32 %v5346, 8388607
    %v5348 = vor.u32 %v5347, 8388608
    %v5349 = vsub.s32 0, %v5348
    %v5350 = vadd.s32 %v5345, 1
    %vm5351 = vcmp.gt.s32.totalorder %v5350, 0
    %v5352 = vsel %vm5351, %v5350, 0
    %v5353 = vshrl.u32 %v5352, 5
    %v5354 = vand.u32 %v5352, 31
    %v5355 = vsub.s32 32, %v5354
    %v5356 = vshrl.u32 683565275, %v5355
    %v5357 = vshll.u32 683565275, %v5354
    %v5358 = vshrl.u32 2475754826, %v5355
    %v5359 = vor.u32 %v5357, %v5358
    %v5360 = vshll.u32 2475754826, %v5354
    %v5361 = vshrl.u32 2131351028, %v5355
    %v5362 = vor.u32 %v5360, %v5361
    %v5363 = vshll.u32 2131351028, %v5354
    %v5364 = vshrl.u32 2102212464, %v5355
    %v5365 = vor.u32 %v5363, %v5364
    %v5366 = vshll.u32 2102212464, %v5354
    %v5367 = vshrl.u32 920167782, %v5355
    %v5368 = vor.u32 %v5366, %v5367
    %v5369 = vshll.u32 920167782, %v5354
    %v5370 = vshrl.u32 1326507024, %v5355
    %v5371 = vor.u32 %v5369, %v5370
    %vm5372 = vcmp.lt.s32.totalorder %v5353, 1
    %vm5373 = vcmp.lt.s32.totalorder %v5353, 2
    %vm5374 = vcmp.lt.s32.totalorder %v5353, 3
    %vm5375 = vcmp.lt.s32.totalorder %v5353, 4
    %v5376 = vsel %vm5372, %v5356, %v5359
    %v5377 = vsel %vm5375, %v5365, 2102212464
    %v5378 = vsel %vm5374, %v5362, %v5377
    %v5379 = vsel %vm5373, %v5376, %v5378
    %v5380 = vsel %vm5372, %v5359, %v5362
    %v5381 = vsel %vm5375, %v5368, 920167782
    %v5382 = vsel %vm5374, %v5365, %v5381
    %v5383 = vsel %vm5373, %v5380, %v5382
    %v5384 = vsel %vm5372, %v5362, %v5365
    %v5385 = vsel %vm5375, %v5371, 1326507024
    %v5386 = vsel %vm5374, %v5368, %v5385
    %v5387 = vsel %vm5373, %v5384, %v5386
    %v5388 = vshll.u32 %v5348, 8
    %v5389 = vand.u32 %v5388, 65535
    %v5390 = vshrl.u32 %v5388, 16
    %v5391 = vand.u32 %v5387, 65535
    %v5392 = vshrl.u32 %v5387, 16
    %v5393 = vmul.u32 %v5389, %v5391
    %v5394 = vmul.u32 %v5389, %v5392
    %v5395 = vmul.u32 %v5390, %v5391
    %v5396 = vmul.u32 %v5390, %v5392
    %v5397 = vshll.u32 %v5394, 16
    %v5398 = vshrl.u32 %v5394, 16
    %v5399 = vshll.u32 %v5395, 16
    %v5400 = vshrl.u32 %v5395, 16
    %vm5401 = vc.u32 %v5393, %v5397
    %v5402 = vsel %vm5401, 1, 0
    %v5403 = vadd.s32 %v5393, %v5397
    %v5404 = vadd.s32 %v5396, %v5402
    %vm5405 = vc.u32 %v5403, %v5399
    %v5406 = vsel %vm5405, 1, 0
    %v5407 = vadd.s32 %v5403, %v5399
    %v5408 = vadd.s32 %v5404, %v5406
    %v5409 = vadd.s32 %v5408, %v5398
    %v5410 = vadd.s32 %v5409, %v5400
    %v5411 = vand.u32 %v5388, 65535
    %v5412 = vshrl.u32 %v5388, 16
    %v5413 = vand.u32 %v5383, 65535
    %v5414 = vshrl.u32 %v5383, 16
    %v5415 = vmul.u32 %v5411, %v5413
    %v5416 = vmul.u32 %v5411, %v5414
    %v5417 = vmul.u32 %v5412, %v5413
    %v5418 = vmul.u32 %v5412, %v5414
    %v5419 = vshll.u32 %v5416, 16
    %v5420 = vshrl.u32 %v5416, 16
    %v5421 = vshll.u32 %v5417, 16
    %v5422 = vshrl.u32 %v5417, 16
    %vm5423 = vc.u32 %v5415, %v5419
    %v5424 = vsel %vm5423, 1, 0
    %v5425 = vadd.s32 %v5415, %v5419
    %v5426 = vadd.s32 %v5418, %v5424
    %vm5427 = vc.u32 %v5425, %v5421
    %v5428 = vsel %vm5427, 1, 0
    %v5429 = vadd.s32 %v5425, %v5421
    %v5430 = vadd.s32 %v5426, %v5428
    %v5431 = vadd.s32 %v5430, %v5420
    %v5432 = vadd.s32 %v5431, %v5422
    %v5433 = vmul.u32 %v5388, %v5379
    %v5434 = vadd.s32 %v5410, %v5429
    %vm5435 = vc.u32 %v5410, %v5429
    %v5436 = vadd.s32 %v5432, 1
    %v5437 = vsel %vm5435, %v5436, %v5432
    %v5438 = vadd.s32 %v5433, %v5437
    %v5439 = vadd.s32 %v5438, 536870912
    %v5440 = vshrl.u32 %v5439, 30
    %v5441 = vshll.u32 %v5440, 30
    %v5442 = vsub.s32 %v5438, %v5441
    %vm5443 = vcmp.lt.s32.totalorder %v5442, 0
    %v5444 = vsub.s32 0, %v5442
    %v5445 = vsel %vm5443, %v5444, %v5442
    %v5446 = vclz %v5445
    %v5447 = vsub.s32 %v5446, 2
    %vm5448 = vcmp.gt.s32.totalorder 0, %v5447
    %v5449 = vsel %vm5448, 0, %v5447
    %v5450 = vsub.s32 32, %v5449
    %v5451 = vshll.u32 %v5442, %v5449
    %v5452 = vshrl.u32 %v5434, %v5450
    %v5453 = vor.u32 %v5451, %v5452
    %v5454 = vsub.s32 4294967266, %v5449
    %v5455 = vadd.s32 %v5454, 127
    %v5456 = vshll.u32 %v5455, 23
    %v5457 = vor.u32 4788187, %v5456
    %v5458 = vand.u32 2147483647, %v5457
    %v5460 = vcvt.s32.f32 %v5453
    %v5461 = vmul.f32 %v5460, %v5458
    %v5462 = vxor.u32 %v5461, 2147483648
    %v5463 = vsel %vm5342, %v5462, %v5461
    %v5464 = vsub.s32 4, %v5440
    %v5465 = vsel %vm5342, %v5464, %v5440
    %v5466 = vsel %vm5341, %v5185, %v5463
    %v5467 = vsel %vm5341, 0, %v5465
    %v5468 = vmul.f32 %v5466, %v5466
    %v5469 = vmul.f32 %v5468, -0.001358992
    %v5470 = vadd.f32 %v5469, 0.041655596
    %v5471 = vmul.f32 %v5468, %v5470
    %v5472 = vadd.f32 %v5471, -0.4999988
    %v5473 = vmul.f32 %v5468, %v5472
    %v5474 = vadd.f32 1.0, %v5473
    %v5475 = vmul.f32 %v5466, %v5466
    %v5476 = vmul.f32 %v5475, -0.00019511016
    %v5477 = vadd.f32 %v5476, 0.008332121
    %v5478 = vmul.f32 %v5475, %v5477
    %v5479 = vadd.f32 %v5478, -0.16666654
    %v5480 = vmul.f32 %v5475, %v5479
    %v5481 = vadd.f32 %v5480, 1.0
    %v5482 = vmul.f32 %v5481, %v5466
    %vm5483 = vweird.f32 %v5185
    %v5484 = vand.u32 %v5467, 3
    %vm5485 = vcmp.lt.s32.totalorder %v5484, 2
    %vm5486 = vcmp.eq.s32.totalorder %v5484, 0
    %v5487 = vxor.u32 %v5482, 2147483648
    %v5488 = vsel %vm5486, %v5474, %v5487
    %vm5489 = vcmp.eq.s32.totalorder %v5484, 2
    %v5490 = vxor.u32 %v5474, 2147483648
    %v5491 = vsel %vm5489, %v5490, %v5482
    %v5492 = vsel %vm5485, %v5488, %v5491
    %v5493 = vsel %vm5483, nan, %v5492
    %v5494 = vmul.f32 %v682, %v5339
    %v5495 = vmul.f32 %v682, %v5493
    %v5496 = vmul.f32 %v685, %v5184
    %v5497 = vmul.f32 %v685, %v5185
    %v5498 = vadd.f32 %v5494, %v5496
    %v5499 = vadd.f32 %v5495, %v5497
    %v5500 = vsub.f32 %v5180, %v5498
    %v5501 = vsub.f32 %v5181, %v5499
    %v5502 = vmul.f32 %v369, %v5500
    %v5503 = vmul.f32 %v369, %v5501
    %v5504 = vadd.f32 %v5184, %v5502
    %v5505 = vadd.f32 %v5185, %v5503
    %v5506 = vand.u32 2147483647, %v5504
    %vm5507 = vcmp.le.f32.partialorder %v5506, 0.7853982
    %vm5508 = vcmp.lt.s32.totalorder %v5504, 0
    %v5509 = vand.u32 %v5504, 2139095040
    %v5510 = vshrl.u32 %v5509, 23
    %v5511 = vsub.s32 %v5510, 127
    %v5512 = vand.u32 2147483647, %v5504
    %v5513 = vand.u32 %v5512, 8388607
    %v5514 = vor.u32 %v5513, 8388608
    %v5515 = vsub.s32 0, %v5514
    %v5516 = vadd.s32 %v5511, 1
    %vm5517 = vcmp.gt.s32.totalorder %v5516, 0
    %v5518 = vsel %vm5517, %v5516, 0
    %v5519 = vshrl.u32 %v5518, 5
    %v5520 = vand.u32 %v5518, 31
    %v5521 = vsub.s32 32, %v5520
    %v5522 = vshrl.u32 683565275, %v5521
    %v5523 = vshll.u32 683565275, %v5520
    %v5524 = vshrl.u32 2475754826, %v5521
    %v5525 = vor.u32 %v5523, %v5524
    %v5526 = vshll.u32 2475754826, %v5520
    %v5527 = vshrl.u32 2131351028, %v5521
    %v5528 = vor.u32 %v5526, %v5527
    %v5529 = vshll.u32 2131351028, %v5520
    %v5530 = vshrl.u32 2102212464, %v5521
    %v5531 = vor.u32 %v5529, %v5530
    %v5532 = vshll.u32 2102212464, %v5520
    %v5533 = vshrl.u32 920167782, %v5521
    %v5534 = vor.u32 %v5532, %v5533
    %v5535 = vshll.u32 920167782, %v5520
    %v5536 = vshrl.u32 1326507024, %v5521
    %v5537 = vor.u32 %v5535, %v5536
    %vm5538 = vcmp.lt.s32.totalorder %v5519, 1
    %vm5539 = vcmp.lt.s32.totalorder %v5519, 2
    %vm5540 = vcmp.lt.s32.totalorder %v5519, 3
    %vm5541 = vcmp.lt.s32.totalorder %v5519, 4
    %v5542 = vsel %vm5538, %v5522, %v5525
    %v5543 = vsel %vm5541, %v5531, 2102212464
    %v5544 = vsel %vm5540, %v5528, %v5543
    %v5545 = vsel %vm5539, %v5542, %v5544
    %v5546 = vsel %vm5538, %v5525, %v5528
    %v5547 = vsel %vm5541, %v5534, 920167782
    %v5548 = vsel %vm5540, %v5531, %v5547
    %v5549 = vsel %vm5539, %v5546, %v5548
    %v5550 = vsel %vm5538, %v5528, %v5531
    %v5551 = vsel %vm5541, %v5537, 1326507024
    %v5552 = vsel %vm5540, %v5534, %v5551
    %v5553 = vsel %vm5539, %v5550, %v5552
    %v5554 = vshll.u32 %v5514, 8
    %v5555 = vand.u32 %v5554, 65535
    %v5556 = vshrl.u32 %v5554, 16
    %v5557 = vand.u32 %v5553, 65535
    %v5558 = vshrl.u32 %v5553, 16
    %v5559 = vmul.u32 %v5555, %v5557
    %v5560 = vmul.u32 %v5555, %v5558
    %v5561 = vmul.u32 %v5556, %v5557
    %v5562 = vmul.u32 %v5556, %v5558
    %v5563 = vshll.u32 %v5560, 16
    %v5564 = vshrl.u32 %v5560, 16
    %v5565 = vshll.u32 %v5561, 16
    %v5566 = vshrl.u32 %v5561, 16
    %vm5567 = vc.u32 %v5559, %v5563
    %v5568 = vsel %vm5567, 1, 0
    %v5569 = vadd.s32 %v5559, %v5563
    %v5570 = vadd.s32 %v5562, %v5568
    %vm5571 = vc.u32 %v5569, %v5565
    %v5572 = vsel %vm5571, 1, 0
    %v5573 = vadd.s32 %v5569, %v5565
    %v5574 = vadd.s32 %v5570, %v5572
    %v5575 = vadd.s32 %v5574, %v5564
    %v5576 = vadd.s32 %v5575, %v5566
    %v5577 = vand.u32 %v5554, 65535
    %v5578 = vshrl.u32 %v5554, 16
    %v5579 = vand.u32 %v5549, 65535
    %v5580 = vshrl.u32 %v5549, 16
    %v5581 = vmul.u32 %v5577, %v5579
    %v5582 = vmul.u32 %v5577, %v5580
    %v5583 = vmul.u32 %v5578, %v5579
    %v5584 = vmul.u32 %v5578, %v5580
    %v5585 = vshll.u32 %v5582, 16
    %v5586 = vshrl.u32 %v5582, 16
    %v5587 = vshll.u32 %v5583, 16
    %v5588 = vshrl.u32 %v5583, 16
    %vm5589 = vc.u32 %v5581, %v5585
    %v5590 = vsel %vm5589, 1, 0
    %v5591 = vadd.s32 %v5581, %v5585
    %v5592 = vadd.s32 %v5584, %v5590
    %vm5593 = vc.u32 %v5591, %v5587
    %v5594 = vsel %vm5593, 1, 0
    %v5595 = vadd.s32 %v5591, %v5587
    %v5596 = vadd.s32 %v5592, %v5594
    %v5597 = vadd.s32 %v5596, %v5586
    %v5598 = vadd.s32 %v5597, %v5588
    %v5599 = vmul.u32 %v5554, %v5545
    %v5600 = vadd.s32 %v5576, %v5595
    %vm5601 = vc.u32 %v5576, %v5595
    %v5602 = vadd.s32 %v5598, 1
    %v5603 = vsel %vm5601, %v5602, %v5598
    %v5604 = vadd.s32 %v5599, %v5603
    %v5605 = vadd.s32 %v5604, 536870912
    %v5606 = vshrl.u32 %v5605, 30
    %v5607 = vshll.u32 %v5606, 30
    %v5608 = vsub.s32 %v5604, %v5607
    %vm5609 = vcmp.lt.s32.totalorder %v5608, 0
    %v5610 = vsub.s32 0, %v5608
    %v5611 = vsel %vm5609, %v5610, %v5608
    %v5612 = vclz %v5611
    %v5613 = vsub.s32 %v5612, 2
    %vm5614 = vcmp.gt.s32.totalorder 0, %v5613
    %v5615 = vsel %vm5614, 0, %v5613
    %v5616 = vsub.s32 32, %v5615
    %v5617 = vshll.u32 %v5608, %v5615
    %v5618 = vshrl.u32 %v5600, %v5616
    %v5619 = vor.u32 %v5617, %v5618
    %v5620 = vsub.s32 4294967266, %v5615
    %v5621 = vadd.s32 %v5620, 127
    %v5622 = vshll.u32 %v5621, 23
    %v5623 = vor.u32 4788187, %v5622
    %v5624 = vand.u32 2147483647, %v5623
    %v5626 = vcvt.s32.f32 %v5619
    %v5627 = vmul.f32 %v5626, %v5624
    %v5628 = vxor.u32 %v5627, 2147483648
    %v5629 = vsel %vm5508, %v5628, %v5627
    %v5630 = vsub.s32 4, %v5606
    %v5631 = vsel %vm5508, %v5630, %v5606
    %v5632 = vsel %vm5507, %v5504, %v5629
    %v5633 = vsel %vm5507, 0, %v5631
    %v5634 = vmul.f32 %v5632, %v5632
    %v5635 = vmul.f32 %v5634, -0.001358992
    %v5636 = vadd.f32 %v5635, 0.041655596
    %v5637 = vmul.f32 %v5634, %v5636
    %v5638 = vadd.f32 %v5637, -0.4999988
    %v5639 = vmul.f32 %v5634, %v5638
    %v5640 = vadd.f32 1.0, %v5639
    %v5641 = vmul.f32 %v5632, %v5632
    %v5642 = vmul.f32 %v5641, -0.00019511016
    %v5643 = vadd.f32 %v5642, 0.008332121
    %v5644 = vmul.f32 %v5641, %v5643
    %v5645 = vadd.f32 %v5644, -0.16666654
    %v5646 = vmul.f32 %v5641, %v5645
    %v5647 = vadd.f32 %v5646, 1.0
    %v5648 = vmul.f32 %v5647, %v5632
    %vm5649 = vweird.f32 %v5504
    %v5650 = vand.u32 %v5633, 3
    %vm5651 = vcmp.lt.s32.totalorder %v5650, 2
    %vm5652 = vcmp.eq.s32.totalorder %v5650, 0
    %v5653 = vxor.u32 %v5648, 2147483648
    %v5654 = vsel %vm5652, %v5640, %v5653
    %vm5655 = vcmp.eq.s32.totalorder %v5650, 2
    %v5656 = vxor.u32 %v5640, 2147483648
    %v5657 = vsel %vm5655, %v5656, %v5648
    %v5658 = vsel %vm5651, %v5654, %v5657
    %v5659 = vsel %vm5649, nan, %v5658
    %v5660 = vand.u32 2147483647, %v5505
    %vm5661 = vcmp.le.f32.partialorder %v5660, 0.7853982
    %vm5662 = vcmp.lt.s32.totalorder %v5505, 0
    %v5663 = vand.u32 %v5505, 2139095040
    %v5664 = vshrl.u32 %v5663, 23
    %v5665 = vsub.s32 %v5664, 127
    %v5666 = vand.u32 2147483647, %v5505
    %v5667 = vand.u32 %v5666, 8388607
    %v5668 = vor.u32 %v5667, 8388608
    %v5669 = vsub.s32 0, %v5668
    %v5670 = vadd.s32 %v5665, 1
    %vm5671 = vcmp.gt.s32.totalorder %v5670, 0
    %v5672 = vsel %vm5671, %v5670, 0
    %v5673 = vshrl.u32 %v5672, 5
    %v5674 = vand.u32 %v5672, 31
    %v5675 = vsub.s32 32, %v5674
    %v5676 = vshrl.u32 683565275, %v5675
    %v5677 = vshll.u32 683565275, %v5674
    %v5678 = vshrl.u32 2475754826, %v5675
    %v5679 = vor.u32 %v5677, %v5678
    %v5680 = vshll.u32 2475754826, %v5674
    %v5681 = vshrl.u32 2131351028, %v5675
    %v5682 = vor.u32 %v5680, %v5681
    %v5683 = vshll.u32 2131351028, %v5674
    %v5684 = vshrl.u32 2102212464, %v5675
    %v5685 = vor.u32 %v5683, %v5684
    %v5686 = vshll.u32 2102212464, %v5674
    %v5687 = vshrl.u32 920167782, %v5675
    %v5688 = vor.u32 %v5686, %v5687
    %v5689 = vshll.u32 920167782, %v5674
    %v5690 = vshrl.u32 1326507024, %v5675
    %v5691 = vor.u32 %v5689, %v5690
    %vm5692 = vcmp.lt.s32.totalorder %v5673, 1
    %vm5693 = vcmp.lt.s32.totalorder %v5673, 2
    %vm5694 = vcmp.lt.s32.totalorder %v5673, 3
    %vm5695 = vcmp.lt.s32.totalorder %v5673, 4
    %v5696 = vsel %vm5692, %v5676, %v5679
    %v5697 = vsel %vm5695, %v5685, 2102212464
    %v5698 = vsel %vm5694, %v5682, %v5697
    %v5699 = vsel %vm5693, %v5696, %v5698
    %v5700 = vsel %vm5692, %v5679, %v5682
    %v5701 = vsel %vm5695, %v5688, 920167782
    %v5702 = vsel %vm5694, %v5685, %v5701
    %v5703 = vsel %vm5693, %v5700, %v5702
    %v5704 = vsel %vm5692, %v5682, %v5685
    %v5705 = vsel %vm5695, %v5691, 1326507024
    %v5706 = vsel %vm5694, %v5688, %v5705
    %v5707 = vsel %vm5693, %v5704, %v5706
    %v5708 = vshll.u32 %v5668, 8
    %v5709 = vand.u32 %v5708, 65535
    %v5710 = vshrl.u32 %v5708, 16
    %v5711 = vand.u32 %v5707, 65535
    %v5712 = vshrl.u32 %v5707, 16
    %v5713 = vmul.u32 %v5709, %v5711
    %v5714 = vmul.u32 %v5709, %v5712
    %v5715 = vmul.u32 %v5710, %v5711
    %v5716 = vmul.u32 %v5710, %v5712
    %v5717 = vshll.u32 %v5714, 16
    %v5718 = vshrl.u32 %v5714, 16
    %v5719 = vshll.u32 %v5715, 16
    %v5720 = vshrl.u32 %v5715, 16
    %vm5721 = vc.u32 %v5713, %v5717
    %v5722 = vsel %vm5721, 1, 0
    %v5723 = vadd.s32 %v5713, %v5717
    %v5724 = vadd.s32 %v5716, %v5722
    %vm5725 = vc.u32 %v5723, %v5719
    %v5726 = vsel %vm5725, 1, 0
    %v5727 = vadd.s32 %v5723, %v5719
    %v5728 = vadd.s32 %v5724, %v5726
    %v5729 = vadd.s32 %v5728, %v5718
    %v5730 = vadd.s32 %v5729, %v5720
    %v5731 = vand.u32 %v5708, 65535
    %v5732 = vshrl.u32 %v5708, 16
    %v5733 = vand.u32 %v5703, 65535
    %v5734 = vshrl.u32 %v5703, 16
    %v5735 = vmul.u32 %v5731, %v5733
    %v5736 = vmul.u32 %v5731, %v5734
    %v5737 = vmul.u32 %v5732, %v5733
    %v5738 = vmul.u32 %v5732, %v5734
    %v5739 = vshll.u32 %v5736, 16
    %v5740 = vshrl.u32 %v5736, 16
    %v5741 = vshll.u32 %v5737, 16
    %v5742 = vshrl.u32 %v5737, 16
    %vm5743 = vc.u32 %v5735, %v5739
    %v5744 = vsel %vm5743, 1, 0
    %v5745 = vadd.s32 %v5735, %v5739
    %v5746 = vadd.s32 %v5738, %v5744
    %vm5747 = vc.u32 %v5745, %v5741
    %v5748 = vsel %vm5747, 1, 0
    %v5749 = vadd.s32 %v5745, %v5741
    %v5750 = vadd.s32 %v5746, %v5748
    %v5751 = vadd.s32 %v5750, %v5740
    %v5752 = vadd.s32 %v5751, %v5742
    %v5753 = vmul.u32 %v5708, %v5699
    %v5754 = vadd.s32 %v5730, %v5749
    %vm5755 = vc.u32 %v5730, %v5749
    %v5756 = vadd.s32 %v5752, 1
    %v5757 = vsel %vm5755, %v5756, %v5752
    %v5758 = vadd.s32 %v5753, %v5757
    %v5759 = vadd.s32 %v5758, 536870912
    %v5760 = vshrl.u32 %v5759, 30
    %v5761 = vshll.u32 %v5760, 30
    %v5762 = vsub.s32 %v5758, %v5761
    %vm5763 = vcmp.lt.s32.totalorder %v5762, 0
    %v5764 = vsub.s32 0, %v5762
    %v5765 = vsel %vm5763, %v5764, %v5762
    %v5766 = vclz %v5765
    %v5767 = vsub.s32 %v5766, 2
    %vm5768 = vcmp.gt.s32.totalorder 0, %v5767
    %v5769 = vsel %vm5768, 0, %v5767
    %v5770 = vsub.s32 32, %v5769
    %v5771 = vshll.u32 %v5762, %v5769
    %v5772 = vshrl.u32 %v5754, %v5770
    %v5773 = vor.u32 %v5771, %v5772
    %v5774 = vsub.s32 4294967266, %v5769
    %v5775 = vadd.s32 %v5774, 127
    %v5776 = vshll.u32 %v5775, 23
    %v5777 = vor.u32 4788187, %v5776
    %v5778 = vand.u32 2147483647, %v5777
    %v5780 = vcvt.s32.f32 %v5773
    %v5781 = vmul.f32 %v5780, %v5778
    %v5782 = vxor.u32 %v5781, 2147483648
    %v5783 = vsel %vm5662, %v5782, %v5781
    %v5784 = vsub.s32 4, %v5760
    %v5785 = vsel %vm5662, %v5784, %v5760
    %v5786 = vsel %vm5661, %v5505, %v5783
    %v5787 = vsel %vm5661, 0, %v5785
    %v5788 = vmul.f32 %v5786, %v5786
    %v5789 = vmul.f32 %v5788, -0.001358992
    %v5790 = vadd.f32 %v5789, 0.041655596
    %v5791 = vmul.f32 %v5788, %v5790
    %v5792 = vadd.f32 %v5791, -0.4999988
    %v5793 = vmul.f32 %v5788, %v5792
    %v5794 = vadd.f32 1.0, %v5793
    %v5795 = vmul.f32 %v5786, %v5786
    %v5796 = vmul.f32 %v5795, -0.00019511016
    %v5797 = vadd.f32 %v5796, 0.008332121
    %v5798 = vmul.f32 %v5795, %v5797
    %v5799 = vadd.f32 %v5798, -0.16666654
    %v5800 = vmul.f32 %v5795, %v5799
    %v5801 = vadd.f32 %v5800, 1.0
    %v5802 = vmul.f32 %v5801, %v5786
    %vm5803 = vweird.f32 %v5505
    %v5804 = vand.u32 %v5787, 3
    %vm5805 = vcmp.lt.s32.totalorder %v5804, 2
    %vm5806 = vcmp.eq.s32.totalorder %v5804, 0
    %v5807 = vxor.u32 %v5802, 2147483648
    %v5808 = vsel %vm5806, %v5794, %v5807
    %vm5809 = vcmp.eq.s32.totalorder %v5804, 2
    %v5810 = vxor.u32 %v5794, 2147483648
    %v5811 = vsel %vm5809, %v5810, %v5802
    %v5812 = vsel %vm5805, %v5808, %v5811
    %v5813 = vsel %vm5803, nan, %v5812
    %v5814 = vmul.f32 %v359, %v5659
    %v5815 = vmul.f32 %v359, %v5813
    %v5816 = vmul.f32 %v362, %v5504
    %v5817 = vmul.f32 %v362, %v5505
    %v5818 = vadd.f32 %v5814, %v5816
    %v5819 = vadd.f32 %v5815, %v5817
    %v5820 = vsub.f32 %v5500, %v5818
    %v5821 = vsub.f32 %v5501, %v5819
    %v5822 = vmul.f32 %v46, %v5820
    %v5823 = vmul.f32 %v46, %v5821
    %v5824 = vadd.f32 %v5504, %v5822
    %v5825 = vadd.f32 %v5505, %v5823
    %v5826 = vadd.f32 %v5824, %v5822
    %v5827 = vadd.f32 %v5825, %v5823
    %v5828 = vand.u32 2147483647, %v5826
    %vm5829 = vcmp.le.f32.partialorder %v5828, 0.7853982
    %vm5830 = vcmp.lt.s32.totalorder %v5826, 0
    %v5831 = vand.u32 %v5826, 2139095040
    %v5832 = vshrl.u32 %v5831, 23
    %v5833 = vsub.s32 %v5832, 127
    %v5834 = vand.u32 2147483647, %v5826
    %v5835 = vand.u32 %v5834, 8388607
    %v5836 = vor.u32 %v5835, 8388608
    %v5837 = vsub.s32 0, %v5836
    %v5838 = vadd.s32 %v5833, 1
    %vm5839 = vcmp.gt.s32.totalorder %v5838, 0
    %v5840 = vsel %vm5839, %v5838, 0
    %v5841 = vshrl.u32 %v5840, 5
    %v5842 = vand.u32 %v5840, 31
    %v5843 = vsub.s32 32, %v5842
    %v5844 = vshrl.u32 683565275, %v5843
    %v5845 = vshll.u32 683565275, %v5842
    %v5846 = vshrl.u32 2475754826, %v5843
    %v5847 = vor.u32 %v5845, %v5846
    %v5848 = vshll.u32 2475754826, %v5842
    %v5849 = vshrl.u32 2131351028, %v5843
    %v5850 = vor.u32 %v5848, %v5849
    %v5851 = vshll.u32 2131351028, %v5842
    %v5852 = vshrl.u32 2102212464, %v5843
    %v5853 = vor.u32 %v5851, %v5852
    %v5854 = vshll.u32 2102212464, %v5842
    %v5855 = vshrl.u32 920167782, %v5843
    %v5856 = vor.u32 %v5854, %v5855
    %v5857 = vshll.u32 920167782, %v5842
    %v5858 = vshrl.u32 1326507024, %v5843
    %v5859 = vor.u32 %v5857, %v5858
    %vm5860 = vcmp.lt.s32.totalorder %v5841, 1
    %vm5861 = vcmp.lt.s32.totalorder %v5841, 2
    %vm5862 = vcmp.lt.s32.totalorder %v5841, 3
    %vm5863 = vcmp.lt.s32.totalorder %v5841, 4
    %v5864 = vsel %vm5860, %v5844, %v5847
    %v5865 = vsel %vm5863, %v5853, 2102212464
    %v5866 = vsel %vm5862, %v5850, %v5865
    %v5867 = vsel %vm5861, %v5864, %v5866
    %v5868 = vsel %vm5860, %v5847, %v5850
    %v5869 = vsel %vm5863, %v5856, 920167782
    %v5870 = vsel %vm5862, %v5853, %v5869
    %v5871 = vsel %vm5861, %v5868, %v5870
    %v5872 = vsel %vm5860, %v5850, %v5853
    %v5873 = vsel %vm5863, %v5859, 1326507024
    %v5874 = vsel %vm5862, %v5856, %v5873
    %v5875 = vsel %vm5861, %v5872, %v5874
    %v5876 = vshll.u32 %v5836, 8
    %v5877 = vand.u32 %v5876, 65535
    %v5878 = vshrl.u32 %v5876, 16
    %v5879 = vand.u32 %v5875, 65535
    %v5880 = vshrl.u32 %v5875, 16
    %v5881 = vmul.u32 %v5877, %v5879
    %v5882 = vmul.u32 %v5877, %v5880
    %v5883 = vmul.u32 %v5878, %v5879
    %v5884 = vmul.u32 %v5878, %v5880
    %v5885 = vshll.u32 %v5882, 16
    %v5886 = vshrl.u32 %v5882, 16
    %v5887 = vshll.u32 %v5883, 16
    %v5888 = vshrl.u32 %v5883, 16
    %vm5889 = vc.u32 %v5881, %v5885
    %v5890 = vsel %vm5889, 1, 0
    %v5891 = vadd.s32 %v5881, %v5885
    %v5892 = vadd.s32 %v5884, %v5890
    %vm5893 = vc.u32 %v5891, %v5887
    %v5894 = vsel %vm5893, 1, 0
    %v5895 = vadd.s32 %v5891, %v5887
    %v5896 = vadd.s32 %v5892, %v5894
    %v5897 = vadd.s32 %v5896, %v5886
    %v5898 = vadd.s32 %v5897, %v5888
    %v5899 = vand.u32 %v5876, 65535
    %v5900 = vshrl.u32 %v5876, 16
    %v5901 = vand.u32 %v5871, 65535
    %v5902 = vshrl.u32 %v5871, 16
    %v5903 = vmul.u32 %v5899, %v5901
    %v5904 = vmul.u32 %v5899, %v5902
    %v5905 = vmul.u32 %v5900, %v5901
    %v5906 = vmul.u32 %v5900, %v5902
    %v5907 = vshll.u32 %v5904, 16
    %v5908 = vshrl.u32 %v5904, 16
    %v5909 = vshll.u32 %v5905, 16
    %v5910 = vshrl.u32 %v5905, 16
    %vm5911 = vc.u32 %v5903, %v5907
    %v5912 = vsel %vm5911, 1, 0
    %v5913 = vadd.s32 %v5903, %v5907
    %v5914 = vadd.s32 %v5906, %v5912
    %vm5915 = vc.u32 %v5913, %v5909
    %v5916 = vsel %vm5915, 1, 0
    %v5917 = vadd.s32 %v5913, %v5909
    %v5918 = vadd.s32 %v5914, %v5916
    %v5919 = vadd.s32 %v5918, %v5908
    %v5920 = vadd.s32 %v5919, %v5910
    %v5921 = vmul.u32 %v5876, %v5867
    %v5922 = vadd.s32 %v5898, %v5917
    %vm5923 = vc.u32 %v5898, %v5917
    %v5924 = vadd.s32 %v5920, 1
    %v5925 = vsel %vm5923, %v5924, %v5920
    %v5926 = vadd.s32 %v5921, %v5925
    %v5927 = vadd.s32 %v5926, 536870912
    %v5928 = vshrl.u32 %v5927, 30
    %v5929 = vshll.u32 %v5928, 30
    %v5930 = vsub.s32 %v5926, %v5929
    %vm5931 = vcmp.lt.s32.totalorder %v5930, 0
    %v5932 = vsub.s32 0, %v5930
    %v5933 = vsel %vm5931, %v5932, %v5930
    %v5934 = vclz %v5933
    %v5935 = vsub.s32 %v5934, 2
    %vm5936 = vcmp.gt.s32.totalorder 0, %v5935
    %v5937 = vsel %vm5936, 0, %v5935
    %v5938 = vsub.s32 32, %v5937
    %v5939 = vshll.u32 %v5930, %v5937
    %v5940 = vshrl.u32 %v5922, %v5938
    %v5941 = vor.u32 %v5939, %v5940
    %v5942 = vsub.s32 4294967266, %v5937
    %v5943 = vadd.s32 %v5942, 127
    %v5944 = vshll.u32 %v5943, 23
    %v5945 = vor.u32 4788187, %v5944
    %v5946 = vand.u32 2147483647, %v5945
    %v5948 = vcvt.s32.f32 %v5941
    %v5949 = vmul.f32 %v5948, %v5946
    %v5950 = vxor.u32 %v5949, 2147483648
    %v5951 = vsel %vm5830, %v5950, %v5949
    %v5952 = vsub.s32 4, %v5928
    %v5953 = vsel %vm5830, %v5952, %v5928
    %v5954 = vsel %vm5829, %v5826, %v5951
    %v5955 = vsel %vm5829, 0, %v5953
    %v5956 = vmul.f32 %v5954, %v5954
    %v5957 = vmul.f32 %v5956, -0.001358992
    %v5958 = vadd.f32 %v5957, 0.041655596
    %v5959 = vmul.f32 %v5956, %v5958
    %v5960 = vadd.f32 %v5959, -0.4999988
    %v5961 = vmul.f32 %v5956, %v5960
    %v5962 = vadd.f32 1.0, %v5961
    %v5963 = vmul.f32 %v5954, %v5954
    %v5964 = vmul.f32 %v5963, -0.00019511016
    %v5965 = vadd.f32 %v5964, 0.008332121
    %v5966 = vmul.f32 %v5963, %v5965
    %v5967 = vadd.f32 %v5966, -0.16666654
    %v5968 = vmul.f32 %v5963, %v5967
    %v5969 = vadd.f32 %v5968, 1.0
    %v5970 = vmul.f32 %v5969, %v5954
    %vm5971 = vweird.f32 %v5826
    %v5972 = vand.u32 %v5955, 3
    %vm5973 = vcmp.lt.s32.totalorder %v5972, 2
    %vm5974 = vcmp.eq.s32.totalorder %v5972, 0
    %v5975 = vxor.u32 %v5970, 2147483648
    %v5976 = vsel %vm5974, %v5962, %v5975
    %vm5977 = vcmp.eq.s32.totalorder %v5972, 2
    %v5978 = vxor.u32 %v5962, 2147483648
    %v5979 = vsel %vm5977, %v5978, %v5970
    %v5980 = vsel %vm5973, %v5976, %v5979
    %v5981 = vsel %vm5971, nan, %v5980
    %v5982 = vand.u32 2147483647, %v5827
    %vm5983 = vcmp.le.f32.partialorder %v5982, 0.7853982
    %vm5984 = vcmp.lt.s32.totalorder %v5827, 0
    %v5985 = vand.u32 %v5827, 2139095040
    %v5986 = vshrl.u32 %v5985, 23
    %v5987 = vsub.s32 %v5986, 127
    %v5988 = vand.u32 2147483647, %v5827
    %v5989 = vand.u32 %v5988, 8388607
    %v5990 = vor.u32 %v5989, 8388608
    %v5991 = vsub.s32 0, %v5990
    %v5992 = vadd.s32 %v5987, 1
    %vm5993 = vcmp.gt.s32.totalorder %v5992, 0
    %v5994 = vsel %vm5993, %v5992, 0
    %v5995 = vshrl.u32 %v5994, 5
    %v5996 = vand.u32 %v5994, 31
    %v5997 = vsub.s32 32, %v5996
    %v5998 = vshrl.u32 683565275, %v5997
    %v5999 = vshll.u32 683565275, %v5996
    %v6000 = vshrl.u32 2475754826, %v5997
    %v6001 = vor.u32 %v5999, %v6000
    %v6002 = vshll.u32 2475754826, %v5996
    %v6003 = vshrl.u32 2131351028, %v5997
    %v6004 = vor.u32 %v6002, %v6003
    %v6005 = vshll.u32 2131351028, %v5996
    %v6006 = vshrl.u32 2102212464, %v5997
    %v6007 = vor.u32 %v6005, %v6006
    %v6008 = vshll.u32 2102212464, %v5996
    %v6009 = vshrl.u32 920167782, %v5997
    %v6010 = vor.u32 %v6008, %v6009
    %v6011 = vshll.u32 920167782, %v5996
    %v6012 = vshrl.u32 1326507024, %v5997
    %v6013 = vor.u32 %v6011, %v6012
    %vm6014 = vcmp.lt.s32.totalorder %v5995, 1
    %vm6015 = vcmp.lt.s32.totalorder %v5995, 2
    %vm6016 = vcmp.lt.s32.totalorder %v5995, 3
    %vm6017 = vcmp.lt.s32.totalorder %v5995, 4
    %v6018 = vsel %vm6014, %v5998, %v6001
    %v6019 = vsel %vm6017, %v6007, 2102212464
    %v6020 = vsel %vm6016, %v6004, %v6019
    %v6021 = vsel %vm6015, %v6018, %v6020
    %v6022 = vsel %vm6014, %v6001, %v6004
    %v6023 = vsel %vm6017, %v6010, 920167782
    %v6024 = vsel %vm6016, %v6007, %v6023
    %v6025 = vsel %vm6015, %v6022, %v6024
    %v6026 = vsel %vm6014, %v6004, %v6007
    %v6027 = vsel %vm6017, %v6013, 1326507024
    %v6028 = vsel %vm6016, %v6010, %v6027
    %v6029 = vsel %vm6015, %v6026, %v6028
    %v6030 = vshll.u32 %v5990, 8
    %v6031 = vand.u32 %v6030, 65535
    %v6032 = vshrl.u32 %v6030, 16
    %v6033 = vand.u32 %v6029, 65535
    %v6034 = vshrl.u32 %v6029, 16
    %v6035 = vmul.u32 %v6031, %v6033
    %v6036 = vmul.u32 %v6031, %v6034
    %v6037 = vmul.u32 %v6032, %v6033
    %v6038 = vmul.u32 %v6032, %v6034
    %v6039 = vshll.u32 %v6036, 16
    %v6040 = vshrl.u32 %v6036, 16
    %v6041 = vshll.u32 %v6037, 16
    %v6042 = vshrl.u32 %v6037, 16
    %vm6043 = vc.u32 %v6035, %v6039
    %v6044 = vsel %vm6043, 1, 0
    %v6045 = vadd.s32 %v6035, %v6039
    %v6046 = vadd.s32 %v6038, %v6044
    %vm6047 = vc.u32 %v6045, %v6041
    %v6048 = vsel %vm6047, 1, 0
    %v6049 = vadd.s32 %v6045, %v6041
    %v6050 = vadd.s32 %v6046, %v6048
    %v6051 = vadd.s32 %v6050, %v6040
    %v6052 = vadd.s32 %v6051, %v6042
    %v6053 = vand.u32 %v6030, 65535
    %v6054 = vshrl.u32 %v6030, 16
    %v6055 = vand.u32 %v6025, 65535
    %v6056 = vshrl.u32 %v6025, 16
    %v6057 = vmul.u32 %v6053, %v6055
    %v6058 = vmul.u32 %v6053, %v6056
    %v6059 = vmul.u32 %v6054, %v6055
    %v6060 = vmul.u32 %v6054, %v6056
    %v6061 = vshll.u32 %v6058, 16
    %v6062 = vshrl.u32 %v6058, 16
    %v6063 = vshll.u32 %v6059, 16
    %v6064 = vshrl.u32 %v6059, 16
    %vm6065 = vc.u32 %v6057, %v6061
    %v6066 = vsel %vm6065, 1, 0
    %v6067 = vadd.s32 %v6057, %v6061
    %v6068 = vadd.s32 %v6060, %v6066
    %vm6069 = vc.u32 %v6067, %v6063
    %v6070 = vsel %vm6069, 1, 0
    %v6071 = vadd.s32 %v6067, %v6063
    %v6072 = vadd.s32 %v6068, %v6070
    %v6073 = vadd.s32 %v6072, %v6062
    %v6074 = vadd.s32 %v6073, %v6064
    %v6075 = vmul.u32 %v6030, %v6021
    %v6076 = vadd.s32 %v6052, %v6071
    %vm6077 = vc.u32 %v6052, %v6071
    %v6078 = vadd.s32 %v6074, 1
    %v6079 = vsel %vm6077, %v6078, %v6074
    %v6080 = vadd.s32 %v6075, %v6079
    %v6081 = vadd.s32 %v6080, 536870912
    %v6082 = vshrl.u32 %v6081, 30
    %v6083 = vshll.u32 %v6082, 30
    %v6084 = vsub.s32 %v6080, %v6083
    %vm6085 = vcmp.lt.s32.totalorder %v6084, 0
    %v6086 = vsub.s32 0, %v6084
    %v6087 = vsel %vm6085, %v6086, %v6084
    %v6088 = vclz %v6087
    %v6089 = vsub.s32 %v6088, 2
    %vm6090 = vcmp.gt.s32.totalorder 0, %v6089
    %v6091 = vsel %vm6090, 0, %v6089
    %v6092 = vsub.s32 32, %v6091
    %v6093 = vshll.u32 %v6084, %v6091
    %v6094 = vshrl.u32 %v6076, %v6092
    %v6095 = vor.u32 %v6093, %v6094
    %v6096 = vsub.s32 4294967266, %v6091
    %v6097 = vadd.s32 %v6096, 127
    %v6098 = vshll.u32 %v6097, 23
    %v6099 = vor.u32 4788187, %v6098
    %v6100 = vand.u32 2147483647, %v6099
    %v6102 = vcvt.s32.f32 %v6095
    %v6103 = vmul.f32 %v6102, %v6100
    %v6104 = vxor.u32 %v6103, 2147483648
    %v6105 = vsel %vm5984, %v6104, %v6103
    %v6106 = vsub.s32 4, %v6082
    %v6107 = vsel %vm5984, %v6106, %v6082
    %v6108 = vsel %vm5983, %v5827, %v6105
    %v6109 = vsel %vm5983, 0, %v6107
    %v6110 = vmul.f32 %v6108, %v6108
    %v6111 = vmul.f32 %v6110, -0.001358992
    %v6112 = vadd.f32 %v6111, 0.041655596
    %v6113 = vmul.f32 %v6110, %v6112
    %v6114 = vadd.f32 %v6113, -0.4999988
    %v6115 = vmul.f32 %v6110, %v6114
    %v6116 = vadd.f32 1.0, %v6115
    %v6117 = vmul.f32 %v6108, %v6108
    %v6118 = vmul.f32 %v6117, -0.00019511016
    %v6119 = vadd.f32 %v6118, 0.008332121
    %v6120 = vmul.f32 %v6117, %v6119
    %v6121 = vadd.f32 %v6120, -0.16666654
    %v6122 = vmul.f32 %v6117, %v6121
    %v6123 = vadd.f32 %v6122, 1.0
    %v6124 = vmul.f32 %v6123, %v6108
    %vm6125 = vweird.f32 %v5827
    %v6126 = vand.u32 %v6109, 3
    %vm6127 = vcmp.lt.s32.totalorder %v6126, 2
    %vm6128 = vcmp.eq.s32.totalorder %v6126, 0
    %v6129 = vxor.u32 %v6124, 2147483648
    %v6130 = vsel %vm6128, %v6116, %v6129
    %vm6131 = vcmp.eq.s32.totalorder %v6126, 2
    %v6132 = vxor.u32 %v6116, 2147483648
    %v6133 = vsel %vm6131, %v6132, %v6124
    %v6134 = vsel %vm6127, %v6130, %v6133
    %v6135 = vsel %vm6125, nan, %v6134
    %v6136 = vmul.f32 %v359, %v5981
    %v6137 = vmul.f32 %v359, %v6135
    %v6138 = vmul.f32 %v362, %v5826
    %v6139 = vmul.f32 %v362, %v5827
    %v6140 = vadd.f32 %v6136, %v6138
    %v6141 = vadd.f32 %v6137, %v6139
    %v6142 = vsub.f32 %v5820, %v6140
    %v6143 = vsub.f32 %v5821, %v6141
    %v6144 = vmul.f32 %v369, %v6142
    %v6145 = vmul.f32 %v369, %v6143
    %v6146 = vadd.f32 %v5826, %v6144
    %v6147 = vadd.f32 %v5827, %v6145
    %v6148 = vand.u32 2147483647, %v6146
    %vm6149 = vcmp.le.f32.partialorder %v6148, 0.7853982
    %vm6150 = vcmp.lt.s32.totalorder %v6146, 0
    %v6151 = vand.u32 %v6146, 2139095040
    %v6152 = vshrl.u32 %v6151, 23
    %v6153 = vsub.s32 %v6152, 127
    %v6154 = vand.u32 2147483647, %v6146
    %v6155 = vand.u32 %v6154, 8388607
    %v6156 = vor.u32 %v6155, 8388608
    %v6157 = vsub.s32 0, %v6156
    %v6158 = vadd.s32 %v6153, 1
    %vm6159 = vcmp.gt.s32.totalorder %v6158, 0
    %v6160 = vsel %vm6159, %v6158, 0
    %v6161 = vshrl.u32 %v6160, 5
    %v6162 = vand.u32 %v6160, 31
    %v6163 = vsub.s32 32, %v6162
    %v6164 = vshrl.u32 683565275, %v6163
    %v6165 = vshll.u32 683565275, %v6162
    %v6166 = vshrl.u32 2475754826, %v6163
    %v6167 = vor.u32 %v6165, %v6166
    %v6168 = vshll.u32 2475754826, %v6162
    %v6169 = vshrl.u32 2131351028, %v6163
    %v6170 = vor.u32 %v6168, %v6169
    %v6171 = vshll.u32 2131351028, %v6162
    %v6172 = vshrl.u32 2102212464, %v6163
    %v6173 = vor.u32 %v6171, %v6172
    %v6174 = vshll.u32 2102212464, %v6162
    %v6175 = vshrl.u32 920167782, %v6163
    %v6176 = vor.u32 %v6174, %v6175
    %v6177 = vshll.u32 920167782, %v6162
    %v6178 = vshrl.u32 1326507024, %v6163
    %v6179 = vor.u32 %v6177, %v6178
    %vm6180 = vcmp.lt.s32.totalorder %v6161, 1
    %vm6181 = vcmp.lt.s32.totalorder %v6161, 2
    %vm6182 = vcmp.lt.s32.totalorder %v6161, 3
    %vm6183 = vcmp.lt.s32.totalorder %v6161, 4
    %v6184 = vsel %vm6180, %v6164, %v6167
    %v6185 = vsel %vm6183, %v6173, 2102212464
    %v6186 = vsel %vm6182, %v6170, %v6185
    %v6187 = vsel %vm6181, %v6184, %v6186
    %v6188 = vsel %vm6180, %v6167, %v6170
    %v6189 = vsel %vm6183, %v6176, 920167782
    %v6190 = vsel %vm6182, %v6173, %v6189
    %v6191 = vsel %vm6181, %v6188, %v6190
    %v6192 = vsel %vm6180, %v6170, %v6173
    %v6193 = vsel %vm6183, %v6179, 1326507024
    %v6194 = vsel %vm6182, %v6176, %v6193
    %v6195 = vsel %vm6181, %v6192, %v6194
    %v6196 = vshll.u32 %v6156, 8
    %v6197 = vand.u32 %v6196, 65535
    %v6198 = vshrl.u32 %v6196, 16
    %v6199 = vand.u32 %v6195, 65535
    %v6200 = vshrl.u32 %v6195, 16
    %v6201 = vmul.u32 %v6197, %v6199
    %v6202 = vmul.u32 %v6197, %v6200
    %v6203 = vmul.u32 %v6198, %v6199
    %v6204 = vmul.u32 %v6198, %v6200
    %v6205 = vshll.u32 %v6202, 16
    %v6206 = vshrl.u32 %v6202, 16
    %v6207 = vshll.u32 %v6203, 16
    %v6208 = vshrl.u32 %v6203, 16
    %vm6209 = vc.u32 %v6201, %v6205
    %v6210 = vsel %vm6209, 1, 0
    %v6211 = vadd.s32 %v6201, %v6205
    %v6212 = vadd.s32 %v6204, %v6210
    %vm6213 = vc.u32 %v6211, %v6207
    %v6214 = vsel %vm6213, 1, 0
    %v6215 = vadd.s32 %v6211, %v6207
    %v6216 = vadd.s32 %v6212, %v6214
    %v6217 = vadd.s32 %v6216, %v6206
    %v6218 = vadd.s32 %v6217, %v6208
    %v6219 = vand.u32 %v6196, 65535
    %v6220 = vshrl.u32 %v6196, 16
    %v6221 = vand.u32 %v6191, 65535
    %v6222 = vshrl.u32 %v6191, 16
    %v6223 = vmul.u32 %v6219, %v6221
    %v6224 = vmul.u32 %v6219, %v6222
    %v6225 = vmul.u32 %v6220, %v6221
    %v6226 = vmul.u32 %v6220, %v6222
    %v6227 = vshll.u32 %v6224, 16
    %v6228 = vshrl.u32 %v6224, 16
    %v6229 = vshll.u32 %v6225, 16
    %v6230 = vshrl.u32 %v6225, 16
    %vm6231 = vc.u32 %v6223, %v6227
    %v6232 = vsel %vm6231, 1, 0
    %v6233 = vadd.s32 %v6223, %v6227
    %v6234 = vadd.s32 %v6226, %v6232
    %vm6235 = vc.u32 %v6233, %v6229
    %v6236 = vsel %vm6235, 1, 0
    %v6237 = vadd.s32 %v6233, %v6229
    %v6238 = vadd.s32 %v6234, %v6236
    %v6239 = vadd.s32 %v6238, %v6228
    %v6240 = vadd.s32 %v6239, %v6230
    %v6241 = vmul.u32 %v6196, %v6187
    %v6242 = vadd.s32 %v6218, %v6237
    %vm6243 = vc.u32 %v6218, %v6237
    %v6244 = vadd.s32 %v6240, 1
    %v6245 = vsel %vm6243, %v6244, %v6240
    %v6246 = vadd.s32 %v6241, %v6245
    %v6247 = vadd.s32 %v6246, 536870912
    %v6248 = vshrl.u32 %v6247, 30
    %v6249 = vshll.u32 %v6248, 30
    %v6250 = vsub.s32 %v6246, %v6249
    %vm6251 = vcmp.lt.s32.totalorder %v6250, 0
    %v6252 = vsub.s32 0, %v6250
    %v6253 = vsel %vm6251, %v6252, %v6250
    %v6254 = vclz %v6253
    %v6255 = vsub.s32 %v6254, 2
    %vm6256 = vcmp.gt.s32.totalorder 0, %v6255
    %v6257 = vsel %vm6256, 0, %v6255
    %v6258 = vsub.s32 32, %v6257
    %v6259 = vshll.u32 %v6250, %v6257
    %v6260 = vshrl.u32 %v6242, %v6258
    %v6261 = vor.u32 %v6259, %v6260
    %v6262 = vsub.s32 4294967266, %v6257
    %v6263 = vadd.s32 %v6262, 127
    %v6264 = vshll.u32 %v6263, 23
    %v6265 = vor.u32 4788187, %v6264
    %v6266 = vand.u32 2147483647, %v6265
    %v6268 = vcvt.s32.f32 %v6261
    %v6269 = vmul.f32 %v6268, %v6266
    %v6270 = vxor.u32 %v6269, 2147483648
    %v6271 = vsel %vm6150, %v6270, %v6269
    %v6272 = vsub.s32 4, %v6248
    %v6273 = vsel %vm6150, %v6272, %v6248
    %v6274 = vsel %vm6149, %v6146, %v6271
    %v6275 = vsel %vm6149, 0, %v6273
    %v6276 = vmul.f32 %v6274, %v6274
    %v6277 = vmul.f32 %v6276, -0.001358992
    %v6278 = vadd.f32 %v6277, 0.041655596
    %v6279 = vmul.f32 %v6276, %v6278
    %v6280 = vadd.f32 %v6279, -0.4999988
    %v6281 = vmul.f32 %v6276, %v6280
    %v6282 = vadd.f32 1.0, %v6281
    %v6283 = vmul.f32 %v6274, %v6274
    %v6284 = vmul.f32 %v6283, -0.00019511016
    %v6285 = vadd.f32 %v6284, 0.008332121
    %v6286 = vmul.f32 %v6283, %v6285
    %v6287 = vadd.f32 %v6286, -0.16666654
    %v6288 = vmul.f32 %v6283, %v6287
    %v6289 = vadd.f32 %v6288, 1.0
    %v6290 = vmul.f32 %v6289, %v6274
    %vm6291 = vweird.f32 %v6146
    %v6292 = vand.u32 %v6275, 3
    %vm6293 = vcmp.lt.s32.totalorder %v6292, 2
    %vm6294 = vcmp.eq.s32.totalorder %v6292, 0
    %v6295 = vxor.u32 %v6290, 2147483648
    %v6296 = vsel %vm6294, %v6282, %v6295
    %vm6297 = vcmp.eq.s32.totalorder %v6292, 2
    %v6298 = vxor.u32 %v6282, 2147483648
    %v6299 = vsel %vm6297, %v6298, %v6290
    %v6300 = vsel %vm6293, %v6296, %v6299
    %v6301 = vsel %vm6291, nan, %v6300
    %v6302 = vand.u32 2147483647, %v6147
    %vm6303 = vcmp.le.f32.partialorder %v6302, 0.7853982
    %vm6304 = vcmp.lt.s32.totalorder %v6147, 0
    %v6305 = vand.u32 %v6147, 2139095040
    %v6306 = vshrl.u32 %v6305, 23
    %v6307 = vsub.s32 %v6306, 127
    %v6308 = vand.u32 2147483647, %v6147
    %v6309 = vand.u32 %v6308, 8388607
    %v6310 = vor.u32 %v6309, 8388608
    %v6311 = vsub.s32 0, %v6310
    %v6312 = vadd.s32 %v6307, 1
    %vm6313 = vcmp.gt.s32.totalorder %v6312, 0
    %v6314 = vsel %vm6313, %v6312, 0
    %v6315 = vshrl.u32 %v6314, 5
    %v6316 = vand.u32 %v6314, 31
    %v6317 = vsub.s32 32, %v6316
    %v6318 = vshrl.u32 683565275, %v6317
    %v6319 = vshll.u32 683565275, %v6316
    %v6320 = vshrl.u32 2475754826, %v6317
    %v6321 = vor.u32 %v6319, %v6320
    %v6322 = vshll.u32 2475754826, %v6316
    %v6323 = vshrl.u32 2131351028, %v6317
    %v6324 = vor.u32 %v6322, %v6323
    %v6325 = vshll.u32 2131351028, %v6316
    %v6326 = vshrl.u32 2102212464, %v6317
    %v6327 = vor.u32 %v6325, %v6326
    %v6328 = vshll.u32 2102212464, %v6316
    %v6329 = vshrl.u32 920167782, %v6317
    %v6330 = vor.u32 %v6328, %v6329
    %v6331 = vshll.u32 920167782, %v6316
    %v6332 = vshrl.u32 1326507024, %v6317
    %v6333 = vor.u32 %v6331, %v6332
    %vm6334 = vcmp.lt.s32.totalorder %v6315, 1
    %vm6335 = vcmp.lt.s32.totalorder %v6315, 2
    %vm6336 = vcmp.lt.s32.totalorder %v6315, 3
    %vm6337 = vcmp.lt.s32.totalorder %v6315, 4
    %v6338 = vsel %vm6334, %v6318, %v6321
    %v6339 = vsel %vm6337, %v6327, 2102212464
    %v6340 = vsel %vm6336, %v6324, %v6339
    %v6341 = vsel %vm6335, %v6338, %v6340
    %v6342 = vsel %vm6334, %v6321, %v6324
    %v6343 = vsel %vm6337, %v6330, 920167782
    %v6344 = vsel %vm6336, %v6327, %v6343
    %v6345 = vsel %vm6335, %v6342, %v6344
    %v6346 = vsel %vm6334, %v6324, %v6327
    %v6347 = vsel %vm6337, %v6333, 1326507024
    %v6348 = vsel %vm6336, %v6330, %v6347
    %v6349 = vsel %vm6335, %v6346, %v6348
    %v6350 = vshll.u32 %v6310, 8
    %v6351 = vand.u32 %v6350, 65535
    %v6352 = vshrl.u32 %v6350, 16
    %v6353 = vand.u32 %v6349, 65535
    %v6354 = vshrl.u32 %v6349, 16
    %v6355 = vmul.u32 %v6351, %v6353
    %v6356 = vmul.u32 %v6351, %v6354
    %v6357 = vmul.u32 %v6352, %v6353
    %v6358 = vmul.u32 %v6352, %v6354
    %v6359 = vshll.u32 %v6356, 16
    %v6360 = vshrl.u32 %v6356, 16
    %v6361 = vshll.u32 %v6357, 16
    %v6362 = vshrl.u32 %v6357, 16
    %vm6363 = vc.u32 %v6355, %v6359
    %v6364 = vsel %vm6363, 1, 0
    %v6365 = vadd.s32 %v6355, %v6359
    %v6366 = vadd.s32 %v6358, %v6364
    %vm6367 = vc.u32 %v6365, %v6361
    %v6368 = vsel %vm6367, 1, 0
    %v6369 = vadd.s32 %v6365, %v6361
    %v6370 = vadd.s32 %v6366, %v6368
    %v6371 = vadd.s32 %v6370, %v6360
    %v6372 = vadd.s32 %v6371, %v6362
    %v6373 = vand.u32 %v6350, 65535
    %v6374 = vshrl.u32 %v6350, 16
    %v6375 = vand.u32 %v6345, 65535
    %v6376 = vshrl.u32 %v6345, 16
    %v6377 = vmul.u32 %v6373, %v6375
    %v6378 = vmul.u32 %v6373, %v6376
    %v6379 = vmul.u32 %v6374, %v6375
    %v6380 = vmul.u32 %v6374, %v6376
    %v6381 = vshll.u32 %v6378, 16
    %v6382 = vshrl.u32 %v6378, 16
    %v6383 = vshll.u32 %v6379, 16
    %v6384 = vshrl.u32 %v6379, 16
    %vm6385 = vc.u32 %v6377, %v6381
    %v6386 = vsel %vm6385, 1, 0
    %v6387 = vadd.s32 %v6377, %v6381
    %v6388 = vadd.s32 %v6380, %v6386
    %vm6389 = vc.u32 %v6387, %v6383
    %v6390 = vsel %vm6389, 1, 0
    %v6391 = vadd.s32 %v6387, %v6383
    %v6392 = vadd.s32 %v6388, %v6390
    %v6393 = vadd.s32 %v6392, %v6382
    %v6394 = vadd.s32 %v6393, %v6384
    %v6395 = vmul.u32 %v6350, %v6341
    %v6396 = vadd.s32 %v6372, %v6391
    %vm6397 = vc.u32 %v6372, %v6391
    %v6398 = vadd.s32 %v6394, 1
    %v6399 = vsel %vm6397, %v6398, %v6394
    %v6400 = vadd.s32 %v6395, %v6399
    %v6401 = vadd.s32 %v6400, 536870912
    %v6402 = vshrl.u32 %v6401, 30
    %v6403 = vshll.u32 %v6402, 30
    %v6404 = vsub.s32 %v6400, %v6403
    %vm6405 = vcmp.lt.s32.totalorder %v6404, 0
    %v6406 = vsub.s32 0, %v6404
    %v6407 = vsel %vm6405, %v6406, %v6404
    %v6408 = vclz %v6407
    %v6409 = vsub.s32 %v6408, 2
    %vm6410 = vcmp.gt.s32.totalorder 0, %v6409
    %v6411 = vsel %vm6410, 0, %v6409
    %v6412 = vsub.s32 32, %v6411
    %v6413 = vshll.u32 %v6404, %v6411
    %v6414 = vshrl.u32 %v6396, %v6412
    %v6415 = vor.u32 %v6413, %v6414
    %v6416 = vsub.s32 4294967266, %v6411
    %v6417 = vadd.s32 %v6416, 127
    %v6418 = vshll.u32 %v6417, 23
    %v6419 = vor.u32 4788187, %v6418
    %v6420 = vand.u32 2147483647, %v6419
    %v6422 = vcvt.s32.f32 %v6415
    %v6423 = vmul.f32 %v6422, %v6420
    %v6424 = vxor.u32 %v6423, 2147483648
    %v6425 = vsel %vm6304, %v6424, %v6423
    %v6426 = vsub.s32 4, %v6402
    %v6427 = vsel %vm6304, %v6426, %v6402
    %v6428 = vsel %vm6303, %v6147, %v6425
    %v6429 = vsel %vm6303, 0, %v6427
    %v6430 = vmul.f32 %v6428, %v6428
    %v6431 = vmul.f32 %v6430, -0.001358992
    %v6432 = vadd.f32 %v6431, 0.041655596
    %v6433 = vmul.f32 %v6430, %v6432
    %v6434 = vadd.f32 %v6433, -0.4999988
    %v6435 = vmul.f32 %v6430, %v6434
    %v6436 = vadd.f32 1.0, %v6435
    %v6437 = vmul.f32 %v6428, %v6428
    %v6438 = vmul.f32 %v6437, -0.00019511016
    %v6439 = vadd.f32 %v6438, 0.008332121
    %v6440 = vmul.f32 %v6437, %v6439
    %v6441 = vadd.f32 %v6440, -0.16666654
    %v6442 = vmul.f32 %v6437, %v6441
    %v6443 = vadd.f32 %v6442, 1.0
    %v6444 = vmul.f32 %v6443, %v6428
    %vm6445 = vweird.f32 %v6147
    %v6446 = vand.u32 %v6429, 3
    %vm6447 = vcmp.lt.s32.totalorder %v6446, 2
    %vm6448 = vcmp.eq.s32.totalorder %v6446, 0
    %v6449 = vxor.u32 %v6444, 2147483648
    %v6450 = vsel %vm6448, %v6436, %v6449
    %vm6451 = vcmp.eq.s32.totalorder %v6446, 2
    %v6452 = vxor.u32 %v6436, 2147483648
    %v6453 = vsel %vm6451, %v6452, %v6444
    %v6454 = vsel %vm6447, %v6450, %v6453
    %v6455 = vsel %vm6445, nan, %v6454
    %v6456 = vmul.f32 %v682, %v6301
    %v6457 = vmul.f32 %v682, %v6455
    %v6458 = vmul.f32 %v685, %v6146
    %v6459 = vmul.f32 %v685, %v6147
    %v6460 = vadd.f32 %v6456, %v6458
    %v6461 = vadd.f32 %v6457, %v6459
    %v6462 = vsub.f32 %v6142, %v6460
    %v6463 = vsub.f32 %v6143, %v6461
    %v6464 = vmul.f32 %v369, %v6462
    %v6465 = vmul.f32 %v369, %v6463
    %v6466 = vadd.f32 %v6146, %v6464
    %v6467 = vadd.f32 %v6147, %v6465
    %v6468 = vand.u32 2147483647, %v6466
    %vm6469 = vcmp.le.f32.partialorder %v6468, 0.7853982
    %vm6470 = vcmp.lt.s32.totalorder %v6466, 0
    %v6471 = vand.u32 %v6466, 2139095040
    %v6472 = vshrl.u32 %v6471, 23
    %v6473 = vsub.s32 %v6472, 127
    %v6474 = vand.u32 2147483647, %v6466
    %v6475 = vand.u32 %v6474, 8388607
    %v6476 = vor.u32 %v6475, 8388608
    %v6477 = vsub.s32 0, %v6476
    %v6478 = vadd.s32 %v6473, 1
    %vm6479 = vcmp.gt.s32.totalorder %v6478, 0
    %v6480 = vsel %vm6479, %v6478, 0
    %v6481 = vshrl.u32 %v6480, 5
    %v6482 = vand.u32 %v6480, 31
    %v6483 = vsub.s32 32, %v6482
    %v6484 = vshrl.u32 683565275, %v6483
    %v6485 = vshll.u32 683565275, %v6482
    %v6486 = vshrl.u32 2475754826, %v6483
    %v6487 = vor.u32 %v6485, %v6486
    %v6488 = vshll.u32 2475754826, %v6482
    %v6489 = vshrl.u32 2131351028, %v6483
    %v6490 = vor.u32 %v6488, %v6489
    %v6491 = vshll.u32 2131351028, %v6482
    %v6492 = vshrl.u32 2102212464, %v6483
    %v6493 = vor.u32 %v6491, %v6492
    %v6494 = vshll.u32 2102212464, %v6482
    %v6495 = vshrl.u32 920167782, %v6483
    %v6496 = vor.u32 %v6494, %v6495
    %v6497 = vshll.u32 920167782, %v6482
    %v6498 = vshrl.u32 1326507024, %v6483
    %v6499 = vor.u32 %v6497, %v6498
    %vm6500 = vcmp.lt.s32.totalorder %v6481, 1
    %vm6501 = vcmp.lt.s32.totalorder %v6481, 2
    %vm6502 = vcmp.lt.s32.totalorder %v6481, 3
    %vm6503 = vcmp.lt.s32.totalorder %v6481, 4
    %v6504 = vsel %vm6500, %v6484, %v6487
    %v6505 = vsel %vm6503, %v6493, 2102212464
    %v6506 = vsel %vm6502, %v6490, %v6505
    %v6507 = vsel %vm6501, %v6504, %v6506
    %v6508 = vsel %vm6500, %v6487, %v6490
    %v6509 = vsel %vm6503, %v6496, 920167782
    %v6510 = vsel %vm6502, %v6493, %v6509
    %v6511 = vsel %vm6501, %v6508, %v6510
    %v6512 = vsel %vm6500, %v6490, %v6493
    %v6513 = vsel %vm6503, %v6499, 1326507024
    %v6514 = vsel %vm6502, %v6496, %v6513
    %v6515 = vsel %vm6501, %v6512, %v6514
    %v6516 = vshll.u32 %v6476, 8
    %v6517 = vand.u32 %v6516, 65535
    %v6518 = vshrl.u32 %v6516, 16
    %v6519 = vand.u32 %v6515, 65535
    %v6520 = vshrl.u32 %v6515, 16
    %v6521 = vmul.u32 %v6517, %v6519
    %v6522 = vmul.u32 %v6517, %v6520
    %v6523 = vmul.u32 %v6518, %v6519
    %v6524 = vmul.u32 %v6518, %v6520
    %v6525 = vshll.u32 %v6522, 16
    %v6526 = vshrl.u32 %v6522, 16
    %v6527 = vshll.u32 %v6523, 16
    %v6528 = vshrl.u32 %v6523, 16
    %vm6529 = vc.u32 %v6521, %v6525
    %v6530 = vsel %vm6529, 1, 0
    %v6531 = vadd.s32 %v6521, %v6525
    %v6532 = vadd.s32 %v6524, %v6530
    %vm6533 = vc.u32 %v6531, %v6527
    %v6534 = vsel %vm6533, 1, 0
    %v6535 = vadd.s32 %v6531, %v6527
    %v6536 = vadd.s32 %v6532, %v6534
    %v6537 = vadd.s32 %v6536, %v6526
    %v6538 = vadd.s32 %v6537, %v6528
    %v6539 = vand.u32 %v6516, 65535
    %v6540 = vshrl.u32 %v6516, 16
    %v6541 = vand.u32 %v6511, 65535
    %v6542 = vshrl.u32 %v6511, 16
    %v6543 = vmul.u32 %v6539, %v6541
    %v6544 = vmul.u32 %v6539, %v6542
    %v6545 = vmul.u32 %v6540, %v6541
    %v6546 = vmul.u32 %v6540, %v6542
    %v6547 = vshll.u32 %v6544, 16
    %v6548 = vshrl.u32 %v6544, 16
    %v6549 = vshll.u32 %v6545, 16
    %v6550 = vshrl.u32 %v6545, 16
    %vm6551 = vc.u32 %v6543, %v6547
    %v6552 = vsel %vm6551, 1, 0
    %v6553 = vadd.s32 %v6543, %v6547
    %v6554 = vadd.s32 %v6546, %v6552
    %vm6555 = vc.u32 %v6553, %v6549
    %v6556 = vsel %vm6555, 1, 0
    %v6557 = vadd.s32 %v6553, %v6549
    %v6558 = vadd.s32 %v6554, %v6556
    %v6559 = vadd.s32 %v6558, %v6548
    %v6560 = vadd.s32 %v6559, %v6550
    %v6561 = vmul.u32 %v6516, %v6507
    %v6562 = vadd.s32 %v6538, %v6557
    %vm6563 = vc.u32 %v6538, %v6557
    %v6564 = vadd.s32 %v6560, 1
    %v6565 = vsel %vm6563, %v6564, %v6560
    %v6566 = vadd.s32 %v6561, %v6565
    %v6567 = vadd.s32 %v6566, 536870912
    %v6568 = vshrl.u32 %v6567, 30
    %v6569 = vshll.u32 %v6568, 30
    %v6570 = vsub.s32 %v6566, %v6569
    %vm6571 = vcmp.lt.s32.totalorder %v6570, 0
    %v6572 = vsub.s32 0, %v6570
    %v6573 = vsel %vm6571, %v6572, %v6570
    %v6574 = vclz %v6573
    %v6575 = vsub.s32 %v6574, 2
    %vm6576 = vcmp.gt.s32.totalorder 0, %v6575
    %v6577 = vsel %vm6576, 0, %v6575
    %v6578 = vsub.s32 32, %v6577
    %v6579 = vshll.u32 %v6570, %v6577
    %v6580 = vshrl.u32 %v6562, %v6578
    %v6581 = vor.u32 %v6579, %v6580
    %v6582 = vsub.s32 4294967266, %v6577
    %v6583 = vadd.s32 %v6582, 127
    %v6584 = vshll.u32 %v6583, 23
    %v6585 = vor.u32 4788187, %v6584
    %v6586 = vand.u32 2147483647, %v6585
    %v6588 = vcvt.s32.f32 %v6581
    %v6589 = vmul.f32 %v6588, %v6586
    %v6590 = vxor.u32 %v6589, 2147483648
    %v6591 = vsel %vm6470, %v6590, %v6589
    %v6592 = vsub.s32 4, %v6568
    %v6593 = vsel %vm6470, %v6592, %v6568
    %v6594 = vsel %vm6469, %v6466, %v6591
    %v6595 = vsel %vm6469, 0, %v6593
    %v6596 = vmul.f32 %v6594, %v6594
    %v6597 = vmul.f32 %v6596, -0.001358992
    %v6598 = vadd.f32 %v6597, 0.041655596
    %v6599 = vmul.f32 %v6596, %v6598
    %v6600 = vadd.f32 %v6599, -0.4999988
    %v6601 = vmul.f32 %v6596, %v6600
    %v6602 = vadd.f32 1.0, %v6601
    %v6603 = vmul.f32 %v6594, %v6594
    %v6604 = vmul.f32 %v6603, -0.00019511016
    %v6605 = vadd.f32 %v6604, 0.008332121
    %v6606 = vmul.f32 %v6603, %v6605
    %v6607 = vadd.f32 %v6606, -0.16666654
    %v6608 = vmul.f32 %v6603, %v6607
    %v6609 = vadd.f32 %v6608, 1.0
    %v6610 = vmul.f32 %v6609, %v6594
    %vm6611 = vweird.f32 %v6466
    %v6612 = vand.u32 %v6595, 3
    %vm6613 = vcmp.lt.s32.totalorder %v6612, 2
    %vm6614 = vcmp.eq.s32.totalorder %v6612, 0
    %v6615 = vxor.u32 %v6610, 2147483648
    %v6616 = vsel %vm6614, %v6602, %v6615
    %vm6617 = vcmp.eq.s32.totalorder %v6612, 2
    %v6618 = vxor.u32 %v6602, 2147483648
    %v6619 = vsel %vm6617, %v6618, %v6610
    %v6620 = vsel %vm6613, %v6616, %v6619
    %v6621 = vsel %vm6611, nan, %v6620
    %v6622 = vand.u32 2147483647, %v6467
    %vm6623 = vcmp.le.f32.partialorder %v6622, 0.7853982
    %vm6624 = vcmp.lt.s32.totalorder %v6467, 0
    %v6625 = vand.u32 %v6467, 2139095040
    %v6626 = vshrl.u32 %v6625, 23
    %v6627 = vsub.s32 %v6626, 127
    %v6628 = vand.u32 2147483647, %v6467
    %v6629 = vand.u32 %v6628, 8388607
    %v6630 = vor.u32 %v6629, 8388608
    %v6631 = vsub.s32 0, %v6630
    %v6632 = vadd.s32 %v6627, 1
    %vm6633 = vcmp.gt.s32.totalorder %v6632, 0
    %v6634 = vsel %vm6633, %v6632, 0
    %v6635 = vshrl.u32 %v6634, 5
    %v6636 = vand.u32 %v6634, 31
    %v6637 = vsub.s32 32, %v6636
    %v6638 = vshrl.u32 683565275, %v6637
    %v6639 = vshll.u32 683565275, %v6636
    %v6640 = vshrl.u32 2475754826, %v6637
    %v6641 = vor.u32 %v6639, %v6640
    %v6642 = vshll.u32 2475754826, %v6636
    %v6643 = vshrl.u32 2131351028, %v6637
    %v6644 = vor.u32 %v6642, %v6643
    %v6645 = vshll.u32 2131351028, %v6636
    %v6646 = vshrl.u32 2102212464, %v6637
    %v6647 = vor.u32 %v6645, %v6646
    %v6648 = vshll.u32 2102212464, %v6636
    %v6649 = vshrl.u32 920167782, %v6637
    %v6650 = vor.u32 %v6648, %v6649
    %v6651 = vshll.u32 920167782, %v6636
    %v6652 = vshrl.u32 1326507024, %v6637
    %v6653 = vor.u32 %v6651, %v6652
    %vm6654 = vcmp.lt.s32.totalorder %v6635, 1
    %vm6655 = vcmp.lt.s32.totalorder %v6635, 2
    %vm6656 = vcmp.lt.s32.totalorder %v6635, 3
    %vm6657 = vcmp.lt.s32.totalorder %v6635, 4
    %v6658 = vsel %vm6654, %v6638, %v6641
    %v6659 = vsel %vm6657, %v6647, 2102212464
    %v6660 = vsel %vm6656, %v6644, %v6659
    %v6661 = vsel %vm6655, %v6658, %v6660
    %v6662 = vsel %vm6654, %v6641, %v6644
    %v6663 = vsel %vm6657, %v6650, 920167782
    %v6664 = vsel %vm6656, %v6647, %v6663
    %v6665 = vsel %vm6655, %v6662, %v6664
    %v6666 = vsel %vm6654, %v6644, %v6647
    %v6667 = vsel %vm6657, %v6653, 1326507024
    %v6668 = vsel %vm6656, %v6650, %v6667
    %v6669 = vsel %vm6655, %v6666, %v6668
    %v6670 = vshll.u32 %v6630, 8
    %v6671 = vand.u32 %v6670, 65535
    %v6672 = vshrl.u32 %v6670, 16
    %v6673 = vand.u32 %v6669, 65535
    %v6674 = vshrl.u32 %v6669, 16
    %v6675 = vmul.u32 %v6671, %v6673
    %v6676 = vmul.u32 %v6671, %v6674
    %v6677 = vmul.u32 %v6672, %v6673
    %v6678 = vmul.u32 %v6672, %v6674
    %v6679 = vshll.u32 %v6676, 16
    %v6680 = vshrl.u32 %v6676, 16
    %v6681 = vshll.u32 %v6677, 16
    %v6682 = vshrl.u32 %v6677, 16
    %vm6683 = vc.u32 %v6675, %v6679
    %v6684 = vsel %vm6683, 1, 0
    %v6685 = vadd.s32 %v6675, %v6679
    %v6686 = vadd.s32 %v6678, %v6684
    %vm6687 = vc.u32 %v6685, %v6681
    %v6688 = vsel %vm6687, 1, 0
    %v6689 = vadd.s32 %v6685, %v6681
    %v6690 = vadd.s32 %v6686, %v6688
    %v6691 = vadd.s32 %v6690, %v6680
    %v6692 = vadd.s32 %v6691, %v6682
    %v6693 = vand.u32 %v6670, 65535
    %v6694 = vshrl.u32 %v6670, 16
    %v6695 = vand.u32 %v6665, 65535
    %v6696 = vshrl.u32 %v6665, 16
    %v6697 = vmul.u32 %v6693, %v6695
    %v6698 = vmul.u32 %v6693, %v6696
    %v6699 = vmul.u32 %v6694, %v6695
    %v6700 = vmul.u32 %v6694, %v6696
    %v6701 = vshll.u32 %v6698, 16
    %v6702 = vshrl.u32 %v6698, 16
    %v6703 = vshll.u32 %v6699, 16
    %v6704 = vshrl.u32 %v6699, 16
    %vm6705 = vc.u32 %v6697, %v6701
    %v6706 = vsel %vm6705, 1, 0
    %v6707 = vadd.s32 %v6697, %v6701
    %v6708 = vadd.s32 %v6700, %v6706
    %vm6709 = vc.u32 %v6707, %v6703
    %v6710 = vsel %vm6709, 1, 0
    %v6711 = vadd.s32 %v6707, %v6703
    %v6712 = vadd.s32 %v6708, %v6710
    %v6713 = vadd.s32 %v6712, %v6702
    %v6714 = vadd.s32 %v6713, %v6704
    %v6715 = vmul.u32 %v6670, %v6661
    %v6716 = vadd.s32 %v6692, %v6711
    %vm6717 = vc.u32 %v6692, %v6711
    %v6718 = vadd.s32 %v6714, 1
    %v6719 = vsel %vm6717, %v6718, %v6714
    %v6720 = vadd.s32 %v6715, %v6719
    %v6721 = vadd.s32 %v6720, 536870912
    %v6722 = vshrl.u32 %v6721, 30
    %v6723 = vshll.u32 %v6722, 30
    %v6724 = vsub.s32 %v6720, %v6723
    %vm6725 = vcmp.lt.s32.totalorder %v6724, 0
    %v6726 = vsub.s32 0, %v6724
    %v6727 = vsel %vm6725, %v6726, %v6724
    %v6728 = vclz %v6727
    %v6729 = vsub.s32 %v6728, 2
    %vm6730 = vcmp.gt.s32.totalorder 0, %v6729
    %v6731 = vsel %vm6730, 0, %v6729
    %v6732 = vsub.s32 32, %v6731
    %v6733 = vshll.u32 %v6724, %v6731
    %v6734 = vshrl.u32 %v6716, %v6732
    %v6735 = vor.u32 %v6733, %v6734
    %v6736 = vsub.s32 4294967266, %v6731
    %v6737 = vadd.s32 %v6736, 127
    %v6738 = vshll.u32 %v6737, 23
    %v6739 = vor.u32 4788187, %v6738
    %v6740 = vand.u32 2147483647, %v6739
    %v6742 = vcvt.s32.f32 %v6735
    %v6743 = vmul.f32 %v6742, %v6740
    %v6744 = vxor.u32 %v6743, 2147483648
    %v6745 = vsel %vm6624, %v6744, %v6743
    %v6746 = vsub.s32 4, %v6722
    %v6747 = vsel %vm6624, %v6746, %v6722
    %v6748 = vsel %vm6623, %v6467, %v6745
    %v6749 = vsel %vm6623, 0, %v6747
    %v6750 = vmul.f32 %v6748, %v6748
    %v6751 = vmul.f32 %v6750, -0.001358992
    %v6752 = vadd.f32 %v6751, 0.041655596
    %v6753 = vmul.f32 %v6750, %v6752
    %v6754 = vadd.f32 %v6753, -0.4999988
    %v6755 = vmul.f32 %v6750, %v6754
    %v6756 = vadd.f32 1.0, %v6755
    %v6757 = vmul.f32 %v6748, %v6748
    %v6758 = vmul.f32 %v6757, -0.00019511016
    %v6759 = vadd.f32 %v6758, 0.008332121
    %v6760 = vmul.f32 %v6757, %v6759
    %v6761 = vadd.f32 %v6760, -0.16666654
    %v6762 = vmul.f32 %v6757, %v6761
    %v6763 = vadd.f32 %v6762, 1.0
    %v6764 = vmul.f32 %v6763, %v6748
    %vm6765 = vweird.f32 %v6467
    %v6766 = vand.u32 %v6749, 3
    %vm6767 = vcmp.lt.s32.totalorder %v6766, 2
    %vm6768 = vcmp.eq.s32.totalorder %v6766, 0
    %v6769 = vxor.u32 %v6764, 2147483648
    %v6770 = vsel %vm6768, %v6756, %v6769
    %vm6771 = vcmp.eq.s32.totalorder %v6766, 2
    %v6772 = vxor.u32 %v6756, 2147483648
    %v6773 = vsel %vm6771, %v6772, %v6764
    %v6774 = vsel %vm6767, %v6770, %v6773
    %v6775 = vsel %vm6765, nan, %v6774
    %v6776 = vmul.f32 %v359, %v6621
    %v6777 = vmul.f32 %v359, %v6775
    %v6778 = vmul.f32 %v362, %v6466
    %v6779 = vmul.f32 %v362, %v6467
    %v6780 = vadd.f32 %v6776, %v6778
    %v6781 = vadd.f32 %v6777, %v6779
    %v6782 = vsub.f32 %v6462, %v6780
    %v6783 = vsub.f32 %v6463, %v6781
    %v6784 = vmul.f32 %v46, %v6782
    %v6785 = vmul.f32 %v46, %v6783
    %v6786 = vadd.f32 %v6466, %v6784
    %v6787 = vadd.f32 %v6467, %v6785
    %v6788 = vadd.f32 %v6786, %v6784
    %v6789 = vadd.f32 %v6787, %v6785
    %v6790 = vand.u32 2147483647, %v6788
    %vm6791 = vcmp.le.f32.partialorder %v6790, 0.7853982
    %vm6792 = vcmp.lt.s32.totalorder %v6788, 0
    %v6793 = vand.u32 %v6788, 2139095040
    %v6794 = vshrl.u32 %v6793, 23
    %v6795 = vsub.s32 %v6794, 127
    %v6796 = vand.u32 2147483647, %v6788
    %v6797 = vand.u32 %v6796, 8388607
    %v6798 = vor.u32 %v6797, 8388608
    %v6799 = vsub.s32 0, %v6798
    %v6800 = vadd.s32 %v6795, 1
    %vm6801 = vcmp.gt.s32.totalorder %v6800, 0
    %v6802 = vsel %vm6801, %v6800, 0
    %v6803 = vshrl.u32 %v6802, 5
    %v6804 = vand.u32 %v6802, 31
    %v6805 = vsub.s32 32, %v6804
    %v6806 = vshrl.u32 683565275, %v6805
    %v6807 = vshll.u32 683565275, %v6804
    %v6808 = vshrl.u32 2475754826, %v6805
    %v6809 = vor.u32 %v6807, %v6808
    %v6810 = vshll.u32 2475754826, %v6804
    %v6811 = vshrl.u32 2131351028, %v6805
    %v6812 = vor.u32 %v6810, %v6811
    %v6813 = vshll.u32 2131351028, %v6804
    %v6814 = vshrl.u32 2102212464, %v6805
    %v6815 = vor.u32 %v6813, %v6814
    %v6816 = vshll.u32 2102212464, %v6804
    %v6817 = vshrl.u32 920167782, %v6805
    %v6818 = vor.u32 %v6816, %v6817
    %v6819 = vshll.u32 920167782, %v6804
    %v6820 = vshrl.u32 1326507024, %v6805
    %v6821 = vor.u32 %v6819, %v6820
    %vm6822 = vcmp.lt.s32.totalorder %v6803, 1
    %vm6823 = vcmp.lt.s32.totalorder %v6803, 2
    %vm6824 = vcmp.lt.s32.totalorder %v6803, 3
    %vm6825 = vcmp.lt.s32.totalorder %v6803, 4
    %v6826 = vsel %vm6822, %v6806, %v6809
    %v6827 = vsel %vm6825, %v6815, 2102212464
    %v6828 = vsel %vm6824, %v6812, %v6827
    %v6829 = vsel %vm6823, %v6826, %v6828
    %v6830 = vsel %vm6822, %v6809, %v6812
    %v6831 = vsel %vm6825, %v6818, 920167782
    %v6832 = vsel %vm6824, %v6815, %v6831
    %v6833 = vsel %vm6823, %v6830, %v6832
    %v6834 = vsel %vm6822, %v6812, %v6815
    %v6835 = vsel %vm6825, %v6821, 1326507024
    %v6836 = vsel %vm6824, %v6818, %v6835
    %v6837 = vsel %vm6823, %v6834, %v6836
    %v6838 = vshll.u32 %v6798, 8
    %v6839 = vand.u32 %v6838, 65535
    %v6840 = vshrl.u32 %v6838, 16
    %v6841 = vand.u32 %v6837, 65535
    %v6842 = vshrl.u32 %v6837, 16
    %v6843 = vmul.u32 %v6839, %v6841
    %v6844 = vmul.u32 %v6839, %v6842
    %v6845 = vmul.u32 %v6840, %v6841
    %v6846 = vmul.u32 %v6840, %v6842
    %v6847 = vshll.u32 %v6844, 16
    %v6848 = vshrl.u32 %v6844, 16
    %v6849 = vshll.u32 %v6845, 16
    %v6850 = vshrl.u32 %v6845, 16
    %vm6851 = vc.u32 %v6843, %v6847
    %v6852 = vsel %vm6851, 1, 0
    %v6853 = vadd.s32 %v6843, %v6847
    %v6854 = vadd.s32 %v6846, %v6852
    %vm6855 = vc.u32 %v6853, %v6849
    %v6856 = vsel %vm6855, 1, 0
    %v6857 = vadd.s32 %v6853, %v6849
    %v6858 = vadd.s32 %v6854, %v6856
    %v6859 = vadd.s32 %v6858, %v6848
    %v6860 = vadd.s32 %v6859, %v6850
    %v6861 = vand.u32 %v6838, 65535
    %v6862 = vshrl.u32 %v6838, 16
    %v6863 = vand.u32 %v6833, 65535
    %v6864 = vshrl.u32 %v6833, 16
    %v6865 = vmul.u32 %v6861, %v6863
    %v6866 = vmul.u32 %v6861, %v6864
    %v6867 = vmul.u32 %v6862, %v6863
    %v6868 = vmul.u32 %v6862, %v6864
    %v6869 = vshll.u32 %v6866, 16
    %v6870 = vshrl.u32 %v6866, 16
    %v6871 = vshll.u32 %v6867, 16
    %v6872 = vshrl.u32 %v6867, 16
    %vm6873 = vc.u32 %v6865, %v6869
    %v6874 = vsel %vm6873, 1, 0
    %v6875 = vadd.s32 %v6865, %v6869
    %v6876 = vadd.s32 %v6868, %v6874
    %vm6877 = vc.u32 %v6875, %v6871
    %v6878 = vsel %vm6877, 1, 0
    %v6879 = vadd.s32 %v6875, %v6871
    %v6880 = vadd.s32 %v6876, %v6878
    %v6881 = vadd.s32 %v6880, %v6870
    %v6882 = vadd.s32 %v6881, %v6872
    %v6883 = vmul.u32 %v6838, %v6829
    %v6884 = vadd.s32 %v6860, %v6879
    %vm6885 = vc.u32 %v6860, %v6879
    %v6886 = vadd.s32 %v6882, 1
    %v6887 = vsel %vm6885, %v6886, %v6882
    %v6888 = vadd.s32 %v6883, %v6887
    %v6889 = vadd.s32 %v6888, 536870912
    %v6890 = vshrl.u32 %v6889, 30
    %v6891 = vshll.u32 %v6890, 30
    %v6892 = vsub.s32 %v6888, %v6891
    %vm6893 = vcmp.lt.s32.totalorder %v6892, 0
    %v6894 = vsub.s32 0, %v6892
    %v6895 = vsel %vm6893, %v6894, %v6892
    %v6896 = vclz %v6895
    %v6897 = vsub.s32 %v6896, 2
    %vm6898 = vcmp.gt.s32.totalorder 0, %v6897
    %v6899 = vsel %vm6898, 0, %v6897
    %v6900 = vsub.s32 32, %v6899
    %v6901 = vshll.u32 %v6892, %v6899
    %v6902 = vshrl.u32 %v6884, %v6900
    %v6903 = vor.u32 %v6901, %v6902
    %v6904 = vsub.s32 4294967266, %v6899
    %v6905 = vadd.s32 %v6904, 127
    %v6906 = vshll.u32 %v6905, 23
    %v6907 = vor.u32 4788187, %v6906
    %v6908 = vand.u32 2147483647, %v6907
    %v6910 = vcvt.s32.f32 %v6903
    %v6911 = vmul.f32 %v6910, %v6908
    %v6912 = vxor.u32 %v6911, 2147483648
    %v6913 = vsel %vm6792, %v6912, %v6911
    %v6914 = vsub.s32 4, %v6890
    %v6915 = vsel %vm6792, %v6914, %v6890
    %v6916 = vsel %vm6791, %v6788, %v6913
    %v6917 = vsel %vm6791, 0, %v6915
    %v6918 = vmul.f32 %v6916, %v6916
    %v6919 = vmul.f32 %v6918, -0.001358992
    %v6920 = vadd.f32 %v6919, 0.041655596
    %v6921 = vmul.f32 %v6918, %v6920
    %v6922 = vadd.f32 %v6921, -0.4999988
    %v6923 = vmul.f32 %v6918, %v6922
    %v6924 = vadd.f32 1.0, %v6923
    %v6925 = vmul.f32 %v6916, %v6916
    %v6926 = vmul.f32 %v6925, -0.00019511016
    %v6927 = vadd.f32 %v6926, 0.008332121
    %v6928 = vmul.f32 %v6925, %v6927
    %v6929 = vadd.f32 %v6928, -0.16666654
    %v6930 = vmul.f32 %v6925, %v6929
    %v6931 = vadd.f32 %v6930, 1.0
    %v6932 = vmul.f32 %v6931, %v6916
    %vm6933 = vweird.f32 %v6788
    %v6934 = vand.u32 %v6917, 3
    %vm6935 = vcmp.lt.s32.totalorder %v6934, 2
    %vm6936 = vcmp.eq.s32.totalorder %v6934, 0
    %v6937 = vxor.u32 %v6932, 2147483648
    %v6938 = vsel %vm6936, %v6924, %v6937
    %vm6939 = vcmp.eq.s32.totalorder %v6934, 2
    %v6940 = vxor.u32 %v6924, 2147483648
    %v6941 = vsel %vm6939, %v6940, %v6932
    %v6942 = vsel %vm6935, %v6938, %v6941
    %v6943 = vsel %vm6933, nan, %v6942
    %v6944 = vand.u32 2147483647, %v6789
    %vm6945 = vcmp.le.f32.partialorder %v6944, 0.7853982
    %vm6946 = vcmp.lt.s32.totalorder %v6789, 0
    %v6947 = vand.u32 %v6789, 2139095040
    %v6948 = vshrl.u32 %v6947, 23
    %v6949 = vsub.s32 %v6948, 127
    %v6950 = vand.u32 2147483647, %v6789
    %v6951 = vand.u32 %v6950, 8388607
    %v6952 = vor.u32 %v6951, 8388608
    %v6953 = vsub.s32 0, %v6952
    %v6954 = vadd.s32 %v6949, 1
    %vm6955 = vcmp.gt.s32.totalorder %v6954, 0
    %v6956 = vsel %vm6955, %v6954, 0
    %v6957 = vshrl.u32 %v6956, 5
    %v6958 = vand.u32 %v6956, 31
    %v6959 = vsub.s32 32, %v6958
    %v6960 = vshrl.u32 683565275, %v6959
    %v6961 = vshll.u32 683565275, %v6958
    %v6962 = vshrl.u32 2475754826, %v6959
    %v6963 = vor.u32 %v6961, %v6962
    %v6964 = vshll.u32 2475754826, %v6958
    %v6965 = vshrl.u32 2131351028, %v6959
    %v6966 = vor.u32 %v6964, %v6965
    %v6967 = vshll.u32 2131351028, %v6958
    %v6968 = vshrl.u32 2102212464, %v6959
    %v6969 = vor.u32 %v6967, %v6968
    %v6970 = vshll.u32 2102212464, %v6958
    %v6971 = vshrl.u32 920167782, %v6959
    %v6972 = vor.u32 %v6970, %v6971
    %v6973 = vshll.u32 920167782, %v6958
    %v6974 = vshrl.u32 1326507024, %v6959
    %v6975 = vor.u32 %v6973, %v6974
    %vm6976 = vcmp.lt.s32.totalorder %v6957, 1
    %vm6977 = vcmp.lt.s32.totalorder %v6957, 2
    %vm6978 = vcmp.lt.s32.totalorder %v6957, 3
    %vm6979 = vcmp.lt.s32.totalorder %v6957, 4
    %v6980 = vsel %vm6976, %v6960, %v6963
    %v6981 = vsel %vm6979, %v6969, 2102212464
    %v6982 = vsel %vm6978, %v6966, %v6981
    %v6983 = vsel %vm6977, %v6980, %v6982
    %v6984 = vsel %vm6976, %v6963, %v6966
    %v6985 = vsel %vm6979, %v6972, 920167782
    %v6986 = vsel %vm6978, %v6969, %v6985
    %v6987 = vsel %vm6977, %v6984, %v6986
    %v6988 = vsel %vm6976, %v6966, %v6969
    %v6989 = vsel %vm6979, %v6975, 1326507024
    %v6990 = vsel %vm6978, %v6972, %v6989
    %v6991 = vsel %vm6977, %v6988, %v6990
    %v6992 = vshll.u32 %v6952, 8
    %v6993 = vand.u32 %v6992, 65535
    %v6994 = vshrl.u32 %v6992, 16
    %v6995 = vand.u32 %v6991, 65535
    %v6996 = vshrl.u32 %v6991, 16
    %v6997 = vmul.u32 %v6993, %v6995
    %v6998 = vmul.u32 %v6993, %v6996
    %v6999 = vmul.u32 %v6994, %v6995
    %v7000 = vmul.u32 %v6994, %v6996
    %v7001 = vshll.u32 %v6998, 16
    %v7002 = vshrl.u32 %v6998, 16
    %v7003 = vshll.u32 %v6999, 16
    %v7004 = vshrl.u32 %v6999, 16
    %vm7005 = vc.u32 %v6997, %v7001
    %v7006 = vsel %vm7005, 1, 0
    %v7007 = vadd.s32 %v6997, %v7001
    %v7008 = vadd.s32 %v7000, %v7006
    %vm7009 = vc.u32 %v7007, %v7003
    %v7010 = vsel %vm7009, 1, 0
    %v7011 = vadd.s32 %v7007, %v7003
    %v7012 = vadd.s32 %v7008, %v7010
    %v7013 = vadd.s32 %v7012, %v7002
    %v7014 = vadd.s32 %v7013, %v7004
    %v7015 = vand.u32 %v6992, 65535
    %v7016 = vshrl.u32 %v6992, 16
    %v7017 = vand.u32 %v6987, 65535
    %v7018 = vshrl.u32 %v6987, 16
    %v7019 = vmul.u32 %v7015, %v7017
    %v7020 = vmul.u32 %v7015, %v7018
    %v7021 = vmul.u32 %v7016, %v7017
    %v7022 = vmul.u32 %v7016, %v7018
    %v7023 = vshll.u32 %v7020, 16
    %v7024 = vshrl.u32 %v7020, 16
    %v7025 = vshll.u32 %v7021, 16
    %v7026 = vshrl.u32 %v7021, 16
    %vm7027 = vc.u32 %v7019, %v7023
    %v7028 = vsel %vm7027, 1, 0
    %v7029 = vadd.s32 %v7019, %v7023
    %v7030 = vadd.s32 %v7022, %v7028
    %vm7031 = vc.u32 %v7029, %v7025
    %v7032 = vsel %vm7031, 1, 0
    %v7033 = vadd.s32 %v7029, %v7025
    %v7034 = vadd.s32 %v7030, %v7032
    %v7035 = vadd.s32 %v7034, %v7024
    %v7036 = vadd.s32 %v7035, %v7026
    %v7037 = vmul.u32 %v6992, %v6983
    %v7038 = vadd.s32 %v7014, %v7033
    %vm7039 = vc.u32 %v7014, %v7033
    %v7040 = vadd.s32 %v7036, 1
    %v7041 = vsel %vm7039, %v7040, %v7036
    %v7042 = vadd.s32 %v7037, %v7041
    %v7043 = vadd.s32 %v7042, 536870912
    %v7044 = vshrl.u32 %v7043, 30
    %v7045 = vshll.u32 %v7044, 30
    %v7046 = vsub.s32 %v7042, %v7045
    %vm7047 = vcmp.lt.s32.totalorder %v7046, 0
    %v7048 = vsub.s32 0, %v7046
    %v7049 = vsel %vm7047, %v7048, %v7046
    %v7050 = vclz %v7049
    %v7051 = vsub.s32 %v7050, 2
    %vm7052 = vcmp.gt.s32.totalorder 0, %v7051
    %v7053 = vsel %vm7052, 0, %v7051
    %v7054 = vsub.s32 32, %v7053
    %v7055 = vshll.u32 %v7046, %v7053
    %v7056 = vshrl.u32 %v7038, %v7054
    %v7057 = vor.u32 %v7055, %v7056
    %v7058 = vsub.s32 4294967266, %v7053
    %v7059 = vadd.s32 %v7058, 127
    %v7060 = vshll.u32 %v7059, 23
    %v7061 = vor.u32 4788187, %v7060
    %v7062 = vand.u32 2147483647, %v7061
    %v7064 = vcvt.s32.f32 %v7057
    %v7065 = vmul.f32 %v7064, %v7062
    %v7066 = vxor.u32 %v7065, 2147483648
    %v7067 = vsel %vm6946, %v7066, %v7065
    %v7068 = vsub.s32 4, %v7044
    %v7069 = vsel %vm6946, %v7068, %v7044
    %v7070 = vsel %vm6945, %v6789, %v7067
    %v7071 = vsel %vm6945, 0, %v7069
    %v7072 = vmul.f32 %v7070, %v7070
    %v7073 = vmul.f32 %v7072, -0.001358992
    %v7074 = vadd.f32 %v7073, 0.041655596
    %v7075 = vmul.f32 %v7072, %v7074
    %v7076 = vadd.f32 %v7075, -0.4999988
    %v7077 = vmul.f32 %v7072, %v7076
    %v7078 = vadd.f32 1.0, %v7077
    %v7079 = vmul.f32 %v7070, %v7070
    %v7080 = vmul.f32 %v7079, -0.00019511016
    %v7081 = vadd.f32 %v7080, 0.008332121
    %v7082 = vmul.f32 %v7079, %v7081
    %v7083 = vadd.f32 %v7082, -0.16666654
    %v7084 = vmul.f32 %v7079, %v7083
    %v7085 = vadd.f32 %v7084, 1.0
    %v7086 = vmul.f32 %v7085, %v7070
    %vm7087 = vweird.f32 %v6789
    %v7088 = vand.u32 %v7071, 3
    %vm7089 = vcmp.lt.s32.totalorder %v7088, 2
    %vm7090 = vcmp.eq.s32.totalorder %v7088, 0
    %v7091 = vxor.u32 %v7086, 2147483648
    %v7092 = vsel %vm7090, %v7078, %v7091
    %vm7093 = vcmp.eq.s32.totalorder %v7088, 2
    %v7094 = vxor.u32 %v7078, 2147483648
    %v7095 = vsel %vm7093, %v7094, %v7086
    %v7096 = vsel %vm7089, %v7092, %v7095
    %v7097 = vsel %vm7087, nan, %v7096
    %v7098 = vmul.f32 %v359, %v6943
    %v7099 = vmul.f32 %v359, %v7097
    %v7100 = vmul.f32 %v362, %v6788
    %v7101 = vmul.f32 %v362, %v6789
    %v7102 = vadd.f32 %v7098, %v7100
    %v7103 = vadd.f32 %v7099, %v7101
    %v7104 = vsub.f32 %v6782, %v7102
    %v7105 = vsub.f32 %v6783, %v7103
    %v7106 = vmul.f32 %v369, %v7104
    %v7107 = vmul.f32 %v369, %v7105
    %v7108 = vadd.f32 %v6788, %v7106
    %v7109 = vadd.f32 %v6789, %v7107
    %v7110 = vand.u32 2147483647, %v7108
    %vm7111 = vcmp.le.f32.partialorder %v7110, 0.7853982
    %vm7112 = vcmp.lt.s32.totalorder %v7108, 0
    %v7113 = vand.u32 %v7108, 2139095040
    %v7114 = vshrl.u32 %v7113, 23
    %v7115 = vsub.s32 %v7114, 127
    %v7116 = vand.u32 2147483647, %v7108
    %v7117 = vand.u32 %v7116, 8388607
    %v7118 = vor.u32 %v7117, 8388608
    %v7119 = vsub.s32 0, %v7118
    %v7120 = vadd.s32 %v7115, 1
    %vm7121 = vcmp.gt.s32.totalorder %v7120, 0
    %v7122 = vsel %vm7121, %v7120, 0
    %v7123 = vshrl.u32 %v7122, 5
    %v7124 = vand.u32 %v7122, 31
    %v7125 = vsub.s32 32, %v7124
    %v7126 = vshrl.u32 683565275, %v7125
    %v7127 = vshll.u32 683565275, %v7124
    %v7128 = vshrl.u32 2475754826, %v7125
    %v7129 = vor.u32 %v7127, %v7128
    %v7130 = vshll.u32 2475754826, %v7124
    %v7131 = vshrl.u32 2131351028, %v7125
    %v7132 = vor.u32 %v7130, %v7131
    %v7133 = vshll.u32 2131351028, %v7124
    %v7134 = vshrl.u32 2102212464, %v7125
    %v7135 = vor.u32 %v7133, %v7134
    %v7136 = vshll.u32 2102212464, %v7124
    %v7137 = vshrl.u32 920167782, %v7125
    %v7138 = vor.u32 %v7136, %v7137
    %v7139 = vshll.u32 920167782, %v7124
    %v7140 = vshrl.u32 1326507024, %v7125
    %v7141 = vor.u32 %v7139, %v7140
    %vm7142 = vcmp.lt.s32.totalorder %v7123, 1
    %vm7143 = vcmp.lt.s32.totalorder %v7123, 2
    %vm7144 = vcmp.lt.s32.totalorder %v7123, 3
    %vm7145 = vcmp.lt.s32.totalorder %v7123, 4
    %v7146 = vsel %vm7142, %v7126, %v7129
    %v7147 = vsel %vm7145, %v7135, 2102212464
    %v7148 = vsel %vm7144, %v7132, %v7147
    %v7149 = vsel %vm7143, %v7146, %v7148
    %v7150 = vsel %vm7142, %v7129, %v7132
    %v7151 = vsel %vm7145, %v7138, 920167782
    %v7152 = vsel %vm7144, %v7135, %v7151
    %v7153 = vsel %vm7143, %v7150, %v7152
    %v7154 = vsel %vm7142, %v7132, %v7135
    %v7155 = vsel %vm7145, %v7141, 1326507024
    %v7156 = vsel %vm7144, %v7138, %v7155
    %v7157 = vsel %vm7143, %v7154, %v7156
    %v7158 = vshll.u32 %v7118, 8
    %v7159 = vand.u32 %v7158, 65535
    %v7160 = vshrl.u32 %v7158, 16
    %v7161 = vand.u32 %v7157, 65535
    %v7162 = vshrl.u32 %v7157, 16
    %v7163 = vmul.u32 %v7159, %v7161
    %v7164 = vmul.u32 %v7159, %v7162
    %v7165 = vmul.u32 %v7160, %v7161
    %v7166 = vmul.u32 %v7160, %v7162
    %v7167 = vshll.u32 %v7164, 16
    %v7168 = vshrl.u32 %v7164, 16
    %v7169 = vshll.u32 %v7165, 16
    %v7170 = vshrl.u32 %v7165, 16
    %vm7171 = vc.u32 %v7163, %v7167
    %v7172 = vsel %vm7171, 1, 0
    %v7173 = vadd.s32 %v7163, %v7167
    %v7174 = vadd.s32 %v7166, %v7172
    %vm7175 = vc.u32 %v7173, %v7169
    %v7176 = vsel %vm7175, 1, 0
    %v7177 = vadd.s32 %v7173, %v7169
    %v7178 = vadd.s32 %v7174, %v7176
    %v7179 = vadd.s32 %v7178, %v7168
    %v7180 = vadd.s32 %v7179, %v7170
    %v7181 = vand.u32 %v7158, 65535
    %v7182 = vshrl.u32 %v7158, 16
    %v7183 = vand.u32 %v7153, 65535
    %v7184 = vshrl.u32 %v7153, 16
    %v7185 = vmul.u32 %v7181, %v7183
    %v7186 = vmul.u32 %v7181, %v7184
    %v7187 = vmul.u32 %v7182, %v7183
    %v7188 = vmul.u32 %v7182, %v7184
    %v7189 = vshll.u32 %v7186, 16
    %v7190 = vshrl.u32 %v7186, 16
    %v7191 = vshll.u32 %v7187, 16
    %v7192 = vshrl.u32 %v7187, 16
    %vm7193 = vc.u32 %v7185, %v7189
    %v7194 = vsel %vm7193, 1, 0
    %v7195 = vadd.s32 %v7185, %v7189
    %v7196 = vadd.s32 %v7188, %v7194
    %vm7197 = vc.u32 %v7195, %v7191
    %v7198 = vsel %vm7197, 1, 0
    %v7199 = vadd.s32 %v7195, %v7191
    %v7200 = vadd.s32 %v7196, %v7198
    %v7201 = vadd.s32 %v7200, %v7190
    %v7202 = vadd.s32 %v7201, %v7192
    %v7203 = vmul.u32 %v7158, %v7149
    %v7204 = vadd.s32 %v7180, %v7199
    %vm7205 = vc.u32 %v7180, %v7199
    %v7206 = vadd.s32 %v7202, 1
    %v7207 = vsel %vm7205, %v7206, %v7202
    %v7208 = vadd.s32 %v7203, %v7207
    %v7209 = vadd.s32 %v7208, 536870912
    %v7210 = vshrl.u32 %v7209, 30
    %v7211 = vshll.u32 %v7210, 30
    %v7212 = vsub.s32 %v7208, %v7211
    %vm7213 = vcmp.lt.s32.totalorder %v7212, 0
    %v7214 = vsub.s32 0, %v7212
    %v7215 = vsel %vm7213, %v7214, %v7212
    %v7216 = vclz %v7215
    %v7217 = vsub.s32 %v7216, 2
    %vm7218 = vcmp.gt.s32.totalorder 0, %v7217
    %v7219 = vsel %vm7218, 0, %v7217
    %v7220 = vsub.s32 32, %v7219
    %v7221 = vshll.u32 %v7212, %v7219
    %v7222 = vshrl.u32 %v7204, %v7220
    %v7223 = vor.u32 %v7221, %v7222
    %v7224 = vsub.s32 4294967266, %v7219
    %v7225 = vadd.s32 %v7224, 127
    %v7226 = vshll.u32 %v7225, 23
    %v7227 = vor.u32 4788187, %v7226
    %v7228 = vand.u32 2147483647, %v7227
    %v7230 = vcvt.s32.f32 %v7223
    %v7231 = vmul.f32 %v7230, %v7228
    %v7232 = vxor.u32 %v7231, 2147483648
    %v7233 = vsel %vm7112, %v7232, %v7231
    %v7234 = vsub.s32 4, %v7210
    %v7235 = vsel %vm7112, %v7234, %v7210
    %v7236 = vsel %vm7111, %v7108, %v7233
    %v7237 = vsel %vm7111, 0, %v7235
    %v7238 = vmul.f32 %v7236, %v7236
    %v7239 = vmul.f32 %v7238, -0.001358992
    %v7240 = vadd.f32 %v7239, 0.041655596
    %v7241 = vmul.f32 %v7238, %v7240
    %v7242 = vadd.f32 %v7241, -0.4999988
    %v7243 = vmul.f32 %v7238, %v7242
    %v7244 = vadd.f32 1.0, %v7243
    %v7245 = vmul.f32 %v7236, %v7236
    %v7246 = vmul.f32 %v7245, -0.00019511016
    %v7247 = vadd.f32 %v7246, 0.008332121
    %v7248 = vmul.f32 %v7245, %v7247
    %v7249 = vadd.f32 %v7248, -0.16666654
    %v7250 = vmul.f32 %v7245, %v7249
    %v7251 = vadd.f32 %v7250, 1.0
    %v7252 = vmul.f32 %v7251, %v7236
    %vm7253 = vweird.f32 %v7108
    %v7254 = vand.u32 %v7237, 3
    %vm7255 = vcmp.lt.s32.totalorder %v7254, 2
    %vm7256 = vcmp.eq.s32.totalorder %v7254, 0
    %v7257 = vxor.u32 %v7252, 2147483648
    %v7258 = vsel %vm7256, %v7244, %v7257
    %vm7259 = vcmp.eq.s32.totalorder %v7254, 2
    %v7260 = vxor.u32 %v7244, 2147483648
    %v7261 = vsel %vm7259, %v7260, %v7252
    %v7262 = vsel %vm7255, %v7258, %v7261
    %v7263 = vsel %vm7253, nan, %v7262
    %v7264 = vand.u32 2147483647, %v7109
    %vm7265 = vcmp.le.f32.partialorder %v7264, 0.7853982
    %vm7266 = vcmp.lt.s32.totalorder %v7109, 0
    %v7267 = vand.u32 %v7109, 2139095040
    %v7268 = vshrl.u32 %v7267, 23
    %v7269 = vsub.s32 %v7268, 127
    %v7270 = vand.u32 2147483647, %v7109
    %v7271 = vand.u32 %v7270, 8388607
    %v7272 = vor.u32 %v7271, 8388608
    %v7273 = vsub.s32 0, %v7272
    %v7274 = vadd.s32 %v7269, 1
    %vm7275 = vcmp.gt.s32.totalorder %v7274, 0
    %v7276 = vsel %vm7275, %v7274, 0
    %v7277 = vshrl.u32 %v7276, 5
    %v7278 = vand.u32 %v7276, 31
    %v7279 = vsub.s32 32, %v7278
    %v7280 = vshrl.u32 683565275, %v7279
    %v7281 = vshll.u32 683565275, %v7278
    %v7282 = vshrl.u32 2475754826, %v7279
    %v7283 = vor.u32 %v7281, %v7282
    %v7284 = vshll.u32 2475754826, %v7278
    %v7285 = vshrl.u32 2131351028, %v7279
    %v7286 = vor.u32 %v7284, %v7285
    %v7287 = vshll.u32 2131351028, %v7278
    %v7288 = vshrl.u32 2102212464, %v7279
    %v7289 = vor.u32 %v7287, %v7288
    %v7290 = vshll.u32 2102212464, %v7278
    %v7291 = vshrl.u32 920167782, %v7279
    %v7292 = vor.u32 %v7290, %v7291
    %v7293 = vshll.u32 920167782, %v7278
    %v7294 = vshrl.u32 1326507024, %v7279
    %v7295 = vor.u32 %v7293, %v7294
    %vm7296 = vcmp.lt.s32.totalorder %v7277, 1
    %vm7297 = vcmp.lt.s32.totalorder %v7277, 2
    %vm7298 = vcmp.lt.s32.totalorder %v7277, 3
    %vm7299 = vcmp.lt.s32.totalorder %v7277, 4
    %v7300 = vsel %vm7296, %v7280, %v7283
    %v7301 = vsel %vm7299, %v7289, 2102212464
    %v7302 = vsel %vm7298, %v7286, %v7301
    %v7303 = vsel %vm7297, %v7300, %v7302
    %v7304 = vsel %vm7296, %v7283, %v7286
    %v7305 = vsel %vm7299, %v7292, 920167782
    %v7306 = vsel %vm7298, %v7289, %v7305
    %v7307 = vsel %vm7297, %v7304, %v7306
    %v7308 = vsel %vm7296, %v7286, %v7289
    %v7309 = vsel %vm7299, %v7295, 1326507024
    %v7310 = vsel %vm7298, %v7292, %v7309
    %v7311 = vsel %vm7297, %v7308, %v7310
    %v7312 = vshll.u32 %v7272, 8
    %v7313 = vand.u32 %v7312, 65535
    %v7314 = vshrl.u32 %v7312, 16
    %v7315 = vand.u32 %v7311, 65535
    %v7316 = vshrl.u32 %v7311, 16
    %v7317 = vmul.u32 %v7313, %v7315
    %v7318 = vmul.u32 %v7313, %v7316
    %v7319 = vmul.u32 %v7314, %v7315
    %v7320 = vmul.u32 %v7314, %v7316
    %v7321 = vshll.u32 %v7318, 16
    %v7322 = vshrl.u32 %v7318, 16
    %v7323 = vshll.u32 %v7319, 16
    %v7324 = vshrl.u32 %v7319, 16
    %vm7325 = vc.u32 %v7317, %v7321
    %v7326 = vsel %vm7325, 1, 0
    %v7327 = vadd.s32 %v7317, %v7321
    %v7328 = vadd.s32 %v7320, %v7326
    %vm7329 = vc.u32 %v7327, %v7323
    %v7330 = vsel %vm7329, 1, 0
    %v7331 = vadd.s32 %v7327, %v7323
    %v7332 = vadd.s32 %v7328, %v7330
    %v7333 = vadd.s32 %v7332, %v7322
    %v7334 = vadd.s32 %v7333, %v7324
    %v7335 = vand.u32 %v7312, 65535
    %v7336 = vshrl.u32 %v7312, 16
    %v7337 = vand.u32 %v7307, 65535
    %v7338 = vshrl.u32 %v7307, 16
    %v7339 = vmul.u32 %v7335, %v7337
    %v7340 = vmul.u32 %v7335, %v7338
    %v7341 = vmul.u32 %v7336, %v7337
    %v7342 = vmul.u32 %v7336, %v7338
    %v7343 = vshll.u32 %v7340, 16
    %v7344 = vshrl.u32 %v7340, 16
    %v7345 = vshll.u32 %v7341, 16
    %v7346 = vshrl.u32 %v7341, 16
    %vm7347 = vc.u32 %v7339, %v7343
    %v7348 = vsel %vm7347, 1, 0
    %v7349 = vadd.s32 %v7339, %v7343
    %v7350 = vadd.s32 %v7342, %v7348
    %vm7351 = vc.u32 %v7349, %v7345
    %v7352 = vsel %vm7351, 1, 0
    %v7353 = vadd.s32 %v7349, %v7345
    %v7354 = vadd.s32 %v7350, %v7352
    %v7355 = vadd.s32 %v7354, %v7344
    %v7356 = vadd.s32 %v7355, %v7346
    %v7357 = vmul.u32 %v7312, %v7303
    %v7358 = vadd.s32 %v7334, %v7353
    %vm7359 = vc.u32 %v7334, %v7353
    %v7360 = vadd.s32 %v7356, 1
    %v7361 = vsel %vm7359, %v7360, %v7356
    %v7362 = vadd.s32 %v7357, %v7361
    %v7363 = vadd.s32 %v7362, 536870912
    %v7364 = vshrl.u32 %v7363, 30
    %v7365 = vshll.u32 %v7364, 30
    %v7366 = vsub.s32 %v7362, %v7365
    %vm7367 = vcmp.lt.s32.totalorder %v7366, 0
    %v7368 = vsub.s32 0, %v7366
    %v7369 = vsel %vm7367, %v7368, %v7366
    %v7370 = vclz %v7369
    %v7371 = vsub.s32 %v7370, 2
    %vm7372 = vcmp.gt.s32.totalorder 0, %v7371
    %v7373 = vsel %vm7372, 0, %v7371
    %v7374 = vsub.s32 32, %v7373
    %v7375 = vshll.u32 %v7366, %v7373
    %v7376 = vshrl.u32 %v7358, %v7374
    %v7377 = vor.u32 %v7375, %v7376
    %v7378 = vsub.s32 4294967266, %v7373
    %v7379 = vadd.s32 %v7378, 127
    %v7380 = vshll.u32 %v7379, 23
    %v7381 = vor.u32 4788187, %v7380
    %v7382 = vand.u32 2147483647, %v7381
    %v7384 = vcvt.s32.f32 %v7377
    %v7385 = vmul.f32 %v7384, %v7382
    %v7386 = vxor.u32 %v7385, 2147483648
    %v7387 = vsel %vm7266, %v7386, %v7385
    %v7388 = vsub.s32 4, %v7364
    %v7389 = vsel %vm7266, %v7388, %v7364
    %v7390 = vsel %vm7265, %v7109, %v7387
    %v7391 = vsel %vm7265, 0, %v7389
    %v7392 = vmul.f32 %v7390, %v7390
    %v7393 = vmul.f32 %v7392, -0.001358992
    %v7394 = vadd.f32 %v7393, 0.041655596
    %v7395 = vmul.f32 %v7392, %v7394
    %v7396 = vadd.f32 %v7395, -0.4999988
    %v7397 = vmul.f32 %v7392, %v7396
    %v7398 = vadd.f32 1.0, %v7397
    %v7399 = vmul.f32 %v7390, %v7390
    %v7400 = vmul.f32 %v7399, -0.00019511016
    %v7401 = vadd.f32 %v7400, 0.008332121
    %v7402 = vmul.f32 %v7399, %v7401
    %v7403 = vadd.f32 %v7402, -0.16666654
    %v7404 = vmul.f32 %v7399, %v7403
    %v7405 = vadd.f32 %v7404, 1.0
    %v7406 = vmul.f32 %v7405, %v7390
    %vm7407 = vweird.f32 %v7109
    %v7408 = vand.u32 %v7391, 3
    %vm7409 = vcmp.lt.s32.totalorder %v7408, 2
    %vm7410 = vcmp.eq.s32.totalorder %v7408, 0
    %v7411 = vxor.u32 %v7406, 2147483648
    %v7412 = vsel %vm7410, %v7398, %v7411
    %vm7413 = vcmp.eq.s32.totalorder %v7408, 2
    %v7414 = vxor.u32 %v7398, 2147483648
    %v7415 = vsel %vm7413, %v7414, %v7406
    %v7416 = vsel %vm7409, %v7412, %v7415
    %v7417 = vsel %vm7407, nan, %v7416
    %v7418 = vmul.f32 %v682, %v7263
    %v7419 = vmul.f32 %v682, %v7417
    %v7420 = vmul.f32 %v685, %v7108
    %v7421 = vmul.f32 %v685, %v7109
    %v7422 = vadd.f32 %v7418, %v7420
    %v7423 = vadd.f32 %v7419, %v7421
    %v7424 = vsub.f32 %v7104, %v7422
    %v7425 = vsub.f32 %v7105, %v7423
    %v7426 = vmul.f32 %v369, %v7424
    %v7427 = vmul.f32 %v369, %v7425
    %v7428 = vadd.f32 %v7108, %v7426
    %v7429 = vadd.f32 %v7109, %v7427
    %v7430 = vand.u32 2147483647, %v7428
    %vm7431 = vcmp.le.f32.partialorder %v7430, 0.7853982
    %vm7432 = vcmp.lt.s32.totalorder %v7428, 0
    %v7433 = vand.u32 %v7428, 2139095040
    %v7434 = vshrl.u32 %v7433, 23
    %v7435 = vsub.s32 %v7434, 127
    %v7436 = vand.u32 2147483647, %v7428
    %v7437 = vand.u32 %v7436, 8388607
    %v7438 = vor.u32 %v7437, 8388608
    %v7439 = vsub.s32 0, %v7438
    %v7440 = vadd.s32 %v7435, 1
    %vm7441 = vcmp.gt.s32.totalorder %v7440, 0
    %v7442 = vsel %vm7441, %v7440, 0
    %v7443 = vshrl.u32 %v7442, 5
    %v7444 = vand.u32 %v7442, 31
    %v7445 = vsub.s32 32, %v7444
    %v7446 = vshrl.u32 683565275, %v7445
    %v7447 = vshll.u32 683565275, %v7444
    %v7448 = vshrl.u32 2475754826, %v7445
    %v7449 = vor.u32 %v7447, %v7448
    %v7450 = vshll.u32 2475754826, %v7444
    %v7451 = vshrl.u32 2131351028, %v7445
    %v7452 = vor.u32 %v7450, %v7451
    %v7453 = vshll.u32 2131351028, %v7444
    %v7454 = vshrl.u32 2102212464, %v7445
    %v7455 = vor.u32 %v7453, %v7454
    %v7456 = vshll.u32 2102212464, %v7444
    %v7457 = vshrl.u32 920167782, %v7445
    %v7458 = vor.u32 %v7456, %v7457
    %v7459 = vshll.u32 920167782, %v7444
    %v7460 = vshrl.u32 1326507024, %v7445
    %v7461 = vor.u32 %v7459, %v7460
    %vm7462 = vcmp.lt.s32.totalorder %v7443, 1
    %vm7463 = vcmp.lt.s32.totalorder %v7443, 2
    %vm7464 = vcmp.lt.s32.totalorder %v7443, 3
    %vm7465 = vcmp.lt.s32.totalorder %v7443, 4
    %v7466 = vsel %vm7462, %v7446, %v7449
    %v7467 = vsel %vm7465, %v7455, 2102212464
    %v7468 = vsel %vm7464, %v7452, %v7467
    %v7469 = vsel %vm7463, %v7466, %v7468
    %v7470 = vsel %vm7462, %v7449, %v7452
    %v7471 = vsel %vm7465, %v7458, 920167782
    %v7472 = vsel %vm7464, %v7455, %v7471
    %v7473 = vsel %vm7463, %v7470, %v7472
    %v7474 = vsel %vm7462, %v7452, %v7455
    %v7475 = vsel %vm7465, %v7461, 1326507024
    %v7476 = vsel %vm7464, %v7458, %v7475
    %v7477 = vsel %vm7463, %v7474, %v7476
    %v7478 = vshll.u32 %v7438, 8
    %v7479 = vand.u32 %v7478, 65535
    %v7480 = vshrl.u32 %v7478, 16
    %v7481 = vand.u32 %v7477, 65535
    %v7482 = vshrl.u32 %v7477, 16
    %v7483 = vmul.u32 %v7479, %v7481
    %v7484 = vmul.u32 %v7479, %v7482
    %v7485 = vmul.u32 %v7480, %v7481
    %v7486 = vmul.u32 %v7480, %v7482
    %v7487 = vshll.u32 %v7484, 16
    %v7488 = vshrl.u32 %v7484, 16
    %v7489 = vshll.u32 %v7485, 16
    %v7490 = vshrl.u32 %v7485, 16
    %vm7491 = vc.u32 %v7483, %v7487
    %v7492 = vsel %vm7491, 1, 0
    %v7493 = vadd.s32 %v7483, %v7487
    %v7494 = vadd.s32 %v7486, %v7492
    %vm7495 = vc.u32 %v7493, %v7489
    %v7496 = vsel %vm7495, 1, 0
    %v7497 = vadd.s32 %v7493, %v7489
    %v7498 = vadd.s32 %v7494, %v7496
    %v7499 = vadd.s32 %v7498, %v7488
    %v7500 = vadd.s32 %v7499, %v7490
    %v7501 = vand.u32 %v7478, 65535
    %v7502 = vshrl.u32 %v7478, 16
    %v7503 = vand.u32 %v7473, 65535
    %v7504 = vshrl.u32 %v7473, 16
    %v7505 = vmul.u32 %v7501, %v7503
    %v7506 = vmul.u32 %v7501, %v7504
    %v7507 = vmul.u32 %v7502, %v7503
    %v7508 = vmul.u32 %v7502, %v7504
    %v7509 = vshll.u32 %v7506, 16
    %v7510 = vshrl.u32 %v7506, 16
    %v7511 = vshll.u32 %v7507, 16
    %v7512 = vshrl.u32 %v7507, 16
    %vm7513 = vc.u32 %v7505, %v7509
    %v7514 = vsel %vm7513, 1, 0
    %v7515 = vadd.s32 %v7505, %v7509
    %v7516 = vadd.s32 %v7508, %v7514
    %vm7517 = vc.u32 %v7515, %v7511
    %v7518 = vsel %vm7517, 1, 0
    %v7519 = vadd.s32 %v7515, %v7511
    %v7520 = vadd.s32 %v7516, %v7518
    %v7521 = vadd.s32 %v7520, %v7510
    %v7522 = vadd.s32 %v7521, %v7512
    %v7523 = vmul.u32 %v7478, %v7469
    %v7524 = vadd.s32 %v7500, %v7519
    %vm7525 = vc.u32 %v7500, %v7519
    %v7526 = vadd.s32 %v7522, 1
    %v7527 = vsel %vm7525, %v7526, %v7522
    %v7528 = vadd.s32 %v7523, %v7527
    %v7529 = vadd.s32 %v7528, 536870912
    %v7530 = vshrl.u32 %v7529, 30
    %v7531 = vshll.u32 %v7530, 30
    %v7532 = vsub.s32 %v7528, %v7531
    %vm7533 = vcmp.lt.s32.totalorder %v7532, 0
    %v7534 = vsub.s32 0, %v7532
    %v7535 = vsel %vm7533, %v7534, %v7532
    %v7536 = vclz %v7535
    %v7537 = vsub.s32 %v7536, 2
    %vm7538 = vcmp.gt.s32.totalorder 0, %v7537
    %v7539 = vsel %vm7538, 0, %v7537
    %v7540 = vsub.s32 32, %v7539
    %v7541 = vshll.u32 %v7532, %v7539
    %v7542 = vshrl.u32 %v7524, %v7540
    %v7543 = vor.u32 %v7541, %v7542
    %v7544 = vsub.s32 4294967266, %v7539
    %v7545 = vadd.s32 %v7544, 127
    %v7546 = vshll.u32 %v7545, 23
    %v7547 = vor.u32 4788187, %v7546
    %v7548 = vand.u32 2147483647, %v7547
    %v7550 = vcvt.s32.f32 %v7543
    %v7551 = vmul.f32 %v7550, %v7548
    %v7552 = vxor.u32 %v7551, 2147483648
    %v7553 = vsel %vm7432, %v7552, %v7551
    %v7554 = vsub.s32 4, %v7530
    %v7555 = vsel %vm7432, %v7554, %v7530
    %v7556 = vsel %vm7431, %v7428, %v7553
    %v7557 = vsel %vm7431, 0, %v7555
    %v7558 = vmul.f32 %v7556, %v7556
    %v7559 = vmul.f32 %v7558, -0.001358992
    %v7560 = vadd.f32 %v7559, 0.041655596
    %v7561 = vmul.f32 %v7558, %v7560
    %v7562 = vadd.f32 %v7561, -0.4999988
    %v7563 = vmul.f32 %v7558, %v7562
    %v7564 = vadd.f32 1.0, %v7563
    %v7565 = vmul.f32 %v7556, %v7556
    %v7566 = vmul.f32 %v7565, -0.00019511016
    %v7567 = vadd.f32 %v7566, 0.008332121
    %v7568 = vmul.f32 %v7565, %v7567
    %v7569 = vadd.f32 %v7568, -0.16666654
    %v7570 = vmul.f32 %v7565, %v7569
    %v7571 = vadd.f32 %v7570, 1.0
    %v7572 = vmul.f32 %v7571, %v7556
    %vm7573 = vweird.f32 %v7428
    %v7574 = vand.u32 %v7557, 3
    %vm7575 = vcmp.lt.s32.totalorder %v7574, 2
    %vm7576 = vcmp.eq.s32.totalorder %v7574, 0
    %v7577 = vxor.u32 %v7572, 2147483648
    %v7578 = vsel %vm7576, %v7564, %v7577
    %vm7579 = vcmp.eq.s32.totalorder %v7574, 2
    %v7580 = vxor.u32 %v7564, 2147483648
    %v7581 = vsel %vm7579, %v7580, %v7572
    %v7582 = vsel %vm7575, %v7578, %v7581
    %v7583 = vsel %vm7573, nan, %v7582
    %v7584 = vand.u32 2147483647, %v7429
    %vm7585 = vcmp.le.f32.partialorder %v7584, 0.7853982
    %vm7586 = vcmp.lt.s32.totalorder %v7429, 0
    %v7587 = vand.u32 %v7429, 2139095040
    %v7588 = vshrl.u32 %v7587, 23
    %v7589 = vsub.s32 %v7588, 127
    %v7590 = vand.u32 2147483647, %v7429
    %v7591 = vand.u32 %v7590, 8388607
    %v7592 = vor.u32 %v7591, 8388608
    %v7593 = vsub.s32 0, %v7592
    %v7594 = vadd.s32 %v7589, 1
    %vm7595 = vcmp.gt.s32.totalorder %v7594, 0
    %v7596 = vsel %vm7595, %v7594, 0
    %v7597 = vshrl.u32 %v7596, 5
    %v7598 = vand.u32 %v7596, 31
    %v7599 = vsub.s32 32, %v7598
    %v7600 = vshrl.u32 683565275, %v7599
    %v7601 = vshll.u32 683565275, %v7598
    %v7602 = vshrl.u32 2475754826, %v7599
    %v7603 = vor.u32 %v7601, %v7602
    %v7604 = vshll.u32 2475754826, %v7598
    %v7605 = vshrl.u32 2131351028, %v7599
    %v7606 = vor.u32 %v7604, %v7605
    %v7607 = vshll.u32 2131351028, %v7598
    %v7608 = vshrl.u32 2102212464, %v7599
    %v7609 = vor.u32 %v7607, %v7608
    %v7610 = vshll.u32 2102212464, %v7598
    %v7611 = vshrl.u32 920167782, %v7599
    %v7612 = vor.u32 %v7610, %v7611
    %v7613 = vshll.u32 920167782, %v7598
    %v7614 = vshrl.u32 1326507024, %v7599
    %v7615 = vor.u32 %v7613, %v7614
    %vm7616 = vcmp.lt.s32.totalorder %v7597, 1
    %vm7617 = vcmp.lt.s32.totalorder %v7597, 2
    %vm7618 = vcmp.lt.s32.totalorder %v7597, 3
    %vm7619 = vcmp.lt.s32.totalorder %v7597, 4
    %v7620 = vsel %vm7616, %v7600, %v7603
    %v7621 = vsel %vm7619, %v7609, 2102212464
    %v7622 = vsel %vm7618, %v7606, %v7621
    %v7623 = vsel %vm7617, %v7620, %v7622
    %v7624 = vsel %vm7616, %v7603, %v7606
    %v7625 = vsel %vm7619, %v7612, 920167782
    %v7626 = vsel %vm7618, %v7609, %v7625
    %v7627 = vsel %vm7617, %v7624, %v7626
    %v7628 = vsel %vm7616, %v7606, %v7609
    %v7629 = vsel %vm7619, %v7615, 1326507024
    %v7630 = vsel %vm7618, %v7612, %v7629
    %v7631 = vsel %vm7617, %v7628, %v7630
    %v7632 = vshll.u32 %v7592, 8
    %v7633 = vand.u32 %v7632, 65535
    %v7634 = vshrl.u32 %v7632, 16
    %v7635 = vand.u32 %v7631, 65535
    %v7636 = vshrl.u32 %v7631, 16
    %v7637 = vmul.u32 %v7633, %v7635
    %v7638 = vmul.u32 %v7633, %v7636
    %v7639 = vmul.u32 %v7634, %v7635
    %v7640 = vmul.u32 %v7634, %v7636
    %v7641 = vshll.u32 %v7638, 16
    %v7642 = vshrl.u32 %v7638, 16
    %v7643 = vshll.u32 %v7639, 16
    %v7644 = vshrl.u32 %v7639, 16
    %vm7645 = vc.u32 %v7637, %v7641
    %v7646 = vsel %vm7645, 1, 0
    %v7647 = vadd.s32 %v7637, %v7641
    %v7648 = vadd.s32 %v7640, %v7646
    %vm7649 = vc.u32 %v7647, %v7643
    %v7650 = vsel %vm7649, 1, 0
    %v7651 = vadd.s32 %v7647, %v7643
    %v7652 = vadd.s32 %v7648, %v7650
    %v7653 = vadd.s32 %v7652, %v7642
    %v7654 = vadd.s32 %v7653, %v7644
    %v7655 = vand.u32 %v7632, 65535
    %v7656 = vshrl.u32 %v7632, 16
    %v7657 = vand.u32 %v7627, 65535
    %v7658 = vshrl.u32 %v7627, 16
    %v7659 = vmul.u32 %v7655, %v7657
    %v7660 = vmul.u32 %v7655, %v7658
    %v7661 = vmul.u32 %v7656, %v7657
    %v7662 = vmul.u32 %v7656, %v7658
    %v7663 = vshll.u32 %v7660, 16
    %v7664 = vshrl.u32 %v7660, 16
    %v7665 = vshll.u32 %v7661, 16
    %v7666 = vshrl.u32 %v7661, 16
    %vm7667 = vc.u32 %v7659, %v7663
    %v7668 = vsel %vm7667, 1, 0
    %v7669 = vadd.s32 %v7659, %v7663
    %v7670 = vadd.s32 %v7662, %v7668
    %vm7671 = vc.u32 %v7669, %v7665
    %v7672 = vsel %vm7671, 1, 0
    %v7673 = vadd.s32 %v7669, %v7665
    %v7674 = vadd.s32 %v7670, %v7672
    %v7675 = vadd.s32 %v7674, %v7664
    %v7676 = vadd.s32 %v7675, %v7666
    %v7677 = vmul.u32 %v7632, %v7623
    %v7678 = vadd.s32 %v7654, %v7673
    %vm7679 = vc.u32 %v7654, %v7673
    %v7680 = vadd.s32 %v7676, 1
    %v7681 = vsel %vm7679, %v7680, %v7676
    %v7682 = vadd.s32 %v7677, %v7681
    %v7683 = vadd.s32 %v7682, 536870912
    %v7684 = vshrl.u32 %v7683, 30
    %v7685 = vshll.u32 %v7684, 30
    %v7686 = vsub.s32 %v7682, %v7685
    %vm7687 = vcmp.lt.s32.totalorder %v7686, 0
    %v7688 = vsub.s32 0, %v7686
    %v7689 = vsel %vm7687, %v7688, %v7686
    %v7690 = vclz %v7689
    %v7691 = vsub.s32 %v7690, 2
    %vm7692 = vcmp.gt.s32.totalorder 0, %v7691
    %v7693 = vsel %vm7692, 0, %v7691
    %v7694 = vsub.s32 32, %v7693
    %v7695 = vshll.u32 %v7686, %v7693
    %v7696 = vshrl.u32 %v7678, %v7694
    %v7697 = vor.u32 %v7695, %v7696
    %v7698 = vsub.s32 4294967266, %v7693
    %v7699 = vadd.s32 %v7698, 127
    %v7700 = vshll.u32 %v7699, 23
    %v7701 = vor.u32 4788187, %v7700
    %v7702 = vand.u32 2147483647, %v7701
    %v7704 = vcvt.s32.f32 %v7697
    %v7705 = vmul.f32 %v7704, %v7702
    %v7706 = vxor.u32 %v7705, 2147483648
    %v7707 = vsel %vm7586, %v7706, %v7705
    %v7708 = vsub.s32 4, %v7684
    %v7709 = vsel %vm7586, %v7708, %v7684
    %v7710 = vsel %vm7585, %v7429, %v7707
    %v7711 = vsel %vm7585, 0, %v7709
    %v7712 = vmul.f32 %v7710, %v7710
    %v7713 = vmul.f32 %v7712, -0.001358992
    %v7714 = vadd.f32 %v7713, 0.041655596
    %v7715 = vmul.f32 %v7712, %v7714
    %v7716 = vadd.f32 %v7715, -0.4999988
    %v7717 = vmul.f32 %v7712, %v7716
    %v7718 = vadd.f32 1.0, %v7717
    %v7719 = vmul.f32 %v7710, %v7710
    %v7720 = vmul.f32 %v7719, -0.00019511016
    %v7721 = vadd.f32 %v7720, 0.008332121
    %v7722 = vmul.f32 %v7719, %v7721
    %v7723 = vadd.f32 %v7722, -0.16666654
    %v7724 = vmul.f32 %v7719, %v7723
    %v7725 = vadd.f32 %v7724, 1.0
    %v7726 = vmul.f32 %v7725, %v7710
    %vm7727 = vweird.f32 %v7429
    %v7728 = vand.u32 %v7711, 3
    %vm7729 = vcmp.lt.s32.totalorder %v7728, 2
    %vm7730 = vcmp.eq.s32.totalorder %v7728, 0
    %v7731 = vxor.u32 %v7726, 2147483648
    %v7732 = vsel %vm7730, %v7718, %v7731
    %vm7733 = vcmp.eq.s32.totalorder %v7728, 2
    %v7734 = vxor.u32 %v7718, 2147483648
    %v7735 = vsel %vm7733, %v7734, %v7726
    %v7736 = vsel %vm7729, %v7732, %v7735
    %v7737 = vsel %vm7727, nan, %v7736
    %v7738 = vmul.f32 %v359, %v7583
    %v7739 = vmul.f32 %v359, %v7737
    %v7740 = vmul.f32 %v362, %v7428
    %v7741 = vmul.f32 %v362, %v7429
    %v7742 = vadd.f32 %v7738, %v7740
    %v7743 = vadd.f32 %v7739, %v7741
    %v7744 = vsub.f32 %v7424, %v7742
    %v7745 = vsub.f32 %v7425, %v7743
    %v7746 = vmul.f32 %v46, %v7744
    %v7747 = vmul.f32 %v46, %v7745
    %v7748 = vadd.f32 %v7428, %v7746
    %v7749 = vadd.f32 %v7429, %v7747
    %v7750 = vadd.f32 %v7748, %v7746
    %v7751 = vadd.f32 %v7749, %v7747
    %v7752 = vand.u32 2147483647, %v7750
    %vm7753 = vcmp.le.f32.partialorder %v7752, 0.7853982
    %vm7754 = vcmp.lt.s32.totalorder %v7750, 0
    %v7755 = vand.u32 %v7750, 2139095040
    %v7756 = vshrl.u32 %v7755, 23
    %v7757 = vsub.s32 %v7756, 127
    %v7758 = vand.u32 2147483647, %v7750
    %v7759 = vand.u32 %v7758, 8388607
    %v7760 = vor.u32 %v7759, 8388608
    %v7761 = vsub.s32 0, %v7760
    %v7762 = vadd.s32 %v7757, 1
    %vm7763 = vcmp.gt.s32.totalorder %v7762, 0
    %v7764 = vsel %vm7763, %v7762, 0
    %v7765 = vshrl.u32 %v7764, 5
    %v7766 = vand.u32 %v7764, 31
    %v7767 = vsub.s32 32, %v7766
    %v7768 = vshrl.u32 683565275, %v7767
    %v7769 = vshll.u32 683565275, %v7766
    %v7770 = vshrl.u32 2475754826, %v7767
    %v7771 = vor.u32 %v7769, %v7770
    %v7772 = vshll.u32 2475754826, %v7766
    %v7773 = vshrl.u32 2131351028, %v7767
    %v7774 = vor.u32 %v7772, %v7773
    %v7775 = vshll.u32 2131351028, %v7766
    %v7776 = vshrl.u32 2102212464, %v7767
    %v7777 = vor.u32 %v7775, %v7776
    %v7778 = vshll.u32 2102212464, %v7766
    %v7779 = vshrl.u32 920167782, %v7767
    %v7780 = vor.u32 %v7778, %v7779
    %v7781 = vshll.u32 920167782, %v7766
    %v7782 = vshrl.u32 1326507024, %v7767
    %v7783 = vor.u32 %v7781, %v7782
    %vm7784 = vcmp.lt.s32.totalorder %v7765, 1
    %vm7785 = vcmp.lt.s32.totalorder %v7765, 2
    %vm7786 = vcmp.lt.s32.totalorder %v7765, 3
    %vm7787 = vcmp.lt.s32.totalorder %v7765, 4
    %v7788 = vsel %vm7784, %v7768, %v7771
    %v7789 = vsel %vm7787, %v7777, 2102212464
    %v7790 = vsel %vm7786, %v7774, %v7789
    %v7791 = vsel %vm7785, %v7788, %v7790
    %v7792 = vsel %vm7784, %v7771, %v7774
    %v7793 = vsel %vm7787, %v7780, 920167782
    %v7794 = vsel %vm7786, %v7777, %v7793
    %v7795 = vsel %vm7785, %v7792, %v7794
    %v7796 = vsel %vm7784, %v7774, %v7777
    %v7797 = vsel %vm7787, %v7783, 1326507024
    %v7798 = vsel %vm7786, %v7780, %v7797
    %v7799 = vsel %vm7785, %v7796, %v7798
    %v7800 = vshll.u32 %v7760, 8
    %v7801 = vand.u32 %v7800, 65535
    %v7802 = vshrl.u32 %v7800, 16
    %v7803 = vand.u32 %v7799, 65535
    %v7804 = vshrl.u32 %v7799, 16
    %v7805 = vmul.u32 %v7801, %v7803
    %v7806 = vmul.u32 %v7801, %v7804
    %v7807 = vmul.u32 %v7802, %v7803
    %v7808 = vmul.u32 %v7802, %v7804
    %v7809 = vshll.u32 %v7806, 16
    %v7810 = vshrl.u32 %v7806, 16
    %v7811 = vshll.u32 %v7807, 16
    %v7812 = vshrl.u32 %v7807, 16
    %vm7813 = vc.u32 %v7805, %v7809
    %v7814 = vsel %vm7813, 1, 0
    %v7815 = vadd.s32 %v7805, %v7809
    %v7816 = vadd.s32 %v7808, %v7814
    %vm7817 = vc.u32 %v7815, %v7811
    %v7818 = vsel %vm7817, 1, 0
    %v7819 = vadd.s32 %v7815, %v7811
    %v7820 = vadd.s32 %v7816, %v7818
    %v7821 = vadd.s32 %v7820, %v7810
    %v7822 = vadd.s32 %v7821, %v7812
    %v7823 = vand.u32 %v7800, 65535
    %v7824 = vshrl.u32 %v7800, 16
    %v7825 = vand.u32 %v7795, 65535
    %v7826 = vshrl.u32 %v7795, 16
    %v7827 = vmul.u32 %v7823, %v7825
    %v7828 = vmul.u32 %v7823, %v7826
    %v7829 = vmul.u32 %v7824, %v7825
    %v7830 = vmul.u32 %v7824, %v7826
    %v7831 = vshll.u32 %v7828, 16
    %v7832 = vshrl.u32 %v7828, 16
    %v7833 = vshll.u32 %v7829, 16
    %v7834 = vshrl.u32 %v7829, 16
    %vm7835 = vc.u32 %v7827, %v7831
    %v7836 = vsel %vm7835, 1, 0
    %v7837 = vadd.s32 %v7827, %v7831
    %v7838 = vadd.s32 %v7830, %v7836
    %vm7839 = vc.u32 %v7837, %v7833
    %v7840 = vsel %vm7839, 1, 0
    %v7841 = vadd.s32 %v7837, %v7833
    %v7842 = vadd.s32 %v7838, %v7840
    %v7843 = vadd.s32 %v7842, %v7832
    %v7844 = vadd.s32 %v7843, %v7834
    %v7845 = vmul.u32 %v7800, %v7791
    %v7846 = vadd.s32 %v7822, %v7841
    %vm7847 = vc.u32 %v7822, %v7841
    %v7848 = vadd.s32 %v7844, 1
    %v7849 = vsel %vm7847, %v7848, %v7844
    %v7850 = vadd.s32 %v7845, %v7849
    %v7851 = vadd.s32 %v7850, 536870912
    %v7852 = vshrl.u32 %v7851, 30
    %v7853 = vshll.u32 %v7852, 30
    %v7854 = vsub.s32 %v7850, %v7853
    %vm7855 = vcmp.lt.s32.totalorder %v7854, 0
    %v7856 = vsub.s32 0, %v7854
    %v7857 = vsel %vm7855, %v7856, %v7854
    %v7858 = vclz %v7857
    %v7859 = vsub.s32 %v7858, 2
    %vm7860 = vcmp.gt.s32.totalorder 0, %v7859
    %v7861 = vsel %vm7860, 0, %v7859
    %v7862 = vsub.s32 32, %v7861
    %v7863 = vshll.u32 %v7854, %v7861
    %v7864 = vshrl.u32 %v7846, %v7862
    %v7865 = vor.u32 %v7863, %v7864
    %v7866 = vsub.s32 4294967266, %v7861
    %v7867 = vadd.s32 %v7866, 127
    %v7868 = vshll.u32 %v7867, 23
    %v7869 = vor.u32 4788187, %v7868
    %v7870 = vand.u32 2147483647, %v7869
    %v7872 = vcvt.s32.f32 %v7865
    %v7873 = vmul.f32 %v7872, %v7870
    %v7874 = vxor.u32 %v7873, 2147483648
    %v7875 = vsel %vm7754, %v7874, %v7873
    %v7876 = vsub.s32 4, %v7852
    %v7877 = vsel %vm7754, %v7876, %v7852
    %v7878 = vsel %vm7753, %v7750, %v7875
    %v7879 = vsel %vm7753, 0, %v7877
    %v7880 = vmul.f32 %v7878, %v7878
    %v7881 = vmul.f32 %v7880, -0.001358992
    %v7882 = vadd.f32 %v7881, 0.041655596
    %v7883 = vmul.f32 %v7880, %v7882
    %v7884 = vadd.f32 %v7883, -0.4999988
    %v7885 = vmul.f32 %v7880, %v7884
    %v7886 = vadd.f32 1.0, %v7885
    %v7887 = vmul.f32 %v7878, %v7878
    %v7888 = vmul.f32 %v7887, -0.00019511016
    %v7889 = vadd.f32 %v7888, 0.008332121
    %v7890 = vmul.f32 %v7887, %v7889
    %v7891 = vadd.f32 %v7890, -0.16666654
    %v7892 = vmul.f32 %v7887, %v7891
    %v7893 = vadd.f32 %v7892, 1.0
    %v7894 = vmul.f32 %v7893, %v7878
    %vm7895 = vweird.f32 %v7750
    %v7896 = vand.u32 %v7879, 3
    %vm7897 = vcmp.lt.s32.totalorder %v7896, 2
    %vm7898 = vcmp.eq.s32.totalorder %v7896, 0
    %v7899 = vxor.u32 %v7894, 2147483648
    %v7900 = vsel %vm7898, %v7886, %v7899
    %vm7901 = vcmp.eq.s32.totalorder %v7896, 2
    %v7902 = vxor.u32 %v7886, 2147483648
    %v7903 = vsel %vm7901, %v7902, %v7894
    %v7904 = vsel %vm7897, %v7900, %v7903
    %v7905 = vsel %vm7895, nan, %v7904
    %v7906 = vand.u32 2147483647, %v7751
    %vm7907 = vcmp.le.f32.partialorder %v7906, 0.7853982
    %vm7908 = vcmp.lt.s32.totalorder %v7751, 0
    %v7909 = vand.u32 %v7751, 2139095040
    %v7910 = vshrl.u32 %v7909, 23
    %v7911 = vsub.s32 %v7910, 127
    %v7912 = vand.u32 2147483647, %v7751
    %v7913 = vand.u32 %v7912, 8388607
    %v7914 = vor.u32 %v7913, 8388608
    %v7915 = vsub.s32 0, %v7914
    %v7916 = vadd.s32 %v7911, 1
    %vm7917 = vcmp.gt.s32.totalorder %v7916, 0
    %v7918 = vsel %vm7917, %v7916, 0
    %v7919 = vshrl.u32 %v7918, 5
    %v7920 = vand.u32 %v7918, 31
    %v7921 = vsub.s32 32, %v7920
    %v7922 = vshrl.u32 683565275, %v7921
    %v7923 = vshll.u32 683565275, %v7920
    %v7924 = vshrl.u32 2475754826, %v7921
    %v7925 = vor.u32 %v7923, %v7924
    %v7926 = vshll.u32 2475754826, %v7920
    %v7927 = vshrl.u32 2131351028, %v7921
    %v7928 = vor.u32 %v7926, %v7927
    %v7929 = vshll.u32 2131351028, %v7920
    %v7930 = vshrl.u32 2102212464, %v7921
    %v7931 = vor.u32 %v7929, %v7930
    %v7932 = vshll.u32 2102212464, %v7920
    %v7933 = vshrl.u32 920167782, %v7921
    %v7934 = vor.u32 %v7932, %v7933
    %v7935 = vshll.u32 920167782, %v7920
    %v7936 = vshrl.u32 1326507024, %v7921
    %v7937 = vor.u32 %v7935, %v7936
    %vm7938 = vcmp.lt.s32.totalorder %v7919, 1
    %vm7939 = vcmp.lt.s32.totalorder %v7919, 2
    %vm7940 = vcmp.lt.s32.totalorder %v7919, 3
    %vm7941 = vcmp.lt.s32.totalorder %v7919, 4
    %v7942 = vsel %vm7938, %v7922, %v7925
    %v7943 = vsel %vm7941, %v7931, 2102212464
    %v7944 = vsel %vm7940, %v7928, %v7943
    %v7945 = vsel %vm7939, %v7942, %v7944
    %v7946 = vsel %vm7938, %v7925, %v7928
    %v7947 = vsel %vm7941, %v7934, 920167782
    %v7948 = vsel %vm7940, %v7931, %v7947
    %v7949 = vsel %vm7939, %v7946, %v7948
    %v7950 = vsel %vm7938, %v7928, %v7931
    %v7951 = vsel %vm7941, %v7937, 1326507024
    %v7952 = vsel %vm7940, %v7934, %v7951
    %v7953 = vsel %vm7939, %v7950, %v7952
    %v7954 = vshll.u32 %v7914, 8
    %v7955 = vand.u32 %v7954, 65535
    %v7956 = vshrl.u32 %v7954, 16
    %v7957 = vand.u32 %v7953, 65535
    %v7958 = vshrl.u32 %v7953, 16
    %v7959 = vmul.u32 %v7955, %v7957
    %v7960 = vmul.u32 %v7955, %v7958
    %v7961 = vmul.u32 %v7956, %v7957
    %v7962 = vmul.u32 %v7956, %v7958
    %v7963 = vshll.u32 %v7960, 16
    %v7964 = vshrl.u32 %v7960, 16
    %v7965 = vshll.u32 %v7961, 16
    %v7966 = vshrl.u32 %v7961, 16
    %vm7967 = vc.u32 %v7959, %v7963
    %v7968 = vsel %vm7967, 1, 0
    %v7969 = vadd.s32 %v7959, %v7963
    %v7970 = vadd.s32 %v7962, %v7968
    %vm7971 = vc.u32 %v7969, %v7965
    %v7972 = vsel %vm7971, 1, 0
    %v7973 = vadd.s32 %v7969, %v7965
    %v7974 = vadd.s32 %v7970, %v7972
    %v7975 = vadd.s32 %v7974, %v7964
    %v7976 = vadd.s32 %v7975, %v7966
    %v7977 = vand.u32 %v7954, 65535
    %v7978 = vshrl.u32 %v7954, 16
    %v7979 = vand.u32 %v7949, 65535
    %v7980 = vshrl.u32 %v7949, 16
    %v7981 = vmul.u32 %v7977, %v7979
    %v7982 = vmul.u32 %v7977, %v7980
    %v7983 = vmul.u32 %v7978, %v7979
    %v7984 = vmul.u32 %v7978, %v7980
    %v7985 = vshll.u32 %v7982, 16
    %v7986 = vshrl.u32 %v7982, 16
    %v7987 = vshll.u32 %v7983, 16
    %v7988 = vshrl.u32 %v7983, 16
    %vm7989 = vc.u32 %v7981, %v7985
    %v7990 = vsel %vm7989, 1, 0
    %v7991 = vadd.s32 %v7981, %v7985
    %v7992 = vadd.s32 %v7984, %v7990
    %vm7993 = vc.u32 %v7991, %v7987
    %v7994 = vsel %vm7993, 1, 0
    %v7995 = vadd.s32 %v7991, %v7987
    %v7996 = vadd.s32 %v7992, %v7994
    %v7997 = vadd.s32 %v7996, %v7986
    %v7998 = vadd.s32 %v7997, %v7988
    %v7999 = vmul.u32 %v7954, %v7945
    %v8000 = vadd.s32 %v7976, %v7995
    %vm8001 = vc.u32 %v7976, %v7995
    %v8002 = vadd.s32 %v7998, 1
    %v8003 = vsel %vm8001, %v8002, %v7998
    %v8004 = vadd.s32 %v7999, %v8003
    %v8005 = vadd.s32 %v8004, 536870912
    %v8006 = vshrl.u32 %v8005, 30
    %v8007 = vshll.u32 %v8006, 30
    %v8008 = vsub.s32 %v8004, %v8007
    %vm8009 = vcmp.lt.s32.totalorder %v8008, 0
    %v8010 = vsub.s32 0, %v8008
    %v8011 = vsel %vm8009, %v8010, %v8008
    %v8012 = vclz %v8011
    %v8013 = vsub.s32 %v8012, 2
    %vm8014 = vcmp.gt.s32.totalorder 0, %v8013
    %v8015 = vsel %vm8014, 0, %v8013
    %v8016 = vsub.s32 32, %v8015
    %v8017 = vshll.u32 %v8008, %v8015
    %v8018 = vshrl.u32 %v8000, %v8016
    %v8019 = vor.u32 %v8017, %v8018
    %v8020 = vsub.s32 4294967266, %v8015
    %v8021 = vadd.s32 %v8020, 127
    %v8022 = vshll.u32 %v8021, 23
    %v8023 = vor.u32 4788187, %v8022
    %v8024 = vand.u32 2147483647, %v8023
    %v8026 = vcvt.s32.f32 %v8019
    %v8027 = vmul.f32 %v8026, %v8024
    %v8028 = vxor.u32 %v8027, 2147483648
    %v8029 = vsel %vm7908, %v8028, %v8027
    %v8030 = vsub.s32 4, %v8006
    %v8031 = vsel %vm7908, %v8030, %v8006
    %v8032 = vsel %vm7907, %v7751, %v8029
    %v8033 = vsel %vm7907, 0, %v8031
    %v8034 = vmul.f32 %v8032, %v8032
    %v8035 = vmul.f32 %v8034, -0.001358992
    %v8036 = vadd.f32 %v8035, 0.041655596
    %v8037 = vmul.f32 %v8034, %v8036
    %v8038 = vadd.f32 %v8037, -0.4999988
    %v8039 = vmul.f32 %v8034, %v8038
    %v8040 = vadd.f32 1.0, %v8039
    %v8041 = vmul.f32 %v8032, %v8032
    %v8042 = vmul.f32 %v8041, -0.00019511016
    %v8043 = vadd.f32 %v8042, 0.008332121
    %v8044 = vmul.f32 %v8041, %v8043
    %v8045 = vadd.f32 %v8044, -0.16666654
    %v8046 = vmul.f32 %v8041, %v8045
    %v8047 = vadd.f32 %v8046, 1.0
    %v8048 = vmul.f32 %v8047, %v8032
    %vm8049 = vweird.f32 %v7751
    %v8050 = vand.u32 %v8033, 3
    %vm8051 = vcmp.lt.s32.totalorder %v8050, 2
    %vm8052 = vcmp.eq.s32.totalorder %v8050, 0
    %v8053 = vxor.u32 %v8048, 2147483648
    %v8054 = vsel %vm8052, %v8040, %v8053
    %vm8055 = vcmp.eq.s32.totalorder %v8050, 2
    %v8056 = vxor.u32 %v8040, 2147483648
    %v8057 = vsel %vm8055, %v8056, %v8048
    %v8058 = vsel %vm8051, %v8054, %v8057
    %v8059 = vsel %vm8049, nan, %v8058
    %v8060 = vmul.f32 %v359, %v7905
    %v8061 = vmul.f32 %v359, %v8059
    %v8062 = vmul.f32 %v362, %v7750
    %v8063 = vmul.f32 %v362, %v7751
    %v8064 = vadd.f32 %v8060, %v8062
    %v8065 = vadd.f32 %v8061, %v8063
    %v8066 = vsub.f32 %v7744, %v8064
    %v8067 = vsub.f32 %v7745, %v8065
    %v8068 = vmul.f32 %v369, %v8066
    %v8069 = vmul.f32 %v369, %v8067
    %v8070 = vadd.f32 %v7750, %v8068
    %v8071 = vadd.f32 %v7751, %v8069
    %v8072 = vand.u32 2147483647, %v8070
    %vm8073 = vcmp.le.f32.partialorder %v8072, 0.7853982
    %vm8074 = vcmp.lt.s32.totalorder %v8070, 0
    %v8075 = vand.u32 %v8070, 2139095040
    %v8076 = vshrl.u32 %v8075, 23
    %v8077 = vsub.s32 %v8076, 127
    %v8078 = vand.u32 2147483647, %v8070
    %v8079 = vand.u32 %v8078, 8388607
    %v8080 = vor.u32 %v8079, 8388608
    %v8081 = vsub.s32 0, %v8080
    %v8082 = vadd.s32 %v8077, 1
    %vm8083 = vcmp.gt.s32.totalorder %v8082, 0
    %v8084 = vsel %vm8083, %v8082, 0
    %v8085 = vshrl.u32 %v8084, 5
    %v8086 = vand.u32 %v8084, 31
    %v8087 = vsub.s32 32, %v8086
    %v8088 = vshrl.u32 683565275, %v8087
    %v8089 = vshll.u32 683565275, %v8086
    %v8090 = vshrl.u32 2475754826, %v8087
    %v8091 = vor.u32 %v8089, %v8090
    %v8092 = vshll.u32 2475754826, %v8086
    %v8093 = vshrl.u32 2131351028, %v8087
    %v8094 = vor.u32 %v8092, %v8093
    %v8095 = vshll.u32 2131351028, %v8086
    %v8096 = vshrl.u32 2102212464, %v8087
    %v8097 = vor.u32 %v8095, %v8096
    %v8098 = vshll.u32 2102212464, %v8086
    %v8099 = vshrl.u32 920167782, %v8087
    %v8100 = vor.u32 %v8098, %v8099
    %v8101 = vshll.u32 920167782, %v8086
    %v8102 = vshrl.u32 1326507024, %v8087
    %v8103 = vor.u32 %v8101, %v8102
    %vm8104 = vcmp.lt.s32.totalorder %v8085, 1
    %vm8105 = vcmp.lt.s32.totalorder %v8085, 2
    %vm8106 = vcmp.lt.s32.totalorder %v8085, 3
    %vm8107 = vcmp.lt.s32.totalorder %v8085, 4
    %v8108 = vsel %vm8104, %v8088, %v8091
    %v8109 = vsel %vm8107, %v8097, 2102212464
    %v8110 = vsel %vm8106, %v8094, %v8109
    %v8111 = vsel %vm8105, %v8108, %v8110
    %v8112 = vsel %vm8104, %v8091, %v8094
    %v8113 = vsel %vm8107, %v8100, 920167782
    %v8114 = vsel %vm8106, %v8097, %v8113
    %v8115 = vsel %vm8105, %v8112, %v8114
    %v8116 = vsel %vm8104, %v8094, %v8097
    %v8117 = vsel %vm8107, %v8103, 1326507024
    %v8118 = vsel %vm8106, %v8100, %v8117
    %v8119 = vsel %vm8105, %v8116, %v8118
    %v8120 = vshll.u32 %v8080, 8
    %v8121 = vand.u32 %v8120, 65535
    %v8122 = vshrl.u32 %v8120, 16
    %v8123 = vand.u32 %v8119, 65535
    %v8124 = vshrl.u32 %v8119, 16
    %v8125 = vmul.u32 %v8121, %v8123
    %v8126 = vmul.u32 %v8121, %v8124
    %v8127 = vmul.u32 %v8122, %v8123
    %v8128 = vmul.u32 %v8122, %v8124
    %v8129 = vshll.u32 %v8126, 16
    %v8130 = vshrl.u32 %v8126, 16
    %v8131 = vshll.u32 %v8127, 16
    %v8132 = vshrl.u32 %v8127, 16
    %vm8133 = vc.u32 %v8125, %v8129
    %v8134 = vsel %vm8133, 1, 0
    %v8135 = vadd.s32 %v8125, %v8129
    %v8136 = vadd.s32 %v8128, %v8134
    %vm8137 = vc.u32 %v8135, %v8131
    %v8138 = vsel %vm8137, 1, 0
    %v8139 = vadd.s32 %v8135, %v8131
    %v8140 = vadd.s32 %v8136, %v8138
    %v8141 = vadd.s32 %v8140, %v8130
    %v8142 = vadd.s32 %v8141, %v8132
    %v8143 = vand.u32 %v8120, 65535
    %v8144 = vshrl.u32 %v8120, 16
    %v8145 = vand.u32 %v8115, 65535
    %v8146 = vshrl.u32 %v8115, 16
    %v8147 = vmul.u32 %v8143, %v8145
    %v8148 = vmul.u32 %v8143, %v8146
    %v8149 = vmul.u32 %v8144, %v8145
    %v8150 = vmul.u32 %v8144, %v8146
    %v8151 = vshll.u32 %v8148, 16
    %v8152 = vshrl.u32 %v8148, 16
    %v8153 = vshll.u32 %v8149, 16
    %v8154 = vshrl.u32 %v8149, 16
    %vm8155 = vc.u32 %v8147, %v8151
    %v8156 = vsel %vm8155, 1, 0
    %v8157 = vadd.s32 %v8147, %v8151
    %v8158 = vadd.s32 %v8150, %v8156
    %vm8159 = vc.u32 %v8157, %v8153
    %v8160 = vsel %vm8159, 1, 0
    %v8161 = vadd.s32 %v8157, %v8153
    %v8162 = vadd.s32 %v8158, %v8160
    %v8163 = vadd.s32 %v8162, %v8152
    %v8164 = vadd.s32 %v8163, %v8154
    %v8165 = vmul.u32 %v8120, %v8111
    %v8166 = vadd.s32 %v8142, %v8161
    %vm8167 = vc.u32 %v8142, %v8161
    %v8168 = vadd.s32 %v8164, 1
    %v8169 = vsel %vm8167, %v8168, %v8164
    %v8170 = vadd.s32 %v8165, %v8169
    %v8171 = vadd.s32 %v8170, 536870912
    %v8172 = vshrl.u32 %v8171, 30
    %v8173 = vshll.u32 %v8172, 30
    %v8174 = vsub.s32 %v8170, %v8173
    %vm8175 = vcmp.lt.s32.totalorder %v8174, 0
    %v8176 = vsub.s32 0, %v8174
    %v8177 = vsel %vm8175, %v8176, %v8174
    %v8178 = vclz %v8177
    %v8179 = vsub.s32 %v8178, 2
    %vm8180 = vcmp.gt.s32.totalorder 0, %v8179
    %v8181 = vsel %vm8180, 0, %v8179
    %v8182 = vsub.s32 32, %v8181
    %v8183 = vshll.u32 %v8174, %v8181
    %v8184 = vshrl.u32 %v8166, %v8182
    %v8185 = vor.u32 %v8183, %v8184
    %v8186 = vsub.s32 4294967266, %v8181
    %v8187 = vadd.s32 %v8186, 127
    %v8188 = vshll.u32 %v8187, 23
    %v8189 = vor.u32 4788187, %v8188
    %v8190 = vand.u32 2147483647, %v8189
    %v8192 = vcvt.s32.f32 %v8185
    %v8193 = vmul.f32 %v8192, %v8190
    %v8194 = vxor.u32 %v8193, 2147483648
    %v8195 = vsel %vm8074, %v8194, %v8193
    %v8196 = vsub.s32 4, %v8172
    %v8197 = vsel %vm8074, %v8196, %v8172
    %v8198 = vsel %vm8073, %v8070, %v8195
    %v8199 = vsel %vm8073, 0, %v8197
    %v8200 = vmul.f32 %v8198, %v8198
    %v8201 = vmul.f32 %v8200, -0.001358992
    %v8202 = vadd.f32 %v8201, 0.041655596
    %v8203 = vmul.f32 %v8200, %v8202
    %v8204 = vadd.f32 %v8203, -0.4999988
    %v8205 = vmul.f32 %v8200, %v8204
    %v8206 = vadd.f32 1.0, %v8205
    %v8207 = vmul.f32 %v8198, %v8198
    %v8208 = vmul.f32 %v8207, -0.00019511016
    %v8209 = vadd.f32 %v8208, 0.008332121
    %v8210 = vmul.f32 %v8207, %v8209
    %v8211 = vadd.f32 %v8210, -0.16666654
    %v8212 = vmul.f32 %v8207, %v8211
    %v8213 = vadd.f32 %v8212, 1.0
    %v8214 = vmul.f32 %v8213, %v8198
    %vm8215 = vweird.f32 %v8070
    %v8216 = vand.u32 %v8199, 3
    %vm8217 = vcmp.lt.s32.totalorder %v8216, 2
    %vm8218 = vcmp.eq.s32.totalorder %v8216, 0
    %v8219 = vxor.u32 %v8214, 2147483648
    %v8220 = vsel %vm8218, %v8206, %v8219
    %vm8221 = vcmp.eq.s32.totalorder %v8216, 2
    %v8222 = vxor.u32 %v8206, 2147483648
    %v8223 = vsel %vm8221, %v8222, %v8214
    %v8224 = vsel %vm8217, %v8220, %v8223
    %v8225 = vsel %vm8215, nan, %v8224
    %v8226 = vand.u32 2147483647, %v8071
    %vm8227 = vcmp.le.f32.partialorder %v8226, 0.7853982
    %vm8228 = vcmp.lt.s32.totalorder %v8071, 0
    %v8229 = vand.u32 %v8071, 2139095040
    %v8230 = vshrl.u32 %v8229, 23
    %v8231 = vsub.s32 %v8230, 127
    %v8232 = vand.u32 2147483647, %v8071
    %v8233 = vand.u32 %v8232, 8388607
    %v8234 = vor.u32 %v8233, 8388608
    %v8235 = vsub.s32 0, %v8234
    %v8236 = vadd.s32 %v8231, 1
    %vm8237 = vcmp.gt.s32.totalorder %v8236, 0
    %v8238 = vsel %vm8237, %v8236, 0
    %v8239 = vshrl.u32 %v8238, 5
    %v8240 = vand.u32 %v8238, 31
    %v8241 = vsub.s32 32, %v8240
    %v8242 = vshrl.u32 683565275, %v8241
    %v8243 = vshll.u32 683565275, %v8240
    %v8244 = vshrl.u32 2475754826, %v8241
    %v8245 = vor.u32 %v8243, %v8244
    %v8246 = vshll.u32 2475754826, %v8240
    %v8247 = vshrl.u32 2131351028, %v8241
    %v8248 = vor.u32 %v8246, %v8247
    %v8249 = vshll.u32 2131351028, %v8240
    %v8250 = vshrl.u32 2102212464, %v8241
    %v8251 = vor.u32 %v8249, %v8250
    %v8252 = vshll.u32 2102212464, %v8240
    %v8253 = vshrl.u32 920167782, %v8241
    %v8254 = vor.u32 %v8252, %v8253
    %v8255 = vshll.u32 920167782, %v8240
    %v8256 = vshrl.u32 1326507024, %v8241
    %v8257 = vor.u32 %v8255, %v8256
    %vm8258 = vcmp.lt.s32.totalorder %v8239, 1
    %vm8259 = vcmp.lt.s32.totalorder %v8239, 2
    %vm8260 = vcmp.lt.s32.totalorder %v8239, 3
    %vm8261 = vcmp.lt.s32.totalorder %v8239, 4
    %v8262 = vsel %vm8258, %v8242, %v8245
    %v8263 = vsel %vm8261, %v8251, 2102212464
    %v8264 = vsel %vm8260, %v8248, %v8263
    %v8265 = vsel %vm8259, %v8262, %v8264
    %v8266 = vsel %vm8258, %v8245, %v8248
    %v8267 = vsel %vm8261, %v8254, 920167782
    %v8268 = vsel %vm8260, %v8251, %v8267
    %v8269 = vsel %vm8259, %v8266, %v8268
    %v8270 = vsel %vm8258, %v8248, %v8251
    %v8271 = vsel %vm8261, %v8257, 1326507024
    %v8272 = vsel %vm8260, %v8254, %v8271
    %v8273 = vsel %vm8259, %v8270, %v8272
    %v8274 = vshll.u32 %v8234, 8
    %v8275 = vand.u32 %v8274, 65535
    %v8276 = vshrl.u32 %v8274, 16
    %v8277 = vand.u32 %v8273, 65535
    %v8278 = vshrl.u32 %v8273, 16
    %v8279 = vmul.u32 %v8275, %v8277
    %v8280 = vmul.u32 %v8275, %v8278
    %v8281 = vmul.u32 %v8276, %v8277
    %v8282 = vmul.u32 %v8276, %v8278
    %v8283 = vshll.u32 %v8280, 16
    %v8284 = vshrl.u32 %v8280, 16
    %v8285 = vshll.u32 %v8281, 16
    %v8286 = vshrl.u32 %v8281, 16
    %vm8287 = vc.u32 %v8279, %v8283
    %v8288 = vsel %vm8287, 1, 0
    %v8289 = vadd.s32 %v8279, %v8283
    %v8290 = vadd.s32 %v8282, %v8288
    %vm8291 = vc.u32 %v8289, %v8285
    %v8292 = vsel %vm8291, 1, 0
    %v8293 = vadd.s32 %v8289, %v8285
    %v8294 = vadd.s32 %v8290, %v8292
    %v8295 = vadd.s32 %v8294, %v8284
    %v8296 = vadd.s32 %v8295, %v8286
    %v8297 = vand.u32 %v8274, 65535
    %v8298 = vshrl.u32 %v8274, 16
    %v8299 = vand.u32 %v8269, 65535
    %v8300 = vshrl.u32 %v8269, 16
    %v8301 = vmul.u32 %v8297, %v8299
    %v8302 = vmul.u32 %v8297, %v8300
    %v8303 = vmul.u32 %v8298, %v8299
    %v8304 = vmul.u32 %v8298, %v8300
    %v8305 = vshll.u32 %v8302, 16
    %v8306 = vshrl.u32 %v8302, 16
    %v8307 = vshll.u32 %v8303, 16
    %v8308 = vshrl.u32 %v8303, 16
    %vm8309 = vc.u32 %v8301, %v8305
    %v8310 = vsel %vm8309, 1, 0
    %v8311 = vadd.s32 %v8301, %v8305
    %v8312 = vadd.s32 %v8304, %v8310
    %vm8313 = vc.u32 %v8311, %v8307
    %v8314 = vsel %vm8313, 1, 0
    %v8315 = vadd.s32 %v8311, %v8307
    %v8316 = vadd.s32 %v8312, %v8314
    %v8317 = vadd.s32 %v8316, %v8306
    %v8318 = vadd.s32 %v8317, %v8308
    %v8319 = vmul.u32 %v8274, %v8265
    %v8320 = vadd.s32 %v8296, %v8315
    %vm8321 = vc.u32 %v8296, %v8315
    %v8322 = vadd.s32 %v8318, 1
    %v8323 = vsel %vm8321, %v8322, %v8318
    %v8324 = vadd.s32 %v8319, %v8323
    %v8325 = vadd.s32 %v8324, 536870912
    %v8326 = vshrl.u32 %v8325, 30
    %v8327 = vshll.u32 %v8326, 30
    %v8328 = vsub.s32 %v8324, %v8327
    %vm8329 = vcmp.lt.s32.totalorder %v8328, 0
    %v8330 = vsub.s32 0, %v8328
    %v8331 = vsel %vm8329, %v8330, %v8328
    %v8332 = vclz %v8331
    %v8333 = vsub.s32 %v8332, 2
    %vm8334 = vcmp.gt.s32.totalorder 0, %v8333
    %v8335 = vsel %vm8334, 0, %v8333
    %v8336 = vsub.s32 32, %v8335
    %v8337 = vshll.u32 %v8328, %v8335
    %v8338 = vshrl.u32 %v8320, %v8336
    %v8339 = vor.u32 %v8337, %v8338
    %v8340 = vsub.s32 4294967266, %v8335
    %v8341 = vadd.s32 %v8340, 127
    %v8342 = vshll.u32 %v8341, 23
    %v8343 = vor.u32 4788187, %v8342
    %v8344 = vand.u32 2147483647, %v8343
    %v8346 = vcvt.s32.f32 %v8339
    %v8347 = vmul.f32 %v8346, %v8344
    %v8348 = vxor.u32 %v8347, 2147483648
    %v8349 = vsel %vm8228, %v8348, %v8347
    %v8350 = vsub.s32 4, %v8326
    %v8351 = vsel %vm8228, %v8350, %v8326
    %v8352 = vsel %vm8227, %v8071, %v8349
    %v8353 = vsel %vm8227, 0, %v8351
    %v8354 = vmul.f32 %v8352, %v8352
    %v8355 = vmul.f32 %v8354, -0.001358992
    %v8356 = vadd.f32 %v8355, 0.041655596
    %v8357 = vmul.f32 %v8354, %v8356
    %v8358 = vadd.f32 %v8357, -0.4999988
    %v8359 = vmul.f32 %v8354, %v8358
    %v8360 = vadd.f32 1.0, %v8359
    %v8361 = vmul.f32 %v8352, %v8352
    %v8362 = vmul.f32 %v8361, -0.00019511016
    %v8363 = vadd.f32 %v8362, 0.008332121
    %v8364 = vmul.f32 %v8361, %v8363
    %v8365 = vadd.f32 %v8364, -0.16666654
    %v8366 = vmul.f32 %v8361, %v8365
    %v8367 = vadd.f32 %v8366, 1.0
    %v8368 = vmul.f32 %v8367, %v8352
    %vm8369 = vweird.f32 %v8071
    %v8370 = vand.u32 %v8353, 3
    %vm8371 = vcmp.lt.s32.totalorder %v8370, 2
    %vm8372 = vcmp.eq.s32.totalorder %v8370, 0
    %v8373 = vxor.u32 %v8368, 2147483648
    %v8374 = vsel %vm8372, %v8360, %v8373
    %vm8375 = vcmp.eq.s32.totalorder %v8370, 2
    %v8376 = vxor.u32 %v8360, 2147483648
    %v8377 = vsel %vm8375, %v8376, %v8368
    %v8378 = vsel %vm8371, %v8374, %v8377
    %v8379 = vsel %vm8369, nan, %v8378
    %v8380 = vmul.f32 %v682, %v8225
    %v8381 = vmul.f32 %v682, %v8379
    %v8382 = vmul.f32 %v685, %v8070
    %v8383 = vmul.f32 %v685, %v8071
    %v8384 = vadd.f32 %v8380, %v8382
    %v8385 = vadd.f32 %v8381, %v8383
    %v8386 = vsub.f32 %v8066, %v8384
    %v8387 = vsub.f32 %v8067, %v8385
    %v8388 = vmul.f32 %v369, %v8386
    %v8389 = vmul.f32 %v369, %v8387
    %v8390 = vadd.f32 %v8070, %v8388
    %v8391 = vadd.f32 %v8071, %v8389
    %v8392 = vand.u32 2147483647, %v8390
    %vm8393 = vcmp.le.f32.partialorder %v8392, 0.7853982
    %vm8394 = vcmp.lt.s32.totalorder %v8390, 0
    %v8395 = vand.u32 %v8390, 2139095040
    %v8396 = vshrl.u32 %v8395, 23
    %v8397 = vsub.s32 %v8396, 127
    %v8398 = vand.u32 2147483647, %v8390
    %v8399 = vand.u32 %v8398, 8388607
    %v8400 = vor.u32 %v8399, 8388608
    %v8401 = vsub.s32 0, %v8400
    %v8402 = vadd.s32 %v8397, 1
    %vm8403 = vcmp.gt.s32.totalorder %v8402, 0
    %v8404 = vsel %vm8403, %v8402, 0
    %v8405 = vshrl.u32 %v8404, 5
    %v8406 = vand.u32 %v8404, 31
    %v8407 = vsub.s32 32, %v8406
    %v8408 = vshrl.u32 683565275, %v8407
    %v8409 = vshll.u32 683565275, %v8406
    %v8410 = vshrl.u32 2475754826, %v8407
    %v8411 = vor.u32 %v8409, %v8410
    %v8412 = vshll.u32 2475754826, %v8406
    %v8413 = vshrl.u32 2131351028, %v8407
    %v8414 = vor.u32 %v8412, %v8413
    %v8415 = vshll.u32 2131351028, %v8406
    %v8416 = vshrl.u32 2102212464, %v8407
    %v8417 = vor.u32 %v8415, %v8416
    %v8418 = vshll.u32 2102212464, %v8406
    %v8419 = vshrl.u32 920167782, %v8407
    %v8420 = vor.u32 %v8418, %v8419
    %v8421 = vshll.u32 920167782, %v8406
    %v8422 = vshrl.u32 1326507024, %v8407
    %v8423 = vor.u32 %v8421, %v8422
    %vm8424 = vcmp.lt.s32.totalorder %v8405, 1
    %vm8425 = vcmp.lt.s32.totalorder %v8405, 2
    %vm8426 = vcmp.lt.s32.totalorder %v8405, 3
    %vm8427 = vcmp.lt.s32.totalorder %v8405, 4
    %v8428 = vsel %vm8424, %v8408, %v8411
    %v8429 = vsel %vm8427, %v8417, 2102212464
    %v8430 = vsel %vm8426, %v8414, %v8429
    %v8431 = vsel %vm8425, %v8428, %v8430
    %v8432 = vsel %vm8424, %v8411, %v8414
    %v8433 = vsel %vm8427, %v8420, 920167782
    %v8434 = vsel %vm8426, %v8417, %v8433
    %v8435 = vsel %vm8425, %v8432, %v8434
    %v8436 = vsel %vm8424, %v8414, %v8417
    %v8437 = vsel %vm8427, %v8423, 1326507024
    %v8438 = vsel %vm8426, %v8420, %v8437
    %v8439 = vsel %vm8425, %v8436, %v8438
    %v8440 = vshll.u32 %v8400, 8
    %v8441 = vand.u32 %v8440, 65535
    %v8442 = vshrl.u32 %v8440, 16
    %v8443 = vand.u32 %v8439, 65535
    %v8444 = vshrl.u32 %v8439, 16
    %v8445 = vmul.u32 %v8441, %v8443
    %v8446 = vmul.u32 %v8441, %v8444
    %v8447 = vmul.u32 %v8442, %v8443
    %v8448 = vmul.u32 %v8442, %v8444
    %v8449 = vshll.u32 %v8446, 16
    %v8450 = vshrl.u32 %v8446, 16
    %v8451 = vshll.u32 %v8447, 16
    %v8452 = vshrl.u32 %v8447, 16
    %vm8453 = vc.u32 %v8445, %v8449
    %v8454 = vsel %vm8453, 1, 0
    %v8455 = vadd.s32 %v8445, %v8449
    %v8456 = vadd.s32 %v8448, %v8454
    %vm8457 = vc.u32 %v8455, %v8451
    %v8458 = vsel %vm8457, 1, 0
    %v8459 = vadd.s32 %v8455, %v8451
    %v8460 = vadd.s32 %v8456, %v8458
    %v8461 = vadd.s32 %v8460, %v8450
    %v8462 = vadd.s32 %v8461, %v8452
    %v8463 = vand.u32 %v8440, 65535
    %v8464 = vshrl.u32 %v8440, 16
    %v8465 = vand.u32 %v8435, 65535
    %v8466 = vshrl.u32 %v8435, 16
    %v8467 = vmul.u32 %v8463, %v8465
    %v8468 = vmul.u32 %v8463, %v8466
    %v8469 = vmul.u32 %v8464, %v8465
    %v8470 = vmul.u32 %v8464, %v8466
    %v8471 = vshll.u32 %v8468, 16
    %v8472 = vshrl.u32 %v8468, 16
    %v8473 = vshll.u32 %v8469, 16
    %v8474 = vshrl.u32 %v8469, 16
    %vm8475 = vc.u32 %v8467, %v8471
    %v8476 = vsel %vm8475, 1, 0
    %v8477 = vadd.s32 %v8467, %v8471
    %v8478 = vadd.s32 %v8470, %v8476
    %vm8479 = vc.u32 %v8477, %v8473
    %v8480 = vsel %vm8479, 1, 0
    %v8481 = vadd.s32 %v8477, %v8473
    %v8482 = vadd.s32 %v8478, %v8480
    %v8483 = vadd.s32 %v8482, %v8472
    %v8484 = vadd.s32 %v8483, %v8474
    %v8485 = vmul.u32 %v8440, %v8431
    %v8486 = vadd.s32 %v8462, %v8481
    %vm8487 = vc.u32 %v8462, %v8481
    %v8488 = vadd.s32 %v8484, 1
    %v8489 = vsel %vm8487, %v8488, %v8484
    %v8490 = vadd.s32 %v8485, %v8489
    %v8491 = vadd.s32 %v8490, 536870912
    %v8492 = vshrl.u32 %v8491, 30
    %v8493 = vshll.u32 %v8492, 30
    %v8494 = vsub.s32 %v8490, %v8493
    %vm8495 = vcmp.lt.s32.totalorder %v8494, 0
    %v8496 = vsub.s32 0, %v8494
    %v8497 = vsel %vm8495, %v8496, %v8494
    %v8498 = vclz %v8497
    %v8499 = vsub.s32 %v8498, 2
    %vm8500 = vcmp.gt.s32.totalorder 0, %v8499
    %v8501 = vsel %vm8500, 0, %v8499
    %v8502 = vsub.s32 32, %v8501
    %v8503 = vshll.u32 %v8494, %v8501
    %v8504 = vshrl.u32 %v8486, %v8502
    %v8505 = vor.u32 %v8503, %v8504
    %v8506 = vsub.s32 4294967266, %v8501
    %v8507 = vadd.s32 %v8506, 127
    %v8508 = vshll.u32 %v8507, 23
    %v8509 = vor.u32 4788187, %v8508
    %v8510 = vand.u32 2147483647, %v8509
    %v8512 = vcvt.s32.f32 %v8505
    %v8513 = vmul.f32 %v8512, %v8510
    %v8514 = vxor.u32 %v8513, 2147483648
    %v8515 = vsel %vm8394, %v8514, %v8513
    %v8516 = vsub.s32 4, %v8492
    %v8517 = vsel %vm8394, %v8516, %v8492
    %v8518 = vsel %vm8393, %v8390, %v8515
    %v8519 = vsel %vm8393, 0, %v8517
    %v8520 = vmul.f32 %v8518, %v8518
    %v8521 = vmul.f32 %v8520, -0.001358992
    %v8522 = vadd.f32 %v8521, 0.041655596
    %v8523 = vmul.f32 %v8520, %v8522
    %v8524 = vadd.f32 %v8523, -0.4999988
    %v8525 = vmul.f32 %v8520, %v8524
    %v8526 = vadd.f32 1.0, %v8525
    %v8527 = vmul.f32 %v8518, %v8518
    %v8528 = vmul.f32 %v8527, -0.00019511016
    %v8529 = vadd.f32 %v8528, 0.008332121
    %v8530 = vmul.f32 %v8527, %v8529
    %v8531 = vadd.f32 %v8530, -0.16666654
    %v8532 = vmul.f32 %v8527, %v8531
    %v8533 = vadd.f32 %v8532, 1.0
    %v8534 = vmul.f32 %v8533, %v8518
    %vm8535 = vweird.f32 %v8390
    %v8536 = vand.u32 %v8519, 3
    %vm8537 = vcmp.lt.s32.totalorder %v8536, 2
    %vm8538 = vcmp.eq.s32.totalorder %v8536, 0
    %v8539 = vxor.u32 %v8534, 2147483648
    %v8540 = vsel %vm8538, %v8526, %v8539
    %vm8541 = vcmp.eq.s32.totalorder %v8536, 2
    %v8542 = vxor.u32 %v8526, 2147483648
    %v8543 = vsel %vm8541, %v8542, %v8534
    %v8544 = vsel %vm8537, %v8540, %v8543
    %v8545 = vsel %vm8535, nan, %v8544
    %v8546 = vand.u32 2147483647, %v8391
    %vm8547 = vcmp.le.f32.partialorder %v8546, 0.7853982
    %vm8548 = vcmp.lt.s32.totalorder %v8391, 0
    %v8549 = vand.u32 %v8391, 2139095040
    %v8550 = vshrl.u32 %v8549, 23
    %v8551 = vsub.s32 %v8550, 127
    %v8552 = vand.u32 2147483647, %v8391
    %v8553 = vand.u32 %v8552, 8388607
    %v8554 = vor.u32 %v8553, 8388608
    %v8555 = vsub.s32 0, %v8554
    %v8556 = vadd.s32 %v8551, 1
    %vm8557 = vcmp.gt.s32.totalorder %v8556, 0
    %v8558 = vsel %vm8557, %v8556, 0
    %v8559 = vshrl.u32 %v8558, 5
    %v8560 = vand.u32 %v8558, 31
    %v8561 = vsub.s32 32, %v8560
    %v8562 = vshrl.u32 683565275, %v8561
    %v8563 = vshll.u32 683565275, %v8560
    %v8564 = vshrl.u32 2475754826, %v8561
    %v8565 = vor.u32 %v8563, %v8564
    %v8566 = vshll.u32 2475754826, %v8560
    %v8567 = vshrl.u32 2131351028, %v8561
    %v8568 = vor.u32 %v8566, %v8567
    %v8569 = vshll.u32 2131351028, %v8560
    %v8570 = vshrl.u32 2102212464, %v8561
    %v8571 = vor.u32 %v8569, %v8570
    %v8572 = vshll.u32 2102212464, %v8560
    %v8573 = vshrl.u32 920167782, %v8561
    %v8574 = vor.u32 %v8572, %v8573
    %v8575 = vshll.u32 920167782, %v8560
    %v8576 = vshrl.u32 1326507024, %v8561
    %v8577 = vor.u32 %v8575, %v8576
    %vm8578 = vcmp.lt.s32.totalorder %v8559, 1
    %vm8579 = vcmp.lt.s32.totalorder %v8559, 2
    %vm8580 = vcmp.lt.s32.totalorder %v8559, 3
    %vm8581 = vcmp.lt.s32.totalorder %v8559, 4
    %v8582 = vsel %vm8578, %v8562, %v8565
    %v8583 = vsel %vm8581, %v8571, 2102212464
    %v8584 = vsel %vm8580, %v8568, %v8583
    %v8585 = vsel %vm8579, %v8582, %v8584
    %v8586 = vsel %vm8578, %v8565, %v8568
    %v8587 = vsel %vm8581, %v8574, 920167782
    %v8588 = vsel %vm8580, %v8571, %v8587
    %v8589 = vsel %vm8579, %v8586, %v8588
    %v8590 = vsel %vm8578, %v8568, %v8571
    %v8591 = vsel %vm8581, %v8577, 1326507024
    %v8592 = vsel %vm8580, %v8574, %v8591
    %v8593 = vsel %vm8579, %v8590, %v8592
    %v8594 = vshll.u32 %v8554, 8
    %v8595 = vand.u32 %v8594, 65535
    %v8596 = vshrl.u32 %v8594, 16
    %v8597 = vand.u32 %v8593, 65535
    %v8598 = vshrl.u32 %v8593, 16
    %v8599 = vmul.u32 %v8595, %v8597
    %v8600 = vmul.u32 %v8595, %v8598
    %v8601 = vmul.u32 %v8596, %v8597
    %v8602 = vmul.u32 %v8596, %v8598
    %v8603 = vshll.u32 %v8600, 16
    %v8604 = vshrl.u32 %v8600, 16
    %v8605 = vshll.u32 %v8601, 16
    %v8606 = vshrl.u32 %v8601, 16
    %vm8607 = vc.u32 %v8599, %v8603
    %v8608 = vsel %vm8607, 1, 0
    %v8609 = vadd.s32 %v8599, %v8603
    %v8610 = vadd.s32 %v8602, %v8608
    %vm8611 = vc.u32 %v8609, %v8605
    %v8612 = vsel %vm8611, 1, 0
    %v8613 = vadd.s32 %v8609, %v8605
    %v8614 = vadd.s32 %v8610, %v8612
    %v8615 = vadd.s32 %v8614, %v8604
    %v8616 = vadd.s32 %v8615, %v8606
    %v8617 = vand.u32 %v8594, 65535
    %v8618 = vshrl.u32 %v8594, 16
    %v8619 = vand.u32 %v8589, 65535
    %v8620 = vshrl.u32 %v8589, 16
    %v8621 = vmul.u32 %v8617, %v8619
    %v8622 = vmul.u32 %v8617, %v8620
    %v8623 = vmul.u32 %v8618, %v8619
    %v8624 = vmul.u32 %v8618, %v8620
    %v8625 = vshll.u32 %v8622, 16
    %v8626 = vshrl.u32 %v8622, 16
    %v8627 = vshll.u32 %v8623, 16
    %v8628 = vshrl.u32 %v8623, 16
    %vm8629 = vc.u32 %v8621, %v8625
    %v8630 = vsel %vm8629, 1, 0
    %v8631 = vadd.s32 %v8621, %v8625
    %v8632 = vadd.s32 %v8624, %v8630
    %vm8633 = vc.u32 %v8631, %v8627
    %v8634 = vsel %vm8633, 1, 0
    %v8635 = vadd.s32 %v8631, %v8627
    %v8636 = vadd.s32 %v8632, %v8634
    %v8637 = vadd.s32 %v8636, %v8626
    %v8638 = vadd.s32 %v8637, %v8628
    %v8639 = vmul.u32 %v8594, %v8585
    %v8640 = vadd.s32 %v8616, %v8635
    %vm8641 = vc.u32 %v8616, %v8635
    %v8642 = vadd.s32 %v8638, 1
    %v8643 = vsel %vm8641, %v8642, %v8638
    %v8644 = vadd.s32 %v8639, %v8643
    %v8645 = vadd.s32 %v8644, 536870912
    %v8646 = vshrl.u32 %v8645, 30
    %v8647 = vshll.u32 %v8646, 30
    %v8648 = vsub.s32 %v8644, %v8647
    %vm8649 = vcmp.lt.s32.totalorder %v8648, 0
    %v8650 = vsub.s32 0, %v8648
    %v8651 = vsel %vm8649, %v8650, %v8648
    %v8652 = vclz %v8651
    %v8653 = vsub.s32 %v8652, 2
    %vm8654 = vcmp.gt.s32.totalorder 0, %v8653
    %v8655 = vsel %vm8654, 0, %v8653
    %v8656 = vsub.s32 32, %v8655
    %v8657 = vshll.u32 %v8648, %v8655
    %v8658 = vshrl.u32 %v8640, %v8656
    %v8659 = vor.u32 %v8657, %v8658
    %v8660 = vsub.s32 4294967266, %v8655
    %v8661 = vadd.s32 %v8660, 127
    %v8662 = vshll.u32 %v8661, 23
    %v8663 = vor.u32 4788187, %v8662
    %v8664 = vand.u32 2147483647, %v8663
    %v8666 = vcvt.s32.f32 %v8659
    %v8667 = vmul.f32 %v8666, %v8664
    %v8668 = vxor.u32 %v8667, 2147483648
    %v8669 = vsel %vm8548, %v8668, %v8667
    %v8670 = vsub.s32 4, %v8646
    %v8671 = vsel %vm8548, %v8670, %v8646
    %v8672 = vsel %vm8547, %v8391, %v8669
    %v8673 = vsel %vm8547, 0, %v8671
    %v8674 = vmul.f32 %v8672, %v8672
    %v8675 = vmul.f32 %v8674, -0.001358992
    %v8676 = vadd.f32 %v8675, 0.041655596
    %v8677 = vmul.f32 %v8674, %v8676
    %v8678 = vadd.f32 %v8677, -0.4999988
    %v8679 = vmul.f32 %v8674, %v8678
    %v8680 = vadd.f32 1.0, %v8679
    %v8681 = vmul.f32 %v8672, %v8672
    %v8682 = vmul.f32 %v8681, -0.00019511016
    %v8683 = vadd.f32 %v8682, 0.008332121
    %v8684 = vmul.f32 %v8681, %v8683
    %v8685 = vadd.f32 %v8684, -0.16666654
    %v8686 = vmul.f32 %v8681, %v8685
    %v8687 = vadd.f32 %v8686, 1.0
    %v8688 = vmul.f32 %v8687, %v8672
    %vm8689 = vweird.f32 %v8391
    %v8690 = vand.u32 %v8673, 3
    %vm8691 = vcmp.lt.s32.totalorder %v8690, 2
    %vm8692 = vcmp.eq.s32.totalorder %v8690, 0
    %v8693 = vxor.u32 %v8688, 2147483648
    %v8694 = vsel %vm8692, %v8680, %v8693
    %vm8695 = vcmp.eq.s32.totalorder %v8690, 2
    %v8696 = vxor.u32 %v8680, 2147483648
    %v8697 = vsel %vm8695, %v8696, %v8688
    %v8698 = vsel %vm8691, %v8694, %v8697
    %v8699 = vsel %vm8689, nan, %v8698
    %v8700 = vmul.f32 %v359, %v8545
    %v8701 = vmul.f32 %v359, %v8699
    %v8702 = vmul.f32 %v362, %v8390
    %v8703 = vmul.f32 %v362, %v8391
    %v8704 = vadd.f32 %v8700, %v8702
    %v8705 = vadd.f32 %v8701, %v8703
    %v8706 = vsub.f32 %v8386, %v8704
    %v8707 = vsub.f32 %v8387, %v8705
    %v8708 = vmul.f32 %v46, %v8706
    %v8709 = vmul.f32 %v46, %v8707
    %v8710 = vadd.f32 %v8390, %v8708
    %v8711 = vadd.f32 %v8391, %v8709
    %v8712 = vadd.f32 %v8710, %v8708
    %v8713 = vadd.f32 %v8711, %v8709
    %v8714 = vand.u32 2147483647, %v8712
    %vm8715 = vcmp.le.f32.partialorder %v8714, 0.7853982
    %vm8716 = vcmp.lt.s32.totalorder %v8712, 0
    %v8717 = vand.u32 %v8712, 2139095040
    %v8718 = vshrl.u32 %v8717, 23
    %v8719 = vsub.s32 %v8718, 127
    %v8720 = vand.u32 2147483647, %v8712
    %v8721 = vand.u32 %v8720, 8388607
    %v8722 = vor.u32 %v8721, 8388608
    %v8723 = vsub.s32 0, %v8722
    %v8724 = vadd.s32 %v8719, 1
    %vm8725 = vcmp.gt.s32.totalorder %v8724, 0
    %v8726 = vsel %vm8725, %v8724, 0
    %v8727 = vshrl.u32 %v8726, 5
    %v8728 = vand.u32 %v8726, 31
    %v8729 = vsub.s32 32, %v8728
    %v8730 = vshrl.u32 683565275, %v8729
    %v8731 = vshll.u32 683565275, %v8728
    %v8732 = vshrl.u32 2475754826, %v8729
    %v8733 = vor.u32 %v8731, %v8732
    %v8734 = vshll.u32 2475754826, %v8728
    %v8735 = vshrl.u32 2131351028, %v8729
    %v8736 = vor.u32 %v8734, %v8735
    %v8737 = vshll.u32 2131351028, %v8728
    %v8738 = vshrl.u32 2102212464, %v8729
    %v8739 = vor.u32 %v8737, %v8738
    %v8740 = vshll.u32 2102212464, %v8728
    %v8741 = vshrl.u32 920167782, %v8729
    %v8742 = vor.u32 %v8740, %v8741
    %v8743 = vshll.u32 920167782, %v8728
    %v8744 = vshrl.u32 1326507024, %v8729
    %v8745 = vor.u32 %v8743, %v8744
    %vm8746 = vcmp.lt.s32.totalorder %v8727, 1
    %vm8747 = vcmp.lt.s32.totalorder %v8727, 2
    %vm8748 = vcmp.lt.s32.totalorder %v8727, 3
    %vm8749 = vcmp.lt.s32.totalorder %v8727, 4
    %v8750 = vsel %vm8746, %v8730, %v8733
    %v8751 = vsel %vm8749, %v8739, 2102212464
    %v8752 = vsel %vm8748, %v8736, %v8751
    %v8753 = vsel %vm8747, %v8750, %v8752
    %v8754 = vsel %vm8746, %v8733, %v8736
    %v8755 = vsel %vm8749, %v8742, 920167782
    %v8756 = vsel %vm8748, %v8739, %v8755
    %v8757 = vsel %vm8747, %v8754, %v8756
    %v8758 = vsel %vm8746, %v8736, %v8739
    %v8759 = vsel %vm8749, %v8745, 1326507024
    %v8760 = vsel %vm8748, %v8742, %v8759
    %v8761 = vsel %vm8747, %v8758, %v8760
    %v8762 = vshll.u32 %v8722, 8
    %v8763 = vand.u32 %v8762, 65535
    %v8764 = vshrl.u32 %v8762, 16
    %v8765 = vand.u32 %v8761, 65535
    %v8766 = vshrl.u32 %v8761, 16
    %v8767 = vmul.u32 %v8763, %v8765
    %v8768 = vmul.u32 %v8763, %v8766
    %v8769 = vmul.u32 %v8764, %v8765
    %v8770 = vmul.u32 %v8764, %v8766
    %v8771 = vshll.u32 %v8768, 16
    %v8772 = vshrl.u32 %v8768, 16
    %v8773 = vshll.u32 %v8769, 16
    %v8774 = vshrl.u32 %v8769, 16
    %vm8775 = vc.u32 %v8767, %v8771
    %v8776 = vsel %vm8775, 1, 0
    %v8777 = vadd.s32 %v8767, %v8771
    %v8778 = vadd.s32 %v8770, %v8776
    %vm8779 = vc.u32 %v8777, %v8773
    %v8780 = vsel %vm8779, 1, 0
    %v8781 = vadd.s32 %v8777, %v8773
    %v8782 = vadd.s32 %v8778, %v8780
    %v8783 = vadd.s32 %v8782, %v8772
    %v8784 = vadd.s32 %v8783, %v8774
    %v8785 = vand.u32 %v8762, 65535
    %v8786 = vshrl.u32 %v8762, 16
    %v8787 = vand.u32 %v8757, 65535
    %v8788 = vshrl.u32 %v8757, 16
    %v8789 = vmul.u32 %v8785, %v8787
    %v8790 = vmul.u32 %v8785, %v8788
    %v8791 = vmul.u32 %v8786, %v8787
    %v8792 = vmul.u32 %v8786, %v8788
    %v8793 = vshll.u32 %v8790, 16
    %v8794 = vshrl.u32 %v8790, 16
    %v8795 = vshll.u32 %v8791, 16
    %v8796 = vshrl.u32 %v8791, 16
    %vm8797 = vc.u32 %v8789, %v8793
    %v8798 = vsel %vm8797, 1, 0
    %v8799 = vadd.s32 %v8789, %v8793
    %v8800 = vadd.s32 %v8792, %v8798
    %vm8801 = vc.u32 %v8799, %v8795
    %v8802 = vsel %vm8801, 1, 0
    %v8803 = vadd.s32 %v8799, %v8795
    %v8804 = vadd.s32 %v8800, %v8802
    %v8805 = vadd.s32 %v8804, %v8794
    %v8806 = vadd.s32 %v8805, %v8796
    %v8807 = vmul.u32 %v8762, %v8753
    %v8808 = vadd.s32 %v8784, %v8803
    %vm8809 = vc.u32 %v8784, %v8803
    %v8810 = vadd.s32 %v8806, 1
    %v8811 = vsel %vm8809, %v8810, %v8806
    %v8812 = vadd.s32 %v8807, %v8811
    %v8813 = vadd.s32 %v8812, 536870912
    %v8814 = vshrl.u32 %v8813, 30
    %v8815 = vshll.u32 %v8814, 30
    %v8816 = vsub.s32 %v8812, %v8815
    %vm8817 = vcmp.lt.s32.totalorder %v8816, 0
    %v8818 = vsub.s32 0, %v8816
    %v8819 = vsel %vm8817, %v8818, %v8816
    %v8820 = vclz %v8819
    %v8821 = vsub.s32 %v8820, 2
    %vm8822 = vcmp.gt.s32.totalorder 0, %v8821
    %v8823 = vsel %vm8822, 0, %v8821
    %v8824 = vsub.s32 32, %v8823
    %v8825 = vshll.u32 %v8816, %v8823
    %v8826 = vshrl.u32 %v8808, %v8824
    %v8827 = vor.u32 %v8825, %v8826
    %v8828 = vsub.s32 4294967266, %v8823
    %v8829 = vadd.s32 %v8828, 127
    %v8830 = vshll.u32 %v8829, 23
    %v8831 = vor.u32 4788187, %v8830
    %v8832 = vand.u32 2147483647, %v8831
    %v8834 = vcvt.s32.f32 %v8827
    %v8835 = vmul.f32 %v8834, %v8832
    %v8836 = vxor.u32 %v8835, 2147483648
    %v8837 = vsel %vm8716, %v8836, %v8835
    %v8838 = vsub.s32 4, %v8814
    %v8839 = vsel %vm8716, %v8838, %v8814
    %v8840 = vsel %vm8715, %v8712, %v8837
    %v8841 = vsel %vm8715, 0, %v8839
    %v8842 = vmul.f32 %v8840, %v8840
    %v8843 = vmul.f32 %v8842, -0.001358992
    %v8844 = vadd.f32 %v8843, 0.041655596
    %v8845 = vmul.f32 %v8842, %v8844
    %v8846 = vadd.f32 %v8845, -0.4999988
    %v8847 = vmul.f32 %v8842, %v8846
    %v8848 = vadd.f32 1.0, %v8847
    %v8849 = vmul.f32 %v8840, %v8840
    %v8850 = vmul.f32 %v8849, -0.00019511016
    %v8851 = vadd.f32 %v8850, 0.008332121
    %v8852 = vmul.f32 %v8849, %v8851
    %v8853 = vadd.f32 %v8852, -0.16666654
    %v8854 = vmul.f32 %v8849, %v8853
    %v8855 = vadd.f32 %v8854, 1.0
    %v8856 = vmul.f32 %v8855, %v8840
    %vm8857 = vweird.f32 %v8712
    %v8858 = vand.u32 %v8841, 3
    %vm8859 = vcmp.lt.s32.totalorder %v8858, 2
    %vm8860 = vcmp.eq.s32.totalorder %v8858, 0
    %v8861 = vxor.u32 %v8856, 2147483648
    %v8862 = vsel %vm8860, %v8848, %v8861
    %vm8863 = vcmp.eq.s32.totalorder %v8858, 2
    %v8864 = vxor.u32 %v8848, 2147483648
    %v8865 = vsel %vm8863, %v8864, %v8856
    %v8866 = vsel %vm8859, %v8862, %v8865
    %v8867 = vsel %vm8857, nan, %v8866
    %v8868 = vand.u32 2147483647, %v8713
    %vm8869 = vcmp.le.f32.partialorder %v8868, 0.7853982
    %vm8870 = vcmp.lt.s32.totalorder %v8713, 0
    %v8871 = vand.u32 %v8713, 2139095040
    %v8872 = vshrl.u32 %v8871, 23
    %v8873 = vsub.s32 %v8872, 127
    %v8874 = vand.u32 2147483647, %v8713
    %v8875 = vand.u32 %v8874, 8388607
    %v8876 = vor.u32 %v8875, 8388608
    %v8877 = vsub.s32 0, %v8876
    %v8878 = vadd.s32 %v8873, 1
    %vm8879 = vcmp.gt.s32.totalorder %v8878, 0
    %v8880 = vsel %vm8879, %v8878, 0
    %v8881 = vshrl.u32 %v8880, 5
    %v8882 = vand.u32 %v8880, 31
    %v8883 = vsub.s32 32, %v8882
    %v8884 = vshrl.u32 683565275, %v8883
    %v8885 = vshll.u32 683565275, %v8882
    %v8886 = vshrl.u32 2475754826, %v8883
    %v8887 = vor.u32 %v8885, %v8886
    %v8888 = vshll.u32 2475754826, %v8882
    %v8889 = vshrl.u32 2131351028, %v8883
    %v8890 = vor.u32 %v8888, %v8889
    %v8891 = vshll.u32 2131351028, %v8882
    %v8892 = vshrl.u32 2102212464, %v8883
    %v8893 = vor.u32 %v8891, %v8892
    %v8894 = vshll.u32 2102212464, %v8882
    %v8895 = vshrl.u32 920167782, %v8883
    %v8896 = vor.u32 %v8894, %v8895
    %v8897 = vshll.u32 920167782, %v8882
    %v8898 = vshrl.u32 1326507024, %v8883
    %v8899 = vor.u32 %v8897, %v8898
    %vm8900 = vcmp.lt.s32.totalorder %v8881, 1
    %vm8901 = vcmp.lt.s32.totalorder %v8881, 2
    %vm8902 = vcmp.lt.s32.totalorder %v8881, 3
    %vm8903 = vcmp.lt.s32.totalorder %v8881, 4
    %v8904 = vsel %vm8900, %v8884, %v8887
    %v8905 = vsel %vm8903, %v8893, 2102212464
    %v8906 = vsel %vm8902, %v8890, %v8905
    %v8907 = vsel %vm8901, %v8904, %v8906
    %v8908 = vsel %vm8900, %v8887, %v8890
    %v8909 = vsel %vm8903, %v8896, 920167782
    %v8910 = vsel %vm8902, %v8893, %v8909
    %v8911 = vsel %vm8901, %v8908, %v8910
    %v8912 = vsel %vm8900, %v8890, %v8893
    %v8913 = vsel %vm8903, %v8899, 1326507024
    %v8914 = vsel %vm8902, %v8896, %v8913
    %v8915 = vsel %vm8901, %v8912, %v8914
    %v8916 = vshll.u32 %v8876, 8
    %v8917 = vand.u32 %v8916, 65535
    %v8918 = vshrl.u32 %v8916, 16
    %v8919 = vand.u32 %v8915, 65535
    %v8920 = vshrl.u32 %v8915, 16
    %v8921 = vmul.u32 %v8917, %v8919
    %v8922 = vmul.u32 %v8917, %v8920
    %v8923 = vmul.u32 %v8918, %v8919
    %v8924 = vmul.u32 %v8918, %v8920
    %v8925 = vshll.u32 %v8922, 16
    %v8926 = vshrl.u32 %v8922, 16
    %v8927 = vshll.u32 %v8923, 16
    %v8928 = vshrl.u32 %v8923, 16
    %vm8929 = vc.u32 %v8921, %v8925
    %v8930 = vsel %vm8929, 1, 0
    %v8931 = vadd.s32 %v8921, %v8925
    %v8932 = vadd.s32 %v8924, %v8930
    %vm8933 = vc.u32 %v8931, %v8927
    %v8934 = vsel %vm8933, 1, 0
    %v8935 = vadd.s32 %v8931, %v8927
    %v8936 = vadd.s32 %v8932, %v8934
    %v8937 = vadd.s32 %v8936, %v8926
    %v8938 = vadd.s32 %v8937, %v8928
    %v8939 = vand.u32 %v8916, 65535
    %v8940 = vshrl.u32 %v8916, 16
    %v8941 = vand.u32 %v8911, 65535
    %v8942 = vshrl.u32 %v8911, 16
    %v8943 = vmul.u32 %v8939, %v8941
    %v8944 = vmul.u32 %v8939, %v8942
    %v8945 = vmul.u32 %v8940, %v8941
    %v8946 = vmul.u32 %v8940, %v8942
    %v8947 = vshll.u32 %v8944, 16
    %v8948 = vshrl.u32 %v8944, 16
    %v8949 = vshll.u32 %v8945, 16
    %v8950 = vshrl.u32 %v8945, 16
    %vm8951 = vc.u32 %v8943, %v8947
    %v8952 = vsel %vm8951, 1, 0
    %v8953 = vadd.s32 %v8943, %v8947
    %v8954 = vadd.s32 %v8946, %v8952
    %vm8955 = vc.u32 %v8953, %v8949
    %v8956 = vsel %vm8955, 1, 0
    %v8957 = vadd.s32 %v8953, %v8949
    %v8958 = vadd.s32 %v8954, %v8956
    %v8959 = vadd.s32 %v8958, %v8948
    %v8960 = vadd.s32 %v8959, %v8950
    %v8961 = vmul.u32 %v8916, %v8907
    %v8962 = vadd.s32 %v8938, %v8957
    %vm8963 = vc.u32 %v8938, %v8957
    %v8964 = vadd.s32 %v8960, 1
    %v8965 = vsel %vm8963, %v8964, %v8960
    %v8966 = vadd.s32 %v8961, %v8965
    %v8967 = vadd.s32 %v8966, 536870912
    %v8968 = vshrl.u32 %v8967, 30
    %v8969 = vshll.u32 %v8968, 30
    %v8970 = vsub.s32 %v8966, %v8969
    %vm8971 = vcmp.lt.s32.totalorder %v8970, 0
    %v8972 = vsub.s32 0, %v8970
    %v8973 = vsel %vm8971, %v8972, %v8970
    %v8974 = vclz %v8973
    %v8975 = vsub.s32 %v8974, 2
    %vm8976 = vcmp.gt.s32.totalorder 0, %v8975
    %v8977 = vsel %vm8976, 0, %v8975
    %v8978 = vsub.s32 32, %v8977
    %v8979 = vshll.u32 %v8970, %v8977
    %v8980 = vshrl.u32 %v8962, %v8978
    %v8981 = vor.u32 %v8979, %v8980
    %v8982 = vsub.s32 4294967266, %v8977
    %v8983 = vadd.s32 %v8982, 127
    %v8984 = vshll.u32 %v8983, 23
    %v8985 = vor.u32 4788187, %v8984
    %v8986 = vand.u32 2147483647, %v8985
    %v8988 = vcvt.s32.f32 %v8981
    %v8989 = vmul.f32 %v8988, %v8986
    %v8990 = vxor.u32 %v8989, 2147483648
    %v8991 = vsel %vm8870, %v8990, %v8989
    %v8992 = vsub.s32 4, %v8968
    %v8993 = vsel %vm8870, %v8992, %v8968
    %v8994 = vsel %vm8869, %v8713, %v8991
    %v8995 = vsel %vm8869, 0, %v8993
    %v8996 = vmul.f32 %v8994, %v8994
    %v8997 = vmul.f32 %v8996, -0.001358992
    %v8998 = vadd.f32 %v8997, 0.041655596
    %v8999 = vmul.f32 %v8996, %v8998
    %v9000 = vadd.f32 %v8999, -0.4999988
    %v9001 = vmul.f32 %v8996, %v9000
    %v9002 = vadd.f32 1.0, %v9001
    %v9003 = vmul.f32 %v8994, %v8994
    %v9004 = vmul.f32 %v9003, -0.00019511016
    %v9005 = vadd.f32 %v9004, 0.008332121
    %v9006 = vmul.f32 %v9003, %v9005
    %v9007 = vadd.f32 %v9006, -0.16666654
    %v9008 = vmul.f32 %v9003, %v9007
    %v9009 = vadd.f32 %v9008, 1.0
    %v9010 = vmul.f32 %v9009, %v8994
    %vm9011 = vweird.f32 %v8713
    %v9012 = vand.u32 %v8995, 3
    %vm9013 = vcmp.lt.s32.totalorder %v9012, 2
    %vm9014 = vcmp.eq.s32.totalorder %v9012, 0
    %v9015 = vxor.u32 %v9010, 2147483648
    %v9016 = vsel %vm9014, %v9002, %v9015
    %vm9017 = vcmp.eq.s32.totalorder %v9012, 2
    %v9018 = vxor.u32 %v9002, 2147483648
    %v9019 = vsel %vm9017, %v9018, %v9010
    %v9020 = vsel %vm9013, %v9016, %v9019
    %v9021 = vsel %vm9011, nan, %v9020
    %v9022 = vmul.f32 %v359, %v8867
    %v9023 = vmul.f32 %v359, %v9021
    %v9024 = vmul.f32 %v362, %v8712
    %v9025 = vmul.f32 %v362, %v8713
    %v9026 = vadd.f32 %v9022, %v9024
    %v9027 = vadd.f32 %v9023, %v9025
    %v9028 = vsub.f32 %v8706, %v9026
    %v9029 = vsub.f32 %v8707, %v9027
    %v9030 = vmul.f32 %v369, %v9028
    %v9031 = vmul.f32 %v369, %v9029
    %v9032 = vadd.f32 %v8712, %v9030
    %v9033 = vadd.f32 %v8713, %v9031
    %v9034 = vand.u32 2147483647, %v9032
    %vm9035 = vcmp.le.f32.partialorder %v9034, 0.7853982
    %vm9036 = vcmp.lt.s32.totalorder %v9032, 0
    %v9037 = vand.u32 %v9032, 2139095040
    %v9038 = vshrl.u32 %v9037, 23
    %v9039 = vsub.s32 %v9038, 127
    %v9040 = vand.u32 2147483647, %v9032
    %v9041 = vand.u32 %v9040, 8388607
    %v9042 = vor.u32 %v9041, 8388608
    %v9043 = vsub.s32 0, %v9042
    %v9044 = vadd.s32 %v9039, 1
    %vm9045 = vcmp.gt.s32.totalorder %v9044, 0
    %v9046 = vsel %vm9045, %v9044, 0
    %v9047 = vshrl.u32 %v9046, 5
    %v9048 = vand.u32 %v9046, 31
    %v9049 = vsub.s32 32, %v9048
    %v9050 = vshrl.u32 683565275, %v9049
    %v9051 = vshll.u32 683565275, %v9048
    %v9052 = vshrl.u32 2475754826, %v9049
    %v9053 = vor.u32 %v9051, %v9052
    %v9054 = vshll.u32 2475754826, %v9048
    %v9055 = vshrl.u32 2131351028, %v9049
    %v9056 = vor.u32 %v9054, %v9055
    %v9057 = vshll.u32 2131351028, %v9048
    %v9058 = vshrl.u32 2102212464, %v9049
    %v9059 = vor.u32 %v9057, %v9058
    %v9060 = vshll.u32 2102212464, %v9048
    %v9061 = vshrl.u32 920167782, %v9049
    %v9062 = vor.u32 %v9060, %v9061
    %v9063 = vshll.u32 920167782, %v9048
    %v9064 = vshrl.u32 1326507024, %v9049
    %v9065 = vor.u32 %v9063, %v9064
    %vm9066 = vcmp.lt.s32.totalorder %v9047, 1
    %vm9067 = vcmp.lt.s32.totalorder %v9047, 2
    %vm9068 = vcmp.lt.s32.totalorder %v9047, 3
    %vm9069 = vcmp.lt.s32.totalorder %v9047, 4
    %v9070 = vsel %vm9066, %v9050, %v9053
    %v9071 = vsel %vm9069, %v9059, 2102212464
    %v9072 = vsel %vm9068, %v9056, %v9071
    %v9073 = vsel %vm9067, %v9070, %v9072
    %v9074 = vsel %vm9066, %v9053, %v9056
    %v9075 = vsel %vm9069, %v9062, 920167782
    %v9076 = vsel %vm9068, %v9059, %v9075
    %v9077 = vsel %vm9067, %v9074, %v9076
    %v9078 = vsel %vm9066, %v9056, %v9059
    %v9079 = vsel %vm9069, %v9065, 1326507024
    %v9080 = vsel %vm9068, %v9062, %v9079
    %v9081 = vsel %vm9067, %v9078, %v9080
    %v9082 = vshll.u32 %v9042, 8
    %v9083 = vand.u32 %v9082, 65535
    %v9084 = vshrl.u32 %v9082, 16
    %v9085 = vand.u32 %v9081, 65535
    %v9086 = vshrl.u32 %v9081, 16
    %v9087 = vmul.u32 %v9083, %v9085
    %v9088 = vmul.u32 %v9083, %v9086
    %v9089 = vmul.u32 %v9084, %v9085
    %v9090 = vmul.u32 %v9084, %v9086
    %v9091 = vshll.u32 %v9088, 16
    %v9092 = vshrl.u32 %v9088, 16
    %v9093 = vshll.u32 %v9089, 16
    %v9094 = vshrl.u32 %v9089, 16
    %vm9095 = vc.u32 %v9087, %v9091
    %v9096 = vsel %vm9095, 1, 0
    %v9097 = vadd.s32 %v9087, %v9091
    %v9098 = vadd.s32 %v9090, %v9096
    %vm9099 = vc.u32 %v9097, %v9093
    %v9100 = vsel %vm9099, 1, 0
    %v9101 = vadd.s32 %v9097, %v9093
    %v9102 = vadd.s32 %v9098, %v9100
    %v9103 = vadd.s32 %v9102, %v9092
    %v9104 = vadd.s32 %v9103, %v9094
    %v9105 = vand.u32 %v9082, 65535
    %v9106 = vshrl.u32 %v9082, 16
    %v9107 = vand.u32 %v9077, 65535
    %v9108 = vshrl.u32 %v9077, 16
    %v9109 = vmul.u32 %v9105, %v9107
    %v9110 = vmul.u32 %v9105, %v9108
    %v9111 = vmul.u32 %v9106, %v9107
    %v9112 = vmul.u32 %v9106, %v9108
    %v9113 = vshll.u32 %v9110, 16
    %v9114 = vshrl.u32 %v9110, 16
    %v9115 = vshll.u32 %v9111, 16
    %v9116 = vshrl.u32 %v9111, 16
    %vm9117 = vc.u32 %v9109, %v9113
    %v9118 = vsel %vm9117, 1, 0
    %v9119 = vadd.s32 %v9109, %v9113
    %v9120 = vadd.s32 %v9112, %v9118
    %vm9121 = vc.u32 %v9119, %v9115
    %v9122 = vsel %vm9121, 1, 0
    %v9123 = vadd.s32 %v9119, %v9115
    %v9124 = vadd.s32 %v9120, %v9122
    %v9125 = vadd.s32 %v9124, %v9114
    %v9126 = vadd.s32 %v9125, %v9116
    %v9127 = vmul.u32 %v9082, %v9073
    %v9128 = vadd.s32 %v9104, %v9123
    %vm9129 = vc.u32 %v9104, %v9123
    %v9130 = vadd.s32 %v9126, 1
    %v9131 = vsel %vm9129, %v9130, %v9126
    %v9132 = vadd.s32 %v9127, %v9131
    %v9133 = vadd.s32 %v9132, 536870912
    %v9134 = vshrl.u32 %v9133, 30
    %v9135 = vshll.u32 %v9134, 30
    %v9136 = vsub.s32 %v9132, %v9135
    %vm9137 = vcmp.lt.s32.totalorder %v9136, 0
    %v9138 = vsub.s32 0, %v9136
    %v9139 = vsel %vm9137, %v9138, %v9136
    %v9140 = vclz %v9139
    %v9141 = vsub.s32 %v9140, 2
    %vm9142 = vcmp.gt.s32.totalorder 0, %v9141
    %v9143 = vsel %vm9142, 0, %v9141
    %v9144 = vsub.s32 32, %v9143
    %v9145 = vshll.u32 %v9136, %v9143
    %v9146 = vshrl.u32 %v9128, %v9144
    %v9147 = vor.u32 %v9145, %v9146
    %v9148 = vsub.s32 4294967266, %v9143
    %v9149 = vadd.s32 %v9148, 127
    %v9150 = vshll.u32 %v9149, 23
    %v9151 = vor.u32 4788187, %v9150
    %v9152 = vand.u32 2147483647, %v9151
    %v9154 = vcvt.s32.f32 %v9147
    %v9155 = vmul.f32 %v9154, %v9152
    %v9156 = vxor.u32 %v9155, 2147483648
    %v9157 = vsel %vm9036, %v9156, %v9155
    %v9158 = vsub.s32 4, %v9134
    %v9159 = vsel %vm9036, %v9158, %v9134
    %v9160 = vsel %vm9035, %v9032, %v9157
    %v9161 = vsel %vm9035, 0, %v9159
    %v9162 = vmul.f32 %v9160, %v9160
    %v9163 = vmul.f32 %v9162, -0.001358992
    %v9164 = vadd.f32 %v9163, 0.041655596
    %v9165 = vmul.f32 %v9162, %v9164
    %v9166 = vadd.f32 %v9165, -0.4999988
    %v9167 = vmul.f32 %v9162, %v9166
    %v9168 = vadd.f32 1.0, %v9167
    %v9169 = vmul.f32 %v9160, %v9160
    %v9170 = vmul.f32 %v9169, -0.00019511016
    %v9171 = vadd.f32 %v9170, 0.008332121
    %v9172 = vmul.f32 %v9169, %v9171
    %v9173 = vadd.f32 %v9172, -0.16666654
    %v9174 = vmul.f32 %v9169, %v9173
    %v9175 = vadd.f32 %v9174, 1.0
    %v9176 = vmul.f32 %v9175, %v9160
    %vm9177 = vweird.f32 %v9032
    %v9178 = vand.u32 %v9161, 3
    %vm9179 = vcmp.lt.s32.totalorder %v9178, 2
    %vm9180 = vcmp.eq.s32.totalorder %v9178, 0
    %v9181 = vxor.u32 %v9176, 2147483648
    %v9182 = vsel %vm9180, %v9168, %v9181
    %vm9183 = vcmp.eq.s32.totalorder %v9178, 2
    %v9184 = vxor.u32 %v9168, 2147483648
    %v9185 = vsel %vm9183, %v9184, %v9176
    %v9186 = vsel %vm9179, %v9182, %v9185
    %v9187 = vsel %vm9177, nan, %v9186
    %v9188 = vand.u32 2147483647, %v9033
    %vm9189 = vcmp.le.f32.partialorder %v9188, 0.7853982
    %vm9190 = vcmp.lt.s32.totalorder %v9033, 0
    %v9191 = vand.u32 %v9033, 2139095040
    %v9192 = vshrl.u32 %v9191, 23
    %v9193 = vsub.s32 %v9192, 127
    %v9194 = vand.u32 2147483647, %v9033
    %v9195 = vand.u32 %v9194, 8388607
    %v9196 = vor.u32 %v9195, 8388608
    %v9197 = vsub.s32 0, %v9196
    %v9198 = vadd.s32 %v9193, 1
    %vm9199 = vcmp.gt.s32.totalorder %v9198, 0
    %v9200 = vsel %vm9199, %v9198, 0
    %v9201 = vshrl.u32 %v9200, 5
    %v9202 = vand.u32 %v9200, 31
    %v9203 = vsub.s32 32, %v9202
    %v9204 = vshrl.u32 683565275, %v9203
    %v9205 = vshll.u32 683565275, %v9202
    %v9206 = vshrl.u32 2475754826, %v9203
    %v9207 = vor.u32 %v9205, %v9206
    %v9208 = vshll.u32 2475754826, %v9202
    %v9209 = vshrl.u32 2131351028, %v9203
    %v9210 = vor.u32 %v9208, %v9209
    %v9211 = vshll.u32 2131351028, %v9202
    %v9212 = vshrl.u32 2102212464, %v9203
    %v9213 = vor.u32 %v9211, %v9212
    %v9214 = vshll.u32 2102212464, %v9202
    %v9215 = vshrl.u32 920167782, %v9203
    %v9216 = vor.u32 %v9214, %v9215
    %v9217 = vshll.u32 920167782, %v9202
    %v9218 = vshrl.u32 1326507024, %v9203
    %v9219 = vor.u32 %v9217, %v9218
    %vm9220 = vcmp.lt.s32.totalorder %v9201, 1
    %vm9221 = vcmp.lt.s32.totalorder %v9201, 2
    %vm9222 = vcmp.lt.s32.totalorder %v9201, 3
    %vm9223 = vcmp.lt.s32.totalorder %v9201, 4
    %v9224 = vsel %vm9220, %v9204, %v9207
    %v9225 = vsel %vm9223, %v9213, 2102212464
    %v9226 = vsel %vm9222, %v9210, %v9225
    %v9227 = vsel %vm9221, %v9224, %v9226
    %v9228 = vsel %vm9220, %v9207, %v9210
    %v9229 = vsel %vm9223, %v9216, 920167782
    %v9230 = vsel %vm9222, %v9213, %v9229
    %v9231 = vsel %vm9221, %v9228, %v9230
    %v9232 = vsel %vm9220, %v9210, %v9213
    %v9233 = vsel %vm9223, %v9219, 1326507024
    %v9234 = vsel %vm9222, %v9216, %v9233
    %v9235 = vsel %vm9221, %v9232, %v9234
    %v9236 = vshll.u32 %v9196, 8
    %v9237 = vand.u32 %v9236, 65535
    %v9238 = vshrl.u32 %v9236, 16
    %v9239 = vand.u32 %v9235, 65535
    %v9240 = vshrl.u32 %v9235, 16
    %v9241 = vmul.u32 %v9237, %v9239
    %v9242 = vmul.u32 %v9237, %v9240
    %v9243 = vmul.u32 %v9238, %v9239
    %v9244 = vmul.u32 %v9238, %v9240
    %v9245 = vshll.u32 %v9242, 16
    %v9246 = vshrl.u32 %v9242, 16
    %v9247 = vshll.u32 %v9243, 16
    %v9248 = vshrl.u32 %v9243, 16
    %vm9249 = vc.u32 %v9241, %v9245
    %v9250 = vsel %vm9249, 1, 0
    %v9251 = vadd.s32 %v9241, %v9245
    %v9252 = vadd.s32 %v9244, %v9250
    %vm9253 = vc.u32 %v9251, %v9247
    %v9254 = vsel %vm9253, 1, 0
    %v9255 = vadd.s32 %v9251, %v9247
    %v9256 = vadd.s32 %v9252, %v9254
    %v9257 = vadd.s32 %v9256, %v9246
    %v9258 = vadd.s32 %v9257, %v9248
    %v9259 = vand.u32 %v9236, 65535
    %v9260 = vshrl.u32 %v9236, 16
    %v9261 = vand.u32 %v9231, 65535
    %v9262 = vshrl.u32 %v9231, 16
    %v9263 = vmul.u32 %v9259, %v9261
    %v9264 = vmul.u32 %v9259, %v9262
    %v9265 = vmul.u32 %v9260, %v9261
    %v9266 = vmul.u32 %v9260, %v9262
    %v9267 = vshll.u32 %v9264, 16
    %v9268 = vshrl.u32 %v9264, 16
    %v9269 = vshll.u32 %v9265, 16
    %v9270 = vshrl.u32 %v9265, 16
    %vm9271 = vc.u32 %v9263, %v9267
    %v9272 = vsel %vm9271, 1, 0
    %v9273 = vadd.s32 %v9263, %v9267
    %v9274 = vadd.s32 %v9266, %v9272
    %vm9275 = vc.u32 %v9273, %v9269
    %v9276 = vsel %vm9275, 1, 0
    %v9277 = vadd.s32 %v9273, %v9269
    %v9278 = vadd.s32 %v9274, %v9276
    %v9279 = vadd.s32 %v9278, %v9268
    %v9280 = vadd.s32 %v9279, %v9270
    %v9281 = vmul.u32 %v9236, %v9227
    %v9282 = vadd.s32 %v9258, %v9277
    %vm9283 = vc.u32 %v9258, %v9277
    %v9284 = vadd.s32 %v9280, 1
    %v9285 = vsel %vm9283, %v9284, %v9280
    %v9286 = vadd.s32 %v9281, %v9285
    %v9287 = vadd.s32 %v9286, 536870912
    %v9288 = vshrl.u32 %v9287, 30
    %v9289 = vshll.u32 %v9288, 30
    %v9290 = vsub.s32 %v9286, %v9289
    %vm9291 = vcmp.lt.s32.totalorder %v9290, 0
    %v9292 = vsub.s32 0, %v9290
    %v9293 = vsel %vm9291, %v9292, %v9290
    %v9294 = vclz %v9293
    %v9295 = vsub.s32 %v9294, 2
    %vm9296 = vcmp.gt.s32.totalorder 0, %v9295
    %v9297 = vsel %vm9296, 0, %v9295
    %v9298 = vsub.s32 32, %v9297
    %v9299 = vshll.u32 %v9290, %v9297
    %v9300 = vshrl.u32 %v9282, %v9298
    %v9301 = vor.u32 %v9299, %v9300
    %v9302 = vsub.s32 4294967266, %v9297
    %v9303 = vadd.s32 %v9302, 127
    %v9304 = vshll.u32 %v9303, 23
    %v9305 = vor.u32 4788187, %v9304
    %v9306 = vand.u32 2147483647, %v9305
    %v9308 = vcvt.s32.f32 %v9301
    %v9309 = vmul.f32 %v9308, %v9306
    %v9310 = vxor.u32 %v9309, 2147483648
    %v9311 = vsel %vm9190, %v9310, %v9309
    %v9312 = vsub.s32 4, %v9288
    %v9313 = vsel %vm9190, %v9312, %v9288
    %v9314 = vsel %vm9189, %v9033, %v9311
    %v9315 = vsel %vm9189, 0, %v9313
    %v9316 = vmul.f32 %v9314, %v9314
    %v9317 = vmul.f32 %v9316, -0.001358992
    %v9318 = vadd.f32 %v9317, 0.041655596
    %v9319 = vmul.f32 %v9316, %v9318
    %v9320 = vadd.f32 %v9319, -0.4999988
    %v9321 = vmul.f32 %v9316, %v9320
    %v9322 = vadd.f32 1.0, %v9321
    %v9323 = vmul.f32 %v9314, %v9314
    %v9324 = vmul.f32 %v9323, -0.00019511016
    %v9325 = vadd.f32 %v9324, 0.008332121
    %v9326 = vmul.f32 %v9323, %v9325
    %v9327 = vadd.f32 %v9326, -0.16666654
    %v9328 = vmul.f32 %v9323, %v9327
    %v9329 = vadd.f32 %v9328, 1.0
    %v9330 = vmul.f32 %v9329, %v9314
    %vm9331 = vweird.f32 %v9033
    %v9332 = vand.u32 %v9315, 3
    %vm9333 = vcmp.lt.s32.totalorder %v9332, 2
    %vm9334 = vcmp.eq.s32.totalorder %v9332, 0
    %v9335 = vxor.u32 %v9330, 2147483648
    %v9336 = vsel %vm9334, %v9322, %v9335
    %vm9337 = vcmp.eq.s32.totalorder %v9332, 2
    %v9338 = vxor.u32 %v9322, 2147483648
    %v9339 = vsel %vm9337, %v9338, %v9330
    %v9340 = vsel %vm9333, %v9336, %v9339
    %v9341 = vsel %vm9331, nan, %v9340
    %v9342 = vmul.f32 %v682, %v9187
    %v9343 = vmul.f32 %v682, %v9341
    %v9344 = vmul.f32 %v685, %v9032
    %v9345 = vmul.f32 %v685, %v9033
    %v9346 = vadd.f32 %v9342, %v9344
    %v9347 = vadd.f32 %v9343, %v9345
    %v9348 = vsub.f32 %v9028, %v9346
    %v9349 = vsub.f32 %v9029, %v9347
    %v9350 = vmul.f32 %v369, %v9348
    %v9351 = vmul.f32 %v369, %v9349
    %v9352 = vadd.f32 %v9032, %v9350
    %v9353 = vadd.f32 %v9033, %v9351
    %v9354 = vand.u32 2147483647, %v9352
    %vm9355 = vcmp.le.f32.partialorder %v9354, 0.7853982
    %vm9356 = vcmp.lt.s32.totalorder %v9352, 0
    %v9357 = vand.u32 %v9352, 2139095040
    %v9358 = vshrl.u32 %v9357, 23
    %v9359 = vsub.s32 %v9358, 127
    %v9360 = vand.u32 2147483647, %v9352
    %v9361 = vand.u32 %v9360, 8388607
    %v9362 = vor.u32 %v9361, 8388608
    %v9363 = vsub.s32 0, %v9362
    %v9364 = vadd.s32 %v9359, 1
    %vm9365 = vcmp.gt.s32.totalorder %v9364, 0
    %v9366 = vsel %vm9365, %v9364, 0
    %v9367 = vshrl.u32 %v9366, 5
    %v9368 = vand.u32 %v9366, 31
    %v9369 = vsub.s32 32, %v9368
    %v9370 = vshrl.u32 683565275, %v9369
    %v9371 = vshll.u32 683565275, %v9368
    %v9372 = vshrl.u32 2475754826, %v9369
    %v9373 = vor.u32 %v9371, %v9372
    %v9374 = vshll.u32 2475754826, %v9368
    %v9375 = vshrl.u32 2131351028, %v9369
    %v9376 = vor.u32 %v9374, %v9375
    %v9377 = vshll.u32 2131351028, %v9368
    %v9378 = vshrl.u32 2102212464, %v9369
    %v9379 = vor.u32 %v9377, %v9378
    %v9380 = vshll.u32 2102212464, %v9368
    %v9381 = vshrl.u32 920167782, %v9369
    %v9382 = vor.u32 %v9380, %v9381
    %v9383 = vshll.u32 920167782, %v9368
    %v9384 = vshrl.u32 1326507024, %v9369
    %v9385 = vor.u32 %v9383, %v9384
    %vm9386 = vcmp.lt.s32.totalorder %v9367, 1
    %vm9387 = vcmp.lt.s32.totalorder %v9367, 2
    %vm9388 = vcmp.lt.s32.totalorder %v9367, 3
    %vm9389 = vcmp.lt.s32.totalorder %v9367, 4
    %v9390 = vsel %vm9386, %v9370, %v9373
    %v9391 = vsel %vm9389, %v9379, 2102212464
    %v9392 = vsel %vm9388, %v9376, %v9391
    %v9393 = vsel %vm9387, %v9390, %v9392
    %v9394 = vsel %vm9386, %v9373, %v9376
    %v9395 = vsel %vm9389, %v9382, 920167782
    %v9396 = vsel %vm9388, %v9379, %v9395
    %v9397 = vsel %vm9387, %v9394, %v9396
    %v9398 = vsel %vm9386, %v9376, %v9379
    %v9399 = vsel %vm9389, %v9385, 1326507024
    %v9400 = vsel %vm9388, %v9382, %v9399
    %v9401 = vsel %vm9387, %v9398, %v9400
    %v9402 = vshll.u32 %v9362, 8
    %v9403 = vand.u32 %v9402, 65535
    %v9404 = vshrl.u32 %v9402, 16
    %v9405 = vand.u32 %v9401, 65535
    %v9406 = vshrl.u32 %v9401, 16
    %v9407 = vmul.u32 %v9403, %v9405
    %v9408 = vmul.u32 %v9403, %v9406
    %v9409 = vmul.u32 %v9404, %v9405
    %v9410 = vmul.u32 %v9404, %v9406
    %v9411 = vshll.u32 %v9408, 16
    %v9412 = vshrl.u32 %v9408, 16
    %v9413 = vshll.u32 %v9409, 16
    %v9414 = vshrl.u32 %v9409, 16
    %vm9415 = vc.u32 %v9407, %v9411
    %v9416 = vsel %vm9415, 1, 0
    %v9417 = vadd.s32 %v9407, %v9411
    %v9418 = vadd.s32 %v9410, %v9416
    %vm9419 = vc.u32 %v9417, %v9413
    %v9420 = vsel %vm9419, 1, 0
    %v9421 = vadd.s32 %v9417, %v9413
    %v9422 = vadd.s32 %v9418, %v9420
    %v9423 = vadd.s32 %v9422, %v9412
    %v9424 = vadd.s32 %v9423, %v9414
    %v9425 = vand.u32 %v9402, 65535
    %v9426 = vshrl.u32 %v9402, 16
    %v9427 = vand.u32 %v9397, 65535
    %v9428 = vshrl.u32 %v9397, 16
    %v9429 = vmul.u32 %v9425, %v9427
    %v9430 = vmul.u32 %v9425, %v9428
    %v9431 = vmul.u32 %v9426, %v9427
    %v9432 = vmul.u32 %v9426, %v9428
    %v9433 = vshll.u32 %v9430, 16
    %v9434 = vshrl.u32 %v9430, 16
    %v9435 = vshll.u32 %v9431, 16
    %v9436 = vshrl.u32 %v9431, 16
    %vm9437 = vc.u32 %v9429, %v9433
    %v9438 = vsel %vm9437, 1, 0
    %v9439 = vadd.s32 %v9429, %v9433
    %v9440 = vadd.s32 %v9432, %v9438
    %vm9441 = vc.u32 %v9439, %v9435
    %v9442 = vsel %vm9441, 1, 0
    %v9443 = vadd.s32 %v9439, %v9435
    %v9444 = vadd.s32 %v9440, %v9442
    %v9445 = vadd.s32 %v9444, %v9434
    %v9446 = vadd.s32 %v9445, %v9436
    %v9447 = vmul.u32 %v9402, %v9393
    %v9448 = vadd.s32 %v9424, %v9443
    %vm9449 = vc.u32 %v9424, %v9443
    %v9450 = vadd.s32 %v9446, 1
    %v9451 = vsel %vm9449, %v9450, %v9446
    %v9452 = vadd.s32 %v9447, %v9451
    %v9453 = vadd.s32 %v9452, 536870912
    %v9454 = vshrl.u32 %v9453, 30
    %v9455 = vshll.u32 %v9454, 30
    %v9456 = vsub.s32 %v9452, %v9455
    %vm9457 = vcmp.lt.s32.totalorder %v9456, 0
    %v9458 = vsub.s32 0, %v9456
    %v9459 = vsel %vm9457, %v9458, %v9456
    %v9460 = vclz %v9459
    %v9461 = vsub.s32 %v9460, 2
    %vm9462 = vcmp.gt.s32.totalorder 0, %v9461
    %v9463 = vsel %vm9462, 0, %v9461
    %v9464 = vsub.s32 32, %v9463
    %v9465 = vshll.u32 %v9456, %v9463
    %v9466 = vshrl.u32 %v9448, %v9464
    %v9467 = vor.u32 %v9465, %v9466
    %v9468 = vsub.s32 4294967266, %v9463
    %v9469 = vadd.s32 %v9468, 127
    %v9470 = vshll.u32 %v9469, 23
    %v9471 = vor.u32 4788187, %v9470
    %v9472 = vand.u32 2147483647, %v9471
    %v9474 = vcvt.s32.f32 %v9467
    %v9475 = vmul.f32 %v9474, %v9472
    %v9476 = vxor.u32 %v9475, 2147483648
    %v9477 = vsel %vm9356, %v9476, %v9475
    %v9478 = vsub.s32 4, %v9454
    %v9479 = vsel %vm9356, %v9478, %v9454
    %v9480 = vsel %vm9355, %v9352, %v9477
    %v9481 = vsel %vm9355, 0, %v9479
    %v9482 = vmul.f32 %v9480, %v9480
    %v9483 = vmul.f32 %v9482, -0.001358992
    %v9484 = vadd.f32 %v9483, 0.041655596
    %v9485 = vmul.f32 %v9482, %v9484
    %v9486 = vadd.f32 %v9485, -0.4999988
    %v9487 = vmul.f32 %v9482, %v9486
    %v9488 = vadd.f32 1.0, %v9487
    %v9489 = vmul.f32 %v9480, %v9480
    %v9490 = vmul.f32 %v9489, -0.00019511016
    %v9491 = vadd.f32 %v9490, 0.008332121
    %v9492 = vmul.f32 %v9489, %v9491
    %v9493 = vadd.f32 %v9492, -0.16666654
    %v9494 = vmul.f32 %v9489, %v9493
    %v9495 = vadd.f32 %v9494, 1.0
    %v9496 = vmul.f32 %v9495, %v9480
    %vm9497 = vweird.f32 %v9352
    %v9498 = vand.u32 %v9481, 3
    %vm9499 = vcmp.lt.s32.totalorder %v9498, 2
    %vm9500 = vcmp.eq.s32.totalorder %v9498, 0
    %v9501 = vxor.u32 %v9496, 2147483648
    %v9502 = vsel %vm9500, %v9488, %v9501
    %vm9503 = vcmp.eq.s32.totalorder %v9498, 2
    %v9504 = vxor.u32 %v9488, 2147483648
    %v9505 = vsel %vm9503, %v9504, %v9496
    %v9506 = vsel %vm9499, %v9502, %v9505
    %v9507 = vsel %vm9497, nan, %v9506
    %v9508 = vand.u32 2147483647, %v9353
    %vm9509 = vcmp.le.f32.partialorder %v9508, 0.7853982
    %vm9510 = vcmp.lt.s32.totalorder %v9353, 0
    %v9511 = vand.u32 %v9353, 2139095040
    %v9512 = vshrl.u32 %v9511, 23
    %v9513 = vsub.s32 %v9512, 127
    %v9514 = vand.u32 2147483647, %v9353
    %v9515 = vand.u32 %v9514, 8388607
    %v9516 = vor.u32 %v9515, 8388608
    %v9517 = vsub.s32 0, %v9516
    %v9518 = vadd.s32 %v9513, 1
    %vm9519 = vcmp.gt.s32.totalorder %v9518, 0
    %v9520 = vsel %vm9519, %v9518, 0
    %v9521 = vshrl.u32 %v9520, 5
    %v9522 = vand.u32 %v9520, 31
    %v9523 = vsub.s32 32, %v9522
    %v9524 = vshrl.u32 683565275, %v9523
    %v9525 = vshll.u32 683565275, %v9522
    %v9526 = vshrl.u32 2475754826, %v9523
    %v9527 = vor.u32 %v9525, %v9526
    %v9528 = vshll.u32 2475754826, %v9522
    %v9529 = vshrl.u32 2131351028, %v9523
    %v9530 = vor.u32 %v9528, %v9529
    %v9531 = vshll.u32 2131351028, %v9522
    %v9532 = vshrl.u32 2102212464, %v9523
    %v9533 = vor.u32 %v9531, %v9532
    %v9534 = vshll.u32 2102212464, %v9522
    %v9535 = vshrl.u32 920167782, %v9523
    %v9536 = vor.u32 %v9534, %v9535
    %v9537 = vshll.u32 920167782, %v9522
    %v9538 = vshrl.u32 1326507024, %v9523
    %v9539 = vor.u32 %v9537, %v9538
    %vm9540 = vcmp.lt.s32.totalorder %v9521, 1
    %vm9541 = vcmp.lt.s32.totalorder %v9521, 2
    %vm9542 = vcmp.lt.s32.totalorder %v9521, 3
    %vm9543 = vcmp.lt.s32.totalorder %v9521, 4
    %v9544 = vsel %vm9540, %v9524, %v9527
    %v9545 = vsel %vm9543, %v9533, 2102212464
    %v9546 = vsel %vm9542, %v9530, %v9545
    %v9547 = vsel %vm9541, %v9544, %v9546
    %v9548 = vsel %vm9540, %v9527, %v9530
    %v9549 = vsel %vm9543, %v9536, 920167782
    %v9550 = vsel %vm9542, %v9533, %v9549
    %v9551 = vsel %vm9541, %v9548, %v9550
    %v9552 = vsel %vm9540, %v9530, %v9533
    %v9553 = vsel %vm9543, %v9539, 1326507024
    %v9554 = vsel %vm9542, %v9536, %v9553
    %v9555 = vsel %vm9541, %v9552, %v9554
    %v9556 = vshll.u32 %v9516, 8
    %v9557 = vand.u32 %v9556, 65535
    %v9558 = vshrl.u32 %v9556, 16
    %v9559 = vand.u32 %v9555, 65535
    %v9560 = vshrl.u32 %v9555, 16
    %v9561 = vmul.u32 %v9557, %v9559
    %v9562 = vmul.u32 %v9557, %v9560
    %v9563 = vmul.u32 %v9558, %v9559
    %v9564 = vmul.u32 %v9558, %v9560
    %v9565 = vshll.u32 %v9562, 16
    %v9566 = vshrl.u32 %v9562, 16
    %v9567 = vshll.u32 %v9563, 16
    %v9568 = vshrl.u32 %v9563, 16
    %vm9569 = vc.u32 %v9561, %v9565
    %v9570 = vsel %vm9569, 1, 0
    %v9571 = vadd.s32 %v9561, %v9565
    %v9572 = vadd.s32 %v9564, %v9570
    %vm9573 = vc.u32 %v9571, %v9567
    %v9574 = vsel %vm9573, 1, 0
    %v9575 = vadd.s32 %v9571, %v9567
    %v9576 = vadd.s32 %v9572, %v9574
    %v9577 = vadd.s32 %v9576, %v9566
    %v9578 = vadd.s32 %v9577, %v9568
    %v9579 = vand.u32 %v9556, 65535
    %v9580 = vshrl.u32 %v9556, 16
    %v9581 = vand.u32 %v9551, 65535
    %v9582 = vshrl.u32 %v9551, 16
    %v9583 = vmul.u32 %v9579, %v9581
    %v9584 = vmul.u32 %v9579, %v9582
    %v9585 = vmul.u32 %v9580, %v9581
    %v9586 = vmul.u32 %v9580, %v9582
    %v9587 = vshll.u32 %v9584, 16
    %v9588 = vshrl.u32 %v9584, 16
    %v9589 = vshll.u32 %v9585, 16
    %v9590 = vshrl.u32 %v9585, 16
    %vm9591 = vc.u32 %v9583, %v9587
    %v9592 = vsel %vm9591, 1, 0
    %v9593 = vadd.s32 %v9583, %v9587
    %v9594 = vadd.s32 %v9586, %v9592
    %vm9595 = vc.u32 %v9593, %v9589
    %v9596 = vsel %vm9595, 1, 0
    %v9597 = vadd.s32 %v9593, %v9589
    %v9598 = vadd.s32 %v9594, %v9596
    %v9599 = vadd.s32 %v9598, %v9588
    %v9600 = vadd.s32 %v9599, %v9590
    %v9601 = vmul.u32 %v9556, %v9547
    %v9602 = vadd.s32 %v9578, %v9597
    %vm9603 = vc.u32 %v9578, %v9597
    %v9604 = vadd.s32 %v9600, 1
    %v9605 = vsel %vm9603, %v9604, %v9600
    %v9606 = vadd.s32 %v9601, %v9605
    %v9607 = vadd.s32 %v9606, 536870912
    %v9608 = vshrl.u32 %v9607, 30
    %v9609 = vshll.u32 %v9608, 30
    %v9610 = vsub.s32 %v9606, %v9609
    %vm9611 = vcmp.lt.s32.totalorder %v9610, 0
    %v9612 = vsub.s32 0, %v9610
    %v9613 = vsel %vm9611, %v9612, %v9610
    %v9614 = vclz %v9613
    %v9615 = vsub.s32 %v9614, 2
    %vm9616 = vcmp.gt.s32.totalorder 0, %v9615
    %v9617 = vsel %vm9616, 0, %v9615
    %v9618 = vsub.s32 32, %v9617
    %v9619 = vshll.u32 %v9610, %v9617
    %v9620 = vshrl.u32 %v9602, %v9618
    %v9621 = vor.u32 %v9619, %v9620
    %v9622 = vsub.s32 4294967266, %v9617
    %v9623 = vadd.s32 %v9622, 127
    %v9624 = vshll.u32 %v9623, 23
    %v9625 = vor.u32 4788187, %v9624
    %v9626 = vand.u32 2147483647, %v9625
    %v9628 = vcvt.s32.f32 %v9621
    %v9629 = vmul.f32 %v9628, %v9626
    %v9630 = vxor.u32 %v9629, 2147483648
    %v9631 = vsel %vm9510, %v9630, %v9629
    %v9632 = vsub.s32 4, %v9608
    %v9633 = vsel %vm9510, %v9632, %v9608
    %v9634 = vsel %vm9509, %v9353, %v9631
    %v9635 = vsel %vm9509, 0, %v9633
    %v9636 = vmul.f32 %v9634, %v9634
    %v9637 = vmul.f32 %v9636, -0.001358992
    %v9638 = vadd.f32 %v9637, 0.041655596
    %v9639 = vmul.f32 %v9636, %v9638
    %v9640 = vadd.f32 %v9639, -0.4999988
    %v9641 = vmul.f32 %v9636, %v9640
    %v9642 = vadd.f32 1.0, %v9641
    %v9643 = vmul.f32 %v9634, %v9634
    %v9644 = vmul.f32 %v9643, -0.00019511016
    %v9645 = vadd.f32 %v9644, 0.008332121
    %v9646 = vmul.f32 %v9643, %v9645
    %v9647 = vadd.f32 %v9646, -0.16666654
    %v9648 = vmul.f32 %v9643, %v9647
    %v9649 = vadd.f32 %v9648, 1.0
    %v9650 = vmul.f32 %v9649, %v9634
    %vm9651 = vweird.f32 %v9353
    %v9652 = vand.u32 %v9635, 3
    %vm9653 = vcmp.lt.s32.totalorder %v9652, 2
    %vm9654 = vcmp.eq.s32.totalorder %v9652, 0
    %v9655 = vxor.u32 %v9650, 2147483648
    %v9656 = vsel %vm9654, %v9642, %v9655
    %vm9657 = vcmp.eq.s32.totalorder %v9652, 2
    %v9658 = vxor.u32 %v9642, 2147483648
    %v9659 = vsel %vm9657, %v9658, %v9650
    %v9660 = vsel %vm9653, %v9656, %v9659
    %v9661 = vsel %vm9651, nan, %v9660
    %v9662 = vmul.f32 %v359, %v9507
    %v9663 = vmul.f32 %v359, %v9661
    %v9664 = vmul.f32 %v362, %v9352
    %v9665 = vmul.f32 %v362, %v9353
    %v9666 = vadd.f32 %v9662, %v9664
    %v9667 = vadd.f32 %v9663, %v9665
    %v9668 = vsub.f32 %v9348, %v9666
    %v9669 = vsub.f32 %v9349, %v9667
    %v9670 = vmul.f32 %v46, %v9668
    %v9671 = vmul.f32 %v46, %v9669
    %v9672 = vadd.f32 %v9352, %v9670
    %v9673 = vadd.f32 %v9353, %v9671
    %9674 = vst [vmem:[#allocation7] sm:$0xff] %v9672
    %9675 = vst [vmem:[#allocation7 + $0x8] sm:$0xff] %v9673
    %s9676 = scalar_lea.vmem [#allocation7], %s42
    %9677 = vst [vmem:[%s9676] sm:$0xff] %v9668
    %9678 = vst [vmem:[%s9676 + $0x8] sm:$0xff] %v9669
    // Predicated region
    $region10: #{tpu_custom_call.1} parent=1 // pred_check
      _
    $region11: #{tpu_custom_call.1} parent=1 // pred_check_branch
      %9680 = sbr.rel (0) target = $region13
    $region12: #{tpu_custom_call.1} parent=1 // pred_region
      %9682 = vsyncadd [#allocation6], 0
      %s9683 = sshll.u32 [#allocation7], 4
      %s9684 = int_to_ptr.vmem [resolvable:$true] %s9683
      %s9685 = sshll.u32 %s2, 4
      %s9686 = int_to_ptr.hbm [resolvable:$true] %s9685
      %9691 = dma.vmem_to_hbm [thread:$0]  %s9684, 512, %s9686, [#allocation6], 128, 128, 8
    $region13: #{tpu_custom_call.1} parent=1 // pred_fallthru
      _
    // Predicated region
    $region14: #{tpu_custom_call.1} parent=1 // pred_check
      _
    $region15: #{tpu_custom_call.1} parent=1 // pred_check_branch
      %9693 = sbr.rel (0) target = $region17
    $region16: #{tpu_custom_call.1} parent=1 // pred_region
      %9695 = dma.done [#allocation6], 512
    $region17: #{tpu_custom_call.1} parent=1 // pred_fallthru
      _
    %9696 = vsyncpa [#allocation5], 1
    %9697 = vsyncpa [#allocation6], 1

</llo_original>
